<compile_context>
chip_gen: v7x
topology: tpu7x:2x2x1
jax: 0.10.0
libtpu: 0.0.40
codegen_flags: <defaults>
</compile_context>

<pallas_src>
import math
import functools

import jax
import jax.numpy as jnp
from jax.experimental import pallas as pl
from jax.experimental.pallas import tpu as pltpu


def _attention_block_kernel(x_ref, gamma_ref, beta_ref, wqkv_ref, bqkv_ref,
                            wout_ref, bout_ref, o_ref, *,
                            n_heads: int, d_heads: int, num_groups: int,
                            eps: float, causal_mask: bool, compute_dtype):
    """One grid step = Bb batch elements, all kept feature-major (C rows, S lanes).

    x_ref    : (Bb, C, S)  input dtype
    gamma_ref: (C, 1)      f32   GroupNorm weight
    beta_ref : (C, 1)      f32   GroupNorm bias
    wqkv_ref : (3C, C)     compute_dtype  (torch in_proj.weight layout, q rows pre-scaled)
    bqkv_ref : (3C, 1)     f32   (q part pre-scaled)
    wout_ref : (C, C)      compute_dtype  (torch out_proj.weight (out, in) layout)
    bout_ref : (C, 1)      f32
    o_ref    : (Bb, C, S)
    """
    Bb, C, S = x_ref.shape
    G = num_groups
    Cg = C // G
    H, dh = n_heads, d_heads
    inv_n = 1.0 / float(Cg * S)

    # Hoist resident params out of the (unrolled) per-batch loop; JAX does not
    # CSE repeated ref reads / broadcasts.
    w_qkv = wqkv_ref[...]
    b_qkv = bqkv_ref[...]
    w_out = wout_ref[...]
    b_out = bout_ref[...]
    gamma = gamma_ref[...]
    beta = beta_ref[...]

    if causal_mask:  # static flag (unused by AttentionBlock, kept for parity)
        row = jax.lax.broadcasted_iota(jnp.int32, (S, S), 0)
        col = jax.lax.broadcasted_iota(jnp.int32, (S, S), 1)
        neg_mask = (col > row)[None, :, :]

    for b in range(Bb):                                  # static, small unroll
        xb = x_ref[b].astype(jnp.float32)                # (C, S)

        # ---- GroupNorm: single pass (sum + sum of squares), all f32 ----------
        xg = xb.reshape(G, Cg, S)
        s1 = jnp.sum(jnp.sum(xg, axis=2, keepdims=True), axis=1, keepdims=True)
        s2 = jnp.sum(jnp.sum(xg * xg, axis=2, keepdims=True), axis=1, keepdims=True)
        mean = s1 * inv_n
        var = jnp.maximum(s2 * inv_n - mean * mean, 0.0)
        xn = (xg - mean) * jax.lax.rsqrt(var + eps)
        xn = xn.reshape(C, S) * gamma + beta             # (C,1) broadcast over lanes

        # ---- fused in_proj: one (3C,C)@(C,S) matmul, free sublane q/k/v split -
        qkv = jnp.dot(w_qkv, xn.astype(compute_dtype),
                      preferred_element_type=jnp.float32) + b_qkv     # (3C, S) f32
        q_fm = qkv[0:C]                                   # (C, S), scale already folded
        k_fm = qkv[C:2 * C]
        v_fm = qkv[2 * C:3 * C]

        # head split is a leading-dim (sublane) split: (C,S) -> (H, dh, S)
        kh = k_fm.reshape(H, dh, S).astype(compute_dtype)
        vh = v_fm.reshape(H, dh, S).astype(compute_dtype)
        # the only activation relayout: q -> (H, S, dh) so both attention
        # einsums are standard bmm contraction patterns.
        qh = pltpu.einshape("hds->hsd", q_fm.reshape(H, dh, S)).astype(compute_dtype)

        # ---- attention -------------------------------------------------------
        scores = jnp.einsum("hqd,hdk->hqk", qh, kh,
                            preferred_element_type=jnp.float32)       # (H, S, S) f32
        if causal_mask:
            scores = jnp.where(neg_mask, -jnp.inf, scores)

        m = jnp.max(scores, axis=-1, keepdims=True)
        e = jnp.exp(scores - m)
        denom = jnp.sum(e, axis=-1, keepdims=True)                    # (H, S, 1)

        # PV with unnormalised probabilities; normalisation deferred (H*S*dh
        # multiplies instead of H*S*S).  Output is already feature-major.
        ctx = jnp.einsum("hdk,hqk->hdq", vh, e.astype(compute_dtype),
                         preferred_element_type=jnp.float32)          # (H, dh, S) f32
        inv = pl.reciprocal(denom, approx=True)                       # (H, S, 1), EUP
        ctx = ctx * inv[:, :, 0][:, None, :]                          # (H,1,S) broadcast

        # ---- out_proj in feature-major orientation + residual -----------------
        ctx2 = ctx.reshape(C, S).astype(compute_dtype)                # free head merge
        out = jnp.dot(w_out, ctx2, preferred_element_type=jnp.float32) + b_out  # (C, S)

        o_ref[b] = (xb + out).astype(o_ref.dtype)


def attention_block_pallas(x, gamma, beta, w_in, b_in, w_out, b_out, *,
                           num_groups, n_heads, eps=1e-5,
                           compute_dtype=jnp.bfloat16, causal_mask=False,
                           max_batch_block=8):
    """x: (B, C, H, W). Weights in torch layout: w_in (3D, D), w_out (D, D)."""
    B, C, Hi, Wi = x.shape
    assert C % num_groups == 0 and C % n_heads == 0
    D = C
    S = Hi * Wi
    d_heads = D // n_heads

    # ---- batch-block size: pack batch elements per grid step when S < 128 ----
    target = max(1, -(-128 // S)) if S < 128 else 1
    target = min(target, B, max_batch_block)
    bb = 1
    for cand in range(target, 0, -1):
        if B % cand == 0:
            bb = cand
            break
    num_blocks = B // bb

    x_flat = x.reshape(B, C, S)

    # ---- weight prep (all one-time, host/XLA side) ----------------------------
    # in_proj weight stays in torch (3D, D) layout (feature-major matmul needs no
    # transpose); fold 1/sqrt(d_heads) into the q rows / q bias.
    scale = 1.0 / math.sqrt(d_heads)
    w_in_f = w_in.astype(jnp.float32)
    w_qkv = jnp.concatenate([w_in_f[:D] * scale, w_in_f[D:]], axis=0).astype(compute_dtype)
    b_in_f = b_in.astype(jnp.float32)
    b_qkv = jnp.concatenate([b_in_f[:D] * scale, b_in_f[D:]]).reshape(3 * D, 1)
    w_out_c = w_out.astype(compute_dtype)                 # torch (out, in) layout
    b_out_c = b_out.reshape(D, 1).astype(jnp.float32)
    gamma_c = gamma.reshape(C, 1).astype(jnp.float32)
    beta_c = beta.reshape(C, 1).astype(jnp.float32)

    kernel = functools.partial(
        _attention_block_kernel,
        n_heads=n_heads, d_heads=d_heads, num_groups=num_groups,
        eps=float(eps), causal_mask=causal_mask, compute_dtype=compute_dtype)

    # ---- advisory cost estimate ------------------------------------------------
    flops = int(B * (2 * S * (3 * D) * D                    # in_proj
                     + 2 * 2 * n_heads * S * S * d_heads    # QK^T and PV
                     + 2 * S * D * D))                      # out_proj
    transcendentals = int(B * (n_heads * S * S + num_groups))
    itemsize_c = jnp.dtype(compute_dtype).itemsize
    bytes_accessed = int(2 * x.size * x.dtype.itemsize
                         + (w_qkv.size + w_out_c.size) * itemsize_c
                         + 4 * (b_qkv.size + b_out_c.size + gamma_c.size + beta_c.size))

    # ---- generation-aware scoped-VMEM budget ------------------------------------
    try:
        cap = int(getattr(pltpu.get_tpu_info(), "vmem_capacity_bytes", 0)) or (64 << 20)
    except Exception:
        cap = 64 << 20                                      # conservative fallback
    working = (4 * bb * C * S * 4                           # x/out blocks (double buffered)
               + 2 * 4 * D * D * itemsize_c                 # resident weights (<=2 bufs)
               + min(bb, 2) * (3 * n_heads * S * S * 4      # scores / exp
                               + 12 * D * S * 4))           # qkv / heads / ctx temporaries
    vmem_limit = int(min(max(2 * working, 16 << 20), int(0.85 * cap)))

    out_shape = jax.ShapeDtypeStruct((B, C, S), x.dtype)
    grid = (num_blocks,)

    def call(single_buffer_weights):
        res_kw = dict(pipeline_mode=pl.Buffered(1)) if single_buffer_weights else {}

        def resident(shape):
            return pl.BlockSpec(shape, lambda nb: (0,) * len(shape), **res_kw)

        gs = pltpu.PrefetchScalarGridSpec(
            num_scalar_prefetch=0,
            grid=grid,
            in_specs=[
                pl.BlockSpec((bb, C, S), lambda nb: (nb, 0, 0)),   # x, bb batch elems / step
                resident((C, 1)),                                  # GroupNorm weight
                resident((C, 1)),                                  # GroupNorm bias
                resident((3 * D, D)),                              # W_qkv (resident)
                resident((3 * D, 1)),                              # b_qkv
                resident((D, D)),                                  # W_out (resident)
                resident((D, 1)),                                  # b_out
            ],
            out_specs=pl.BlockSpec((bb, C, S), lambda nb: (nb, 0, 0)),
        )
        return pl.pallas_call(
            kernel,
            out_shape=out_shape,
            grid_spec=gs,
            compiler_params=pltpu.CompilerParams(
                dimension_semantics=("parallel",),
                vmem_limit_bytes=vmem_limit),
            cost_estimate=pl.CostEstimate(
                flops=flops, transcendentals=transcendentals,
                bytes_accessed=bytes_accessed),
        )(x_flat, gamma_c, beta_c, w_qkv, b_qkv, w_out_c, b_out_c)

    try:
        out_flat = call(True)          # single-buffer the resident weights
    except Exception:
        out_flat = call(False)         # fall back if Buffered(1) is rejected

    return out_flat.reshape(B, C, Hi, Wi)


def attention_block_ref(x, gamma, beta, w_in, b_in, w_out, b_out, *,
                        num_groups, n_heads, eps=1e-5, causal_mask=False):
    """Pure-JAX reference mirroring the PyTorch AttentionBlock forward exactly."""
    B, C, Hi, Wi = x.shape
    S = Hi * Wi
    dh = C // n_heads
    # GroupNorm
    xg = x.reshape(B, num_groups, C // num_groups, Hi, Wi)
    mean = xg.mean(axis=(2, 3, 4), keepdims=True)
    var = xg.var(axis=(2, 3, 4), keepdims=True)
    xn = (xg - mean) / jnp.sqrt(var + eps)
    xn = xn.reshape(B, C, Hi, Wi) * gamma[None, :, None, None] + beta[None, :, None, None]
    # SelfAttention
    t = xn.reshape(B, C, S).transpose(0, 2, 1)               # (B, S, C)
    qkv = jnp.einsum("bsd,ed->bse", t, w_in) + b_in          # Linear: x @ W^T + b
    q, k, v = jnp.split(qkv, 3, axis=-1)

    def heads(a):
        return a.reshape(B, S, n_heads, dh).transpose(0, 2, 1, 3)

    q, k, v = heads(q), heads(k), heads(v)
    w = jnp.einsum("bhqd,bhkd->bhqk", q, k)
    if causal_mask:
        cm = jnp.triu(jnp.ones((S, S), dtype=bool), 1)
        w = jnp.where(cm, -jnp.inf, w)
    w = w / math.sqrt(dh)
    p = jax.nn.softmax(w, axis=-1)
    o = jnp.einsum("bhqk,bhkd->bhqd", p, v)
    o = o.transpose(0, 2, 1, 3).reshape(B, S, C)
    o = jnp.einsum("bsd,ed->bse", o, w_out) + b_out
    o = o.transpose(0, 2, 1).reshape(B, C, Hi, Wi)
    return x + o


if __name__ == "__main__":
    # Small shapes consistent with the module: batch=2, channels=32, 8x8 spatial
    # (seq = 64), 8 groups, 4 heads.
    B, C, Hi, Wi = 2, 32, 8, 8
    G, NH = 8, 4

    key = jax.random.PRNGKey(0)
    k1, k2, k3, k4, k5, k6, kx = jax.random.split(key, 7)

    bound = 1.0 / math.sqrt(C)
    w_in = jax.random.uniform(k1, (3 * C, C), jnp.float32, -bound, bound)    # in_proj.weight
    b_in = jax.random.uniform(k2, (3 * C,), jnp.float32, -bound, bound)      # in_proj.bias
    w_out = jax.random.uniform(k3, (C, C), jnp.float32, -bound, bound)       # out_proj.weight
    b_out = jax.random.uniform(k4, (C,), jnp.float32, -bound, bound)         # out_proj.bias
    gamma = 1.0 + 0.1 * jax.random.normal(k5, (C,), jnp.float32)             # group_norm.weight
    beta = 0.1 * jax.random.normal(k6, (C,), jnp.float32)                    # group_norm.bias
    x = jax.random.normal(kx, (B, C, Hi, Wi), jnp.float32)

    args = (x, gamma, beta, w_in, b_in, w_out, b_out)

    # f32 matmul path (tolerance accounts for the approximate EUP reciprocal
    # used in the deferred softmax normalisation).
    for causal in (False, True):
        ref = attention_block_ref(*args, num_groups=G, n_heads=NH, causal_mask=causal)
        out = attention_block_pallas(*args, num_groups=G, n_heads=NH,
                                     compute_dtype=jnp.float32, causal_mask=causal)
        out = jax.block_until_ready(out)
        assert out.shape == x.shape
        err = float(jnp.max(jnp.abs(out - ref)))
        assert jnp.allclose(out, ref, atol=1e-2, rtol=1e-2), \
            f"f32 mismatch (causal={causal}): max err {err}"

    # bf16 matmul-input path (f32 accumulation / softmax / residual) -- looser
    # tolerance vs the f32 reference.
    ref = attention_block_ref(*args, num_groups=G, n_heads=NH, causal_mask=False)
    out16 = attention_block_pallas(*args, num_groups=G, n_heads=NH,
                                   compute_dtype=jnp.bfloat16, causal_mask=False)
    out16 = jax.block_until_ready(out16)
    err16 = float(jnp.max(jnp.abs(out16 - ref)))
    assert jnp.allclose(out16, ref, atol=1e-1, rtol=1e-1), f"bf16 mismatch: max err {err16}"

    print("KERNEL_OK")
</pallas_src>

<mosaic_0001>
module attributes {stable_mosaic.version = 11 : i64} {
  func.func @_attention_block_kernel(%arg0: i32, %arg1: memref<2x32x64xf32, #tpu.memory_space<vmem>>, %arg2: memref<32x1xf32, #tpu.memory_space<vmem>>, %arg3: memref<32x1xf32, #tpu.memory_space<vmem>>, %arg4: memref<96x32xf32, #tpu.memory_space<vmem>>, %arg5: memref<96x1xf32, #tpu.memory_space<vmem>>, %arg6: memref<32x32xf32, #tpu.memory_space<vmem>>, %arg7: memref<32x1xf32, #tpu.memory_space<vmem>>, %arg8: memref<2x32x64xf32, #tpu.memory_space<vmem>>) attributes {dimension_semantics = [#tpu.dimension_semantics<parallel>], iteration_bounds = array<i64: 1>, scalar_prefetch = 0 : i64, scratch_operands = 0 : i64, tpu.core_type = #tpu.core_type<tc>, window_params = [{transform_indices = @transform_0, window_bounds = array<i64: 2, 32, 64>}, {pipeline_mode = #tpu.pipeline_mode<synchronous>, transform_indices = @transform_1, window_bounds = array<i64: 32, 1>}, {pipeline_mode = #tpu.pipeline_mode<synchronous>, transform_indices = @transform_2, window_bounds = array<i64: 32, 1>}, {pipeline_mode = #tpu.pipeline_mode<synchronous>, transform_indices = @transform_3, window_bounds = array<i64: 96, 32>}, {pipeline_mode = #tpu.pipeline_mode<synchronous>, transform_indices = @transform_4, window_bounds = array<i64: 96, 1>}, {pipeline_mode = #tpu.pipeline_mode<synchronous>, transform_indices = @transform_5, window_bounds = array<i64: 32, 32>}, {pipeline_mode = #tpu.pipeline_mode<synchronous>, transform_indices = @transform_6, window_bounds = array<i64: 32, 1>}, {transform_indices = @transform_7, window_bounds = array<i64: 2, 32, 64>}]} {
    %c0 = arith.constant 0 : index
    %c0_0 = arith.constant 0 : index
    %0 = vector.load %arg4[%c0, %c0_0] : memref<96x32xf32, #tpu.memory_space<vmem>>, vector<96x32xf32>
    %c0_1 = arith.constant 0 : index
    %c0_2 = arith.constant 0 : index
    %1 = vector.load %arg5[%c0_1, %c0_2] : memref<96x1xf32, #tpu.memory_space<vmem>>, vector<96x1xf32>
    %c0_3 = arith.constant 0 : index
    %c0_4 = arith.constant 0 : index
    %2 = vector.load %arg6[%c0_3, %c0_4] : memref<32x32xf32, #tpu.memory_space<vmem>>, vector<32x32xf32>
    %c0_5 = arith.constant 0 : index
    %c0_6 = arith.constant 0 : index
    %3 = vector.load %arg7[%c0_5, %c0_6] : memref<32x1xf32, #tpu.memory_space<vmem>>, vector<32x1xf32>
    %c0_7 = arith.constant 0 : index
    %c0_8 = arith.constant 0 : index
    %4 = vector.load %arg2[%c0_7, %c0_8] : memref<32x1xf32, #tpu.memory_space<vmem>>, vector<32x1xf32>
    %c0_9 = arith.constant 0 : index
    %c0_10 = arith.constant 0 : index
    %5 = vector.load %arg3[%c0_9, %c0_10] : memref<32x1xf32, #tpu.memory_space<vmem>>, vector<32x1xf32>
    %c0_11 = arith.constant 0 : index
    %c0_12 = arith.constant 0 : index
    %c0_13 = arith.constant 0 : index
    %6 = vector.load %arg1[%c0_11, %c0_12, %c0_13] : memref<2x32x64xf32, #tpu.memory_space<vmem>>, vector<1x32x64xf32>
    %7 = vector.shape_cast %6 : vector<1x32x64xf32> to vector<32x64xf32>
    %8 = vector.shape_cast %7 : vector<32x64xf32> to vector<8x4x64xf32>
    %cst = arith.constant dense<0.000000e+00> : vector<8x4xf32>
    %9 = vector.multi_reduction <add>, %8, %cst [2] : vector<8x4x64xf32> to vector<8x4xf32>
    %10 = vector.shape_cast %9 : vector<8x4xf32> to vector<8x4x1xf32>
    %cst_14 = arith.constant dense<0.000000e+00> : vector<8x1xf32>
    %11 = vector.multi_reduction <add>, %10, %cst_14 [1] : vector<8x4x1xf32> to vector<8x1xf32>
    %12 = vector.shape_cast %11 : vector<8x1xf32> to vector<8x1x1xf32>
    %13 = arith.mulf %8, %8 : vector<8x4x64xf32>
    %cst_15 = arith.constant dense<0.000000e+00> : vector<8x4xf32>
    %14 = vector.multi_reduction <add>, %13, %cst_15 [2] : vector<8x4x64xf32> to vector<8x4xf32>
    %15 = vector.shape_cast %14 : vector<8x4xf32> to vector<8x4x1xf32>
    %cst_16 = arith.constant dense<0.000000e+00> : vector<8x1xf32>
    %16 = vector.multi_reduction <add>, %15, %cst_16 [1] : vector<8x4x1xf32> to vector<8x1xf32>
    %17 = vector.shape_cast %16 : vector<8x1xf32> to vector<8x1x1xf32>
    %cst_17 = arith.constant 3.906250e-03 : f32
    %18 = vector.broadcast %cst_17 : f32 to vector<8x1x1xf32>
    %19 = arith.mulf %12, %18 : vector<8x1x1xf32>
    %cst_18 = arith.constant 3.906250e-03 : f32
    %20 = vector.broadcast %cst_18 : f32 to vector<8x1x1xf32>
    %21 = arith.mulf %17, %20 : vector<8x1x1xf32>
    %22 = arith.mulf %19, %19 : vector<8x1x1xf32>
    %23 = arith.subf %21, %22 : vector<8x1x1xf32>
    %cst_19 = arith.constant 0.000000e+00 : f32
    %24 = vector.broadcast %cst_19 : f32 to vector<8x1x1xf32>
    %25 = arith.maximumf %23, %24 : vector<8x1x1xf32>
    %26 = vector.broadcast %19 : vector<8x1x1xf32> to vector<8x4x64xf32>
    %27 = arith.subf %8, %26 : vector<8x4x64xf32>
    %cst_20 = arith.constant 9.99999974E-6 : f32
    %28 = vector.broadcast %cst_20 : f32 to vector<8x1x1xf32>
    %29 = arith.addf %25, %28 : vector<8x1x1xf32>
    %30 = math.rsqrt %29 : vector<8x1x1xf32>
    %31 = vector.broadcast %30 : vector<8x1x1xf32> to vector<8x4x64xf32>
    %32 = arith.mulf %27, %31 : vector<8x4x64xf32>
    %33 = vector.shape_cast %32 : vector<8x4x64xf32> to vector<32x64xf32>
    %34 = vector.broadcast %4 : vector<32x1xf32> to vector<32x64xf32>
    %35 = arith.mulf %33, %34 : vector<32x64xf32>
    %36 = vector.broadcast %5 : vector<32x1xf32> to vector<32x64xf32>
    %37 = arith.addf %35, %36 : vector<32x64xf32>
    %cst_21 = arith.constant dense<0.000000e+00> : vector<96x64xf32>
    %38 = tpu.matmul %0, %37, %cst_21 {dimension_numbers = #tpu.dot_dimension_numbers<[1], [0], [0], [1], [0, 0, 1, 1], [], []>} : vector<96x32xf32>, vector<32x64xf32>, vector<96x64xf32> -> vector<96x64xf32>
    %39 = vector.broadcast %1 : vector<96x1xf32> to vector<96x64xf32>
    %40 = arith.addf %38, %39 : vector<96x64xf32>
    %41 = vector.extract_strided_slice %40 {offsets = [0, 0], sizes = [32, 64], strides = [1, 1]} : vector<96x64xf32> to vector<32x64xf32>
    %42 = vector.extract_strided_slice %40 {offsets = [32, 0], sizes = [32, 64], strides = [1, 1]} : vector<96x64xf32> to vector<32x64xf32>
    %43 = vector.extract_strided_slice %40 {offsets = [64, 0], sizes = [32, 64], strides = [1, 1]} : vector<96x64xf32> to vector<32x64xf32>
    %44 = vector.shape_cast %42 : vector<32x64xf32> to vector<4x8x64xf32>
    %45 = vector.shape_cast %43 : vector<32x64xf32> to vector<4x8x64xf32>
    %46 = vector.shape_cast %41 : vector<32x64xf32> to vector<4x8x64xf32>
    %47 = tpu.transpose %46, [0, 2, 1] : vector<4x8x64xf32> -> vector<4x64x8xf32>
    "tpu.trace_start"() <{level = 10 : i32, message = "hqd,hdk->hqk"}> : () -> ()
    %cst_22 = arith.constant dense<0.000000e+00> : vector<4x64x64xf32>
    %48 = tpu.matmul %47, %44, %cst_22 {dimension_numbers = #tpu.dot_dimension_numbers<[2], [1], [1], [2], [0, 0, 0, 1, 1, 2], [0], [0]>} : vector<4x64x8xf32>, vector<4x8x64xf32>, vector<4x64x64xf32> -> vector<4x64x64xf32>
    "tpu.trace_stop"() : () -> ()
    %cst_23 = arith.constant dense<0xFF800000> : vector<4x64xf32>
    %49 = vector.multi_reduction <maximumf>, %48, %cst_23 [2] : vector<4x64x64xf32> to vector<4x64xf32>
    %50 = vector.shape_cast %49 : vector<4x64xf32> to vector<4x64x1xf32>
    %51 = vector.broadcast %50 : vector<4x64x1xf32> to vector<4x64x64xf32>
    %52 = arith.subf %48, %51 : vector<4x64x64xf32>
    %53 = math.exp %52 : vector<4x64x64xf32>
    %cst_24 = arith.constant dense<0.000000e+00> : vector<4x64xf32>
    %54 = vector.multi_reduction <add>, %53, %cst_24 [2] : vector<4x64x64xf32> to vector<4x64xf32>
    %55 = vector.shape_cast %54 : vector<4x64xf32> to vector<4x64x1xf32>
    "tpu.trace_start"() <{level = 10 : i32, message = "hdk,hqk->hdq"}> : () -> ()
    %cst_25 = arith.constant dense<0.000000e+00> : vector<4x8x64xf32>
    %56 = tpu.matmul %45, %53, %cst_25 {dimension_numbers = #tpu.dot_dimension_numbers<[2], [2], [1], [1], [0, 0, 0, 1, 1, 1], [0], [0]>} : vector<4x8x64xf32>, vector<4x64x64xf32>, vector<4x8x64xf32> -> vector<4x8x64xf32>
    "tpu.trace_stop"() : () -> ()
    %57 = tpu.reciprocal %55 {approx = true} : vector<4x64x1xf32> -> vector<4x64x1xf32>
    %58 = vector.shape_cast %57 : vector<4x64x1xf32> to vector<4x64xf32>
    %59 = vector.shape_cast %58 : vector<4x64xf32> to vector<4x1x64xf32>
    %60 = vector.broadcast %59 : vector<4x1x64xf32> to vector<4x8x64xf32>
    %61 = arith.mulf %56, %60 : vector<4x8x64xf32>
    %62 = vector.shape_cast %61 : vector<4x8x64xf32> to vector<32x64xf32>
    %cst_26 = arith.constant dense<0.000000e+00> : vector<32x64xf32>
    %63 = tpu.matmul %2, %62, %cst_26 {dimension_numbers = #tpu.dot_dimension_numbers<[1], [0], [0], [1], [0, 0, 1, 1], [], []>} : vector<32x32xf32>, vector<32x64xf32>, vector<32x64xf32> -> vector<32x64xf32>
    %64 = vector.broadcast %3 : vector<32x1xf32> to vector<32x64xf32>
    %65 = arith.addf %63, %64 : vector<32x64xf32>
    %66 = arith.addf %7, %65 : vector<32x64xf32>
    %c0_27 = arith.constant 0 : index
    %c0_28 = arith.constant 0 : index
    %c0_29 = arith.constant 0 : index
    %67 = vector.load %arg8[%c0_27, %c0_28, %c0_29] : memref<2x32x64xf32, #tpu.memory_space<vmem>>, vector<1x32x64xf32>
    %68 = vector.shape_cast %67 : vector<1x32x64xf32> to vector<32x64xf32>
    %69 = vector.shape_cast %66 : vector<32x64xf32> to vector<1x32x64xf32>
    tpu.vector_store %arg8[%c0_27, %c0_28, %c0_29], %69 {strides = array<i32>} : memref<2x32x64xf32, #tpu.memory_space<vmem>>, vector<1x32x64xf32>,
    %c1 = arith.constant 1 : index
    %c0_30 = arith.constant 0 : index
    %c0_31 = arith.constant 0 : index
    %70 = vector.load %arg1[%c1, %c0_30, %c0_31] : memref<2x32x64xf32, #tpu.memory_space<vmem>>, vector<1x32x64xf32>
    %71 = vector.shape_cast %70 : vector<1x32x64xf32> to vector<32x64xf32>
    %72 = vector.shape_cast %71 : vector<32x64xf32> to vector<8x4x64xf32>
    %cst_32 = arith.constant dense<0.000000e+00> : vector<8x4xf32>
    %73 = vector.multi_reduction <add>, %72, %cst_32 [2] : vector<8x4x64xf32> to vector<8x4xf32>
    %74 = vector.shape_cast %73 : vector<8x4xf32> to vector<8x4x1xf32>
    %cst_33 = arith.constant dense<0.000000e+00> : vector<8x1xf32>
    %75 = vector.multi_reduction <add>, %74, %cst_33 [1] : vector<8x4x1xf32> to vector<8x1xf32>
    %76 = vector.shape_cast %75 : vector<8x1xf32> to vector<8x1x1xf32>
    %77 = arith.mulf %72, %72 : vector<8x4x64xf32>
    %cst_34 = arith.constant dense<0.000000e+00> : vector<8x4xf32>
    %78 = vector.multi_reduction <add>, %77, %cst_34 [2] : vector<8x4x64xf32> to vector<8x4xf32>
    %79 = vector.shape_cast %78 : vector<8x4xf32> to vector<8x4x1xf32>
    %cst_35 = arith.constant dense<0.000000e+00> : vector<8x1xf32>
    %80 = vector.multi_reduction <add>, %79, %cst_35 [1] : vector<8x4x1xf32> to vector<8x1xf32>
    %81 = vector.shape_cast %80 : vector<8x1xf32> to vector<8x1x1xf32>
    %cst_36 = arith.constant 3.906250e-03 : f32
    %82 = vector.broadcast %cst_36 : f32 to vector<8x1x1xf32>
    %83 = arith.mulf %76, %82 : vector<8x1x1xf32>
    %cst_37 = arith.constant 3.906250e-03 : f32
    %84 = vector.broadcast %cst_37 : f32 to vector<8x1x1xf32>
    %85 = arith.mulf %81, %84 : vector<8x1x1xf32>
    %86 = arith.mulf %83, %83 : vector<8x1x1xf32>
    %87 = arith.subf %85, %86 : vector<8x1x1xf32>
    %cst_38 = arith.constant 0.000000e+00 : f32
    %88 = vector.broadcast %cst_38 : f32 to vector<8x1x1xf32>
    %89 = arith.maximumf %87, %88 : vector<8x1x1xf32>
    %90 = vector.broadcast %83 : vector<8x1x1xf32> to vector<8x4x64xf32>
    %91 = arith.subf %72, %90 : vector<8x4x64xf32>
    %cst_39 = arith.constant 9.99999974E-6 : f32
    %92 = vector.broadcast %cst_39 : f32 to vector<8x1x1xf32>
    %93 = arith.addf %89, %92 : vector<8x1x1xf32>
    %94 = math.rsqrt %93 : vector<8x1x1xf32>
    %95 = vector.broadcast %94 : vector<8x1x1xf32> to vector<8x4x64xf32>
    %96 = arith.mulf %91, %95 : vector<8x4x64xf32>
    %97 = vector.shape_cast %96 : vector<8x4x64xf32> to vector<32x64xf32>
    %98 = vector.broadcast %4 : vector<32x1xf32> to vector<32x64xf32>
    %99 = arith.mulf %97, %98 : vector<32x64xf32>
    %100 = vector.broadcast %5 : vector<32x1xf32> to vector<32x64xf32>
    %101 = arith.addf %99, %100 : vector<32x64xf32>
    %cst_40 = arith.constant dense<0.000000e+00> : vector<96x64xf32>
    %102 = tpu.matmul %0, %101, %cst_40 {dimension_numbers = #tpu.dot_dimension_numbers<[1], [0], [0], [1], [0, 0, 1, 1], [], []>} : vector<96x32xf32>, vector<32x64xf32>, vector<96x64xf32> -> vector<96x64xf32>
    %103 = vector.broadcast %1 : vector<96x1xf32> to vector<96x64xf32>
    %104 = arith.addf %102, %103 : vector<96x64xf32>
    %105 = vector.extract_strided_slice %104 {offsets = [0, 0], sizes = [32, 64], strides = [1, 1]} : vector<96x64xf32> to vector<32x64xf32>
    %106 = vector.extract_strided_slice %104 {offsets = [32, 0], sizes = [32, 64], strides = [1, 1]} : vector<96x64xf32> to vector<32x64xf32>
    %107 = vector.extract_strided_slice %104 {offsets = [64, 0], sizes = [32, 64], strides = [1, 1]} : vector<96x64xf32> to vector<32x64xf32>
    %108 = vector.shape_cast %106 : vector<32x64xf32> to vector<4x8x64xf32>
    %109 = vector.shape_cast %107 : vector<32x64xf32> to vector<4x8x64xf32>
    %110 = vector.shape_cast %105 : vector<32x64xf32> to vector<4x8x64xf32>
    %111 = tpu.transpose %110, [0, 2, 1] : vector<4x8x64xf32> -> vector<4x64x8xf32>
    "tpu.trace_start"() <{level = 10 : i32, message = "hqd,hdk->hqk"}> : () -> ()
    %cst_41 = arith.constant dense<0.000000e+00> : vector<4x64x64xf32>
    %112 = tpu.matmul %111, %108, %cst_41 {dimension_numbers = #tpu.dot_dimension_numbers<[2], [1], [1], [2], [0, 0, 0, 1, 1, 2], [0], [0]>} : vector<4x64x8xf32>, vector<4x8x64xf32>, vector<4x64x64xf32> -> vector<4x64x64xf32>
    "tpu.trace_stop"() : () -> ()
    %cst_42 = arith.constant dense<0xFF800000> : vector<4x64xf32>
    %113 = vector.multi_reduction <maximumf>, %112, %cst_42 [2] : vector<4x64x64xf32> to vector<4x64xf32>
    %114 = vector.shape_cast %113 : vector<4x64xf32> to vector<4x64x1xf32>
    %115 = vector.broadcast %114 : vector<4x64x1xf32> to vector<4x64x64xf32>
    %116 = arith.subf %112, %115 : vector<4x64x64xf32>
    %117 = math.exp %116 : vector<4x64x64xf32>
    %cst_43 = arith.constant dense<0.000000e+00> : vector<4x64xf32>
    %118 = vector.multi_reduction <add>, %117, %cst_43 [2] : vector<4x64x64xf32> to vector<4x64xf32>
    %119 = vector.shape_cast %118 : vector<4x64xf32> to vector<4x64x1xf32>
    "tpu.trace_start"() <{level = 10 : i32, message = "hdk,hqk->hdq"}> : () -> ()
    %cst_44 = arith.constant dense<0.000000e+00> : vector<4x8x64xf32>
    %120 = tpu.matmul %109, %117, %cst_44 {dimension_numbers = #tpu.dot_dimension_numbers<[2], [2], [1], [1], [0, 0, 0, 1, 1, 1], [0], [0]>} : vector<4x8x64xf32>, vector<4x64x64xf32>, vector<4x8x64xf32> -> vector<4x8x64xf32>
    "tpu.trace_stop"() : () -> ()
    %121 = tpu.reciprocal %119 {approx = true} : vector<4x64x1xf32> -> vector<4x64x1xf32>
    %122 = vector.shape_cast %121 : vector<4x64x1xf32> to vector<4x64xf32>
    %123 = vector.shape_cast %122 : vector<4x64xf32> to vector<4x1x64xf32>
    %124 = vector.broadcast %123 : vector<4x1x64xf32> to vector<4x8x64xf32>
    %125 = arith.mulf %120, %124 : vector<4x8x64xf32>
    %126 = vector.shape_cast %125 : vector<4x8x64xf32> to vector<32x64xf32>
    %cst_45 = arith.constant dense<0.000000e+00> : vector<32x64xf32>
    %127 = tpu.matmul %2, %126, %cst_45 {dimension_numbers = #tpu.dot_dimension_numbers<[1], [0], [0], [1], [0, 0, 1, 1], [], []>} : vector<32x32xf32>, vector<32x64xf32>, vector<32x64xf32> -> vector<32x64xf32>
    %128 = vector.broadcast %3 : vector<32x1xf32> to vector<32x64xf32>
    %129 = arith.addf %127, %128 : vector<32x64xf32>
    %130 = arith.addf %71, %129 : vector<32x64xf32>
    %c1_46 = arith.constant 1 : index
    %c0_47 = arith.constant 0 : index
    %c0_48 = arith.constant 0 : index
    %131 = vector.load %arg8[%c1_46, %c0_47, %c0_48] : memref<2x32x64xf32, #tpu.memory_space<vmem>>, vector<1x32x64xf32>
    %132 = vector.shape_cast %131 : vector<1x32x64xf32> to vector<32x64xf32>
    %133 = vector.shape_cast %130 : vector<32x64xf32> to vector<1x32x64xf32>
    tpu.vector_store %arg8[%c1_46, %c0_47, %c0_48], %133 {strides = array<i32>} : memref<2x32x64xf32, #tpu.memory_space<vmem>>, vector<1x32x64xf32>,
    return
  }
  func.func @transform_0(%arg0: i32) -> (i32, i32, i32) {
    %c0_i32 = arith.constant 0 : i32
    %c0_i32_0 = arith.constant 0 : i32
    %c0_i32_1 = arith.constant 0 : i32
    return %arg0, %c0_i32, %c0_i32_0 : i32, i32, i32
  }
  func.func @transform_1(%arg0: i32) -> (i32, i32) {
    %c0_i32 = arith.constant 0 : i32
    %c0_i32_0 = arith.constant 0 : i32
    %c0_i32_1 = arith.constant 0 : i32
    return %c0_i32, %c0_i32_0 : i32, i32
  }
  func.func @transform_2(%arg0: i32) -> (i32, i32) {
    %c0_i32 = arith.constant 0 : i32
    %c0_i32_0 = arith.constant 0 : i32
    %c0_i32_1 = arith.constant 0 : i32
    return %c0_i32, %c0_i32_0 : i32, i32
  }
  func.func @transform_3(%arg0: i32) -> (i32, i32) {
    %c0_i32 = arith.constant 0 : i32
    %c0_i32_0 = arith.constant 0 : i32
    %c0_i32_1 = arith.constant 0 : i32
    return %c0_i32, %c0_i32_0 : i32, i32
  }
  func.func @transform_4(%arg0: i32) -> (i32, i32) {
    %c0_i32 = arith.constant 0 : i32
    %c0_i32_0 = arith.constant 0 : i32
    %c0_i32_1 = arith.constant 0 : i32
    return %c0_i32, %c0_i32_0 : i32, i32
  }
  func.func @transform_5(%arg0: i32) -> (i32, i32) {
    %c0_i32 = arith.constant 0 : i32
    %c0_i32_0 = arith.constant 0 : i32
    %c0_i32_1 = arith.constant 0 : i32
    return %c0_i32, %c0_i32_0 : i32, i32
  }
  func.func @transform_6(%arg0: i32) -> (i32, i32) {
    %c0_i32 = arith.constant 0 : i32
    %c0_i32_0 = arith.constant 0 : i32
    %c0_i32_1 = arith.constant 0 : i32
    return %c0_i32, %c0_i32_0 : i32, i32
  }
  func.func @transform_7(%arg0: i32) -> (i32, i32, i32) {
    %c0_i32 = arith.constant 0 : i32
    %c0_i32_0 = arith.constant 0 : i32
    %c0_i32_1 = arith.constant 0 : i32
    return %arg0, %c0_i32, %c0_i32_0 : i32, i32, i32
  }
}

module attributes {stable_mosaic.version = 11 : i64} {
  func.func @_attention_block_kernel(%arg0: i32, %arg1: memref<2x32x64xf32, #tpu.memory_space<vmem>>, %arg2: memref<32x1xf32, #tpu.memory_space<vmem>>, %arg3: memref<32x1xf32, #tpu.memory_space<vmem>>, %arg4: memref<96x32xf32, #tpu.memory_space<vmem>>, %arg5: memref<96x1xf32, #tpu.memory_space<vmem>>, %arg6: memref<32x32xf32, #tpu.memory_space<vmem>>, %arg7: memref<32x1xf32, #tpu.memory_space<vmem>>, %arg8: memref<2x32x64xf32, #tpu.memory_space<vmem>>) attributes {dimension_semantics = [#tpu.dimension_semantics<parallel>], iteration_bounds = array<i64: 1>, scalar_prefetch = 0 : i64, scratch_operands = 0 : i64, tpu.core_type = #tpu.core_type<tc>, window_params = [{transform_indices = @transform_0, window_bounds = array<i64: 2, 32, 64>}, {pipeline_mode = #tpu.pipeline_mode<synchronous>, transform_indices = @transform_1, window_bounds = array<i64: 32, 1>}, {pipeline_mode = #tpu.pipeline_mode<synchronous>, transform_indices = @transform_2, window_bounds = array<i64: 32, 1>}, {pipeline_mode = #tpu.pipeline_mode<synchronous>, transform_indices = @transform_3, window_bounds = array<i64: 96, 32>}, {pipeline_mode = #tpu.pipeline_mode<synchronous>, transform_indices = @transform_4, window_bounds = array<i64: 96, 1>}, {pipeline_mode = #tpu.pipeline_mode<synchronous>, transform_indices = @transform_5, window_bounds = array<i64: 32, 32>}, {pipeline_mode = #tpu.pipeline_mode<synchronous>, transform_indices = @transform_6, window_bounds = array<i64: 32, 1>}, {transform_indices = @transform_7, window_bounds = array<i64: 2, 32, 64>}]} {
    %c0 = arith.constant 0 : index
    %c0_0 = arith.constant 0 : index
    %0 = vector.load %arg4[%c0, %c0_0] : memref<96x32xf32, #tpu.memory_space<vmem>>, vector<96x32xf32>
    %c0_1 = arith.constant 0 : index
    %c0_2 = arith.constant 0 : index
    %1 = vector.load %arg5[%c0_1, %c0_2] : memref<96x1xf32, #tpu.memory_space<vmem>>, vector<96x1xf32>
    %c0_3 = arith.constant 0 : index
    %c0_4 = arith.constant 0 : index
    %2 = vector.load %arg6[%c0_3, %c0_4] : memref<32x32xf32, #tpu.memory_space<vmem>>, vector<32x32xf32>
    %c0_5 = arith.constant 0 : index
    %c0_6 = arith.constant 0 : index
    %3 = vector.load %arg7[%c0_5, %c0_6] : memref<32x1xf32, #tpu.memory_space<vmem>>, vector<32x1xf32>
    %c0_7 = arith.constant 0 : index
    %c0_8 = arith.constant 0 : index
    %4 = vector.load %arg2[%c0_7, %c0_8] : memref<32x1xf32, #tpu.memory_space<vmem>>, vector<32x1xf32>
    %c0_9 = arith.constant 0 : index
    %c0_10 = arith.constant 0 : index
    %5 = vector.load %arg3[%c0_9, %c0_10] : memref<32x1xf32, #tpu.memory_space<vmem>>, vector<32x1xf32>
    %c0_11 = arith.constant 0 : index
    %c0_12 = arith.constant 0 : index
    %c0_13 = arith.constant 0 : index
    %6 = vector.load %arg1[%c0_11, %c0_12, %c0_13] : memref<2x32x64xf32, #tpu.memory_space<vmem>>, vector<1x32x64xf32>
    %7 = vector.shape_cast %6 : vector<1x32x64xf32> to vector<32x64xf32>
    %8 = vector.shape_cast %7 : vector<32x64xf32> to vector<8x4x64xf32>
    %cst = arith.constant dense<0.000000e+00> : vector<8x4xf32>
    %9 = vector.multi_reduction <add>, %8, %cst [2] : vector<8x4x64xf32> to vector<8x4xf32>
    %10 = vector.shape_cast %9 : vector<8x4xf32> to vector<8x4x1xf32>
    %cst_14 = arith.constant dense<0.000000e+00> : vector<8x1xf32>
    %11 = vector.multi_reduction <add>, %10, %cst_14 [1] : vector<8x4x1xf32> to vector<8x1xf32>
    %12 = vector.shape_cast %11 : vector<8x1xf32> to vector<8x1x1xf32>
    %13 = arith.mulf %8, %8 : vector<8x4x64xf32>
    %cst_15 = arith.constant dense<0.000000e+00> : vector<8x4xf32>
    %14 = vector.multi_reduction <add>, %13, %cst_15 [2] : vector<8x4x64xf32> to vector<8x4xf32>
    %15 = vector.shape_cast %14 : vector<8x4xf32> to vector<8x4x1xf32>
    %cst_16 = arith.constant dense<0.000000e+00> : vector<8x1xf32>
    %16 = vector.multi_reduction <add>, %15, %cst_16 [1] : vector<8x4x1xf32> to vector<8x1xf32>
    %17 = vector.shape_cast %16 : vector<8x1xf32> to vector<8x1x1xf32>
    %cst_17 = arith.constant 3.906250e-03 : f32
    %18 = vector.broadcast %cst_17 : f32 to vector<8x1x1xf32>
    %19 = arith.mulf %12, %18 : vector<8x1x1xf32>
    %cst_18 = arith.constant 3.906250e-03 : f32
    %20 = vector.broadcast %cst_18 : f32 to vector<8x1x1xf32>
    %21 = arith.mulf %17, %20 : vector<8x1x1xf32>
    %22 = arith.mulf %19, %19 : vector<8x1x1xf32>
    %23 = arith.subf %21, %22 : vector<8x1x1xf32>
    %cst_19 = arith.constant 0.000000e+00 : f32
    %24 = vector.broadcast %cst_19 : f32 to vector<8x1x1xf32>
    %25 = arith.maximumf %23, %24 : vector<8x1x1xf32>
    %26 = vector.broadcast %19 : vector<8x1x1xf32> to vector<8x4x64xf32>
    %27 = arith.subf %8, %26 : vector<8x4x64xf32>
    %cst_20 = arith.constant 9.99999974E-6 : f32
    %28 = vector.broadcast %cst_20 : f32 to vector<8x1x1xf32>
    %29 = arith.addf %25, %28 : vector<8x1x1xf32>
    %30 = math.rsqrt %29 : vector<8x1x1xf32>
    %31 = vector.broadcast %30 : vector<8x1x1xf32> to vector<8x4x64xf32>
    %32 = arith.mulf %27, %31 : vector<8x4x64xf32>
    %33 = vector.shape_cast %32 : vector<8x4x64xf32> to vector<32x64xf32>
    %34 = vector.broadcast %4 : vector<32x1xf32> to vector<32x64xf32>
    %35 = arith.mulf %33, %34 : vector<32x64xf32>
    %36 = vector.broadcast %5 : vector<32x1xf32> to vector<32x64xf32>
    %37 = arith.addf %35, %36 : vector<32x64xf32>
    %cst_21 = arith.constant dense<0.000000e+00> : vector<96x64xf32>
    %38 = tpu.matmul %0, %37, %cst_21 {dimension_numbers = #tpu.dot_dimension_numbers<[1], [0], [0], [1], [0, 0, 1, 1], [], []>} : vector<96x32xf32>, vector<32x64xf32>, vector<96x64xf32> -> vector<96x64xf32>
    %39 = vector.broadcast %1 : vector<96x1xf32> to vector<96x64xf32>
    %40 = arith.addf %38, %39 : vector<96x64xf32>
    %41 = vector.extract_strided_slice %40 {offsets = [0, 0], sizes = [32, 64], strides = [1, 1]} : vector<96x64xf32> to vector<32x64xf32>
    %42 = vector.extract_strided_slice %40 {offsets = [32, 0], sizes = [32, 64], strides = [1, 1]} : vector<96x64xf32> to vector<32x64xf32>
    %43 = vector.extract_strided_slice %40 {offsets = [64, 0], sizes = [32, 64], strides = [1, 1]} : vector<96x64xf32> to vector<32x64xf32>
    %44 = vector.shape_cast %42 : vector<32x64xf32> to vector<4x8x64xf32>
    %45 = vector.shape_cast %43 : vector<32x64xf32> to vector<4x8x64xf32>
    %46 = vector.shape_cast %41 : vector<32x64xf32> to vector<4x8x64xf32>
    %47 = tpu.transpose %46, [0, 2, 1] : vector<4x8x64xf32> -> vector<4x64x8xf32>
    "tpu.trace_start"() <{level = 10 : i32, message = "hqd,hdk->hqk"}> : () -> ()
    %cst_22 = arith.constant dense<0.000000e+00> : vector<4x64x64xf32>
    %48 = tpu.matmul %47, %44, %cst_22 {dimension_numbers = #tpu.dot_dimension_numbers<[2], [1], [1], [2], [0, 0, 0, 1, 1, 2], [0], [0]>} : vector<4x64x8xf32>, vector<4x8x64xf32>, vector<4x64x64xf32> -> vector<4x64x64xf32>
    "tpu.trace_stop"() : () -> ()
    %cst_23 = arith.constant dense<0xFF800000> : vector<4x64xf32>
    %49 = vector.multi_reduction <maximumf>, %48, %cst_23 [2] : vector<4x64x64xf32> to vector<4x64xf32>
    %50 = vector.shape_cast %49 : vector<4x64xf32> to vector<4x64x1xf32>
    %51 = vector.broadcast %50 : vector<4x64x1xf32> to vector<4x64x64xf32>
    %52 = arith.subf %48, %51 : vector<4x64x64xf32>
    %53 = math.exp %52 : vector<4x64x64xf32>
    %cst_24 = arith.constant dense<0.000000e+00> : vector<4x64xf32>
    %54 = vector.multi_reduction <add>, %53, %cst_24 [2] : vector<4x64x64xf32> to vector<4x64xf32>
    %55 = vector.shape_cast %54 : vector<4x64xf32> to vector<4x64x1xf32>
    "tpu.trace_start"() <{level = 10 : i32, message = "hdk,hqk->hdq"}> : () -> ()
    %cst_25 = arith.constant dense<0.000000e+00> : vector<4x8x64xf32>
    %56 = tpu.matmul %45, %53, %cst_25 {dimension_numbers = #tpu.dot_dimension_numbers<[2], [2], [1], [1], [0, 0, 0, 1, 1, 1], [0], [0]>} : vector<4x8x64xf32>, vector<4x64x64xf32>, vector<4x8x64xf32> -> vector<4x8x64xf32>
    "tpu.trace_stop"() : () -> ()
    %57 = tpu.reciprocal %55 {approx = true} : vector<4x64x1xf32> -> vector<4x64x1xf32>
    %58 = vector.shape_cast %57 : vector<4x64x1xf32> to vector<4x64xf32>
    %59 = vector.shape_cast %58 : vector<4x64xf32> to vector<4x1x64xf32>
    %60 = vector.broadcast %59 : vector<4x1x64xf32> to vector<4x8x64xf32>
    %61 = arith.mulf %56, %60 : vector<4x8x64xf32>
    %62 = vector.shape_cast %61 : vector<4x8x64xf32> to vector<32x64xf32>
    %cst_26 = arith.constant dense<0.000000e+00> : vector<32x64xf32>
    %63 = tpu.matmul %2, %62, %cst_26 {dimension_numbers = #tpu.dot_dimension_numbers<[1], [0], [0], [1], [0, 0, 1, 1], [], []>} : vector<32x32xf32>, vector<32x64xf32>, vector<32x64xf32> -> vector<32x64xf32>
    %64 = vector.broadcast %3 : vector<32x1xf32> to vector<32x64xf32>
    %65 = arith.addf %63, %64 : vector<32x64xf32>
    %66 = arith.addf %7, %65 : vector<32x64xf32>
    %c0_27 = arith.constant 0 : index
    %c0_28 = arith.constant 0 : index
    %c0_29 = arith.constant 0 : index
    %67 = vector.load %arg8[%c0_27, %c0_28, %c0_29] : memref<2x32x64xf32, #tpu.memory_space<vmem>>, vector<1x32x64xf32>
    %68 = vector.shape_cast %67 : vector<1x32x64xf32> to vector<32x64xf32>
    %69 = vector.shape_cast %66 : vector<32x64xf32> to vector<1x32x64xf32>
    tpu.vector_store %arg8[%c0_27, %c0_28, %c0_29], %69 {strides = array<i32>} : memref<2x32x64xf32, #tpu.memory_space<vmem>>, vector<1x32x64xf32>,
    %c1 = arith.constant 1 : index
    %c0_30 = arith.constant 0 : index
    %c0_31 = arith.constant 0 : index
    %70 = vector.load %arg1[%c1, %c0_30, %c0_31] : memref<2x32x64xf32, #tpu.memory_space<vmem>>, vector<1x32x64xf32>
    %71 = vector.shape_cast %70 : vector<1x32x64xf32> to vector<32x64xf32>
    %72 = vector.shape_cast %71 : vector<32x64xf32> to vector<8x4x64xf32>
    %cst_32 = arith.constant dense<0.000000e+00> : vector<8x4xf32>
    %73 = vector.multi_reduction <add>, %72, %cst_32 [2] : vector<8x4x64xf32> to vector<8x4xf32>
    %74 = vector.shape_cast %73 : vector<8x4xf32> to vector<8x4x1xf32>
    %cst_33 = arith.constant dense<0.000000e+00> : vector<8x1xf32>
    %75 = vector.multi_reduction <add>, %74, %cst_33 [1] : vector<8x4x1xf32> to vector<8x1xf32>
    %76 = vector.shape_cast %75 : vector<8x1xf32> to vector<8x1x1xf32>
    %77 = arith.mulf %72, %72 : vector<8x4x64xf32>
    %cst_34 = arith.constant dense<0.000000e+00> : vector<8x4xf32>
    %78 = vector.multi_reduction <add>, %77, %cst_34 [2] : vector<8x4x64xf32> to vector<8x4xf32>
    %79 = vector.shape_cast %78 : vector<8x4xf32> to vector<8x4x1xf32>
    %cst_35 = arith.constant dense<0.000000e+00> : vector<8x1xf32>
    %80 = vector.multi_reduction <add>, %79, %cst_35 [1] : vector<8x4x1xf32> to vector<8x1xf32>
    %81 = vector.shape_cast %80 : vector<8x1xf32> to vector<8x1x1xf32>
    %cst_36 = arith.constant 3.906250e-03 : f32
    %82 = vector.broadcast %cst_36 : f32 to vector<8x1x1xf32>
    %83 = arith.mulf %76, %82 : vector<8x1x1xf32>
    %cst_37 = arith.constant 3.906250e-03 : f32
    %84 = vector.broadcast %cst_37 : f32 to vector<8x1x1xf32>
    %85 = arith.mulf %81, %84 : vector<8x1x1xf32>
    %86 = arith.mulf %83, %83 : vector<8x1x1xf32>
    %87 = arith.subf %85, %86 : vector<8x1x1xf32>
    %cst_38 = arith.constant 0.000000e+00 : f32
    %88 = vector.broadcast %cst_38 : f32 to vector<8x1x1xf32>
    %89 = arith.maximumf %87, %88 : vector<8x1x1xf32>
    %90 = vector.broadcast %83 : vector<8x1x1xf32> to vector<8x4x64xf32>
    %91 = arith.subf %72, %90 : vector<8x4x64xf32>
    %cst_39 = arith.constant 9.99999974E-6 : f32
    %92 = vector.broadcast %cst_39 : f32 to vector<8x1x1xf32>
    %93 = arith.addf %89, %92 : vector<8x1x1xf32>
    %94 = math.rsqrt %93 : vector<8x1x1xf32>
    %95 = vector.broadcast %94 : vector<8x1x1xf32> to vector<8x4x64xf32>
    %96 = arith.mulf %91, %95 : vector<8x4x64xf32>
    %97 = vector.shape_cast %96 : vector<8x4x64xf32> to vector<32x64xf32>
    %98 = vector.broadcast %4 : vector<32x1xf32> to vector<32x64xf32>
    %99 = arith.mulf %97, %98 : vector<32x64xf32>
    %100 = vector.broadcast %5 : vector<32x1xf32> to vector<32x64xf32>
    %101 = arith.addf %99, %100 : vector<32x64xf32>
    %cst_40 = arith.constant dense<0.000000e+00> : vector<96x64xf32>
    %102 = tpu.matmul %0, %101, %cst_40 {dimension_numbers = #tpu.dot_dimension_numbers<[1], [0], [0], [1], [0, 0, 1, 1], [], []>} : vector<96x32xf32>, vector<32x64xf32>, vector<96x64xf32> -> vector<96x64xf32>
    %103 = vector.broadcast %1 : vector<96x1xf32> to vector<96x64xf32>
    %104 = arith.addf %102, %103 : vector<96x64xf32>
    %105 = vector.extract_strided_slice %104 {offsets = [0, 0], sizes = [32, 64], strides = [1, 1]} : vector<96x64xf32> to vector<32x64xf32>
    %106 = vector.extract_strided_slice %104 {offsets = [32, 0], sizes = [32, 64], strides = [1, 1]} : vector<96x64xf32> to vector<32x64xf32>
    %107 = vector.extract_strided_slice %104 {offsets = [64, 0], sizes = [32, 64], strides = [1, 1]} : vector<96x64xf32> to vector<32x64xf32>
    %108 = vector.shape_cast %106 : vector<32x64xf32> to vector<4x8x64xf32>
    %109 = vector.shape_cast %107 : vector<32x64xf32> to vector<4x8x64xf32>
    %110 = vector.shape_cast %105 : vector<32x64xf32> to vector<4x8x64xf32>
    %111 = tpu.transpose %110, [0, 2, 1] : vector<4x8x64xf32> -> vector<4x64x8xf32>
    "tpu.trace_start"() <{level = 10 : i32, message = "hqd,hdk->hqk"}> : () -> ()
    %cst_41 = arith.constant dense<0.000000e+00> : vector<4x64x64xf32>
    %112 = tpu.matmul %111, %108, %cst_41 {dimension_numbers = #tpu.dot_dimension_numbers<[2], [1], [1], [2], [0, 0, 0, 1, 1, 2], [0], [0]>} : vector<4x64x8xf32>, vector<4x8x64xf32>, vector<4x64x64xf32> -> vector<4x64x64xf32>
    "tpu.trace_stop"() : () -> ()
    %cst_42 = arith.constant dense<0xFF800000> : vector<4x64xf32>
    %113 = vector.multi_reduction <maximumf>, %112, %cst_42 [2] : vector<4x64x64xf32> to vector<4x64xf32>
    %114 = vector.shape_cast %113 : vector<4x64xf32> to vector<4x64x1xf32>
    %115 = vector.broadcast %114 : vector<4x64x1xf32> to vector<4x64x64xf32>
    %116 = arith.subf %112, %115 : vector<4x64x64xf32>
    %117 = math.exp %116 : vector<4x64x64xf32>
    %cst_43 = arith.constant dense<0.000000e+00> : vector<4x64xf32>
    %118 = vector.multi_reduction <add>, %117, %cst_43 [2] : vector<4x64x64xf32> to vector<4x64xf32>
    %119 = vector.shape_cast %118 : vector<4x64xf32> to vector<4x64x1xf32>
    "tpu.trace_start"() <{level = 10 : i32, message = "hdk,hqk->hdq"}> : () -> ()
    %cst_44 = arith.constant dense<0.000000e+00> : vector<4x8x64xf32>
    %120 = tpu.matmul %109, %117, %cst_44 {dimension_numbers = #tpu.dot_dimension_numbers<[2], [2], [1], [1], [0, 0, 0, 1, 1, 1], [0], [0]>} : vector<4x8x64xf32>, vector<4x64x64xf32>, vector<4x8x64xf32> -> vector<4x8x64xf32>
    "tpu.trace_stop"() : () -> ()
    %121 = tpu.reciprocal %119 {approx = true} : vector<4x64x1xf32> -> vector<4x64x1xf32>
    %122 = vector.shape_cast %121 : vector<4x64x1xf32> to vector<4x64xf32>
    %123 = vector.shape_cast %122 : vector<4x64xf32> to vector<4x1x64xf32>
    %124 = vector.broadcast %123 : vector<4x1x64xf32> to vector<4x8x64xf32>
    %125 = arith.mulf %120, %124 : vector<4x8x64xf32>
    %126 = vector.shape_cast %125 : vector<4x8x64xf32> to vector<32x64xf32>
    %cst_45 = arith.constant dense<0.000000e+00> : vector<32x64xf32>
    %127 = tpu.matmul %2, %126, %cst_45 {dimension_numbers = #tpu.dot_dimension_numbers<[1], [0], [0], [1], [0, 0, 1, 1], [], []>} : vector<32x32xf32>, vector<32x64xf32>, vector<32x64xf32> -> vector<32x64xf32>
    %128 = vector.broadcast %3 : vector<32x1xf32> to vector<32x64xf32>
    %129 = arith.addf %127, %128 : vector<32x64xf32>
    %130 = arith.addf %71, %129 : vector<32x64xf32>
    %c1_46 = arith.constant 1 : index
    %c0_47 = arith.constant 0 : index
    %c0_48 = arith.constant 0 : index
    %131 = vector.load %arg8[%c1_46, %c0_47, %c0_48] : memref<2x32x64xf32, #tpu.memory_space<vmem>>, vector<1x32x64xf32>
    %132 = vector.shape_cast %131 : vector<1x32x64xf32> to vector<32x64xf32>
    %133 = vector.shape_cast %130 : vector<32x64xf32> to vector<1x32x64xf32>
    tpu.vector_store %arg8[%c1_46, %c0_47, %c0_48], %133 {strides = array<i32>} : memref<2x32x64xf32, #tpu.memory_space<vmem>>, vector<1x32x64xf32>,
    return
  }
  func.func @transform_0(%arg0: i32) -> (i32, i32, i32) {
    %c0_i32 = arith.constant 0 : i32
    %c0_i32_0 = arith.constant 0 : i32
    %c0_i32_1 = arith.constant 0 : i32
    return %arg0, %c0_i32, %c0_i32_0 : i32, i32, i32
  }
  func.func @transform_1(%arg0: i32) -> (i32, i32) {
    %c0_i32 = arith.constant 0 : i32
    %c0_i32_0 = arith.constant 0 : i32
    %c0_i32_1 = arith.constant 0 : i32
    return %c0_i32, %c0_i32_0 : i32, i32
  }
  func.func @transform_2(%arg0: i32) -> (i32, i32) {
    %c0_i32 = arith.constant 0 : i32
    %c0_i32_0 = arith.constant 0 : i32
    %c0_i32_1 = arith.constant 0 : i32
    return %c0_i32, %c0_i32_0 : i32, i32
  }
  func.func @transform_3(%arg0: i32) -> (i32, i32) {
    %c0_i32 = arith.constant 0 : i32
    %c0_i32_0 = arith.constant 0 : i32
    %c0_i32_1 = arith.constant 0 : i32
    return %c0_i32, %c0_i32_0 : i32, i32
  }
  func.func @transform_4(%arg0: i32) -> (i32, i32) {
    %c0_i32 = arith.constant 0 : i32
    %c0_i32_0 = arith.constant 0 : i32
    %c0_i32_1 = arith.constant 0 : i32
    return %c0_i32, %c0_i32_0 : i32, i32
  }
  func.func @transform_5(%arg0: i32) -> (i32, i32) {
    %c0_i32 = arith.constant 0 : i32
    %c0_i32_0 = arith.constant 0 : i32
    %c0_i32_1 = arith.constant 0 : i32
    return %c0_i32, %c0_i32_0 : i32, i32
  }
  func.func @transform_6(%arg0: i32) -> (i32, i32) {
    %c0_i32 = arith.constant 0 : i32
    %c0_i32_0 = arith.constant 0 : i32
    %c0_i32_1 = arith.constant 0 : i32
    return %c0_i32, %c0_i32_0 : i32, i32
  }
  func.func @transform_7(%arg0: i32) -> (i32, i32, i32) {
    %c0_i32 = arith.constant 0 : i32
    %c0_i32_0 = arith.constant 0 : i32
    %c0_i32_1 = arith.constant 0 : i32
    return %arg0, %c0_i32, %c0_i32_0 : i32, i32, i32
  }
}

</mosaic_0001>

<llo_original>
// kernel: tpu_custom_call.1
$region0: #{tpu_custom_call.1}
  #allocation0 [shape = 'u32[]', space=smem, size = 0x4, offset = 0x4, fixed_abs, tag = 'smem constant byte address 0x4 - core index']
  #allocation1 [shape = 'u32[144,128]{1,0:T(1,128)}', space=vmem, size = 0x12000, scoped, tag = 'internal scratch']
  %s0 = inlined_call_operand.vmem [shape: f32[2,32,64], index: 0, kind: input, shape index: {}]
  %s1 = inlined_call_operand.vmem [shape: f32[32,1], index: 1, kind: input, shape index: {}]
  %s2 = inlined_call_operand.vmem [shape: f32[32,1], index: 2, kind: input, shape index: {}]
  %s3 = inlined_call_operand.vmem [shape: f32[96,32], index: 3, kind: input, shape index: {}]
  %s4 = inlined_call_operand.vmem [shape: f32[96,1], index: 4, kind: input, shape index: {}]
  %s5 = inlined_call_operand.vmem [shape: f32[32,32], index: 5, kind: input, shape index: {}]
  %s6 = inlined_call_operand.vmem [shape: f32[32,1], index: 6, kind: input, shape index: {}]
  %s7 = inlined_call_operand.hbm [shape: f32[2,32,64], index: 7, kind: output, shape index: {}]
  %s8 = sld [smem:[#allocation0]]
  $region38: #{tpu_custom_call.1} parent=0
    _
  %s10 = ssub.s32 1, %s8
  %s11 = scalar_select 0, %s10, %s8
  $region1: #{tpu_custom_call.1} parent=0
    #allocation2 [shape = 'u8[32768]{0}', space=vmem, size = 0x8000, scoped, tag = 'output window, operand 0, single buffered']
    #allocation3 [shape = 's32[1]{0}', space=sflag, size = 0x4, scoped, tag = 'scoped memory for tpu_custom_call.1']
    %12 = vsyncpa [#allocation3], 0
    // Predicated region
    $region2: #{tpu_custom_call.1} parent=1 // pred_check
      _
    $region3: #{tpu_custom_call.1} parent=1 // pred_check_branch
      %14 = sbr.rel (0) target = $region5
    $region4: #{tpu_custom_call.1} parent=1 // pred_region
      _
    $region5: #{tpu_custom_call.1} parent=1 // pred_fallthru
      _
    // Predicated region
    $region6: #{tpu_custom_call.1} parent=1 // pred_check
      _
    $region7: #{tpu_custom_call.1} parent=1 // pred_check_branch
      %16 = sbr.rel (0) target = $region9
    $region8: #{tpu_custom_call.1} parent=1 // pred_region
      _
    $region9: #{tpu_custom_call.1} parent=1 // pred_fallthru
      _
    // Predicated region
    $region10: #{tpu_custom_call.1} parent=1 // pred_check
      _
    $region11: #{tpu_custom_call.1} parent=1 // pred_check_branch
      %18 = sbr.rel (0) target = $region13
    $region12: #{tpu_custom_call.1} parent=1 // pred_region
      _
    $region13: #{tpu_custom_call.1} parent=1 // pred_fallthru
      _
    // Predicated region
    $region14: #{tpu_custom_call.1} parent=1 // pred_check
      _
    $region15: #{tpu_custom_call.1} parent=1 // pred_check_branch
      %20 = sbr.rel (0) target = $region17
    $region16: #{tpu_custom_call.1} parent=1 // pred_region
      _
    $region17: #{tpu_custom_call.1} parent=1 // pred_fallthru
      _
    // Predicated region
    $region18: #{tpu_custom_call.1} parent=1 // pred_check
      _
    $region19: #{tpu_custom_call.1} parent=1 // pred_check_branch
      %22 = sbr.rel (0) target = $region21
    $region20: #{tpu_custom_call.1} parent=1 // pred_region
      _
    $region21: #{tpu_custom_call.1} parent=1 // pred_fallthru
      _
    // Predicated region
    $region22: #{tpu_custom_call.1} parent=1 // pred_check
      _
    $region23: #{tpu_custom_call.1} parent=1 // pred_check_branch
      %24 = sbr.rel (0) target = $region25
    $region24: #{tpu_custom_call.1} parent=1 // pred_region
      _
    $region25: #{tpu_custom_call.1} parent=1 // pred_fallthru
      _
    // Predicated region
    $region26: #{tpu_custom_call.1} parent=1 // pred_check
      _
    $region27: #{tpu_custom_call.1} parent=1 // pred_check_branch
      %26 = sbr.rel (0) target = $region29
    $region28: #{tpu_custom_call.1} parent=1 // pred_region
      _
    $region29: #{tpu_custom_call.1} parent=1 // pred_fallthru
      _
    %v27 = vld [vmem:[%s3] sm:$0xff]
    %v28 = vld [vmem:[%s3 + $0x8] sm:$0xff]
    %v29 = vld [vmem:[%s3 + $0x10] sm:$0xff]
    %v30 = vld [vmem:[%s3 + $0x18] sm:$0xff]
    %v31 = vld [vmem:[%s3 + $0x20] sm:$0xff]
    %v32 = vld [vmem:[%s3 + $0x28] sm:$0xff]
    %v33 = vld [vmem:[%s3 + $0x30] sm:$0xff]
    %v34 = vld [vmem:[%s3 + $0x38] sm:$0xff]
    %v35 = vld [vmem:[%s3 + $0x40] sm:$0xff]
    %v36 = vld [vmem:[%s3 + $0x48] sm:$0xff]
    %v37 = vld [vmem:[%s3 + $0x50] sm:$0xff]
    %v38 = vld [vmem:[%s3 + $0x58] sm:$0xff]
    %v39 = vld [vmem:[%s4] sm:$0xff]
    %v40 = vld [vmem:[%s4 + $0x8] sm:$0xff]
    %v41 = vld [vmem:[%s4 + $0x10] sm:$0xff]
    %v42 = vld [vmem:[%s4 + $0x18] sm:$0xff]
    %v43 = vld [vmem:[%s4 + $0x20] sm:$0xff]
    %v44 = vld [vmem:[%s4 + $0x28] sm:$0xff]
    %v45 = vld [vmem:[%s4 + $0x30] sm:$0xff]
    %v46 = vld [vmem:[%s4 + $0x38] sm:$0xff]
    %v47 = vld [vmem:[%s4 + $0x40] sm:$0xff]
    %v48 = vld [vmem:[%s4 + $0x48] sm:$0xff]
    %v49 = vld [vmem:[%s4 + $0x50] sm:$0xff]
    %v50 = vld [vmem:[%s4 + $0x58] sm:$0xff]
    %v51 = vld [vmem:[%s5] sm:$0xff]
    %v52 = vld [vmem:[%s5 + $0x8] sm:$0xff]
    %v53 = vld [vmem:[%s5 + $0x10] sm:$0xff]
    %v54 = vld [vmem:[%s5 + $0x18] sm:$0xff]
    %v55 = vld [vmem:[%s6] sm:$0xff]
    %v56 = vld [vmem:[%s6 + $0x8] sm:$0xff]
    %v57 = vld [vmem:[%s6 + $0x10] sm:$0xff]
    %v58 = vld [vmem:[%s6 + $0x18] sm:$0xff]
    %v59 = vld [vmem:[%s1] sm:$0xff]
    %v60 = vld [vmem:[%s1 + $0x8] sm:$0xff]
    %v61 = vld [vmem:[%s1 + $0x10] sm:$0xff]
    %v62 = vld [vmem:[%s1 + $0x18] sm:$0xff]
    %v63 = vld [vmem:[%s2] sm:$0xff]
    %v64 = vld [vmem:[%s2 + $0x8] sm:$0xff]
    %v65 = vld [vmem:[%s2 + $0x10] sm:$0xff]
    %v66 = vld [vmem:[%s2 + $0x18] sm:$0xff]
    %v67 = vld [vmem:[%s0] sm:$0xff]
    %v68 = vld [vmem:[%s0 + $0x8] sm:$0xff]
    %v69 = vld [vmem:[%s0 + $0x10] sm:$0xff]
    %v70 = vld [vmem:[%s0 + $0x18] sm:$0xff]
    %v75 = vcombine.high %v67, %v67
    %v76 = vcombine.high %v68, %v68
    %v77 = vcombine.high %v69, %v69
    %v78 = vcombine.high %v70, %v70
    %vm83 = vcmask 519168
    %v84 = vsel %vm83, %v67, 0.0
    %85 = vadd.xlane.f32.xlu0 %v84
    %v86 = vpop.xlane.xlu0 %85
    %v87 = vsel %vm83, %v75, 0.0
    %88 = vadd.xlane.f32.xlu0 %v87
    %v89 = vpop.xlane.xlu0 %88
    %v90 = vsel %vm83, %v68, 0.0
    %91 = vadd.xlane.f32.xlu0 %v90
    %v92 = vpop.xlane.xlu0 %91
    %v93 = vsel %vm83, %v76, 0.0
    %94 = vadd.xlane.f32.xlu0 %v93
    %v95 = vpop.xlane.xlu0 %94
    %v96 = vsel %vm83, %v69, 0.0
    %97 = vadd.xlane.f32.xlu0 %v96
    %v98 = vpop.xlane.xlu0 %97
    %v99 = vsel %vm83, %v77, 0.0
    %100 = vadd.xlane.f32.xlu0 %v99
    %v101 = vpop.xlane.xlu0 %100
    %v102 = vsel %vm83, %v70, 0.0
    %103 = vadd.xlane.f32.xlu0 %v102
    %v104 = vpop.xlane.xlu0 %103
    %v105 = vsel %vm83, %v78, 0.0
    %106 = vadd.xlane.f32.xlu0 %v105
    %v107 = vpop.xlane.xlu0 %106
    %vm108 = vcmask 1043456
    %v109 = vsel %vm108, %v86, 0.0
    %v110 = vrot.slane %v109, 4
    %v111 = vadd.f32 %v109, %v110
    %v112 = vrot.slane %v111, 2
    %v113 = vadd.f32 %v111, %v112
    %v114 = vrot.slane %v113, 1
    %v115 = vadd.f32 %v113, %v114
    %v116 = vsel %vm108, %v89, 0.0
    %v117 = vrot.slane %v116, 4
    %v118 = vadd.f32 %v116, %v117
    %v119 = vrot.slane %v118, 2
    %v120 = vadd.f32 %v118, %v119
    %v121 = vrot.slane %v120, 1
    %v122 = vadd.f32 %v120, %v121
    %v123 = vsel %vm108, %v92, 0.0
    %v124 = vrot.slane %v123, 4
    %v125 = vadd.f32 %v123, %v124
    %v126 = vrot.slane %v125, 2
    %v127 = vadd.f32 %v125, %v126
    %v128 = vrot.slane %v127, 1
    %v129 = vadd.f32 %v127, %v128
    %v130 = vsel %vm108, %v95, 0.0
    %v131 = vrot.slane %v130, 4
    %v132 = vadd.f32 %v130, %v131
    %v133 = vrot.slane %v132, 2
    %v134 = vadd.f32 %v132, %v133
    %v135 = vrot.slane %v134, 1
    %v136 = vadd.f32 %v134, %v135
    %v137 = vsel %vm108, %v98, 0.0
    %v138 = vrot.slane %v137, 4
    %v139 = vadd.f32 %v137, %v138
    %v140 = vrot.slane %v139, 2
    %v141 = vadd.f32 %v139, %v140
    %v142 = vrot.slane %v141, 1
    %v143 = vadd.f32 %v141, %v142
    %v144 = vsel %vm108, %v101, 0.0
    %v145 = vrot.slane %v144, 4
    %v146 = vadd.f32 %v144, %v145
    %v147 = vrot.slane %v146, 2
    %v148 = vadd.f32 %v146, %v147
    %v149 = vrot.slane %v148, 1
    %v150 = vadd.f32 %v148, %v149
    %v151 = vsel %vm108, %v104, 0.0
    %v152 = vrot.slane %v151, 4
    %v153 = vadd.f32 %v151, %v152
    %v154 = vrot.slane %v153, 2
    %v155 = vadd.f32 %v153, %v154
    %v156 = vrot.slane %v155, 1
    %v157 = vadd.f32 %v155, %v156
    %v158 = vsel %vm108, %v107, 0.0
    %v159 = vrot.slane %v158, 4
    %v160 = vadd.f32 %v158, %v159
    %v161 = vrot.slane %v160, 2
    %v162 = vadd.f32 %v160, %v161
    %v163 = vrot.slane %v162, 1
    %v164 = vadd.f32 %v162, %v163
    %v165 = vmul.f32 %v67, %v67
    %v166 = vmul.f32 %v75, %v75
    %v167 = vmul.f32 %v68, %v68
    %v168 = vmul.f32 %v76, %v76
    %v169 = vmul.f32 %v69, %v69
    %v170 = vmul.f32 %v77, %v77
    %v171 = vmul.f32 %v70, %v70
    %v172 = vmul.f32 %v78, %v78
    %v173 = vsel %vm83, %v165, 0.0
    %174 = vadd.xlane.f32.xlu0 %v173
    %v175 = vpop.xlane.xlu0 %174
    %v176 = vsel %vm83, %v166, 0.0
    %177 = vadd.xlane.f32.xlu0 %v176
    %v178 = vpop.xlane.xlu0 %177
    %v179 = vsel %vm83, %v167, 0.0
    %180 = vadd.xlane.f32.xlu0 %v179
    %v181 = vpop.xlane.xlu0 %180
    %v182 = vsel %vm83, %v168, 0.0
    %183 = vadd.xlane.f32.xlu0 %v182
    %v184 = vpop.xlane.xlu0 %183
    %v185 = vsel %vm83, %v169, 0.0
    %186 = vadd.xlane.f32.xlu0 %v185
    %v187 = vpop.xlane.xlu0 %186
    %v188 = vsel %vm83, %v170, 0.0
    %189 = vadd.xlane.f32.xlu0 %v188
    %v190 = vpop.xlane.xlu0 %189
    %v191 = vsel %vm83, %v171, 0.0
    %192 = vadd.xlane.f32.xlu0 %v191
    %v193 = vpop.xlane.xlu0 %192
    %v194 = vsel %vm83, %v172, 0.0
    %195 = vadd.xlane.f32.xlu0 %v194
    %v196 = vpop.xlane.xlu0 %195
    %v197 = vsel %vm108, %v175, 0.0
    %v198 = vrot.slane %v197, 4
    %v199 = vadd.f32 %v197, %v198
    %v200 = vrot.slane %v199, 2
    %v201 = vadd.f32 %v199, %v200
    %v202 = vrot.slane %v201, 1
    %v203 = vadd.f32 %v201, %v202
    %v204 = vsel %vm108, %v178, 0.0
    %v205 = vrot.slane %v204, 4
    %v206 = vadd.f32 %v204, %v205
    %v207 = vrot.slane %v206, 2
    %v208 = vadd.f32 %v206, %v207
    %v209 = vrot.slane %v208, 1
    %v210 = vadd.f32 %v208, %v209
    %v211 = vsel %vm108, %v181, 0.0
    %v212 = vrot.slane %v211, 4
    %v213 = vadd.f32 %v211, %v212
    %v214 = vrot.slane %v213, 2
    %v215 = vadd.f32 %v213, %v214
    %v216 = vrot.slane %v215, 1
    %v217 = vadd.f32 %v215, %v216
    %v218 = vsel %vm108, %v184, 0.0
    %v219 = vrot.slane %v218, 4
    %v220 = vadd.f32 %v218, %v219
    %v221 = vrot.slane %v220, 2
    %v222 = vadd.f32 %v220, %v221
    %v223 = vrot.slane %v222, 1
    %v224 = vadd.f32 %v222, %v223
    %v225 = vsel %vm108, %v187, 0.0
    %v226 = vrot.slane %v225, 4
    %v227 = vadd.f32 %v225, %v226
    %v228 = vrot.slane %v227, 2
    %v229 = vadd.f32 %v227, %v228
    %v230 = vrot.slane %v229, 1
    %v231 = vadd.f32 %v229, %v230
    %v232 = vsel %vm108, %v190, 0.0
    %v233 = vrot.slane %v232, 4
    %v234 = vadd.f32 %v232, %v233
    %v235 = vrot.slane %v234, 2
    %v236 = vadd.f32 %v234, %v235
    %v237 = vrot.slane %v236, 1
    %v238 = vadd.f32 %v236, %v237
    %v239 = vsel %vm108, %v193, 0.0
    %v240 = vrot.slane %v239, 4
    %v241 = vadd.f32 %v239, %v240
    %v242 = vrot.slane %v241, 2
    %v243 = vadd.f32 %v241, %v242
    %v244 = vrot.slane %v243, 1
    %v245 = vadd.f32 %v243, %v244
    %v246 = vsel %vm108, %v196, 0.0
    %v247 = vrot.slane %v246, 4
    %v248 = vadd.f32 %v246, %v247
    %v249 = vrot.slane %v248, 2
    %v250 = vadd.f32 %v248, %v249
    %v251 = vrot.slane %v250, 1
    %v252 = vadd.f32 %v250, %v251
    %v253 = vmul.f32 %v115, 0.00390625
    %v254 = vmul.f32 %v122, 0.00390625
    %v255 = vmul.f32 %v129, 0.00390625
    %v256 = vmul.f32 %v136, 0.00390625
    %v257 = vmul.f32 %v143, 0.00390625
    %v258 = vmul.f32 %v150, 0.00390625
    %v259 = vmul.f32 %v157, 0.00390625
    %v260 = vmul.f32 %v164, 0.00390625
    %v261 = vmul.f32 %v203, 0.00390625
    %v262 = vmul.f32 %v210, 0.00390625
    %v263 = vmul.f32 %v217, 0.00390625
    %v264 = vmul.f32 %v224, 0.00390625
    %v265 = vmul.f32 %v231, 0.00390625
    %v266 = vmul.f32 %v238, 0.00390625
    %v267 = vmul.f32 %v245, 0.00390625
    %v268 = vmul.f32 %v252, 0.00390625
    %v269 = vmul.f32 %v253, %v253
    %v270 = vmul.f32 %v254, %v254
    %v271 = vmul.f32 %v255, %v255
    %v272 = vmul.f32 %v256, %v256
    %v273 = vmul.f32 %v257, %v257
    %v274 = vmul.f32 %v258, %v258
    %v275 = vmul.f32 %v259, %v259
    %v276 = vmul.f32 %v260, %v260
    %v277 = vsub.f32 %v261, %v269
    %v278 = vsub.f32 %v262, %v270
    %v279 = vsub.f32 %v263, %v271
    %v280 = vsub.f32 %v264, %v272
    %v281 = vsub.f32 %v265, %v273
    %v282 = vsub.f32 %v266, %v274
    %v283 = vsub.f32 %v267, %v275
    %v284 = vsub.f32 %v268, %v276
    %v285 = vmax.f32 %v277, 0.0
    %v286 = vmax.f32 %v278, 0.0
    %v287 = vmax.f32 %v279, 0.0
    %v288 = vmax.f32 %v280, 0.0
    %v289 = vmax.f32 %v281, 0.0
    %v290 = vmax.f32 %v282, 0.0
    %v291 = vmax.f32 %v283, 0.0
    %v292 = vmax.f32 %v284, 0.0
    %v293 = vsub.f32 %v67, %v253
    %v294 = vsub.f32 %v75, %v254
    %v295 = vsub.f32 %v68, %v255
    %v296 = vsub.f32 %v76, %v256
    %v297 = vsub.f32 %v69, %v257
    %v298 = vsub.f32 %v77, %v258
    %v299 = vsub.f32 %v70, %v259
    %v300 = vsub.f32 %v78, %v260
    %v301 = vadd.f32 %v285, 1e-05
    %v302 = vadd.f32 %v286, 1e-05
    %v303 = vadd.f32 %v287, 1e-05
    %v304 = vadd.f32 %v288, 1e-05
    %v305 = vadd.f32 %v289, 1e-05
    %v306 = vadd.f32 %v290, 1e-05
    %v307 = vadd.f32 %v291, 1e-05
    %v308 = vadd.f32 %v292, 1e-05
    %v309 = vrsqrt.pop %v301
    %v310 = vrsqrt.pop %v302
    %v311 = vrsqrt.pop %v303
    %v312 = vrsqrt.pop %v304
    %v313 = vrsqrt.pop %v305
    %v314 = vrsqrt.pop %v306
    %v315 = vrsqrt.pop %v307
    %v316 = vrsqrt.pop %v308
    %v317 = vmul.f32 %v293, %v309
    %v318 = vmul.f32 %v294, %v310
    %v319 = vmul.f32 %v295, %v311
    %v320 = vmul.f32 %v296, %v312
    %v321 = vmul.f32 %v297, %v313
    %v322 = vmul.f32 %v298, %v314
    %v323 = vmul.f32 %v299, %v315
    %v324 = vmul.f32 %v300, %v316
    %326 = vset.pattern.permute.xlu0 0
    %327 = vperm.xlu0 %326, %v59
    %v328 = vpop.permute.xlu0 %327
    %330 = vset.pattern.permute.xlu0 0
    %331 = vperm.xlu0 %330, %v60
    %v332 = vpop.permute.xlu0 %331
    %334 = vset.pattern.permute.xlu0 0
    %335 = vperm.xlu0 %334, %v61
    %v336 = vpop.permute.xlu0 %335
    %338 = vset.pattern.permute.xlu0 0
    %339 = vperm.xlu0 %338, %v62
    %v340 = vpop.permute.xlu0 %339
    %v342 = vunpack.c.l.s4 839922192
    %v343 = vunpack.c.0.s8 %v342
    %v344 = vlaneseq
    %v345 = vshrl.u32 %v344, 7
    %v346 = vsub.s32 %v343, %v345
    %v347 = vrot.slane %v328, %v346
    %v349 = vunpack.c.l.s4 1985246804
    %v350 = vunpack.c.0.s8 %v349
    %v351 = vlaneseq
    %v352 = vshrl.u32 %v351, 7
    %v353 = vsub.s32 %v350, %v352
    %v354 = vrot.slane %v328, %v353
    %v356 = vunpack.c.l.s4 839922192
    %v357 = vunpack.c.0.s8 %v356
    %v358 = vlaneseq
    %v359 = vshrl.u32 %v358, 7
    %v360 = vsub.s32 %v357, %v359
    %v361 = vrot.slane %v332, %v360
    %v363 = vunpack.c.l.s4 1985246804
    %v364 = vunpack.c.0.s8 %v363
    %v365 = vlaneseq
    %v366 = vshrl.u32 %v365, 7
    %v367 = vsub.s32 %v364, %v366
    %v368 = vrot.slane %v332, %v367
    %v370 = vunpack.c.l.s4 839922192
    %v371 = vunpack.c.0.s8 %v370
    %v372 = vlaneseq
    %v373 = vshrl.u32 %v372, 7
    %v374 = vsub.s32 %v371, %v373
    %v375 = vrot.slane %v336, %v374
    %v377 = vunpack.c.l.s4 1985246804
    %v378 = vunpack.c.0.s8 %v377
    %v379 = vlaneseq
    %v380 = vshrl.u32 %v379, 7
    %v381 = vsub.s32 %v378, %v380
    %v382 = vrot.slane %v336, %v381
    %v384 = vunpack.c.l.s4 839922192
    %v385 = vunpack.c.0.s8 %v384
    %v386 = vlaneseq
    %v387 = vshrl.u32 %v386, 7
    %v388 = vsub.s32 %v385, %v387
    %v389 = vrot.slane %v340, %v388
    %v391 = vunpack.c.l.s4 1985246804
    %v392 = vunpack.c.0.s8 %v391
    %v393 = vlaneseq
    %v394 = vshrl.u32 %v393, 7
    %v395 = vsub.s32 %v392, %v394
    %v396 = vrot.slane %v340, %v395
    %v405 = vmul.f32 %v317, %v347
    %v406 = vmul.f32 %v318, %v354
    %v407 = vmul.f32 %v319, %v361
    %v408 = vmul.f32 %v320, %v368
    %v409 = vmul.f32 %v321, %v375
    %v410 = vmul.f32 %v322, %v382
    %v411 = vmul.f32 %v323, %v389
    %v412 = vmul.f32 %v324, %v396
    %414 = vset.pattern.permute.xlu0 0
    %415 = vperm.xlu0 %414, %v63
    %v416 = vpop.permute.xlu0 %415
    %418 = vset.pattern.permute.xlu0 0
    %419 = vperm.xlu0 %418, %v64
    %v420 = vpop.permute.xlu0 %419
    %422 = vset.pattern.permute.xlu0 0
    %423 = vperm.xlu0 %422, %v65
    %v424 = vpop.permute.xlu0 %423
    %426 = vset.pattern.permute.xlu0 0
    %427 = vperm.xlu0 %426, %v66
    %v428 = vpop.permute.xlu0 %427
    %v430 = vunpack.c.l.s4 839922192
    %v431 = vunpack.c.0.s8 %v430
    %v432 = vlaneseq
    %v433 = vshrl.u32 %v432, 7
    %v434 = vsub.s32 %v431, %v433
    %v435 = vrot.slane %v416, %v434
    %v437 = vunpack.c.l.s4 1985246804
    %v438 = vunpack.c.0.s8 %v437
    %v439 = vlaneseq
    %v440 = vshrl.u32 %v439, 7
    %v441 = vsub.s32 %v438, %v440
    %v442 = vrot.slane %v416, %v441
    %v444 = vunpack.c.l.s4 839922192
    %v445 = vunpack.c.0.s8 %v444
    %v446 = vlaneseq
    %v447 = vshrl.u32 %v446, 7
    %v448 = vsub.s32 %v445, %v447
    %v449 = vrot.slane %v420, %v448
    %v451 = vunpack.c.l.s4 1985246804
    %v452 = vunpack.c.0.s8 %v451
    %v453 = vlaneseq
    %v454 = vshrl.u32 %v453, 7
    %v455 = vsub.s32 %v452, %v454
    %v456 = vrot.slane %v420, %v455
    %v458 = vunpack.c.l.s4 839922192
    %v459 = vunpack.c.0.s8 %v458
    %v460 = vlaneseq
    %v461 = vshrl.u32 %v460, 7
    %v462 = vsub.s32 %v459, %v461
    %v463 = vrot.slane %v424, %v462
    %v465 = vunpack.c.l.s4 1985246804
    %v466 = vunpack.c.0.s8 %v465
    %v467 = vlaneseq
    %v468 = vshrl.u32 %v467, 7
    %v469 = vsub.s32 %v466, %v468
    %v470 = vrot.slane %v424, %v469
    %v472 = vunpack.c.l.s4 839922192
    %v473 = vunpack.c.0.s8 %v472
    %v474 = vlaneseq
    %v475 = vshrl.u32 %v474, 7
    %v476 = vsub.s32 %v473, %v475
    %v477 = vrot.slane %v428, %v476
    %v479 = vunpack.c.l.s4 1985246804
    %v480 = vunpack.c.0.s8 %v479
    %v481 = vlaneseq
    %v482 = vshrl.u32 %v481, 7
    %v483 = vsub.s32 %v480, %v482
    %v484 = vrot.slane %v428, %v483
    %v493 = vadd.f32 %v405, %v435
    %v494 = vadd.f32 %v406, %v442
    %v495 = vadd.f32 %v407, %v449
    %v496 = vadd.f32 %v408, %v456
    %v497 = vadd.f32 %v409, %v463
    %v498 = vadd.f32 %v410, %v470
    %v499 = vadd.f32 %v411, %v477
    %v500 = vadd.f32 %v412, %v484
    %502 = vset.pattern.permute.xlu0 0
    %503 = vperm.xlu0 %502, %v39
    %v504 = vpop.permute.xlu0 %503
    %507 = vset.pattern.permute.xlu0 0
    %508 = vperm.xlu0 %507, %v40
    %v509 = vpop.permute.xlu0 %508
    %512 = vset.pattern.permute.xlu0 0
    %513 = vperm.xlu0 %512, %v41
    %v514 = vpop.permute.xlu0 %513
    %517 = vset.pattern.permute.xlu0 0
    %518 = vperm.xlu0 %517, %v42
    %v519 = vpop.permute.xlu0 %518
    %522 = vset.pattern.permute.xlu0 0
    %523 = vperm.xlu0 %522, %v43
    %v524 = vpop.permute.xlu0 %523
    %527 = vset.pattern.permute.xlu0 0
    %528 = vperm.xlu0 %527, %v44
    %v529 = vpop.permute.xlu0 %528
    %532 = vset.pattern.permute.xlu0 0
    %533 = vperm.xlu0 %532, %v45
    %v534 = vpop.permute.xlu0 %533
    %537 = vset.pattern.permute.xlu0 0
    %538 = vperm.xlu0 %537, %v46
    %v539 = vpop.permute.xlu0 %538
    %542 = vset.pattern.permute.xlu0 0
    %543 = vperm.xlu0 %542, %v47
    %v544 = vpop.permute.xlu0 %543
    %547 = vset.pattern.permute.xlu0 0
    %548 = vperm.xlu0 %547, %v48
    %v549 = vpop.permute.xlu0 %548
    %552 = vset.pattern.permute.xlu0 0
    %553 = vperm.xlu0 %552, %v49
    %v554 = vpop.permute.xlu0 %553
    %557 = vset.pattern.permute.xlu0 0
    %558 = vperm.xlu0 %557, %v50
    %v559 = vpop.permute.xlu0 %558
    %v569 = vcombine.low %v493, %v494
    %v570 = vcombine.low %v495, %v496
    %v571 = vcombine.low %v497, %v498
    %v572 = vcombine.low %v499, %v500
    %vm577 = vcmask 261120
    %v579 = vsel %vm577, %v27, 0
    %v582 = vsel %vm577, %v28, 0
    %v585 = vsel %vm577, %v29, 0
    %v588 = vsel %vm577, %v30, 0
    %v591 = vsel %vm577, %v31, 0
    %v594 = vsel %vm577, %v32, 0
    %v597 = vsel %vm577, %v33, 0
    %v600 = vsel %vm577, %v34, 0
    %v603 = vsel %vm577, %v35, 0
    %v606 = vsel %vm577, %v36, 0
    %v609 = vsel %vm577, %v37, 0
    %v612 = vsel %vm577, %v38, 0
    %614 = vmatprep.subr.mxu0 0.0
    %615 = vmatpush1.msra.mxu0 %v569
    %616 = vmatprep.subr.mxu0 0.0
    %617 = vmatpush1.msra.mxu0 %v570
    %618 = vmatprep.subr.mxu0 0.0
    %619 = vmatpush1.msra.mxu0 %v571
    %620 = vmatprep.subr.mxu0 0.0
    %621 = vmatpush1.msra.mxu0 %v572
    %622 = vmatprep.subr.mxu0 0.0
    %623 = vmatpush1.msra.mxu0 0.0
    %624 = vmatprep.subr.mxu0 0.0
    %625 = vmatpush1.msra.mxu0 0.0
    %626 = vmatprep.subr.mxu0 0.0
    %627 = vmatpush1.msra.mxu0 0.0
    %628 = vmatprep.subr.mxu0 0.0
    %629 = vmatpush1.msra.mxu0 0.0
    %630 = vmatprep.subr.mxu0 0.0
    %631 = vmatpush1.msra.mxu0 0.0
    %632 = vmatprep.subr.mxu0 0.0
    %633 = vmatpush1.msra.mxu0 0.0
    %634 = vmatprep.subr.mxu0 0.0
    %635 = vmatpush1.msra.mxu0 0.0
    %636 = vmatprep.subr.mxu0 0.0
    %637 = vmatpush1.msra.mxu0 0.0
    %638 = vmatprep.subr.mxu0 0.0
    %639 = vmatpush1.msra.mxu0 0.0
    %640 = vmatprep.subr.mxu0 0.0
    %641 = vmatpush1.msra.mxu0 0.0
    %642 = vmatprep.subr.mxu0 0.0
    %643 = vmatpush1.msra.mxu0 0.0
    %644 = vmatprep.subr.mxu0 0.0
    %645 = vmatpush1.msra.mxu0 0.0
    %646 = vmatprep.subr.mxu0 0.0
    %647 = vmatpush1.msra.mxu0 0.0
    %648 = vmatprep.subr.mxu0 0.0
    %649 = vmatpush1.msra.mxu0 0.0
    %650 = vmatprep.subr.mxu0 0.0
    %651 = vmatpush1.msra.mxu0 0.0
    %652 = vmatprep.subr.mxu0 0.0
    %653 = vmatpush1.msra.mxu0 0.0
    %654 = vmatprep.subr.mxu0 0.0
    %655 = vmatpush1.msra.mxu0 0.0
    %656 = vmatprep.subr.mxu0 0.0
    %657 = vmatpush1.msra.mxu0 0.0
    %658 = vmatprep.subr.mxu0 0.0
    %659 = vmatpush1.msra.mxu0 0.0
    %660 = vmatprep.subr.mxu0 0.0
    %661 = vmatpush1.msra.mxu0 0.0
    %662 = vmatprep.subr.mxu0 0.0
    %663 = vmatpush1.msra.mxu0 0.0
    %664 = vmatprep.subr.mxu0 0.0
    %665 = vmatpush1.msra.mxu0 0.0
    %666 = vmatprep.subr.mxu0 0.0
    %667 = vmatpush1.msra.mxu0 0.0
    %668 = vmatprep.subr.mxu0 0.0
    %669 = vmatpush1.msra.mxu0 0.0
    %670 = vmatprep.subr.mxu0 0.0
    %671 = vmatpush1.msra.mxu0 0.0
    %672 = vmatprep.subr.mxu0 0.0
    %673 = vmatpush1.msra.mxu0 0.0
    %674 = vmatprep.subr.mxu0 0.0
    %675 = vmatpush1.msra.mxu0 0.0
    %676 = vmatprep.subr.mxu0 0.0
    %677 = vmatpush1.msra.mxu0 0.0
    %678 = vmatprep.mubr.f32.mxu0 0.0
    %679 = vmatmul.mubr.f32.gmra.mrb[0].mxu0 %v579
    %v680 = vpop.f32.mrb[0].mxu0
    %v681 = vadd.f32 %v504, %v680
    %v682 = vpop.f32.mrb[0].mxu0
    %683 = vmatprep.mubr.f32.mxu0 0.0
    %684 = vmatmul.mubr.f32.gmra.mrb[0].mxu0 %v582
    %v685 = vpop.f32.mrb[0].mxu0
    %v686 = vadd.f32 %v509, %v685
    %v687 = vpop.f32.mrb[0].mxu0
    %688 = vmatprep.mubr.f32.mxu0 0.0
    %689 = vmatmul.mubr.f32.gmra.mrb[0].mxu0 %v585
    %v690 = vpop.f32.mrb[0].mxu0
    %v691 = vadd.f32 %v514, %v690
    %v692 = vpop.f32.mrb[0].mxu0
    %693 = vmatprep.mubr.f32.mxu0 0.0
    %694 = vmatmul.mubr.f32.gmra.mrb[0].mxu0 %v588
    %v695 = vpop.f32.mrb[0].mxu0
    %v696 = vadd.f32 %v519, %v695
    %v697 = vpop.f32.mrb[0].mxu0
    %698 = vmatprep.mubr.f32.mxu0 0.0
    %699 = vmatmul.mubr.f32.gmra.mrb[0].mxu0 %v591
    %v700 = vpop.f32.mrb[0].mxu0
    %v701 = vadd.f32 %v524, %v700
    %v702 = vpop.f32.mrb[0].mxu0
    %703 = vmatprep.mubr.f32.mxu0 0.0
    %704 = vmatmul.mubr.f32.gmra.mrb[0].mxu0 %v594
    %v705 = vpop.f32.mrb[0].mxu0
    %v706 = vadd.f32 %v529, %v705
    %v707 = vpop.f32.mrb[0].mxu0
    %708 = vmatprep.mubr.f32.mxu0 0.0
    %709 = vmatmul.mubr.f32.gmra.mrb[0].mxu0 %v597
    %v710 = vpop.f32.mrb[0].mxu0
    %v711 = vadd.f32 %v534, %v710
    %v712 = vpop.f32.mrb[0].mxu0
    %713 = vmatprep.mubr.f32.mxu0 0.0
    %714 = vmatmul.mubr.f32.gmra.mrb[0].mxu0 %v600
    %v715 = vpop.f32.mrb[0].mxu0
    %v716 = vadd.f32 %v539, %v715
    %v717 = vpop.f32.mrb[0].mxu0
    %718 = vmatprep.mubr.f32.mxu0 0.0
    %719 = vmatmul.mubr.f32.gmra.mrb[0].mxu0 %v603
    %v720 = vpop.f32.mrb[0].mxu0
    %v721 = vadd.f32 %v544, %v720
    %v722 = vpop.f32.mrb[0].mxu0
    %723 = vmatprep.mubr.f32.mxu0 0.0
    %724 = vmatmul.mubr.f32.gmra.mrb[0].mxu0 %v606
    %v725 = vpop.f32.mrb[0].mxu0
    %v726 = vadd.f32 %v549, %v725
    %v727 = vpop.f32.mrb[0].mxu0
    %728 = vmatprep.mubr.f32.mxu0 0.0
    %729 = vmatmul.mubr.f32.gmra.mrb[0].mxu0 %v609
    %v730 = vpop.f32.mrb[0].mxu0
    %v731 = vadd.f32 %v554, %v730
    %v732 = vpop.f32.mrb[0].mxu0
    %733 = vmatprep.mubr.f32.mxu0 0.0
    %734 = vmatmul.mubr.f32.gmra.mrb[0].mxu0 %v612
    %v735 = vpop.f32.mrb[0].mxu0
    %v736 = vadd.f32 %v559, %v735
    %v737 = vpop.f32.mrb[0].mxu0
    %738 = vdwg.mxu0
    %739 = vxpose.xlu0.b32.start [1/16] %v681, 128
    %740 = vxpose.xlu0.b32.cont [2/16] 0.0, 128
    %741 = vxpose.xlu0.b32.cont [3/16] 0.0, 128
    %742 = vxpose.xlu0.b32.cont [4/16] 0.0, 128
    %743 = vxpose.xlu0.b32.cont [5/16] 0.0, 128
    %744 = vxpose.xlu0.b32.cont [6/16] 0.0, 128
    %745 = vxpose.xlu0.b32.cont [7/16] 0.0, 128
    %746 = vxpose.xlu0.b32.cont [8/16] 0.0, 128
    %747 = vxpose.xlu0.b32.cont [9/16] 0.0, 128
    %748 = vxpose.xlu0.b32.cont [10/16] 0.0, 128
    %749 = vxpose.xlu0.b32.cont [11/16] 0.0, 128
    %750 = vxpose.xlu0.b32.cont [12/16] 0.0, 128
    %751 = vxpose.xlu0.b32.cont [13/16] 0.0, 128
    %752 = vxpose.xlu0.b32.cont [14/16] 0.0, 128
    %753 = vxpose.xlu0.b32.cont [15/16] 0.0, 128
    %754 = vxpose.xlu0.b32.end [16/16] 0.0, 128
    %v755 = vpop.trf.xlu0
    %v756 = vpop.trf.xlu0
    %v757 = vpop.trf.xlu0
    %v758 = vpop.trf.xlu0
    %v759 = vpop.trf.xlu0
    %v760 = vpop.trf.xlu0
    %v761 = vpop.trf.xlu0
    %v762 = vpop.trf.xlu0
    %v763 = vpop.trf.xlu0
    %v764 = vpop.trf.xlu0
    %v765 = vpop.trf.xlu0
    %v766 = vpop.trf.xlu0
    %v767 = vpop.trf.xlu0
    %v768 = vpop.trf.xlu0
    %v769 = vpop.trf.xlu0
    %v770 = vpop.trf.xlu0
    %771 = vxpose.xlu0.b32.start [1/16] %v686, 128
    %772 = vxpose.xlu0.b32.cont [2/16] 0.0, 128
    %773 = vxpose.xlu0.b32.cont [3/16] 0.0, 128
    %774 = vxpose.xlu0.b32.cont [4/16] 0.0, 128
    %775 = vxpose.xlu0.b32.cont [5/16] 0.0, 128
    %776 = vxpose.xlu0.b32.cont [6/16] 0.0, 128
    %777 = vxpose.xlu0.b32.cont [7/16] 0.0, 128
    %778 = vxpose.xlu0.b32.cont [8/16] 0.0, 128
    %779 = vxpose.xlu0.b32.cont [9/16] 0.0, 128
    %780 = vxpose.xlu0.b32.cont [10/16] 0.0, 128
    %781 = vxpose.xlu0.b32.cont [11/16] 0.0, 128
    %782 = vxpose.xlu0.b32.cont [12/16] 0.0, 128
    %783 = vxpose.xlu0.b32.cont [13/16] 0.0, 128
    %784 = vxpose.xlu0.b32.cont [14/16] 0.0, 128
    %785 = vxpose.xlu0.b32.cont [15/16] 0.0, 128
    %786 = vxpose.xlu0.b32.end [16/16] 0.0, 128
    %v787 = vpop.trf.xlu0
    %v788 = vpop.trf.xlu0
    %v789 = vpop.trf.xlu0
    %v790 = vpop.trf.xlu0
    %v791 = vpop.trf.xlu0
    %v792 = vpop.trf.xlu0
    %v793 = vpop.trf.xlu0
    %v794 = vpop.trf.xlu0
    %v795 = vpop.trf.xlu0
    %v796 = vpop.trf.xlu0
    %v797 = vpop.trf.xlu0
    %v798 = vpop.trf.xlu0
    %v799 = vpop.trf.xlu0
    %v800 = vpop.trf.xlu0
    %v801 = vpop.trf.xlu0
    %v802 = vpop.trf.xlu0
    %803 = vxpose.xlu0.b32.start [1/16] %v691, 128
    %804 = vxpose.xlu0.b32.cont [2/16] 0.0, 128
    %805 = vxpose.xlu0.b32.cont [3/16] 0.0, 128
    %806 = vxpose.xlu0.b32.cont [4/16] 0.0, 128
    %807 = vxpose.xlu0.b32.cont [5/16] 0.0, 128
    %808 = vxpose.xlu0.b32.cont [6/16] 0.0, 128
    %809 = vxpose.xlu0.b32.cont [7/16] 0.0, 128
    %810 = vxpose.xlu0.b32.cont [8/16] 0.0, 128
    %811 = vxpose.xlu0.b32.cont [9/16] 0.0, 128
    %812 = vxpose.xlu0.b32.cont [10/16] 0.0, 128
    %813 = vxpose.xlu0.b32.cont [11/16] 0.0, 128
    %814 = vxpose.xlu0.b32.cont [12/16] 0.0, 128
    %815 = vxpose.xlu0.b32.cont [13/16] 0.0, 128
    %816 = vxpose.xlu0.b32.cont [14/16] 0.0, 128
    %817 = vxpose.xlu0.b32.cont [15/16] 0.0, 128
    %818 = vxpose.xlu0.b32.end [16/16] 0.0, 128
    %v819 = vpop.trf.xlu0
    %v820 = vpop.trf.xlu0
    %v821 = vpop.trf.xlu0
    %v822 = vpop.trf.xlu0
    %v823 = vpop.trf.xlu0
    %v824 = vpop.trf.xlu0
    %v825 = vpop.trf.xlu0
    %v826 = vpop.trf.xlu0
    %v827 = vpop.trf.xlu0
    %v828 = vpop.trf.xlu0
    %v829 = vpop.trf.xlu0
    %v830 = vpop.trf.xlu0
    %v831 = vpop.trf.xlu0
    %v832 = vpop.trf.xlu0
    %v833 = vpop.trf.xlu0
    %v834 = vpop.trf.xlu0
    %835 = vxpose.xlu0.b32.start [1/16] %v696, 128
    %836 = vxpose.xlu0.b32.cont [2/16] 0.0, 128
    %837 = vxpose.xlu0.b32.cont [3/16] 0.0, 128
    %838 = vxpose.xlu0.b32.cont [4/16] 0.0, 128
    %839 = vxpose.xlu0.b32.cont [5/16] 0.0, 128
    %840 = vxpose.xlu0.b32.cont [6/16] 0.0, 128
    %841 = vxpose.xlu0.b32.cont [7/16] 0.0, 128
    %842 = vxpose.xlu0.b32.cont [8/16] 0.0, 128
    %843 = vxpose.xlu0.b32.cont [9/16] 0.0, 128
    %844 = vxpose.xlu0.b32.cont [10/16] 0.0, 128
    %845 = vxpose.xlu0.b32.cont [11/16] 0.0, 128
    %846 = vxpose.xlu0.b32.cont [12/16] 0.0, 128
    %847 = vxpose.xlu0.b32.cont [13/16] 0.0, 128
    %848 = vxpose.xlu0.b32.cont [14/16] 0.0, 128
    %849 = vxpose.xlu0.b32.cont [15/16] 0.0, 128
    %850 = vxpose.xlu0.b32.end [16/16] 0.0, 128
    %v851 = vpop.trf.xlu0
    %v852 = vpop.trf.xlu0
    %v853 = vpop.trf.xlu0
    %v854 = vpop.trf.xlu0
    %v855 = vpop.trf.xlu0
    %v856 = vpop.trf.xlu0
    %v857 = vpop.trf.xlu0
    %v858 = vpop.trf.xlu0
    %v859 = vpop.trf.xlu0
    %v860 = vpop.trf.xlu0
    %v861 = vpop.trf.xlu0
    %v862 = vpop.trf.xlu0
    %v863 = vpop.trf.xlu0
    %v864 = vpop.trf.xlu0
    %v865 = vpop.trf.xlu0
    %v866 = vpop.trf.xlu0
    %vm867 = vcmask 64512
    %v869 = vsel %vm867, %v755, 0
    %v872 = vsel %vm867, %v756, 0
    %v875 = vsel %vm867, %v757, 0
    %v878 = vsel %vm867, %v758, 0
    %v881 = vsel %vm867, %v759, 0
    %v884 = vsel %vm867, %v760, 0
    %v887 = vsel %vm867, %v761, 0
    %v890 = vsel %vm867, %v762, 0
    %892 = vmatprep.subr.mxu0 0.0
    %893 = vmatpush1.msra.mxu0 %v701
    %894 = vmatprep.subr.mxu0 0.0
    %895 = vmatpush1.msra.mxu0 0.0
    %896 = vmatprep.subr.mxu0 0.0
    %897 = vmatpush1.msra.mxu0 0.0
    %898 = vmatprep.subr.mxu0 0.0
    %899 = vmatpush1.msra.mxu0 0.0
    %900 = vmatprep.subr.mxu0 0.0
    %901 = vmatpush1.msra.mxu0 0.0
    %902 = vmatprep.subr.mxu0 0.0
    %903 = vmatpush1.msra.mxu0 0.0
    %904 = vmatprep.subr.mxu0 0.0
    %905 = vmatpush1.msra.mxu0 0.0
    %906 = vmatprep.subr.mxu0 0.0
    %907 = vmatpush1.msra.mxu0 0.0
    %908 = vmatprep.subr.mxu0 0.0
    %909 = vmatpush1.msra.mxu0 0.0
    %910 = vmatprep.subr.mxu0 0.0
    %911 = vmatpush1.msra.mxu0 0.0
    %912 = vmatprep.subr.mxu0 0.0
    %913 = vmatpush1.msra.mxu0 0.0
    %914 = vmatprep.subr.mxu0 0.0
    %915 = vmatpush1.msra.mxu0 0.0
    %916 = vmatprep.subr.mxu0 0.0
    %917 = vmatpush1.msra.mxu0 0.0
    %918 = vmatprep.subr.mxu0 0.0
    %919 = vmatpush1.msra.mxu0 0.0
    %920 = vmatprep.subr.mxu0 0.0
    %921 = vmatpush1.msra.mxu0 0.0
    %922 = vmatprep.subr.mxu0 0.0
    %923 = vmatpush1.msra.mxu0 0.0
    %924 = vmatprep.subr.mxu0 0.0
    %925 = vmatpush1.msra.mxu0 0.0
    %926 = vmatprep.subr.mxu0 0.0
    %927 = vmatpush1.msra.mxu0 0.0
    %928 = vmatprep.subr.mxu0 0.0
    %929 = vmatpush1.msra.mxu0 0.0
    %930 = vmatprep.subr.mxu0 0.0
    %931 = vmatpush1.msra.mxu0 0.0
    %932 = vmatprep.subr.mxu0 0.0
    %933 = vmatpush1.msra.mxu0 0.0
    %934 = vmatprep.subr.mxu0 0.0
    %935 = vmatpush1.msra.mxu0 0.0
    %936 = vmatprep.subr.mxu0 0.0
    %937 = vmatpush1.msra.mxu0 0.0
    %938 = vmatprep.subr.mxu0 0.0
    %939 = vmatpush1.msra.mxu0 0.0
    %940 = vmatprep.subr.mxu0 0.0
    %941 = vmatpush1.msra.mxu0 0.0
    %942 = vmatprep.subr.mxu0 0.0
    %943 = vmatpush1.msra.mxu0 0.0
    %944 = vmatprep.subr.mxu0 0.0
    %945 = vmatpush1.msra.mxu0 0.0
    %946 = vmatprep.subr.mxu0 0.0
    %947 = vmatpush1.msra.mxu0 0.0
    %948 = vmatprep.subr.mxu0 0.0
    %949 = vmatpush1.msra.mxu0 0.0
    %950 = vmatprep.subr.mxu0 0.0
    %951 = vmatpush1.msra.mxu0 0.0
    %952 = vmatprep.subr.mxu0 0.0
    %953 = vmatpush1.msra.mxu0 0.0
    %954 = vmatprep.subr.mxu0 0.0
    %955 = vmatpush1.msra.mxu0 0.0
    %956 = vmatprep.mubr.f32.mxu0 0.0
    %957 = vmatmul.mubr.f32.gmra.mrb[0].mxu0 %v869
    %v958 = vpop.f32.mrb[0].mxu0
    %v959 = vadd.f32 0.0, %v958
    %v960 = vpop.f32.mrb[0].mxu0
    %961 = vmatprep.mubr.f32.mxu0 0.0
    %962 = vmatmul.mubr.f32.gmra.mrb[0].mxu0 %v872
    %v963 = vpop.f32.mrb[0].mxu0
    %v964 = vadd.f32 0.0, %v963
    %v965 = vpop.f32.mrb[0].mxu0
    %966 = vmatprep.mubr.f32.mxu0 0.0
    %967 = vmatmul.mubr.f32.gmra.mrb[0].mxu0 %v875
    %v968 = vpop.f32.mrb[0].mxu0
    %v969 = vadd.f32 0.0, %v968
    %v970 = vpop.f32.mrb[0].mxu0
    %971 = vmatprep.mubr.f32.mxu0 0.0
    %972 = vmatmul.mubr.f32.gmra.mrb[0].mxu0 %v878
    %v973 = vpop.f32.mrb[0].mxu0
    %v974 = vadd.f32 0.0, %v973
    %v975 = vpop.f32.mrb[0].mxu0
    %976 = vmatprep.mubr.f32.mxu0 0.0
    %977 = vmatmul.mubr.f32.gmra.mrb[0].mxu0 %v881
    %v978 = vpop.f32.mrb[0].mxu0
    %v979 = vadd.f32 0.0, %v978
    %v980 = vpop.f32.mrb[0].mxu0
    %981 = vmatprep.mubr.f32.mxu0 0.0
    %982 = vmatmul.mubr.f32.gmra.mrb[0].mxu0 %v884
    %v983 = vpop.f32.mrb[0].mxu0
    %v984 = vadd.f32 0.0, %v983
    %v985 = vpop.f32.mrb[0].mxu0
    %986 = vmatprep.mubr.f32.mxu0 0.0
    %987 = vmatmul.mubr.f32.gmra.mrb[0].mxu0 %v887
    %v988 = vpop.f32.mrb[0].mxu0
    %v989 = vadd.f32 0.0, %v988
    %v990 = vpop.f32.mrb[0].mxu0
    %991 = vmatprep.mubr.f32.mxu0 0.0
    %992 = vmatmul.mubr.f32.gmra.mrb[0].mxu0 %v890
    %v993 = vpop.f32.mrb[0].mxu0
    %v994 = vadd.f32 0.0, %v993
    %v995 = vpop.f32.mrb[0].mxu0
    %996 = vdwg.mxu0
    %v998 = vsel %vm867, %v787, 0
    %v1001 = vsel %vm867, %v788, 0
    %v1004 = vsel %vm867, %v789, 0
    %v1007 = vsel %vm867, %v790, 0
    %v1010 = vsel %vm867, %v791, 0
    %v1013 = vsel %vm867, %v792, 0
    %v1016 = vsel %vm867, %v793, 0
    %v1019 = vsel %vm867, %v794, 0
    %1021 = vmatprep.subr.mxu0 0.0
    %1022 = vmatpush1.msra.mxu0 %v706
    %1023 = vmatprep.subr.mxu0 0.0
    %1024 = vmatpush1.msra.mxu0 0.0
    %1025 = vmatprep.subr.mxu0 0.0
    %1026 = vmatpush1.msra.mxu0 0.0
    %1027 = vmatprep.subr.mxu0 0.0
    %1028 = vmatpush1.msra.mxu0 0.0
    %1029 = vmatprep.subr.mxu0 0.0
    %1030 = vmatpush1.msra.mxu0 0.0
    %1031 = vmatprep.subr.mxu0 0.0
    %1032 = vmatpush1.msra.mxu0 0.0
    %1033 = vmatprep.subr.mxu0 0.0
    %1034 = vmatpush1.msra.mxu0 0.0
    %1035 = vmatprep.subr.mxu0 0.0
    %1036 = vmatpush1.msra.mxu0 0.0
    %1037 = vmatprep.subr.mxu0 0.0
    %1038 = vmatpush1.msra.mxu0 0.0
    %1039 = vmatprep.subr.mxu0 0.0
    %1040 = vmatpush1.msra.mxu0 0.0
    %1041 = vmatprep.subr.mxu0 0.0
    %1042 = vmatpush1.msra.mxu0 0.0
    %1043 = vmatprep.subr.mxu0 0.0
    %1044 = vmatpush1.msra.mxu0 0.0
    %1045 = vmatprep.subr.mxu0 0.0
    %1046 = vmatpush1.msra.mxu0 0.0
    %1047 = vmatprep.subr.mxu0 0.0
    %1048 = vmatpush1.msra.mxu0 0.0
    %1049 = vmatprep.subr.mxu0 0.0
    %1050 = vmatpush1.msra.mxu0 0.0
    %1051 = vmatprep.subr.mxu0 0.0
    %1052 = vmatpush1.msra.mxu0 0.0
    %1053 = vmatprep.subr.mxu0 0.0
    %1054 = vmatpush1.msra.mxu0 0.0
    %1055 = vmatprep.subr.mxu0 0.0
    %1056 = vmatpush1.msra.mxu0 0.0
    %1057 = vmatprep.subr.mxu0 0.0
    %1058 = vmatpush1.msra.mxu0 0.0
    %1059 = vmatprep.subr.mxu0 0.0
    %1060 = vmatpush1.msra.mxu0 0.0
    %1061 = vmatprep.subr.mxu0 0.0
    %1062 = vmatpush1.msra.mxu0 0.0
    %1063 = vmatprep.subr.mxu0 0.0
    %1064 = vmatpush1.msra.mxu0 0.0
    %1065 = vmatprep.subr.mxu0 0.0
    %1066 = vmatpush1.msra.mxu0 0.0
    %1067 = vmatprep.subr.mxu0 0.0
    %1068 = vmatpush1.msra.mxu0 0.0
    %1069 = vmatprep.subr.mxu0 0.0
    %1070 = vmatpush1.msra.mxu0 0.0
    %1071 = vmatprep.subr.mxu0 0.0
    %1072 = vmatpush1.msra.mxu0 0.0
    %1073 = vmatprep.subr.mxu0 0.0
    %1074 = vmatpush1.msra.mxu0 0.0
    %1075 = vmatprep.subr.mxu0 0.0
    %1076 = vmatpush1.msra.mxu0 0.0
    %1077 = vmatprep.subr.mxu0 0.0
    %1078 = vmatpush1.msra.mxu0 0.0
    %1079 = vmatprep.subr.mxu0 0.0
    %1080 = vmatpush1.msra.mxu0 0.0
    %1081 = vmatprep.subr.mxu0 0.0
    %1082 = vmatpush1.msra.mxu0 0.0
    %1083 = vmatprep.subr.mxu0 0.0
    %1084 = vmatpush1.msra.mxu0 0.0
    %1085 = vmatprep.mubr.f32.mxu0 0.0
    %1086 = vmatmul.mubr.f32.gmra.mrb[0].mxu0 %v998
    %v1087 = vpop.f32.mrb[0].mxu0
    %v1088 = vadd.f32 0.0, %v1087
    %v1089 = vpop.f32.mrb[0].mxu0
    %1090 = vmatprep.mubr.f32.mxu0 0.0
    %1091 = vmatmul.mubr.f32.gmra.mrb[0].mxu0 %v1001
    %v1092 = vpop.f32.mrb[0].mxu0
    %v1093 = vadd.f32 0.0, %v1092
    %v1094 = vpop.f32.mrb[0].mxu0
    %1095 = vmatprep.mubr.f32.mxu0 0.0
    %1096 = vmatmul.mubr.f32.gmra.mrb[0].mxu0 %v1004
    %v1097 = vpop.f32.mrb[0].mxu0
    %v1098 = vadd.f32 0.0, %v1097
    %v1099 = vpop.f32.mrb[0].mxu0
    %1100 = vmatprep.mubr.f32.mxu0 0.0
    %1101 = vmatmul.mubr.f32.gmra.mrb[0].mxu0 %v1007
    %v1102 = vpop.f32.mrb[0].mxu0
    %v1103 = vadd.f32 0.0, %v1102
    %v1104 = vpop.f32.mrb[0].mxu0
    %1105 = vmatprep.mubr.f32.mxu0 0.0
    %1106 = vmatmul.mubr.f32.gmra.mrb[0].mxu0 %v1010
    %v1107 = vpop.f32.mrb[0].mxu0
    %v1108 = vadd.f32 0.0, %v1107
    %v1109 = vpop.f32.mrb[0].mxu0
    %1110 = vmatprep.mubr.f32.mxu0 0.0
    %1111 = vmatmul.mubr.f32.gmra.mrb[0].mxu0 %v1013
    %v1112 = vpop.f32.mrb[0].mxu0
    %v1113 = vadd.f32 0.0, %v1112
    %v1114 = vpop.f32.mrb[0].mxu0
    %1115 = vmatprep.mubr.f32.mxu0 0.0
    %1116 = vmatmul.mubr.f32.gmra.mrb[0].mxu0 %v1016
    %v1117 = vpop.f32.mrb[0].mxu0
    %v1118 = vadd.f32 0.0, %v1117
    %v1119 = vpop.f32.mrb[0].mxu0
    %1120 = vmatprep.mubr.f32.mxu0 0.0
    %1121 = vmatmul.mubr.f32.gmra.mrb[0].mxu0 %v1019
    %v1122 = vpop.f32.mrb[0].mxu0
    %v1123 = vadd.f32 0.0, %v1122
    %v1124 = vpop.f32.mrb[0].mxu0
    %1125 = vdwg.mxu0
    %v1127 = vsel %vm867, %v819, 0
    %v1130 = vsel %vm867, %v820, 0
    %v1133 = vsel %vm867, %v821, 0
    %v1136 = vsel %vm867, %v822, 0
    %v1139 = vsel %vm867, %v823, 0
    %v1142 = vsel %vm867, %v824, 0
    %v1145 = vsel %vm867, %v825, 0
    %v1148 = vsel %vm867, %v826, 0
    %1150 = vmatprep.subr.mxu0 0.0
    %1151 = vmatpush1.msra.mxu0 %v711
    %1152 = vmatprep.subr.mxu0 0.0
    %1153 = vmatpush1.msra.mxu0 0.0
    %1154 = vmatprep.subr.mxu0 0.0
    %1155 = vmatpush1.msra.mxu0 0.0
    %1156 = vmatprep.subr.mxu0 0.0
    %1157 = vmatpush1.msra.mxu0 0.0
    %1158 = vmatprep.subr.mxu0 0.0
    %1159 = vmatpush1.msra.mxu0 0.0
    %1160 = vmatprep.subr.mxu0 0.0
    %1161 = vmatpush1.msra.mxu0 0.0
    %1162 = vmatprep.subr.mxu0 0.0
    %1163 = vmatpush1.msra.mxu0 0.0
    %1164 = vmatprep.subr.mxu0 0.0
    %1165 = vmatpush1.msra.mxu0 0.0
    %1166 = vmatprep.subr.mxu0 0.0
    %1167 = vmatpush1.msra.mxu0 0.0
    %1168 = vmatprep.subr.mxu0 0.0
    %1169 = vmatpush1.msra.mxu0 0.0
    %1170 = vmatprep.subr.mxu0 0.0
    %1171 = vmatpush1.msra.mxu0 0.0
    %1172 = vmatprep.subr.mxu0 0.0
    %1173 = vmatpush1.msra.mxu0 0.0
    %1174 = vmatprep.subr.mxu0 0.0
    %1175 = vmatpush1.msra.mxu0 0.0
    %1176 = vmatprep.subr.mxu0 0.0
    %1177 = vmatpush1.msra.mxu0 0.0
    %1178 = vmatprep.subr.mxu0 0.0
    %1179 = vmatpush1.msra.mxu0 0.0
    %1180 = vmatprep.subr.mxu0 0.0
    %1181 = vmatpush1.msra.mxu0 0.0
    %1182 = vmatprep.subr.mxu0 0.0
    %1183 = vmatpush1.msra.mxu0 0.0
    %1184 = vmatprep.subr.mxu0 0.0
    %1185 = vmatpush1.msra.mxu0 0.0
    %1186 = vmatprep.subr.mxu0 0.0
    %1187 = vmatpush1.msra.mxu0 0.0
    %1188 = vmatprep.subr.mxu0 0.0
    %1189 = vmatpush1.msra.mxu0 0.0
    %1190 = vmatprep.subr.mxu0 0.0
    %1191 = vmatpush1.msra.mxu0 0.0
    %1192 = vmatprep.subr.mxu0 0.0
    %1193 = vmatpush1.msra.mxu0 0.0
    %1194 = vmatprep.subr.mxu0 0.0
    %1195 = vmatpush1.msra.mxu0 0.0
    %1196 = vmatprep.subr.mxu0 0.0
    %1197 = vmatpush1.msra.mxu0 0.0
    %1198 = vmatprep.subr.mxu0 0.0
    %1199 = vmatpush1.msra.mxu0 0.0
    %1200 = vmatprep.subr.mxu0 0.0
    %1201 = vmatpush1.msra.mxu0 0.0
    %1202 = vmatprep.subr.mxu0 0.0
    %1203 = vmatpush1.msra.mxu0 0.0
    %1204 = vmatprep.subr.mxu0 0.0
    %1205 = vmatpush1.msra.mxu0 0.0
    %1206 = vmatprep.subr.mxu0 0.0
    %1207 = vmatpush1.msra.mxu0 0.0
    %1208 = vmatprep.subr.mxu0 0.0
    %1209 = vmatpush1.msra.mxu0 0.0
    %1210 = vmatprep.subr.mxu0 0.0
    %1211 = vmatpush1.msra.mxu0 0.0
    %1212 = vmatprep.subr.mxu0 0.0
    %1213 = vmatpush1.msra.mxu0 0.0
    %1214 = vmatprep.mubr.f32.mxu0 0.0
    %1215 = vmatmul.mubr.f32.gmra.mrb[0].mxu0 %v1127
    %v1216 = vpop.f32.mrb[0].mxu0
    %v1217 = vadd.f32 0.0, %v1216
    %v1218 = vpop.f32.mrb[0].mxu0
    %1219 = vmatprep.mubr.f32.mxu0 0.0
    %1220 = vmatmul.mubr.f32.gmra.mrb[0].mxu0 %v1130
    %v1221 = vpop.f32.mrb[0].mxu0
    %v1222 = vadd.f32 0.0, %v1221
    %v1223 = vpop.f32.mrb[0].mxu0
    %1224 = vmatprep.mubr.f32.mxu0 0.0
    %1225 = vmatmul.mubr.f32.gmra.mrb[0].mxu0 %v1133
    %v1226 = vpop.f32.mrb[0].mxu0
    %v1227 = vadd.f32 0.0, %v1226
    %v1228 = vpop.f32.mrb[0].mxu0
    %1229 = vmatprep.mubr.f32.mxu0 0.0
    %1230 = vmatmul.mubr.f32.gmra.mrb[0].mxu0 %v1136
    %v1231 = vpop.f32.mrb[0].mxu0
    %v1232 = vadd.f32 0.0, %v1231
    %v1233 = vpop.f32.mrb[0].mxu0
    %1234 = vmatprep.mubr.f32.mxu0 0.0
    %1235 = vmatmul.mubr.f32.gmra.mrb[0].mxu0 %v1139
    %v1236 = vpop.f32.mrb[0].mxu0
    %v1237 = vadd.f32 0.0, %v1236
    %v1238 = vpop.f32.mrb[0].mxu0
    %1239 = vmatprep.mubr.f32.mxu0 0.0
    %1240 = vmatmul.mubr.f32.gmra.mrb[0].mxu0 %v1142
    %v1241 = vpop.f32.mrb[0].mxu0
    %v1242 = vadd.f32 0.0, %v1241
    %v1243 = vpop.f32.mrb[0].mxu0
    %1244 = vmatprep.mubr.f32.mxu0 0.0
    %1245 = vmatmul.mubr.f32.gmra.mrb[0].mxu0 %v1145
    %v1246 = vpop.f32.mrb[0].mxu0
    %v1247 = vadd.f32 0.0, %v1246
    %v1248 = vpop.f32.mrb[0].mxu0
    %1249 = vmatprep.mubr.f32.mxu0 0.0
    %1250 = vmatmul.mubr.f32.gmra.mrb[0].mxu0 %v1148
    %v1251 = vpop.f32.mrb[0].mxu0
    %v1252 = vadd.f32 0.0, %v1251
    %v1253 = vpop.f32.mrb[0].mxu0
    %1254 = vdwg.mxu0
    %v1256 = vsel %vm867, %v851, 0
    %v1259 = vsel %vm867, %v852, 0
    %v1262 = vsel %vm867, %v853, 0
    %v1265 = vsel %vm867, %v854, 0
    %v1268 = vsel %vm867, %v855, 0
    %v1271 = vsel %vm867, %v856, 0
    %v1274 = vsel %vm867, %v857, 0
    %v1277 = vsel %vm867, %v858, 0
    %1279 = vmatprep.subr.mxu0 0.0
    %1280 = vmatpush1.msra.mxu0 %v716
    %1281 = vmatprep.subr.mxu0 0.0
    %1282 = vmatpush1.msra.mxu0 0.0
    %1283 = vmatprep.subr.mxu0 0.0
    %1284 = vmatpush1.msra.mxu0 0.0
    %1285 = vmatprep.subr.mxu0 0.0
    %1286 = vmatpush1.msra.mxu0 0.0
    %1287 = vmatprep.subr.mxu0 0.0
    %1288 = vmatpush1.msra.mxu0 0.0
    %1289 = vmatprep.subr.mxu0 0.0
    %1290 = vmatpush1.msra.mxu0 0.0
    %1291 = vmatprep.subr.mxu0 0.0
    %1292 = vmatpush1.msra.mxu0 0.0
    %1293 = vmatprep.subr.mxu0 0.0
    %1294 = vmatpush1.msra.mxu0 0.0
    %1295 = vmatprep.subr.mxu0 0.0
    %1296 = vmatpush1.msra.mxu0 0.0
    %1297 = vmatprep.subr.mxu0 0.0
    %1298 = vmatpush1.msra.mxu0 0.0
    %1299 = vmatprep.subr.mxu0 0.0
    %1300 = vmatpush1.msra.mxu0 0.0
    %1301 = vmatprep.subr.mxu0 0.0
    %1302 = vmatpush1.msra.mxu0 0.0
    %1303 = vmatprep.subr.mxu0 0.0
    %1304 = vmatpush1.msra.mxu0 0.0
    %1305 = vmatprep.subr.mxu0 0.0
    %1306 = vmatpush1.msra.mxu0 0.0
    %1307 = vmatprep.subr.mxu0 0.0
    %1308 = vmatpush1.msra.mxu0 0.0
    %1309 = vmatprep.subr.mxu0 0.0
    %1310 = vmatpush1.msra.mxu0 0.0
    %1311 = vmatprep.subr.mxu0 0.0
    %1312 = vmatpush1.msra.mxu0 0.0
    %1313 = vmatprep.subr.mxu0 0.0
    %1314 = vmatpush1.msra.mxu0 0.0
    %1315 = vmatprep.subr.mxu0 0.0
    %1316 = vmatpush1.msra.mxu0 0.0
    %1317 = vmatprep.subr.mxu0 0.0
    %1318 = vmatpush1.msra.mxu0 0.0
    %1319 = vmatprep.subr.mxu0 0.0
    %1320 = vmatpush1.msra.mxu0 0.0
    %1321 = vmatprep.subr.mxu0 0.0
    %1322 = vmatpush1.msra.mxu0 0.0
    %1323 = vmatprep.subr.mxu0 0.0
    %1324 = vmatpush1.msra.mxu0 0.0
    %1325 = vmatprep.subr.mxu0 0.0
    %1326 = vmatpush1.msra.mxu0 0.0
    %1327 = vmatprep.subr.mxu0 0.0
    %1328 = vmatpush1.msra.mxu0 0.0
    %1329 = vmatprep.subr.mxu0 0.0
    %1330 = vmatpush1.msra.mxu0 0.0
    %1331 = vmatprep.subr.mxu0 0.0
    %1332 = vmatpush1.msra.mxu0 0.0
    %1333 = vmatprep.subr.mxu0 0.0
    %1334 = vmatpush1.msra.mxu0 0.0
    %1335 = vmatprep.subr.mxu0 0.0
    %1336 = vmatpush1.msra.mxu0 0.0
    %1337 = vmatprep.subr.mxu0 0.0
    %1338 = vmatpush1.msra.mxu0 0.0
    %1339 = vmatprep.subr.mxu0 0.0
    %1340 = vmatpush1.msra.mxu0 0.0
    %1341 = vmatprep.subr.mxu0 0.0
    %1342 = vmatpush1.msra.mxu0 0.0
    %1343 = vmatprep.mubr.f32.mxu0 0.0
    %1344 = vmatmul.mubr.f32.gmra.mrb[0].mxu0 %v1256
    %v1345 = vpop.f32.mrb[0].mxu0
    %v1346 = vadd.f32 0.0, %v1345
    %v1347 = vpop.f32.mrb[0].mxu0
    %1348 = vmatprep.mubr.f32.mxu0 0.0
    %1349 = vmatmul.mubr.f32.gmra.mrb[0].mxu0 %v1259
    %v1350 = vpop.f32.mrb[0].mxu0
    %v1351 = vadd.f32 0.0, %v1350
    %v1352 = vpop.f32.mrb[0].mxu0
    %1353 = vmatprep.mubr.f32.mxu0 0.0
    %1354 = vmatmul.mubr.f32.gmra.mrb[0].mxu0 %v1262
    %v1355 = vpop.f32.mrb[0].mxu0
    %v1356 = vadd.f32 0.0, %v1355
    %v1357 = vpop.f32.mrb[0].mxu0
    %1358 = vmatprep.mubr.f32.mxu0 0.0
    %1359 = vmatmul.mubr.f32.gmra.mrb[0].mxu0 %v1265
    %v1360 = vpop.f32.mrb[0].mxu0
    %v1361 = vadd.f32 0.0, %v1360
    %v1362 = vpop.f32.mrb[0].mxu0
    %1363 = vmatprep.mubr.f32.mxu0 0.0
    %1364 = vmatmul.mubr.f32.gmra.mrb[0].mxu0 %v1268
    %v1365 = vpop.f32.mrb[0].mxu0
    %v1366 = vadd.f32 0.0, %v1365
    %v1367 = vpop.f32.mrb[0].mxu0
    %1368 = vmatprep.mubr.f32.mxu0 0.0
    %1369 = vmatmul.mubr.f32.gmra.mrb[0].mxu0 %v1271
    %v1370 = vpop.f32.mrb[0].mxu0
    %v1371 = vadd.f32 0.0, %v1370
    %v1372 = vpop.f32.mrb[0].mxu0
    %1373 = vmatprep.mubr.f32.mxu0 0.0
    %1374 = vmatmul.mubr.f32.gmra.mrb[0].mxu0 %v1274
    %v1375 = vpop.f32.mrb[0].mxu0
    %v1376 = vadd.f32 0.0, %v1375
    %v1377 = vpop.f32.mrb[0].mxu0
    %1378 = vmatprep.mubr.f32.mxu0 0.0
    %1379 = vmatmul.mubr.f32.gmra.mrb[0].mxu0 %v1277
    %v1380 = vpop.f32.mrb[0].mxu0
    %v1381 = vadd.f32 0.0, %v1380
    %v1382 = vpop.f32.mrb[0].mxu0
    %1383 = vdwg.mxu0
    %vm1384 = vcmask 523264
    %v1385 = vsel %vm1384, %v959, -inf
    %1386 = vmax.xlane.f32.xlu0 %v1385
    %v1387 = vpop.xlane.xlu0 %1386
    %v1388 = vsel %vm1384, %v964, -inf
    %1389 = vmax.xlane.f32.xlu0 %v1388
    %v1390 = vpop.xlane.xlu0 %1389
    %v1391 = vsel %vm1384, %v969, -inf
    %1392 = vmax.xlane.f32.xlu0 %v1391
    %v1393 = vpop.xlane.xlu0 %1392
    %v1394 = vsel %vm1384, %v974, -inf
    %1395 = vmax.xlane.f32.xlu0 %v1394
    %v1396 = vpop.xlane.xlu0 %1395
    %v1397 = vsel %vm1384, %v979, -inf
    %1398 = vmax.xlane.f32.xlu0 %v1397
    %v1399 = vpop.xlane.xlu0 %1398
    %v1400 = vsel %vm1384, %v984, -inf
    %1401 = vmax.xlane.f32.xlu0 %v1400
    %v1402 = vpop.xlane.xlu0 %1401
    %v1403 = vsel %vm1384, %v989, -inf
    %1404 = vmax.xlane.f32.xlu0 %v1403
    %v1405 = vpop.xlane.xlu0 %1404
    %v1406 = vsel %vm1384, %v994, -inf
    %1407 = vmax.xlane.f32.xlu0 %v1406
    %v1408 = vpop.xlane.xlu0 %1407
    %v1409 = vsel %vm1384, %v1088, -inf
    %1410 = vmax.xlane.f32.xlu0 %v1409
    %v1411 = vpop.xlane.xlu0 %1410
    %v1412 = vsel %vm1384, %v1093, -inf
    %1413 = vmax.xlane.f32.xlu0 %v1412
    %v1414 = vpop.xlane.xlu0 %1413
    %v1415 = vsel %vm1384, %v1098, -inf
    %1416 = vmax.xlane.f32.xlu0 %v1415
    %v1417 = vpop.xlane.xlu0 %1416
    %v1418 = vsel %vm1384, %v1103, -inf
    %1419 = vmax.xlane.f32.xlu0 %v1418
    %v1420 = vpop.xlane.xlu0 %1419
    %v1421 = vsel %vm1384, %v1108, -inf
    %1422 = vmax.xlane.f32.xlu0 %v1421
    %v1423 = vpop.xlane.xlu0 %1422
    %v1424 = vsel %vm1384, %v1113, -inf
    %1425 = vmax.xlane.f32.xlu0 %v1424
    %v1426 = vpop.xlane.xlu0 %1425
    %v1427 = vsel %vm1384, %v1118, -inf
    %1428 = vmax.xlane.f32.xlu0 %v1427
    %v1429 = vpop.xlane.xlu0 %1428
    %v1430 = vsel %vm1384, %v1123, -inf
    %1431 = vmax.xlane.f32.xlu0 %v1430
    %v1432 = vpop.xlane.xlu0 %1431
    %v1433 = vsel %vm1384, %v1217, -inf
    %1434 = vmax.xlane.f32.xlu0 %v1433
    %v1435 = vpop.xlane.xlu0 %1434
    %v1436 = vsel %vm1384, %v1222, -inf
    %1437 = vmax.xlane.f32.xlu0 %v1436
    %v1438 = vpop.xlane.xlu0 %1437
    %v1439 = vsel %vm1384, %v1227, -inf
    %1440 = vmax.xlane.f32.xlu0 %v1439
    %v1441 = vpop.xlane.xlu0 %1440
    %v1442 = vsel %vm1384, %v1232, -inf
    %1443 = vmax.xlane.f32.xlu0 %v1442
    %v1444 = vpop.xlane.xlu0 %1443
    %v1445 = vsel %vm1384, %v1237, -inf
    %1446 = vmax.xlane.f32.xlu0 %v1445
    %v1447 = vpop.xlane.xlu0 %1446
    %v1448 = vsel %vm1384, %v1242, -inf
    %1449 = vmax.xlane.f32.xlu0 %v1448
    %v1450 = vpop.xlane.xlu0 %1449
    %v1451 = vsel %vm1384, %v1247, -inf
    %1452 = vmax.xlane.f32.xlu0 %v1451
    %v1453 = vpop.xlane.xlu0 %1452
    %v1454 = vsel %vm1384, %v1252, -inf
    %1455 = vmax.xlane.f32.xlu0 %v1454
    %v1456 = vpop.xlane.xlu0 %1455
    %v1457 = vsel %vm1384, %v1346, -inf
    %1458 = vmax.xlane.f32.xlu0 %v1457
    %v1459 = vpop.xlane.xlu0 %1458
    %v1460 = vsel %vm1384, %v1351, -inf
    %1461 = vmax.xlane.f32.xlu0 %v1460
    %v1462 = vpop.xlane.xlu0 %1461
    %v1463 = vsel %vm1384, %v1356, -inf
    %1464 = vmax.xlane.f32.xlu0 %v1463
    %v1465 = vpop.xlane.xlu0 %1464
    %v1466 = vsel %vm1384, %v1361, -inf
    %1467 = vmax.xlane.f32.xlu0 %v1466
    %v1468 = vpop.xlane.xlu0 %1467
    %v1469 = vsel %vm1384, %v1366, -inf
    %1470 = vmax.xlane.f32.xlu0 %v1469
    %v1471 = vpop.xlane.xlu0 %1470
    %v1472 = vsel %vm1384, %v1371, -inf
    %1473 = vmax.xlane.f32.xlu0 %v1472
    %v1474 = vpop.xlane.xlu0 %1473
    %v1475 = vsel %vm1384, %v1376, -inf
    %1476 = vmax.xlane.f32.xlu0 %v1475
    %v1477 = vpop.xlane.xlu0 %1476
    %v1478 = vsel %vm1384, %v1381, -inf
    %1479 = vmax.xlane.f32.xlu0 %v1478
    %v1480 = vpop.xlane.xlu0 %1479
    %v1481 = vsub.f32 %v959, %v1387
    %v1482 = vsub.f32 %v964, %v1390
    %v1483 = vsub.f32 %v969, %v1393
    %v1484 = vsub.f32 %v974, %v1396
    %v1485 = vsub.f32 %v979, %v1399
    %v1486 = vsub.f32 %v984, %v1402
    %v1487 = vsub.f32 %v989, %v1405
    %v1488 = vsub.f32 %v994, %v1408
    %v1489 = vsub.f32 %v1088, %v1411
    %v1490 = vsub.f32 %v1093, %v1414
    %v1491 = vsub.f32 %v1098, %v1417
    %v1492 = vsub.f32 %v1103, %v1420
    %v1493 = vsub.f32 %v1108, %v1423
    %v1494 = vsub.f32 %v1113, %v1426
    %v1495 = vsub.f32 %v1118, %v1429
    %v1496 = vsub.f32 %v1123, %v1432
    %v1497 = vsub.f32 %v1217, %v1435
    %v1498 = vsub.f32 %v1222, %v1438
    %v1499 = vsub.f32 %v1227, %v1441
    %v1500 = vsub.f32 %v1232, %v1444
    %v1501 = vsub.f32 %v1237, %v1447
    %v1502 = vsub.f32 %v1242, %v1450
    %v1503 = vsub.f32 %v1247, %v1453
    %v1504 = vsub.f32 %v1252, %v1456
    %v1505 = vsub.f32 %v1346, %v1459
    %v1506 = vsub.f32 %v1351, %v1462
    %v1507 = vsub.f32 %v1356, %v1465
    %v1508 = vsub.f32 %v1361, %v1468
    %v1509 = vsub.f32 %v1366, %v1471
    %v1510 = vsub.f32 %v1371, %v1474
    %v1511 = vsub.f32 %v1376, %v1477
    %v1512 = vsub.f32 %v1381, %v1480
    %v1513 = vmul.f32 %v1481, 1.442695
    %v1514 = vpow.pop %v1513
    %v1515 = vmul.f32 %v1482, 1.442695
    %v1516 = vpow.pop %v1515
    %v1517 = vmul.f32 %v1483, 1.442695
    %v1518 = vpow.pop %v1517
    %v1519 = vmul.f32 %v1484, 1.442695
    %v1520 = vpow.pop %v1519
    %v1521 = vmul.f32 %v1485, 1.442695
    %v1522 = vpow.pop %v1521
    %v1523 = vmul.f32 %v1486, 1.442695
    %v1524 = vpow.pop %v1523
    %v1525 = vmul.f32 %v1487, 1.442695
    %v1526 = vpow.pop %v1525
    %v1527 = vmul.f32 %v1488, 1.442695
    %v1528 = vpow.pop %v1527
    %v1529 = vmul.f32 %v1489, 1.442695
    %v1530 = vpow.pop %v1529
    %v1531 = vmul.f32 %v1490, 1.442695
    %v1532 = vpow.pop %v1531
    %v1533 = vmul.f32 %v1491, 1.442695
    %v1534 = vpow.pop %v1533
    %v1535 = vmul.f32 %v1492, 1.442695
    %v1536 = vpow.pop %v1535
    %v1537 = vmul.f32 %v1493, 1.442695
    %v1538 = vpow.pop %v1537
    %v1539 = vmul.f32 %v1494, 1.442695
    %v1540 = vpow.pop %v1539
    %v1541 = vmul.f32 %v1495, 1.442695
    %v1542 = vpow.pop %v1541
    %v1543 = vmul.f32 %v1496, 1.442695
    %v1544 = vpow.pop %v1543
    %v1545 = vmul.f32 %v1497, 1.442695
    %v1546 = vpow.pop %v1545
    %v1547 = vmul.f32 %v1498, 1.442695
    %v1548 = vpow.pop %v1547
    %v1549 = vmul.f32 %v1499, 1.442695
    %v1550 = vpow.pop %v1549
    %v1551 = vmul.f32 %v1500, 1.442695
    %v1552 = vpow.pop %v1551
    %v1553 = vmul.f32 %v1501, 1.442695
    %v1554 = vpow.pop %v1553
    %v1555 = vmul.f32 %v1502, 1.442695
    %v1556 = vpow.pop %v1555
    %v1557 = vmul.f32 %v1503, 1.442695
    %v1558 = vpow.pop %v1557
    %v1559 = vmul.f32 %v1504, 1.442695
    %v1560 = vpow.pop %v1559
    %v1561 = vmul.f32 %v1505, 1.442695
    %v1562 = vpow.pop %v1561
    %v1563 = vmul.f32 %v1506, 1.442695
    %v1564 = vpow.pop %v1563
    %v1565 = vmul.f32 %v1507, 1.442695
    %v1566 = vpow.pop %v1565
    %v1567 = vmul.f32 %v1508, 1.442695
    %v1568 = vpow.pop %v1567
    %v1569 = vmul.f32 %v1509, 1.442695
    %v1570 = vpow.pop %v1569
    %v1571 = vmul.f32 %v1510, 1.442695
    %v1572 = vpow.pop %v1571
    %v1573 = vmul.f32 %v1511, 1.442695
    %v1574 = vpow.pop %v1573
    %v1575 = vmul.f32 %v1512, 1.442695
    %v1576 = vpow.pop %v1575
    %v1577 = vsel %vm1384, %v1514, 0.0
    %1578 = vadd.xlane.f32.xlu0 %v1577
    %v1579 = vpop.xlane.xlu0 %1578
    %v1580 = vsel %vm1384, %v1516, 0.0
    %1581 = vadd.xlane.f32.xlu0 %v1580
    %v1582 = vpop.xlane.xlu0 %1581
    %v1583 = vsel %vm1384, %v1518, 0.0
    %1584 = vadd.xlane.f32.xlu0 %v1583
    %v1585 = vpop.xlane.xlu0 %1584
    %v1586 = vsel %vm1384, %v1520, 0.0
    %1587 = vadd.xlane.f32.xlu0 %v1586
    %v1588 = vpop.xlane.xlu0 %1587
    %v1589 = vsel %vm1384, %v1522, 0.0
    %1590 = vadd.xlane.f32.xlu0 %v1589
    %v1591 = vpop.xlane.xlu0 %1590
    %v1592 = vsel %vm1384, %v1524, 0.0
    %1593 = vadd.xlane.f32.xlu0 %v1592
    %v1594 = vpop.xlane.xlu0 %1593
    %v1595 = vsel %vm1384, %v1526, 0.0
    %1596 = vadd.xlane.f32.xlu0 %v1595
    %v1597 = vpop.xlane.xlu0 %1596
    %v1598 = vsel %vm1384, %v1528, 0.0
    %1599 = vadd.xlane.f32.xlu0 %v1598
    %v1600 = vpop.xlane.xlu0 %1599
    %v1601 = vsel %vm1384, %v1530, 0.0
    %1602 = vadd.xlane.f32.xlu0 %v1601
    %v1603 = vpop.xlane.xlu0 %1602
    %v1604 = vsel %vm1384, %v1532, 0.0
    %1605 = vadd.xlane.f32.xlu0 %v1604
    %v1606 = vpop.xlane.xlu0 %1605
    %v1607 = vsel %vm1384, %v1534, 0.0
    %1608 = vadd.xlane.f32.xlu0 %v1607
    %v1609 = vpop.xlane.xlu0 %1608
    %v1610 = vsel %vm1384, %v1536, 0.0
    %1611 = vadd.xlane.f32.xlu0 %v1610
    %v1612 = vpop.xlane.xlu0 %1611
    %v1613 = vsel %vm1384, %v1538, 0.0
    %1614 = vadd.xlane.f32.xlu0 %v1613
    %v1615 = vpop.xlane.xlu0 %1614
    %v1616 = vsel %vm1384, %v1540, 0.0
    %1617 = vadd.xlane.f32.xlu0 %v1616
    %v1618 = vpop.xlane.xlu0 %1617
    %v1619 = vsel %vm1384, %v1542, 0.0
    %1620 = vadd.xlane.f32.xlu0 %v1619
    %v1621 = vpop.xlane.xlu0 %1620
    %v1622 = vsel %vm1384, %v1544, 0.0
    %1623 = vadd.xlane.f32.xlu0 %v1622
    %v1624 = vpop.xlane.xlu0 %1623
    %v1625 = vsel %vm1384, %v1546, 0.0
    %1626 = vadd.xlane.f32.xlu0 %v1625
    %v1627 = vpop.xlane.xlu0 %1626
    %v1628 = vsel %vm1384, %v1548, 0.0
    %1629 = vadd.xlane.f32.xlu0 %v1628
    %v1630 = vpop.xlane.xlu0 %1629
    %v1631 = vsel %vm1384, %v1550, 0.0
    %1632 = vadd.xlane.f32.xlu0 %v1631
    %v1633 = vpop.xlane.xlu0 %1632
    %v1634 = vsel %vm1384, %v1552, 0.0
    %1635 = vadd.xlane.f32.xlu0 %v1634
    %v1636 = vpop.xlane.xlu0 %1635
    %v1637 = vsel %vm1384, %v1554, 0.0
    %1638 = vadd.xlane.f32.xlu0 %v1637
    %v1639 = vpop.xlane.xlu0 %1638
    %v1640 = vsel %vm1384, %v1556, 0.0
    %1641 = vadd.xlane.f32.xlu0 %v1640
    %v1642 = vpop.xlane.xlu0 %1641
    %v1643 = vsel %vm1384, %v1558, 0.0
    %1644 = vadd.xlane.f32.xlu0 %v1643
    %v1645 = vpop.xlane.xlu0 %1644
    %v1646 = vsel %vm1384, %v1560, 0.0
    %1647 = vadd.xlane.f32.xlu0 %v1646
    %v1648 = vpop.xlane.xlu0 %1647
    %v1649 = vsel %vm1384, %v1562, 0.0
    %1650 = vadd.xlane.f32.xlu0 %v1649
    %v1651 = vpop.xlane.xlu0 %1650
    %v1652 = vsel %vm1384, %v1564, 0.0
    %1653 = vadd.xlane.f32.xlu0 %v1652
    %v1654 = vpop.xlane.xlu0 %1653
    %v1655 = vsel %vm1384, %v1566, 0.0
    %1656 = vadd.xlane.f32.xlu0 %v1655
    %v1657 = vpop.xlane.xlu0 %1656
    %v1658 = vsel %vm1384, %v1568, 0.0
    %1659 = vadd.xlane.f32.xlu0 %v1658
    %v1660 = vpop.xlane.xlu0 %1659
    %v1661 = vsel %vm1384, %v1570, 0.0
    %1662 = vadd.xlane.f32.xlu0 %v1661
    %v1663 = vpop.xlane.xlu0 %1662
    %v1664 = vsel %vm1384, %v1572, 0.0
    %1665 = vadd.xlane.f32.xlu0 %v1664
    %v1666 = vpop.xlane.xlu0 %1665
    %v1667 = vsel %vm1384, %v1574, 0.0
    %1668 = vadd.xlane.f32.xlu0 %v1667
    %v1669 = vpop.xlane.xlu0 %1668
    %v1670 = vsel %vm1384, %v1576, 0.0
    %1671 = vadd.xlane.f32.xlu0 %v1670
    %v1672 = vpop.xlane.xlu0 %1671
    %v1674 = vsel %vm1384, %v721, 0
    %v1677 = vsel %vm1384, %v1514, 0
    %v1680 = vsel %vm1384, %v1516, 0
    %v1683 = vsel %vm1384, %v1518, 0
    %v1686 = vsel %vm1384, %v1520, 0
    %v1689 = vsel %vm1384, %v1522, 0
    %v1692 = vsel %vm1384, %v1524, 0
    %v1695 = vsel %vm1384, %v1526, 0
    %v1698 = vsel %vm1384, %v1528, 0
    %1700 = vmatprep.subr.mxu0 0.0
    %1701 = vmatpush1.xpose.msra.mxu0 %v1677
    %1702 = vmatprep.subr.mxu0 0.0
    %1703 = vmatpush1.xpose.msra.mxu0 %v1680
    %1704 = vmatprep.subr.mxu0 0.0
    %1705 = vmatpush1.xpose.msra.mxu0 %v1683
    %1706 = vmatprep.subr.mxu0 0.0
    %1707 = vmatpush1.xpose.msra.mxu0 %v1686
    %1708 = vmatprep.subr.mxu0 0.0
    %1709 = vmatpush1.xpose.msra.mxu0 %v1689
    %1710 = vmatprep.subr.mxu0 0.0
    %1711 = vmatpush1.xpose.msra.mxu0 %v1692
    %1712 = vmatprep.subr.mxu0 0.0
    %1713 = vmatpush1.xpose.msra.mxu0 %v1695
    %1714 = vmatprep.subr.mxu0 0.0
    %1715 = vmatpush1.xpose.msra.mxu0 %v1698
    %1716 = vmatprep.subr.mxu0 0.0
    %1717 = vmatpush1.xpose.msra.mxu0 0.0
    %1718 = vmatprep.subr.mxu0 0.0
    %1719 = vmatpush1.xpose.msra.mxu0 0.0
    %1720 = vmatprep.subr.mxu0 0.0
    %1721 = vmatpush1.xpose.msra.mxu0 0.0
    %1722 = vmatprep.subr.mxu0 0.0
    %1723 = vmatpush1.xpose.msra.mxu0 0.0
    %1724 = vmatprep.subr.mxu0 0.0
    %1725 = vmatpush1.xpose.msra.mxu0 0.0
    %1726 = vmatprep.subr.mxu0 0.0
    %1727 = vmatpush1.xpose.msra.mxu0 0.0
    %1728 = vmatprep.subr.mxu0 0.0
    %1729 = vmatpush1.xpose.msra.mxu0 0.0
    %1730 = vmatprep.subr.mxu0 0.0
    %1731 = vmatpush1.xpose.msra.mxu0 0.0
    %1732 = vmatprep.subr.mxu0 0.0
    %1733 = vmatpush1.xpose.msra.mxu0 0.0
    %1734 = vmatprep.subr.mxu0 0.0
    %1735 = vmatpush1.xpose.msra.mxu0 0.0
    %1736 = vmatprep.subr.mxu0 0.0
    %1737 = vmatpush1.xpose.msra.mxu0 0.0
    %1738 = vmatprep.subr.mxu0 0.0
    %1739 = vmatpush1.xpose.msra.mxu0 0.0
    %1740 = vmatprep.subr.mxu0 0.0
    %1741 = vmatpush1.xpose.msra.mxu0 0.0
    %1742 = vmatprep.subr.mxu0 0.0
    %1743 = vmatpush1.xpose.msra.mxu0 0.0
    %1744 = vmatprep.subr.mxu0 0.0
    %1745 = vmatpush1.xpose.msra.mxu0 0.0
    %1746 = vmatprep.subr.mxu0 0.0
    %1747 = vmatpush1.xpose.msra.mxu0 0.0
    %1748 = vmatprep.subr.mxu0 0.0
    %1749 = vmatpush1.xpose.msra.mxu0 0.0
    %1750 = vmatprep.subr.mxu0 0.0
    %1751 = vmatpush1.xpose.msra.mxu0 0.0
    %1752 = vmatprep.subr.mxu0 0.0
    %1753 = vmatpush1.xpose.msra.mxu0 0.0
    %1754 = vmatprep.subr.mxu0 0.0
    %1755 = vmatpush1.xpose.msra.mxu0 0.0
    %1756 = vmatprep.subr.mxu0 0.0
    %1757 = vmatpush1.xpose.msra.mxu0 0.0
    %1758 = vmatprep.subr.mxu0 0.0
    %1759 = vmatpush1.xpose.msra.mxu0 0.0
    %1760 = vmatprep.subr.mxu0 0.0
    %1761 = vmatpush1.xpose.msra.mxu0 0.0
    %1762 = vmatprep.subr.mxu0 0.0
    %1763 = vmatpush1.xpose.msra.mxu0 0.0
    %1764 = vmatprep.mubr.f32.mxu0 0.0
    %1765 = vmatmul.mubr.f32.gmra.mrb[0].mxu0 %v1674
    %v1766 = vpop.f32.mrb[0].mxu0
    %v1767 = vadd.f32 0.0, %v1766
    %v1768 = vpop.f32.mrb[0].mxu0
    %1769 = vdwg.mxu0
    %v1771 = vsel %vm1384, %v726, 0
    %v1774 = vsel %vm1384, %v1530, 0
    %v1777 = vsel %vm1384, %v1532, 0
    %v1780 = vsel %vm1384, %v1534, 0
    %v1783 = vsel %vm1384, %v1536, 0
    %v1786 = vsel %vm1384, %v1538, 0
    %v1789 = vsel %vm1384, %v1540, 0
    %v1792 = vsel %vm1384, %v1542, 0
    %v1795 = vsel %vm1384, %v1544, 0
    %1797 = vmatprep.subr.mxu0 0.0
    %1798 = vmatpush1.xpose.msra.mxu0 %v1774
    %1799 = vmatprep.subr.mxu0 0.0
    %1800 = vmatpush1.xpose.msra.mxu0 %v1777
    %1801 = vmatprep.subr.mxu0 0.0
    %1802 = vmatpush1.xpose.msra.mxu0 %v1780
    %1803 = vmatprep.subr.mxu0 0.0
    %1804 = vmatpush1.xpose.msra.mxu0 %v1783
    %1805 = vmatprep.subr.mxu0 0.0
    %1806 = vmatpush1.xpose.msra.mxu0 %v1786
    %1807 = vmatprep.subr.mxu0 0.0
    %1808 = vmatpush1.xpose.msra.mxu0 %v1789
    %1809 = vmatprep.subr.mxu0 0.0
    %1810 = vmatpush1.xpose.msra.mxu0 %v1792
    %1811 = vmatprep.subr.mxu0 0.0
    %1812 = vmatpush1.xpose.msra.mxu0 %v1795
    %1813 = vmatprep.subr.mxu0 0.0
    %1814 = vmatpush1.xpose.msra.mxu0 0.0
    %1815 = vmatprep.subr.mxu0 0.0
    %1816 = vmatpush1.xpose.msra.mxu0 0.0
    %1817 = vmatprep.subr.mxu0 0.0
    %1818 = vmatpush1.xpose.msra.mxu0 0.0
    %1819 = vmatprep.subr.mxu0 0.0
    %1820 = vmatpush1.xpose.msra.mxu0 0.0
    %1821 = vmatprep.subr.mxu0 0.0
    %1822 = vmatpush1.xpose.msra.mxu0 0.0
    %1823 = vmatprep.subr.mxu0 0.0
    %1824 = vmatpush1.xpose.msra.mxu0 0.0
    %1825 = vmatprep.subr.mxu0 0.0
    %1826 = vmatpush1.xpose.msra.mxu0 0.0
    %1827 = vmatprep.subr.mxu0 0.0
    %1828 = vmatpush1.xpose.msra.mxu0 0.0
    %1829 = vmatprep.subr.mxu0 0.0
    %1830 = vmatpush1.xpose.msra.mxu0 0.0
    %1831 = vmatprep.subr.mxu0 0.0
    %1832 = vmatpush1.xpose.msra.mxu0 0.0
    %1833 = vmatprep.subr.mxu0 0.0
    %1834 = vmatpush1.xpose.msra.mxu0 0.0
    %1835 = vmatprep.subr.mxu0 0.0
    %1836 = vmatpush1.xpose.msra.mxu0 0.0
    %1837 = vmatprep.subr.mxu0 0.0
    %1838 = vmatpush1.xpose.msra.mxu0 0.0
    %1839 = vmatprep.subr.mxu0 0.0
    %1840 = vmatpush1.xpose.msra.mxu0 0.0
    %1841 = vmatprep.subr.mxu0 0.0
    %1842 = vmatpush1.xpose.msra.mxu0 0.0
    %1843 = vmatprep.subr.mxu0 0.0
    %1844 = vmatpush1.xpose.msra.mxu0 0.0
    %1845 = vmatprep.subr.mxu0 0.0
    %1846 = vmatpush1.xpose.msra.mxu0 0.0
    %1847 = vmatprep.subr.mxu0 0.0
    %1848 = vmatpush1.xpose.msra.mxu0 0.0
    %1849 = vmatprep.subr.mxu0 0.0
    %1850 = vmatpush1.xpose.msra.mxu0 0.0
    %1851 = vmatprep.subr.mxu0 0.0
    %1852 = vmatpush1.xpose.msra.mxu0 0.0
    %1853 = vmatprep.subr.mxu0 0.0
    %1854 = vmatpush1.xpose.msra.mxu0 0.0
    %1855 = vmatprep.subr.mxu0 0.0
    %1856 = vmatpush1.xpose.msra.mxu0 0.0
    %1857 = vmatprep.subr.mxu0 0.0
    %1858 = vmatpush1.xpose.msra.mxu0 0.0
    %1859 = vmatprep.subr.mxu0 0.0
    %1860 = vmatpush1.xpose.msra.mxu0 0.0
    %1861 = vmatprep.mubr.f32.mxu0 0.0
    %1862 = vmatmul.mubr.f32.gmra.mrb[0].mxu0 %v1771
    %v1863 = vpop.f32.mrb[0].mxu0
    %v1864 = vadd.f32 0.0, %v1863
    %v1865 = vpop.f32.mrb[0].mxu0
    %1866 = vdwg.mxu0
    %v1868 = vsel %vm1384, %v731, 0
    %v1871 = vsel %vm1384, %v1546, 0
    %v1874 = vsel %vm1384, %v1548, 0
    %v1877 = vsel %vm1384, %v1550, 0
    %v1880 = vsel %vm1384, %v1552, 0
    %v1883 = vsel %vm1384, %v1554, 0
    %v1886 = vsel %vm1384, %v1556, 0
    %v1889 = vsel %vm1384, %v1558, 0
    %v1892 = vsel %vm1384, %v1560, 0
    %1894 = vmatprep.subr.mxu0 0.0
    %1895 = vmatpush1.xpose.msra.mxu0 %v1871
    %1896 = vmatprep.subr.mxu0 0.0
    %1897 = vmatpush1.xpose.msra.mxu0 %v1874
    %1898 = vmatprep.subr.mxu0 0.0
    %1899 = vmatpush1.xpose.msra.mxu0 %v1877
    %1900 = vmatprep.subr.mxu0 0.0
    %1901 = vmatpush1.xpose.msra.mxu0 %v1880
    %1902 = vmatprep.subr.mxu0 0.0
    %1903 = vmatpush1.xpose.msra.mxu0 %v1883
    %1904 = vmatprep.subr.mxu0 0.0
    %1905 = vmatpush1.xpose.msra.mxu0 %v1886
    %1906 = vmatprep.subr.mxu0 0.0
    %1907 = vmatpush1.xpose.msra.mxu0 %v1889
    %1908 = vmatprep.subr.mxu0 0.0
    %1909 = vmatpush1.xpose.msra.mxu0 %v1892
    %1910 = vmatprep.subr.mxu0 0.0
    %1911 = vmatpush1.xpose.msra.mxu0 0.0
    %1912 = vmatprep.subr.mxu0 0.0
    %1913 = vmatpush1.xpose.msra.mxu0 0.0
    %1914 = vmatprep.subr.mxu0 0.0
    %1915 = vmatpush1.xpose.msra.mxu0 0.0
    %1916 = vmatprep.subr.mxu0 0.0
    %1917 = vmatpush1.xpose.msra.mxu0 0.0
    %1918 = vmatprep.subr.mxu0 0.0
    %1919 = vmatpush1.xpose.msra.mxu0 0.0
    %1920 = vmatprep.subr.mxu0 0.0
    %1921 = vmatpush1.xpose.msra.mxu0 0.0
    %1922 = vmatprep.subr.mxu0 0.0
    %1923 = vmatpush1.xpose.msra.mxu0 0.0
    %1924 = vmatprep.subr.mxu0 0.0
    %1925 = vmatpush1.xpose.msra.mxu0 0.0
    %1926 = vmatprep.subr.mxu0 0.0
    %1927 = vmatpush1.xpose.msra.mxu0 0.0
    %1928 = vmatprep.subr.mxu0 0.0
    %1929 = vmatpush1.xpose.msra.mxu0 0.0
    %1930 = vmatprep.subr.mxu0 0.0
    %1931 = vmatpush1.xpose.msra.mxu0 0.0
    %1932 = vmatprep.subr.mxu0 0.0
    %1933 = vmatpush1.xpose.msra.mxu0 0.0
    %1934 = vmatprep.subr.mxu0 0.0
    %1935 = vmatpush1.xpose.msra.mxu0 0.0
    %1936 = vmatprep.subr.mxu0 0.0
    %1937 = vmatpush1.xpose.msra.mxu0 0.0
    %1938 = vmatprep.subr.mxu0 0.0
    %1939 = vmatpush1.xpose.msra.mxu0 0.0
    %1940 = vmatprep.subr.mxu0 0.0
    %1941 = vmatpush1.xpose.msra.mxu0 0.0
    %1942 = vmatprep.subr.mxu0 0.0
    %1943 = vmatpush1.xpose.msra.mxu0 0.0
    %1944 = vmatprep.subr.mxu0 0.0
    %1945 = vmatpush1.xpose.msra.mxu0 0.0
    %1946 = vmatprep.subr.mxu0 0.0
    %1947 = vmatpush1.xpose.msra.mxu0 0.0
    %1948 = vmatprep.subr.mxu0 0.0
    %1949 = vmatpush1.xpose.msra.mxu0 0.0
    %1950 = vmatprep.subr.mxu0 0.0
    %1951 = vmatpush1.xpose.msra.mxu0 0.0
    %1952 = vmatprep.subr.mxu0 0.0
    %1953 = vmatpush1.xpose.msra.mxu0 0.0
    %1954 = vmatprep.subr.mxu0 0.0
    %1955 = vmatpush1.xpose.msra.mxu0 0.0
    %1956 = vmatprep.subr.mxu0 0.0
    %1957 = vmatpush1.xpose.msra.mxu0 0.0
    %1958 = vmatprep.mubr.f32.mxu0 0.0
    %1959 = vmatmul.mubr.f32.gmra.mrb[0].mxu0 %v1868
    %v1960 = vpop.f32.mrb[0].mxu0
    %v1961 = vadd.f32 0.0, %v1960
    %v1962 = vpop.f32.mrb[0].mxu0
    %1963 = vdwg.mxu0
    %v1965 = vsel %vm1384, %v736, 0
    %v1968 = vsel %vm1384, %v1562, 0
    %v1971 = vsel %vm1384, %v1564, 0
    %v1974 = vsel %vm1384, %v1566, 0
    %v1977 = vsel %vm1384, %v1568, 0
    %v1980 = vsel %vm1384, %v1570, 0
    %v1983 = vsel %vm1384, %v1572, 0
    %v1986 = vsel %vm1384, %v1574, 0
    %v1989 = vsel %vm1384, %v1576, 0
    %1991 = vmatprep.subr.mxu0 0.0
    %1992 = vmatpush1.xpose.msra.mxu0 %v1968
    %1993 = vmatprep.subr.mxu0 0.0
    %1994 = vmatpush1.xpose.msra.mxu0 %v1971
    %1995 = vmatprep.subr.mxu0 0.0
    %1996 = vmatpush1.xpose.msra.mxu0 %v1974
    %1997 = vmatprep.subr.mxu0 0.0
    %1998 = vmatpush1.xpose.msra.mxu0 %v1977
    %1999 = vmatprep.subr.mxu0 0.0
    %2000 = vmatpush1.xpose.msra.mxu0 %v1980
    %2001 = vmatprep.subr.mxu0 0.0
    %2002 = vmatpush1.xpose.msra.mxu0 %v1983
    %2003 = vmatprep.subr.mxu0 0.0
    %2004 = vmatpush1.xpose.msra.mxu0 %v1986
    %2005 = vmatprep.subr.mxu0 0.0
    %2006 = vmatpush1.xpose.msra.mxu0 %v1989
    %2007 = vmatprep.subr.mxu0 0.0
    %2008 = vmatpush1.xpose.msra.mxu0 0.0
    %2009 = vmatprep.subr.mxu0 0.0
    %2010 = vmatpush1.xpose.msra.mxu0 0.0
    %2011 = vmatprep.subr.mxu0 0.0
    %2012 = vmatpush1.xpose.msra.mxu0 0.0
    %2013 = vmatprep.subr.mxu0 0.0
    %2014 = vmatpush1.xpose.msra.mxu0 0.0
    %2015 = vmatprep.subr.mxu0 0.0
    %2016 = vmatpush1.xpose.msra.mxu0 0.0
    %2017 = vmatprep.subr.mxu0 0.0
    %2018 = vmatpush1.xpose.msra.mxu0 0.0
    %2019 = vmatprep.subr.mxu0 0.0
    %2020 = vmatpush1.xpose.msra.mxu0 0.0
    %2021 = vmatprep.subr.mxu0 0.0
    %2022 = vmatpush1.xpose.msra.mxu0 0.0
    %2023 = vmatprep.subr.mxu0 0.0
    %2024 = vmatpush1.xpose.msra.mxu0 0.0
    %2025 = vmatprep.subr.mxu0 0.0
    %2026 = vmatpush1.xpose.msra.mxu0 0.0
    %2027 = vmatprep.subr.mxu0 0.0
    %2028 = vmatpush1.xpose.msra.mxu0 0.0
    %2029 = vmatprep.subr.mxu0 0.0
    %2030 = vmatpush1.xpose.msra.mxu0 0.0
    %2031 = vmatprep.subr.mxu0 0.0
    %2032 = vmatpush1.xpose.msra.mxu0 0.0
    %2033 = vmatprep.subr.mxu0 0.0
    %2034 = vmatpush1.xpose.msra.mxu0 0.0
    %2035 = vmatprep.subr.mxu0 0.0
    %2036 = vmatpush1.xpose.msra.mxu0 0.0
    %2037 = vmatprep.subr.mxu0 0.0
    %2038 = vmatpush1.xpose.msra.mxu0 0.0
    %2039 = vmatprep.subr.mxu0 0.0
    %2040 = vmatpush1.xpose.msra.mxu0 0.0
    %2041 = vmatprep.subr.mxu0 0.0
    %2042 = vmatpush1.xpose.msra.mxu0 0.0
    %2043 = vmatprep.subr.mxu0 0.0
    %2044 = vmatpush1.xpose.msra.mxu0 0.0
    %2045 = vmatprep.subr.mxu0 0.0
    %2046 = vmatpush1.xpose.msra.mxu0 0.0
    %2047 = vmatprep.subr.mxu0 0.0
    %2048 = vmatpush1.xpose.msra.mxu0 0.0
    %2049 = vmatprep.subr.mxu0 0.0
    %2050 = vmatpush1.xpose.msra.mxu0 0.0
    %2051 = vmatprep.subr.mxu0 0.0
    %2052 = vmatpush1.xpose.msra.mxu0 0.0
    %2053 = vmatprep.subr.mxu0 0.0
    %2054 = vmatpush1.xpose.msra.mxu0 0.0
    %2055 = vmatprep.mubr.f32.mxu0 0.0
    %2056 = vmatmul.mubr.f32.gmra.mrb[0].mxu0 %v1965
    %v2057 = vpop.f32.mrb[0].mxu0
    %v2058 = vadd.f32 0.0, %v2057
    %v2059 = vpop.f32.mrb[0].mxu0
    %2060 = vdwg.mxu0
    %v2061 = vrcp.pop %v1579
    %v2062 = vrcp.pop %v1582
    %v2063 = vrcp.pop %v1585
    %v2064 = vrcp.pop %v1588
    %v2065 = vrcp.pop %v1591
    %v2066 = vrcp.pop %v1594
    %v2067 = vrcp.pop %v1597
    %v2068 = vrcp.pop %v1600
    %v2069 = vrcp.pop %v1603
    %v2070 = vrcp.pop %v1606
    %v2071 = vrcp.pop %v1609
    %v2072 = vrcp.pop %v1612
    %v2073 = vrcp.pop %v1615
    %v2074 = vrcp.pop %v1618
    %v2075 = vrcp.pop %v1621
    %v2076 = vrcp.pop %v1624
    %v2077 = vrcp.pop %v1627
    %v2078 = vrcp.pop %v1630
    %v2079 = vrcp.pop %v1633
    %v2080 = vrcp.pop %v1636
    %v2081 = vrcp.pop %v1639
    %v2082 = vrcp.pop %v1642
    %v2083 = vrcp.pop %v1645
    %v2084 = vrcp.pop %v1648
    %v2085 = vrcp.pop %v1651
    %v2086 = vrcp.pop %v1654
    %v2087 = vrcp.pop %v1657
    %v2088 = vrcp.pop %v1660
    %v2089 = vrcp.pop %v1663
    %v2090 = vrcp.pop %v1666
    %v2091 = vrcp.pop %v1669
    %v2092 = vrcp.pop %v1672
    %v2125 = vlaneseq
    %v2126 = vand.u32 %v2125, 127
    %v2127 = vlaneseq
    %v2128 = vshrl.u32 %v2127, 7
    %v2129 = vsub.s32 %v2126, %v2128
    %v2130 = vrot.slane %v2061, %v2129
    %v2131 = vadd.s32 %v2126, 4294967288
    %v2132 = vlaneseq
    %v2133 = vshrl.u32 %v2132, 7
    %v2134 = vsub.s32 %v2131, %v2133
    %v2135 = vrot.slane %v2062, %v2134
    %vm2136 = vcmask 130112
    %v2137 = vsel %vm2136, %v2135, %v2130
    %v2138 = vadd.s32 %v2126, 4294967280
    %v2139 = vlaneseq
    %v2140 = vshrl.u32 %v2139, 7
    %v2141 = vsub.s32 %v2138, %v2140
    %v2142 = vrot.slane %v2063, %v2141
    %vm2143 = vcmask 195712
    %v2144 = vsel %vm2143, %v2142, %v2137
    %v2145 = vadd.s32 %v2126, 4294967272
    %v2146 = vlaneseq
    %v2147 = vshrl.u32 %v2146, 7
    %v2148 = vsub.s32 %v2145, %v2147
    %v2149 = vrot.slane %v2064, %v2148
    %vm2150 = vcmask 261312
    %v2151 = vsel %vm2150, %v2149, %v2144
    %v2152 = vadd.s32 %v2126, 4294967264
    %v2153 = vlaneseq
    %v2154 = vshrl.u32 %v2153, 7
    %v2155 = vsub.s32 %v2152, %v2154
    %v2156 = vrot.slane %v2065, %v2155
    %vm2157 = vcmask 326912
    %v2158 = vsel %vm2157, %v2156, %v2151
    %v2159 = vadd.s32 %v2126, 4294967256
    %v2160 = vlaneseq
    %v2161 = vshrl.u32 %v2160, 7
    %v2162 = vsub.s32 %v2159, %v2161
    %v2163 = vrot.slane %v2066, %v2162
    %vm2164 = vcmask 392512
    %v2165 = vsel %vm2164, %v2163, %v2158
    %v2166 = vadd.s32 %v2126, 4294967248
    %v2167 = vlaneseq
    %v2168 = vshrl.u32 %v2167, 7
    %v2169 = vsub.s32 %v2166, %v2168
    %v2170 = vrot.slane %v2067, %v2169
    %vm2171 = vcmask 458112
    %v2172 = vsel %vm2171, %v2170, %v2165
    %v2173 = vadd.s32 %v2126, 4294967240
    %v2174 = vlaneseq
    %v2175 = vshrl.u32 %v2174, 7
    %v2176 = vsub.s32 %v2173, %v2175
    %v2177 = vrot.slane %v2068, %v2176
    %vm2178 = vcmask 523712
    %v2179 = vsel %vm2178, %v2177, %v2172
    %v2180 = vlaneseq
    %v2181 = vshrl.u32 %v2180, 7
    %v2182 = vsub.s32 %v2126, %v2181
    %v2183 = vrot.slane %v2069, %v2182
    %v2184 = vlaneseq
    %v2185 = vshrl.u32 %v2184, 7
    %v2186 = vsub.s32 %v2131, %v2185
    %v2187 = vrot.slane %v2070, %v2186
    %v2188 = vsel %vm2136, %v2187, %v2183
    %v2189 = vlaneseq
    %v2190 = vshrl.u32 %v2189, 7
    %v2191 = vsub.s32 %v2138, %v2190
    %v2192 = vrot.slane %v2071, %v2191
    %v2193 = vsel %vm2143, %v2192, %v2188
    %v2194 = vlaneseq
    %v2195 = vshrl.u32 %v2194, 7
    %v2196 = vsub.s32 %v2145, %v2195
    %v2197 = vrot.slane %v2072, %v2196
    %v2198 = vsel %vm2150, %v2197, %v2193
    %v2199 = vlaneseq
    %v2200 = vshrl.u32 %v2199, 7
    %v2201 = vsub.s32 %v2152, %v2200
    %v2202 = vrot.slane %v2073, %v2201
    %v2203 = vsel %vm2157, %v2202, %v2198
    %v2204 = vlaneseq
    %v2205 = vshrl.u32 %v2204, 7
    %v2206 = vsub.s32 %v2159, %v2205
    %v2207 = vrot.slane %v2074, %v2206
    %v2208 = vsel %vm2164, %v2207, %v2203
    %v2209 = vlaneseq
    %v2210 = vshrl.u32 %v2209, 7
    %v2211 = vsub.s32 %v2166, %v2210
    %v2212 = vrot.slane %v2075, %v2211
    %v2213 = vsel %vm2171, %v2212, %v2208
    %v2214 = vlaneseq
    %v2215 = vshrl.u32 %v2214, 7
    %v2216 = vsub.s32 %v2173, %v2215
    %v2217 = vrot.slane %v2076, %v2216
    %v2218 = vsel %vm2178, %v2217, %v2213
    %v2219 = vlaneseq
    %v2220 = vshrl.u32 %v2219, 7
    %v2221 = vsub.s32 %v2126, %v2220
    %v2222 = vrot.slane %v2077, %v2221
    %v2223 = vlaneseq
    %v2224 = vshrl.u32 %v2223, 7
    %v2225 = vsub.s32 %v2131, %v2224
    %v2226 = vrot.slane %v2078, %v2225
    %v2227 = vsel %vm2136, %v2226, %v2222
    %v2228 = vlaneseq
    %v2229 = vshrl.u32 %v2228, 7
    %v2230 = vsub.s32 %v2138, %v2229
    %v2231 = vrot.slane %v2079, %v2230
    %v2232 = vsel %vm2143, %v2231, %v2227
    %v2233 = vlaneseq
    %v2234 = vshrl.u32 %v2233, 7
    %v2235 = vsub.s32 %v2145, %v2234
    %v2236 = vrot.slane %v2080, %v2235
    %v2237 = vsel %vm2150, %v2236, %v2232
    %v2238 = vlaneseq
    %v2239 = vshrl.u32 %v2238, 7
    %v2240 = vsub.s32 %v2152, %v2239
    %v2241 = vrot.slane %v2081, %v2240
    %v2242 = vsel %vm2157, %v2241, %v2237
    %v2243 = vlaneseq
    %v2244 = vshrl.u32 %v2243, 7
    %v2245 = vsub.s32 %v2159, %v2244
    %v2246 = vrot.slane %v2082, %v2245
    %v2247 = vsel %vm2164, %v2246, %v2242
    %v2248 = vlaneseq
    %v2249 = vshrl.u32 %v2248, 7
    %v2250 = vsub.s32 %v2166, %v2249
    %v2251 = vrot.slane %v2083, %v2250
    %v2252 = vsel %vm2171, %v2251, %v2247
    %v2253 = vlaneseq
    %v2254 = vshrl.u32 %v2253, 7
    %v2255 = vsub.s32 %v2173, %v2254
    %v2256 = vrot.slane %v2084, %v2255
    %v2257 = vsel %vm2178, %v2256, %v2252
    %v2258 = vlaneseq
    %v2259 = vshrl.u32 %v2258, 7
    %v2260 = vsub.s32 %v2126, %v2259
    %v2261 = vrot.slane %v2085, %v2260
    %v2262 = vlaneseq
    %v2263 = vshrl.u32 %v2262, 7
    %v2264 = vsub.s32 %v2131, %v2263
    %v2265 = vrot.slane %v2086, %v2264
    %v2266 = vsel %vm2136, %v2265, %v2261
    %v2267 = vlaneseq
    %v2268 = vshrl.u32 %v2267, 7
    %v2269 = vsub.s32 %v2138, %v2268
    %v2270 = vrot.slane %v2087, %v2269
    %v2271 = vsel %vm2143, %v2270, %v2266
    %v2272 = vlaneseq
    %v2273 = vshrl.u32 %v2272, 7
    %v2274 = vsub.s32 %v2145, %v2273
    %v2275 = vrot.slane %v2088, %v2274
    %v2276 = vsel %vm2150, %v2275, %v2271
    %v2277 = vlaneseq
    %v2278 = vshrl.u32 %v2277, 7
    %v2279 = vsub.s32 %v2152, %v2278
    %v2280 = vrot.slane %v2089, %v2279
    %v2281 = vsel %vm2157, %v2280, %v2276
    %v2282 = vlaneseq
    %v2283 = vshrl.u32 %v2282, 7
    %v2284 = vsub.s32 %v2159, %v2283
    %v2285 = vrot.slane %v2090, %v2284
    %v2286 = vsel %vm2164, %v2285, %v2281
    %v2287 = vlaneseq
    %v2288 = vshrl.u32 %v2287, 7
    %v2289 = vsub.s32 %v2166, %v2288
    %v2290 = vrot.slane %v2091, %v2289
    %v2291 = vsel %vm2171, %v2290, %v2286
    %v2292 = vlaneseq
    %v2293 = vshrl.u32 %v2292, 7
    %v2294 = vsub.s32 %v2173, %v2293
    %v2295 = vrot.slane %v2092, %v2294
    %v2296 = vsel %vm2178, %v2295, %v2291
    %vm2297 = vcmask 1042434
    %v2298 = vsel %vm2297, %v2179, %v2179
    %vm2299 = vcmask 1043459
    %v2300 = vsel %vm2299, %v2179, %v2298
    %vm2301 = vcmask 1044484
    %v2302 = vsel %vm2301, %v2179, %v2300
    %vm2303 = vcmask 1045509
    %v2304 = vsel %vm2303, %v2179, %v2302
    %vm2305 = vcmask 1046534
    %v2306 = vsel %vm2305, %v2179, %v2304
    %vm2307 = vcmask 1047559
    %v2308 = vsel %vm2307, %v2179, %v2306
    %v2309 = vsel %vm2297, %v2218, %v2218
    %v2310 = vsel %vm2299, %v2218, %v2309
    %v2311 = vsel %vm2301, %v2218, %v2310
    %v2312 = vsel %vm2303, %v2218, %v2311
    %v2313 = vsel %vm2305, %v2218, %v2312
    %v2314 = vsel %vm2307, %v2218, %v2313
    %v2315 = vsel %vm2297, %v2257, %v2257
    %v2316 = vsel %vm2299, %v2257, %v2315
    %v2317 = vsel %vm2301, %v2257, %v2316
    %v2318 = vsel %vm2303, %v2257, %v2317
    %v2319 = vsel %vm2305, %v2257, %v2318
    %v2320 = vsel %vm2307, %v2257, %v2319
    %v2321 = vsel %vm2297, %v2296, %v2296
    %v2322 = vsel %vm2299, %v2296, %v2321
    %v2323 = vsel %vm2301, %v2296, %v2322
    %v2324 = vsel %vm2303, %v2296, %v2323
    %v2325 = vsel %vm2305, %v2296, %v2324
    %v2326 = vsel %vm2307, %v2296, %v2325
    %v2331 = vmul.f32 %v1767, %v2308
    %v2332 = vmul.f32 %v1864, %v2314
    %v2333 = vmul.f32 %v1961, %v2320
    %v2334 = vmul.f32 %v2058, %v2326
    %2336 = vset.pattern.permute.xlu0 0
    %2337 = vperm.xlu0 %2336, %v55
    %v2338 = vpop.permute.xlu0 %2337
    %2341 = vset.pattern.permute.xlu0 0
    %2342 = vperm.xlu0 %2341, %v56
    %v2343 = vpop.permute.xlu0 %2342
    %2346 = vset.pattern.permute.xlu0 0
    %2347 = vperm.xlu0 %2346, %v57
    %v2348 = vpop.permute.xlu0 %2347
    %2351 = vset.pattern.permute.xlu0 0
    %2352 = vperm.xlu0 %2351, %v58
    %v2353 = vpop.permute.xlu0 %2352
    %v2356 = vsel %vm577, %v51, 0
    %v2359 = vsel %vm577, %v52, 0
    %v2362 = vsel %vm577, %v53, 0
    %v2365 = vsel %vm577, %v54, 0
    %2367 = vmatprep.subr.mxu0 0.0
    %2368 = vmatpush1.msra.mxu0 %v2331
    %2369 = vmatprep.subr.mxu0 0.0
    %2370 = vmatpush1.msra.mxu0 %v2332
    %2371 = vmatprep.subr.mxu0 0.0
    %2372 = vmatpush1.msra.mxu0 %v2333
    %2373 = vmatprep.subr.mxu0 0.0
    %2374 = vmatpush1.msra.mxu0 %v2334
    %2375 = vmatprep.subr.mxu0 0.0
    %2376 = vmatpush1.msra.mxu0 0.0
    %2377 = vmatprep.subr.mxu0 0.0
    %2378 = vmatpush1.msra.mxu0 0.0
    %2379 = vmatprep.subr.mxu0 0.0
    %2380 = vmatpush1.msra.mxu0 0.0
    %2381 = vmatprep.subr.mxu0 0.0
    %2382 = vmatpush1.msra.mxu0 0.0
    %2383 = vmatprep.subr.mxu0 0.0
    %2384 = vmatpush1.msra.mxu0 0.0
    %2385 = vmatprep.subr.mxu0 0.0
    %2386 = vmatpush1.msra.mxu0 0.0
    %2387 = vmatprep.subr.mxu0 0.0
    %2388 = vmatpush1.msra.mxu0 0.0
    %2389 = vmatprep.subr.mxu0 0.0
    %2390 = vmatpush1.msra.mxu0 0.0
    %2391 = vmatprep.subr.mxu0 0.0
    %2392 = vmatpush1.msra.mxu0 0.0
    %2393 = vmatprep.subr.mxu0 0.0
    %2394 = vmatpush1.msra.mxu0 0.0
    %2395 = vmatprep.subr.mxu0 0.0
    %2396 = vmatpush1.msra.mxu0 0.0
    %2397 = vmatprep.subr.mxu0 0.0
    %2398 = vmatpush1.msra.mxu0 0.0
    %2399 = vmatprep.subr.mxu0 0.0
    %2400 = vmatpush1.msra.mxu0 0.0
    %2401 = vmatprep.subr.mxu0 0.0
    %2402 = vmatpush1.msra.mxu0 0.0
    %2403 = vmatprep.subr.mxu0 0.0
    %2404 = vmatpush1.msra.mxu0 0.0
    %2405 = vmatprep.subr.mxu0 0.0
    %2406 = vmatpush1.msra.mxu0 0.0
    %2407 = vmatprep.subr.mxu0 0.0
    %2408 = vmatpush1.msra.mxu0 0.0
    %2409 = vmatprep.subr.mxu0 0.0
    %2410 = vmatpush1.msra.mxu0 0.0
    %2411 = vmatprep.subr.mxu0 0.0
    %2412 = vmatpush1.msra.mxu0 0.0
    %2413 = vmatprep.subr.mxu0 0.0
    %2414 = vmatpush1.msra.mxu0 0.0
    %2415 = vmatprep.subr.mxu0 0.0
    %2416 = vmatpush1.msra.mxu0 0.0
    %2417 = vmatprep.subr.mxu0 0.0
    %2418 = vmatpush1.msra.mxu0 0.0
    %2419 = vmatprep.subr.mxu0 0.0
    %2420 = vmatpush1.msra.mxu0 0.0
    %2421 = vmatprep.subr.mxu0 0.0
    %2422 = vmatpush1.msra.mxu0 0.0
    %2423 = vmatprep.subr.mxu0 0.0
    %2424 = vmatpush1.msra.mxu0 0.0
    %2425 = vmatprep.subr.mxu0 0.0
    %2426 = vmatpush1.msra.mxu0 0.0
    %2427 = vmatprep.subr.mxu0 0.0
    %2428 = vmatpush1.msra.mxu0 0.0
    %2429 = vmatprep.subr.mxu0 0.0
    %2430 = vmatpush1.msra.mxu0 0.0
    %2431 = vmatprep.mubr.f32.mxu0 0.0
    %2432 = vmatmul.mubr.f32.gmra.mrb[0].mxu0 %v2356
    %v2433 = vpop.f32.mrb[0].mxu0
    %v2434 = vadd.f32 %v2338, %v2433
    %v2435 = vpop.f32.mrb[0].mxu0
    %2436 = vmatprep.mubr.f32.mxu0 0.0
    %2437 = vmatmul.mubr.f32.gmra.mrb[0].mxu0 %v2359
    %v2438 = vpop.f32.mrb[0].mxu0
    %v2439 = vadd.f32 %v2343, %v2438
    %v2440 = vpop.f32.mrb[0].mxu0
    %2441 = vmatprep.mubr.f32.mxu0 0.0
    %2442 = vmatmul.mubr.f32.gmra.mrb[0].mxu0 %v2362
    %v2443 = vpop.f32.mrb[0].mxu0
    %v2444 = vadd.f32 %v2348, %v2443
    %v2445 = vpop.f32.mrb[0].mxu0
    %2446 = vmatprep.mubr.f32.mxu0 0.0
    %2447 = vmatmul.mubr.f32.gmra.mrb[0].mxu0 %v2365
    %v2448 = vpop.f32.mrb[0].mxu0
    %v2449 = vadd.f32 %v2353, %v2448
    %v2450 = vpop.f32.mrb[0].mxu0
    %2451 = vdwg.mxu0
    %v2452 = vadd.f32 %v67, %v2434
    %v2453 = vadd.f32 %v68, %v2439
    %v2454 = vadd.f32 %v69, %v2444
    %v2455 = vadd.f32 %v70, %v2449
    %2456 = vst.msk [vmem:[#allocation2] sm:$0xff] %vm1384, %v2452
    %2457 = vst.msk [vmem:[#allocation2 + $0x8] sm:$0xff] %vm1384, %v2453
    %2458 = vst.msk [vmem:[#allocation2 + $0x10] sm:$0xff] %vm1384, %v2454
    %2459 = vst.msk [vmem:[#allocation2 + $0x18] sm:$0xff] %vm1384, %v2455
    %s2460 = scalar_lea.vmem %s0, 32
    %v2461 = vld [vmem:[%s2460] sm:$0xff]
    %v2462 = vld [vmem:[%s2460 + $0x8] sm:$0xff]
    %v2463 = vld [vmem:[%s2460 + $0x10] sm:$0xff]
    %v2464 = vld [vmem:[%s2460 + $0x18] sm:$0xff]
    %v2469 = vcombine.high %v2461, %v2461
    %v2470 = vcombine.high %v2462, %v2462
    %v2471 = vcombine.high %v2463, %v2463
    %v2472 = vcombine.high %v2464, %v2464
    %v2477 = vsel %vm83, %v2461, 0.0
    %2478 = vadd.xlane.f32.xlu0 %v2477
    %v2479 = vpop.xlane.xlu0 %2478
    %v2480 = vsel %vm83, %v2469, 0.0
    %2481 = vadd.xlane.f32.xlu0 %v2480
    %v2482 = vpop.xlane.xlu0 %2481
    %v2483 = vsel %vm83, %v2462, 0.0
    %2484 = vadd.xlane.f32.xlu0 %v2483
    %v2485 = vpop.xlane.xlu0 %2484
    %v2486 = vsel %vm83, %v2470, 0.0
    %2487 = vadd.xlane.f32.xlu0 %v2486
    %v2488 = vpop.xlane.xlu0 %2487
    %v2489 = vsel %vm83, %v2463, 0.0
    %2490 = vadd.xlane.f32.xlu0 %v2489
    %v2491 = vpop.xlane.xlu0 %2490
    %v2492 = vsel %vm83, %v2471, 0.0
    %2493 = vadd.xlane.f32.xlu0 %v2492
    %v2494 = vpop.xlane.xlu0 %2493
    %v2495 = vsel %vm83, %v2464, 0.0
    %2496 = vadd.xlane.f32.xlu0 %v2495
    %v2497 = vpop.xlane.xlu0 %2496
    %v2498 = vsel %vm83, %v2472, 0.0
    %2499 = vadd.xlane.f32.xlu0 %v2498
    %v2500 = vpop.xlane.xlu0 %2499
    %v2501 = vsel %vm108, %v2479, 0.0
    %v2502 = vrot.slane %v2501, 4
    %v2503 = vadd.f32 %v2501, %v2502
    %v2504 = vrot.slane %v2503, 2
    %v2505 = vadd.f32 %v2503, %v2504
    %v2506 = vrot.slane %v2505, 1
    %v2507 = vadd.f32 %v2505, %v2506
    %v2508 = vsel %vm108, %v2482, 0.0
    %v2509 = vrot.slane %v2508, 4
    %v2510 = vadd.f32 %v2508, %v2509
    %v2511 = vrot.slane %v2510, 2
    %v2512 = vadd.f32 %v2510, %v2511
    %v2513 = vrot.slane %v2512, 1
    %v2514 = vadd.f32 %v2512, %v2513
    %v2515 = vsel %vm108, %v2485, 0.0
    %v2516 = vrot.slane %v2515, 4
    %v2517 = vadd.f32 %v2515, %v2516
    %v2518 = vrot.slane %v2517, 2
    %v2519 = vadd.f32 %v2517, %v2518
    %v2520 = vrot.slane %v2519, 1
    %v2521 = vadd.f32 %v2519, %v2520
    %v2522 = vsel %vm108, %v2488, 0.0
    %v2523 = vrot.slane %v2522, 4
    %v2524 = vadd.f32 %v2522, %v2523
    %v2525 = vrot.slane %v2524, 2
    %v2526 = vadd.f32 %v2524, %v2525
    %v2527 = vrot.slane %v2526, 1
    %v2528 = vadd.f32 %v2526, %v2527
    %v2529 = vsel %vm108, %v2491, 0.0
    %v2530 = vrot.slane %v2529, 4
    %v2531 = vadd.f32 %v2529, %v2530
    %v2532 = vrot.slane %v2531, 2
    %v2533 = vadd.f32 %v2531, %v2532
    %v2534 = vrot.slane %v2533, 1
    %v2535 = vadd.f32 %v2533, %v2534
    %v2536 = vsel %vm108, %v2494, 0.0
    %v2537 = vrot.slane %v2536, 4
    %v2538 = vadd.f32 %v2536, %v2537
    %v2539 = vrot.slane %v2538, 2
    %v2540 = vadd.f32 %v2538, %v2539
    %v2541 = vrot.slane %v2540, 1
    %v2542 = vadd.f32 %v2540, %v2541
    %v2543 = vsel %vm108, %v2497, 0.0
    %v2544 = vrot.slane %v2543, 4
    %v2545 = vadd.f32 %v2543, %v2544
    %v2546 = vrot.slane %v2545, 2
    %v2547 = vadd.f32 %v2545, %v2546
    %v2548 = vrot.slane %v2547, 1
    %v2549 = vadd.f32 %v2547, %v2548
    %v2550 = vsel %vm108, %v2500, 0.0
    %v2551 = vrot.slane %v2550, 4
    %v2552 = vadd.f32 %v2550, %v2551
    %v2553 = vrot.slane %v2552, 2
    %v2554 = vadd.f32 %v2552, %v2553
    %v2555 = vrot.slane %v2554, 1
    %v2556 = vadd.f32 %v2554, %v2555
    %v2557 = vmul.f32 %v2461, %v2461
    %v2558 = vmul.f32 %v2469, %v2469
    %v2559 = vmul.f32 %v2462, %v2462
    %v2560 = vmul.f32 %v2470, %v2470
    %v2561 = vmul.f32 %v2463, %v2463
    %v2562 = vmul.f32 %v2471, %v2471
    %v2563 = vmul.f32 %v2464, %v2464
    %v2564 = vmul.f32 %v2472, %v2472
    %v2565 = vsel %vm83, %v2557, 0.0
    %2566 = vadd.xlane.f32.xlu0 %v2565
    %v2567 = vpop.xlane.xlu0 %2566
    %v2568 = vsel %vm83, %v2558, 0.0
    %2569 = vadd.xlane.f32.xlu0 %v2568
    %v2570 = vpop.xlane.xlu0 %2569
    %v2571 = vsel %vm83, %v2559, 0.0
    %2572 = vadd.xlane.f32.xlu0 %v2571
    %v2573 = vpop.xlane.xlu0 %2572
    %v2574 = vsel %vm83, %v2560, 0.0
    %2575 = vadd.xlane.f32.xlu0 %v2574
    %v2576 = vpop.xlane.xlu0 %2575
    %v2577 = vsel %vm83, %v2561, 0.0
    %2578 = vadd.xlane.f32.xlu0 %v2577
    %v2579 = vpop.xlane.xlu0 %2578
    %v2580 = vsel %vm83, %v2562, 0.0
    %2581 = vadd.xlane.f32.xlu0 %v2580
    %v2582 = vpop.xlane.xlu0 %2581
    %v2583 = vsel %vm83, %v2563, 0.0
    %2584 = vadd.xlane.f32.xlu0 %v2583
    %v2585 = vpop.xlane.xlu0 %2584
    %v2586 = vsel %vm83, %v2564, 0.0
    %2587 = vadd.xlane.f32.xlu0 %v2586
    %v2588 = vpop.xlane.xlu0 %2587
    %v2589 = vsel %vm108, %v2567, 0.0
    %v2590 = vrot.slane %v2589, 4
    %v2591 = vadd.f32 %v2589, %v2590
    %v2592 = vrot.slane %v2591, 2
    %v2593 = vadd.f32 %v2591, %v2592
    %v2594 = vrot.slane %v2593, 1
    %v2595 = vadd.f32 %v2593, %v2594
    %v2596 = vsel %vm108, %v2570, 0.0
    %v2597 = vrot.slane %v2596, 4
    %v2598 = vadd.f32 %v2596, %v2597
    %v2599 = vrot.slane %v2598, 2
    %v2600 = vadd.f32 %v2598, %v2599
    %v2601 = vrot.slane %v2600, 1
    %v2602 = vadd.f32 %v2600, %v2601
    %v2603 = vsel %vm108, %v2573, 0.0
    %v2604 = vrot.slane %v2603, 4
    %v2605 = vadd.f32 %v2603, %v2604
    %v2606 = vrot.slane %v2605, 2
    %v2607 = vadd.f32 %v2605, %v2606
    %v2608 = vrot.slane %v2607, 1
    %v2609 = vadd.f32 %v2607, %v2608
    %v2610 = vsel %vm108, %v2576, 0.0
    %v2611 = vrot.slane %v2610, 4
    %v2612 = vadd.f32 %v2610, %v2611
    %v2613 = vrot.slane %v2612, 2
    %v2614 = vadd.f32 %v2612, %v2613
    %v2615 = vrot.slane %v2614, 1
    %v2616 = vadd.f32 %v2614, %v2615
    %v2617 = vsel %vm108, %v2579, 0.0
    %v2618 = vrot.slane %v2617, 4
    %v2619 = vadd.f32 %v2617, %v2618
    %v2620 = vrot.slane %v2619, 2
    %v2621 = vadd.f32 %v2619, %v2620
    %v2622 = vrot.slane %v2621, 1
    %v2623 = vadd.f32 %v2621, %v2622
    %v2624 = vsel %vm108, %v2582, 0.0
    %v2625 = vrot.slane %v2624, 4
    %v2626 = vadd.f32 %v2624, %v2625
    %v2627 = vrot.slane %v2626, 2
    %v2628 = vadd.f32 %v2626, %v2627
    %v2629 = vrot.slane %v2628, 1
    %v2630 = vadd.f32 %v2628, %v2629
    %v2631 = vsel %vm108, %v2585, 0.0
    %v2632 = vrot.slane %v2631, 4
    %v2633 = vadd.f32 %v2631, %v2632
    %v2634 = vrot.slane %v2633, 2
    %v2635 = vadd.f32 %v2633, %v2634
    %v2636 = vrot.slane %v2635, 1
    %v2637 = vadd.f32 %v2635, %v2636
    %v2638 = vsel %vm108, %v2588, 0.0
    %v2639 = vrot.slane %v2638, 4
    %v2640 = vadd.f32 %v2638, %v2639
    %v2641 = vrot.slane %v2640, 2
    %v2642 = vadd.f32 %v2640, %v2641
    %v2643 = vrot.slane %v2642, 1
    %v2644 = vadd.f32 %v2642, %v2643
    %v2645 = vmul.f32 %v2507, 0.00390625
    %v2646 = vmul.f32 %v2514, 0.00390625
    %v2647 = vmul.f32 %v2521, 0.00390625
    %v2648 = vmul.f32 %v2528, 0.00390625
    %v2649 = vmul.f32 %v2535, 0.00390625
    %v2650 = vmul.f32 %v2542, 0.00390625
    %v2651 = vmul.f32 %v2549, 0.00390625
    %v2652 = vmul.f32 %v2556, 0.00390625
    %v2653 = vmul.f32 %v2595, 0.00390625
    %v2654 = vmul.f32 %v2602, 0.00390625
    %v2655 = vmul.f32 %v2609, 0.00390625
    %v2656 = vmul.f32 %v2616, 0.00390625
    %v2657 = vmul.f32 %v2623, 0.00390625
    %v2658 = vmul.f32 %v2630, 0.00390625
    %v2659 = vmul.f32 %v2637, 0.00390625
    %v2660 = vmul.f32 %v2644, 0.00390625
    %v2661 = vmul.f32 %v2645, %v2645
    %v2662 = vmul.f32 %v2646, %v2646
    %v2663 = vmul.f32 %v2647, %v2647
    %v2664 = vmul.f32 %v2648, %v2648
    %v2665 = vmul.f32 %v2649, %v2649
    %v2666 = vmul.f32 %v2650, %v2650
    %v2667 = vmul.f32 %v2651, %v2651
    %v2668 = vmul.f32 %v2652, %v2652
    %v2669 = vsub.f32 %v2653, %v2661
    %v2670 = vsub.f32 %v2654, %v2662
    %v2671 = vsub.f32 %v2655, %v2663
    %v2672 = vsub.f32 %v2656, %v2664
    %v2673 = vsub.f32 %v2657, %v2665
    %v2674 = vsub.f32 %v2658, %v2666
    %v2675 = vsub.f32 %v2659, %v2667
    %v2676 = vsub.f32 %v2660, %v2668
    %v2677 = vmax.f32 %v2669, 0.0
    %v2678 = vmax.f32 %v2670, 0.0
    %v2679 = vmax.f32 %v2671, 0.0
    %v2680 = vmax.f32 %v2672, 0.0
    %v2681 = vmax.f32 %v2673, 0.0
    %v2682 = vmax.f32 %v2674, 0.0
    %v2683 = vmax.f32 %v2675, 0.0
    %v2684 = vmax.f32 %v2676, 0.0
    %v2685 = vsub.f32 %v2461, %v2645
    %v2686 = vsub.f32 %v2469, %v2646
    %v2687 = vsub.f32 %v2462, %v2647
    %v2688 = vsub.f32 %v2470, %v2648
    %v2689 = vsub.f32 %v2463, %v2649
    %v2690 = vsub.f32 %v2471, %v2650
    %v2691 = vsub.f32 %v2464, %v2651
    %v2692 = vsub.f32 %v2472, %v2652
    %v2693 = vadd.f32 %v2677, 1e-05
    %v2694 = vadd.f32 %v2678, 1e-05
    %v2695 = vadd.f32 %v2679, 1e-05
    %v2696 = vadd.f32 %v2680, 1e-05
    %v2697 = vadd.f32 %v2681, 1e-05
    %v2698 = vadd.f32 %v2682, 1e-05
    %v2699 = vadd.f32 %v2683, 1e-05
    %v2700 = vadd.f32 %v2684, 1e-05
    %v2701 = vrsqrt.pop %v2693
    %v2702 = vrsqrt.pop %v2694
    %v2703 = vrsqrt.pop %v2695
    %v2704 = vrsqrt.pop %v2696
    %v2705 = vrsqrt.pop %v2697
    %v2706 = vrsqrt.pop %v2698
    %v2707 = vrsqrt.pop %v2699
    %v2708 = vrsqrt.pop %v2700
    %v2709 = vmul.f32 %v2685, %v2701
    %v2710 = vmul.f32 %v2686, %v2702
    %v2711 = vmul.f32 %v2687, %v2703
    %v2712 = vmul.f32 %v2688, %v2704
    %v2713 = vmul.f32 %v2689, %v2705
    %v2714 = vmul.f32 %v2690, %v2706
    %v2715 = vmul.f32 %v2691, %v2707
    %v2716 = vmul.f32 %v2692, %v2708
    %v2717 = vmul.f32 %v2709, %v347
    %v2718 = vmul.f32 %v2710, %v354
    %v2719 = vmul.f32 %v2711, %v361
    %v2720 = vmul.f32 %v2712, %v368
    %v2721 = vmul.f32 %v2713, %v375
    %v2722 = vmul.f32 %v2714, %v382
    %v2723 = vmul.f32 %v2715, %v389
    %v2724 = vmul.f32 %v2716, %v396
    %v2725 = vadd.f32 %v2717, %v435
    %v2726 = vadd.f32 %v2718, %v442
    %v2727 = vadd.f32 %v2719, %v449
    %v2728 = vadd.f32 %v2720, %v456
    %v2729 = vadd.f32 %v2721, %v463
    %v2730 = vadd.f32 %v2722, %v470
    %v2731 = vadd.f32 %v2723, %v477
    %v2732 = vadd.f32 %v2724, %v484
    %v2741 = vcombine.low %v2725, %v2726
    %v2742 = vcombine.low %v2727, %v2728
    %v2743 = vcombine.low %v2729, %v2730
    %v2744 = vcombine.low %v2731, %v2732
    %2749 = vmatprep.subr.mxu0 0.0
    %2750 = vmatpush1.msra.mxu0 %v2741
    %2751 = vmatprep.subr.mxu0 0.0
    %2752 = vmatpush1.msra.mxu0 %v2742
    %2753 = vmatprep.subr.mxu0 0.0
    %2754 = vmatpush1.msra.mxu0 %v2743
    %2755 = vmatprep.subr.mxu0 0.0
    %2756 = vmatpush1.msra.mxu0 %v2744
    %2757 = vmatprep.subr.mxu0 0.0
    %2758 = vmatpush1.msra.mxu0 0.0
    %2759 = vmatprep.subr.mxu0 0.0
    %2760 = vmatpush1.msra.mxu0 0.0
    %2761 = vmatprep.subr.mxu0 0.0
    %2762 = vmatpush1.msra.mxu0 0.0
    %2763 = vmatprep.subr.mxu0 0.0
    %2764 = vmatpush1.msra.mxu0 0.0
    %2765 = vmatprep.subr.mxu0 0.0
    %2766 = vmatpush1.msra.mxu0 0.0
    %2767 = vmatprep.subr.mxu0 0.0
    %2768 = vmatpush1.msra.mxu0 0.0
    %2769 = vmatprep.subr.mxu0 0.0
    %2770 = vmatpush1.msra.mxu0 0.0
    %2771 = vmatprep.subr.mxu0 0.0
    %2772 = vmatpush1.msra.mxu0 0.0
    %2773 = vmatprep.subr.mxu0 0.0
    %2774 = vmatpush1.msra.mxu0 0.0
    %2775 = vmatprep.subr.mxu0 0.0
    %2776 = vmatpush1.msra.mxu0 0.0
    %2777 = vmatprep.subr.mxu0 0.0
    %2778 = vmatpush1.msra.mxu0 0.0
    %2779 = vmatprep.subr.mxu0 0.0
    %2780 = vmatpush1.msra.mxu0 0.0
    %2781 = vmatprep.subr.mxu0 0.0
    %2782 = vmatpush1.msra.mxu0 0.0
    %2783 = vmatprep.subr.mxu0 0.0
    %2784 = vmatpush1.msra.mxu0 0.0
    %2785 = vmatprep.subr.mxu0 0.0
    %2786 = vmatpush1.msra.mxu0 0.0
    %2787 = vmatprep.subr.mxu0 0.0
    %2788 = vmatpush1.msra.mxu0 0.0
    %2789 = vmatprep.subr.mxu0 0.0
    %2790 = vmatpush1.msra.mxu0 0.0
    %2791 = vmatprep.subr.mxu0 0.0
    %2792 = vmatpush1.msra.mxu0 0.0
    %2793 = vmatprep.subr.mxu0 0.0
    %2794 = vmatpush1.msra.mxu0 0.0
    %2795 = vmatprep.subr.mxu0 0.0
    %2796 = vmatpush1.msra.mxu0 0.0
    %2797 = vmatprep.subr.mxu0 0.0
    %2798 = vmatpush1.msra.mxu0 0.0
    %2799 = vmatprep.subr.mxu0 0.0
    %2800 = vmatpush1.msra.mxu0 0.0
    %2801 = vmatprep.subr.mxu0 0.0
    %2802 = vmatpush1.msra.mxu0 0.0
    %2803 = vmatprep.subr.mxu0 0.0
    %2804 = vmatpush1.msra.mxu0 0.0
    %2805 = vmatprep.subr.mxu0 0.0
    %2806 = vmatpush1.msra.mxu0 0.0
    %2807 = vmatprep.subr.mxu0 0.0
    %2808 = vmatpush1.msra.mxu0 0.0
    %2809 = vmatprep.subr.mxu0 0.0
    %2810 = vmatpush1.msra.mxu0 0.0
    %2811 = vmatprep.subr.mxu0 0.0
    %2812 = vmatpush1.msra.mxu0 0.0
    %2813 = vmatprep.mubr.f32.mxu0 0.0
    %2814 = vmatmul.mubr.f32.gmra.mrb[0].mxu0 %v579
    %v2815 = vpop.f32.mrb[0].mxu0
    %v2816 = vadd.f32 %v504, %v2815
    %v2817 = vpop.f32.mrb[0].mxu0
    %2818 = vmatprep.mubr.f32.mxu0 0.0
    %2819 = vmatmul.mubr.f32.gmra.mrb[0].mxu0 %v582
    %v2820 = vpop.f32.mrb[0].mxu0
    %v2821 = vadd.f32 %v509, %v2820
    %v2822 = vpop.f32.mrb[0].mxu0
    %2823 = vmatprep.mubr.f32.mxu0 0.0
    %2824 = vmatmul.mubr.f32.gmra.mrb[0].mxu0 %v585
    %v2825 = vpop.f32.mrb[0].mxu0
    %v2826 = vadd.f32 %v514, %v2825
    %v2827 = vpop.f32.mrb[0].mxu0
    %2828 = vmatprep.mubr.f32.mxu0 0.0
    %2829 = vmatmul.mubr.f32.gmra.mrb[0].mxu0 %v588
    %v2830 = vpop.f32.mrb[0].mxu0
    %v2831 = vadd.f32 %v519, %v2830
    %v2832 = vpop.f32.mrb[0].mxu0
    %2833 = vmatprep.mubr.f32.mxu0 0.0
    %2834 = vmatmul.mubr.f32.gmra.mrb[0].mxu0 %v591
    %v2835 = vpop.f32.mrb[0].mxu0
    %v2836 = vadd.f32 %v524, %v2835
    %v2837 = vpop.f32.mrb[0].mxu0
    %2838 = vmatprep.mubr.f32.mxu0 0.0
    %2839 = vmatmul.mubr.f32.gmra.mrb[0].mxu0 %v594
    %v2840 = vpop.f32.mrb[0].mxu0
    %v2841 = vadd.f32 %v529, %v2840
    %v2842 = vpop.f32.mrb[0].mxu0
    %2843 = vmatprep.mubr.f32.mxu0 0.0
    %2844 = vmatmul.mubr.f32.gmra.mrb[0].mxu0 %v597
    %v2845 = vpop.f32.mrb[0].mxu0
    %v2846 = vadd.f32 %v534, %v2845
    %v2847 = vpop.f32.mrb[0].mxu0
    %2848 = vmatprep.mubr.f32.mxu0 0.0
    %2849 = vmatmul.mubr.f32.gmra.mrb[0].mxu0 %v600
    %v2850 = vpop.f32.mrb[0].mxu0
    %v2851 = vadd.f32 %v539, %v2850
    %v2852 = vpop.f32.mrb[0].mxu0
    %2853 = vmatprep.mubr.f32.mxu0 0.0
    %2854 = vmatmul.mubr.f32.gmra.mrb[0].mxu0 %v603
    %v2855 = vpop.f32.mrb[0].mxu0
    %v2856 = vadd.f32 %v544, %v2855
    %v2857 = vpop.f32.mrb[0].mxu0
    %2858 = vmatprep.mubr.f32.mxu0 0.0
    %2859 = vmatmul.mubr.f32.gmra.mrb[0].mxu0 %v606
    %v2860 = vpop.f32.mrb[0].mxu0
    %v2861 = vadd.f32 %v549, %v2860
    %v2862 = vpop.f32.mrb[0].mxu0
    %2863 = vmatprep.mubr.f32.mxu0 0.0
    %2864 = vmatmul.mubr.f32.gmra.mrb[0].mxu0 %v609
    %v2865 = vpop.f32.mrb[0].mxu0
    %v2866 = vadd.f32 %v554, %v2865
    %v2867 = vpop.f32.mrb[0].mxu0
    %2868 = vmatprep.mubr.f32.mxu0 0.0
    %2869 = vmatmul.mubr.f32.gmra.mrb[0].mxu0 %v612
    %v2870 = vpop.f32.mrb[0].mxu0
    %v2871 = vadd.f32 %v559, %v2870
    %v2872 = vpop.f32.mrb[0].mxu0
    %2873 = vdwg.mxu0
    %2874 = vxpose.xlu0.b32.start [1/16] %v2816, 128
    %2875 = vxpose.xlu0.b32.cont [2/16] 0.0, 128
    %2876 = vxpose.xlu0.b32.cont [3/16] 0.0, 128
    %2877 = vxpose.xlu0.b32.cont [4/16] 0.0, 128
    %2878 = vxpose.xlu0.b32.cont [5/16] 0.0, 128
    %2879 = vxpose.xlu0.b32.cont [6/16] 0.0, 128
    %2880 = vxpose.xlu0.b32.cont [7/16] 0.0, 128
    %2881 = vxpose.xlu0.b32.cont [8/16] 0.0, 128
    %2882 = vxpose.xlu0.b32.cont [9/16] 0.0, 128
    %2883 = vxpose.xlu0.b32.cont [10/16] 0.0, 128
    %2884 = vxpose.xlu0.b32.cont [11/16] 0.0, 128
    %2885 = vxpose.xlu0.b32.cont [12/16] 0.0, 128
    %2886 = vxpose.xlu0.b32.cont [13/16] 0.0, 128
    %2887 = vxpose.xlu0.b32.cont [14/16] 0.0, 128
    %2888 = vxpose.xlu0.b32.cont [15/16] 0.0, 128
    %2889 = vxpose.xlu0.b32.end [16/16] 0.0, 128
    %v2890 = vpop.trf.xlu0
    %v2891 = vpop.trf.xlu0
    %v2892 = vpop.trf.xlu0
    %v2893 = vpop.trf.xlu0
    %v2894 = vpop.trf.xlu0
    %v2895 = vpop.trf.xlu0
    %v2896 = vpop.trf.xlu0
    %v2897 = vpop.trf.xlu0
    %v2898 = vpop.trf.xlu0
    %v2899 = vpop.trf.xlu0
    %v2900 = vpop.trf.xlu0
    %v2901 = vpop.trf.xlu0
    %v2902 = vpop.trf.xlu0
    %v2903 = vpop.trf.xlu0
    %v2904 = vpop.trf.xlu0
    %v2905 = vpop.trf.xlu0
    %2906 = vxpose.xlu0.b32.start [1/16] %v2821, 128
    %2907 = vxpose.xlu0.b32.cont [2/16] 0.0, 128
    %2908 = vxpose.xlu0.b32.cont [3/16] 0.0, 128
    %2909 = vxpose.xlu0.b32.cont [4/16] 0.0, 128
    %2910 = vxpose.xlu0.b32.cont [5/16] 0.0, 128
    %2911 = vxpose.xlu0.b32.cont [6/16] 0.0, 128
    %2912 = vxpose.xlu0.b32.cont [7/16] 0.0, 128
    %2913 = vxpose.xlu0.b32.cont [8/16] 0.0, 128
    %2914 = vxpose.xlu0.b32.cont [9/16] 0.0, 128
    %2915 = vxpose.xlu0.b32.cont [10/16] 0.0, 128
    %2916 = vxpose.xlu0.b32.cont [11/16] 0.0, 128
    %2917 = vxpose.xlu0.b32.cont [12/16] 0.0, 128
    %2918 = vxpose.xlu0.b32.cont [13/16] 0.0, 128
    %2919 = vxpose.xlu0.b32.cont [14/16] 0.0, 128
    %2920 = vxpose.xlu0.b32.cont [15/16] 0.0, 128
    %2921 = vxpose.xlu0.b32.end [16/16] 0.0, 128
    %v2922 = vpop.trf.xlu0
    %v2923 = vpop.trf.xlu0
    %v2924 = vpop.trf.xlu0
    %v2925 = vpop.trf.xlu0
    %v2926 = vpop.trf.xlu0
    %v2927 = vpop.trf.xlu0
    %v2928 = vpop.trf.xlu0
    %v2929 = vpop.trf.xlu0
    %v2930 = vpop.trf.xlu0
    %v2931 = vpop.trf.xlu0
    %v2932 = vpop.trf.xlu0
    %v2933 = vpop.trf.xlu0
    %v2934 = vpop.trf.xlu0
    %v2935 = vpop.trf.xlu0
    %v2936 = vpop.trf.xlu0
    %v2937 = vpop.trf.xlu0
    %2938 = vxpose.xlu0.b32.start [1/16] %v2826, 128
    %2939 = vxpose.xlu0.b32.cont [2/16] 0.0, 128
    %2940 = vxpose.xlu0.b32.cont [3/16] 0.0, 128
    %2941 = vxpose.xlu0.b32.cont [4/16] 0.0, 128
    %2942 = vxpose.xlu0.b32.cont [5/16] 0.0, 128
    %2943 = vxpose.xlu0.b32.cont [6/16] 0.0, 128
    %2944 = vxpose.xlu0.b32.cont [7/16] 0.0, 128
    %2945 = vxpose.xlu0.b32.cont [8/16] 0.0, 128
    %2946 = vxpose.xlu0.b32.cont [9/16] 0.0, 128
    %2947 = vxpose.xlu0.b32.cont [10/16] 0.0, 128
    %2948 = vxpose.xlu0.b32.cont [11/16] 0.0, 128
    %2949 = vxpose.xlu0.b32.cont [12/16] 0.0, 128
    %2950 = vxpose.xlu0.b32.cont [13/16] 0.0, 128
    %2951 = vxpose.xlu0.b32.cont [14/16] 0.0, 128
    %2952 = vxpose.xlu0.b32.cont [15/16] 0.0, 128
    %2953 = vxpose.xlu0.b32.end [16/16] 0.0, 128
    %v2954 = vpop.trf.xlu0
    %v2955 = vpop.trf.xlu0
    %v2956 = vpop.trf.xlu0
    %v2957 = vpop.trf.xlu0
    %v2958 = vpop.trf.xlu0
    %v2959 = vpop.trf.xlu0
    %v2960 = vpop.trf.xlu0
    %v2961 = vpop.trf.xlu0
    %v2962 = vpop.trf.xlu0
    %v2963 = vpop.trf.xlu0
    %v2964 = vpop.trf.xlu0
    %v2965 = vpop.trf.xlu0
    %v2966 = vpop.trf.xlu0
    %v2967 = vpop.trf.xlu0
    %v2968 = vpop.trf.xlu0
    %v2969 = vpop.trf.xlu0
    %2970 = vxpose.xlu0.b32.start [1/16] %v2831, 128
    %2971 = vxpose.xlu0.b32.cont [2/16] 0.0, 128
    %2972 = vxpose.xlu0.b32.cont [3/16] 0.0, 128
    %2973 = vxpose.xlu0.b32.cont [4/16] 0.0, 128
    %2974 = vxpose.xlu0.b32.cont [5/16] 0.0, 128
    %2975 = vxpose.xlu0.b32.cont [6/16] 0.0, 128
    %2976 = vxpose.xlu0.b32.cont [7/16] 0.0, 128
    %2977 = vxpose.xlu0.b32.cont [8/16] 0.0, 128
    %2978 = vxpose.xlu0.b32.cont [9/16] 0.0, 128
    %2979 = vxpose.xlu0.b32.cont [10/16] 0.0, 128
    %2980 = vxpose.xlu0.b32.cont [11/16] 0.0, 128
    %2981 = vxpose.xlu0.b32.cont [12/16] 0.0, 128
    %2982 = vxpose.xlu0.b32.cont [13/16] 0.0, 128
    %2983 = vxpose.xlu0.b32.cont [14/16] 0.0, 128
    %2984 = vxpose.xlu0.b32.cont [15/16] 0.0, 128
    %2985 = vxpose.xlu0.b32.end [16/16] 0.0, 128
    %v2986 = vpop.trf.xlu0
    %v2987 = vpop.trf.xlu0
    %v2988 = vpop.trf.xlu0
    %v2989 = vpop.trf.xlu0
    %v2990 = vpop.trf.xlu0
    %v2991 = vpop.trf.xlu0
    %v2992 = vpop.trf.xlu0
    %v2993 = vpop.trf.xlu0
    %v2994 = vpop.trf.xlu0
    %v2995 = vpop.trf.xlu0
    %v2996 = vpop.trf.xlu0
    %v2997 = vpop.trf.xlu0
    %v2998 = vpop.trf.xlu0
    %v2999 = vpop.trf.xlu0
    %v3000 = vpop.trf.xlu0
    %v3001 = vpop.trf.xlu0
    %v3003 = vsel %vm867, %v2890, 0
    %v3006 = vsel %vm867, %v2891, 0
    %v3009 = vsel %vm867, %v2892, 0
    %v3012 = vsel %vm867, %v2893, 0
    %v3015 = vsel %vm867, %v2894, 0
    %v3018 = vsel %vm867, %v2895, 0
    %v3021 = vsel %vm867, %v2896, 0
    %v3024 = vsel %vm867, %v2897, 0
    %3026 = vmatprep.subr.mxu0 0.0
    %3027 = vmatpush1.msra.mxu0 %v2836
    %3028 = vmatprep.subr.mxu0 0.0
    %3029 = vmatpush1.msra.mxu0 0.0
    %3030 = vmatprep.subr.mxu0 0.0
    %3031 = vmatpush1.msra.mxu0 0.0
    %3032 = vmatprep.subr.mxu0 0.0
    %3033 = vmatpush1.msra.mxu0 0.0
    %3034 = vmatprep.subr.mxu0 0.0
    %3035 = vmatpush1.msra.mxu0 0.0
    %3036 = vmatprep.subr.mxu0 0.0
    %3037 = vmatpush1.msra.mxu0 0.0
    %3038 = vmatprep.subr.mxu0 0.0
    %3039 = vmatpush1.msra.mxu0 0.0
    %3040 = vmatprep.subr.mxu0 0.0
    %3041 = vmatpush1.msra.mxu0 0.0
    %3042 = vmatprep.subr.mxu0 0.0
    %3043 = vmatpush1.msra.mxu0 0.0
    %3044 = vmatprep.subr.mxu0 0.0
    %3045 = vmatpush1.msra.mxu0 0.0
    %3046 = vmatprep.subr.mxu0 0.0
    %3047 = vmatpush1.msra.mxu0 0.0
    %3048 = vmatprep.subr.mxu0 0.0
    %3049 = vmatpush1.msra.mxu0 0.0
    %3050 = vmatprep.subr.mxu0 0.0
    %3051 = vmatpush1.msra.mxu0 0.0
    %3052 = vmatprep.subr.mxu0 0.0
    %3053 = vmatpush1.msra.mxu0 0.0
    %3054 = vmatprep.subr.mxu0 0.0
    %3055 = vmatpush1.msra.mxu0 0.0
    %3056 = vmatprep.subr.mxu0 0.0
    %3057 = vmatpush1.msra.mxu0 0.0
    %3058 = vmatprep.subr.mxu0 0.0
    %3059 = vmatpush1.msra.mxu0 0.0
    %3060 = vmatprep.subr.mxu0 0.0
    %3061 = vmatpush1.msra.mxu0 0.0
    %3062 = vmatprep.subr.mxu0 0.0
    %3063 = vmatpush1.msra.mxu0 0.0
    %3064 = vmatprep.subr.mxu0 0.0
    %3065 = vmatpush1.msra.mxu0 0.0
    %3066 = vmatprep.subr.mxu0 0.0
    %3067 = vmatpush1.msra.mxu0 0.0
    %3068 = vmatprep.subr.mxu0 0.0
    %3069 = vmatpush1.msra.mxu0 0.0
    %3070 = vmatprep.subr.mxu0 0.0
    %3071 = vmatpush1.msra.mxu0 0.0
    %3072 = vmatprep.subr.mxu0 0.0
    %3073 = vmatpush1.msra.mxu0 0.0
    %3074 = vmatprep.subr.mxu0 0.0
    %3075 = vmatpush1.msra.mxu0 0.0
    %3076 = vmatprep.subr.mxu0 0.0
    %3077 = vmatpush1.msra.mxu0 0.0
    %3078 = vmatprep.subr.mxu0 0.0
    %3079 = vmatpush1.msra.mxu0 0.0
    %3080 = vmatprep.subr.mxu0 0.0
    %3081 = vmatpush1.msra.mxu0 0.0
    %3082 = vmatprep.subr.mxu0 0.0
    %3083 = vmatpush1.msra.mxu0 0.0
    %3084 = vmatprep.subr.mxu0 0.0
    %3085 = vmatpush1.msra.mxu0 0.0
    %3086 = vmatprep.subr.mxu0 0.0
    %3087 = vmatpush1.msra.mxu0 0.0
    %3088 = vmatprep.subr.mxu0 0.0
    %3089 = vmatpush1.msra.mxu0 0.0
    %3090 = vmatprep.mubr.f32.mxu0 0.0
    %3091 = vmatmul.mubr.f32.gmra.mrb[0].mxu0 %v3003
    %v3092 = vpop.f32.mrb[0].mxu0
    %v3093 = vadd.f32 0.0, %v3092
    %v3094 = vpop.f32.mrb[0].mxu0
    %3095 = vmatprep.mubr.f32.mxu0 0.0
    %3096 = vmatmul.mubr.f32.gmra.mrb[0].mxu0 %v3006
    %v3097 = vpop.f32.mrb[0].mxu0
    %v3098 = vadd.f32 0.0, %v3097
    %v3099 = vpop.f32.mrb[0].mxu0
    %3100 = vmatprep.mubr.f32.mxu0 0.0
    %3101 = vmatmul.mubr.f32.gmra.mrb[0].mxu0 %v3009
    %v3102 = vpop.f32.mrb[0].mxu0
    %v3103 = vadd.f32 0.0, %v3102
    %v3104 = vpop.f32.mrb[0].mxu0
    %3105 = vmatprep.mubr.f32.mxu0 0.0
    %3106 = vmatmul.mubr.f32.gmra.mrb[0].mxu0 %v3012
    %v3107 = vpop.f32.mrb[0].mxu0
    %v3108 = vadd.f32 0.0, %v3107
    %v3109 = vpop.f32.mrb[0].mxu0
    %3110 = vmatprep.mubr.f32.mxu0 0.0
    %3111 = vmatmul.mubr.f32.gmra.mrb[0].mxu0 %v3015
    %v3112 = vpop.f32.mrb[0].mxu0
    %v3113 = vadd.f32 0.0, %v3112
    %v3114 = vpop.f32.mrb[0].mxu0
    %3115 = vmatprep.mubr.f32.mxu0 0.0
    %3116 = vmatmul.mubr.f32.gmra.mrb[0].mxu0 %v3018
    %v3117 = vpop.f32.mrb[0].mxu0
    %v3118 = vadd.f32 0.0, %v3117
    %v3119 = vpop.f32.mrb[0].mxu0
    %3120 = vmatprep.mubr.f32.mxu0 0.0
    %3121 = vmatmul.mubr.f32.gmra.mrb[0].mxu0 %v3021
    %v3122 = vpop.f32.mrb[0].mxu0
    %v3123 = vadd.f32 0.0, %v3122
    %v3124 = vpop.f32.mrb[0].mxu0
    %3125 = vmatprep.mubr.f32.mxu0 0.0
    %3126 = vmatmul.mubr.f32.gmra.mrb[0].mxu0 %v3024
    %v3127 = vpop.f32.mrb[0].mxu0
    %v3128 = vadd.f32 0.0, %v3127
    %v3129 = vpop.f32.mrb[0].mxu0
    %3130 = vdwg.mxu0
    %v3132 = vsel %vm867, %v2922, 0
    %v3135 = vsel %vm867, %v2923, 0
    %v3138 = vsel %vm867, %v2924, 0
    %v3141 = vsel %vm867, %v2925, 0
    %v3144 = vsel %vm867, %v2926, 0
    %v3147 = vsel %vm867, %v2927, 0
    %v3150 = vsel %vm867, %v2928, 0
    %v3153 = vsel %vm867, %v2929, 0
    %3155 = vmatprep.subr.mxu0 0.0
    %3156 = vmatpush1.msra.mxu0 %v2841
    %3157 = vmatprep.subr.mxu0 0.0
    %3158 = vmatpush1.msra.mxu0 0.0
    %3159 = vmatprep.subr.mxu0 0.0
    %3160 = vmatpush1.msra.mxu0 0.0
    %3161 = vmatprep.subr.mxu0 0.0
    %3162 = vmatpush1.msra.mxu0 0.0
    %3163 = vmatprep.subr.mxu0 0.0
    %3164 = vmatpush1.msra.mxu0 0.0
    %3165 = vmatprep.subr.mxu0 0.0
    %3166 = vmatpush1.msra.mxu0 0.0
    %3167 = vmatprep.subr.mxu0 0.0
    %3168 = vmatpush1.msra.mxu0 0.0
    %3169 = vmatprep.subr.mxu0 0.0
    %3170 = vmatpush1.msra.mxu0 0.0
    %3171 = vmatprep.subr.mxu0 0.0
    %3172 = vmatpush1.msra.mxu0 0.0
    %3173 = vmatprep.subr.mxu0 0.0
    %3174 = vmatpush1.msra.mxu0 0.0
    %3175 = vmatprep.subr.mxu0 0.0
    %3176 = vmatpush1.msra.mxu0 0.0
    %3177 = vmatprep.subr.mxu0 0.0
    %3178 = vmatpush1.msra.mxu0 0.0
    %3179 = vmatprep.subr.mxu0 0.0
    %3180 = vmatpush1.msra.mxu0 0.0
    %3181 = vmatprep.subr.mxu0 0.0
    %3182 = vmatpush1.msra.mxu0 0.0
    %3183 = vmatprep.subr.mxu0 0.0
    %3184 = vmatpush1.msra.mxu0 0.0
    %3185 = vmatprep.subr.mxu0 0.0
    %3186 = vmatpush1.msra.mxu0 0.0
    %3187 = vmatprep.subr.mxu0 0.0
    %3188 = vmatpush1.msra.mxu0 0.0
    %3189 = vmatprep.subr.mxu0 0.0
    %3190 = vmatpush1.msra.mxu0 0.0
    %3191 = vmatprep.subr.mxu0 0.0
    %3192 = vmatpush1.msra.mxu0 0.0
    %3193 = vmatprep.subr.mxu0 0.0
    %3194 = vmatpush1.msra.mxu0 0.0
    %3195 = vmatprep.subr.mxu0 0.0
    %3196 = vmatpush1.msra.mxu0 0.0
    %3197 = vmatprep.subr.mxu0 0.0
    %3198 = vmatpush1.msra.mxu0 0.0
    %3199 = vmatprep.subr.mxu0 0.0
    %3200 = vmatpush1.msra.mxu0 0.0
    %3201 = vmatprep.subr.mxu0 0.0
    %3202 = vmatpush1.msra.mxu0 0.0
    %3203 = vmatprep.subr.mxu0 0.0
    %3204 = vmatpush1.msra.mxu0 0.0
    %3205 = vmatprep.subr.mxu0 0.0
    %3206 = vmatpush1.msra.mxu0 0.0
    %3207 = vmatprep.subr.mxu0 0.0
    %3208 = vmatpush1.msra.mxu0 0.0
    %3209 = vmatprep.subr.mxu0 0.0
    %3210 = vmatpush1.msra.mxu0 0.0
    %3211 = vmatprep.subr.mxu0 0.0
    %3212 = vmatpush1.msra.mxu0 0.0
    %3213 = vmatprep.subr.mxu0 0.0
    %3214 = vmatpush1.msra.mxu0 0.0
    %3215 = vmatprep.subr.mxu0 0.0
    %3216 = vmatpush1.msra.mxu0 0.0
    %3217 = vmatprep.subr.mxu0 0.0
    %3218 = vmatpush1.msra.mxu0 0.0
    %3219 = vmatprep.mubr.f32.mxu0 0.0
    %3220 = vmatmul.mubr.f32.gmra.mrb[0].mxu0 %v3132
    %v3221 = vpop.f32.mrb[0].mxu0
    %v3222 = vadd.f32 0.0, %v3221
    %v3223 = vpop.f32.mrb[0].mxu0
    %3224 = vmatprep.mubr.f32.mxu0 0.0
    %3225 = vmatmul.mubr.f32.gmra.mrb[0].mxu0 %v3135
    %v3226 = vpop.f32.mrb[0].mxu0
    %v3227 = vadd.f32 0.0, %v3226
    %v3228 = vpop.f32.mrb[0].mxu0
    %3229 = vmatprep.mubr.f32.mxu0 0.0
    %3230 = vmatmul.mubr.f32.gmra.mrb[0].mxu0 %v3138
    %v3231 = vpop.f32.mrb[0].mxu0
    %v3232 = vadd.f32 0.0, %v3231
    %v3233 = vpop.f32.mrb[0].mxu0
    %3234 = vmatprep.mubr.f32.mxu0 0.0
    %3235 = vmatmul.mubr.f32.gmra.mrb[0].mxu0 %v3141
    %v3236 = vpop.f32.mrb[0].mxu0
    %v3237 = vadd.f32 0.0, %v3236
    %v3238 = vpop.f32.mrb[0].mxu0
    %3239 = vmatprep.mubr.f32.mxu0 0.0
    %3240 = vmatmul.mubr.f32.gmra.mrb[0].mxu0 %v3144
    %v3241 = vpop.f32.mrb[0].mxu0
    %v3242 = vadd.f32 0.0, %v3241
    %v3243 = vpop.f32.mrb[0].mxu0
    %3244 = vmatprep.mubr.f32.mxu0 0.0
    %3245 = vmatmul.mubr.f32.gmra.mrb[0].mxu0 %v3147
    %v3246 = vpop.f32.mrb[0].mxu0
    %v3247 = vadd.f32 0.0, %v3246
    %v3248 = vpop.f32.mrb[0].mxu0
    %3249 = vmatprep.mubr.f32.mxu0 0.0
    %3250 = vmatmul.mubr.f32.gmra.mrb[0].mxu0 %v3150
    %v3251 = vpop.f32.mrb[0].mxu0
    %v3252 = vadd.f32 0.0, %v3251
    %v3253 = vpop.f32.mrb[0].mxu0
    %3254 = vmatprep.mubr.f32.mxu0 0.0
    %3255 = vmatmul.mubr.f32.gmra.mrb[0].mxu0 %v3153
    %v3256 = vpop.f32.mrb[0].mxu0
    %v3257 = vadd.f32 0.0, %v3256
    %v3258 = vpop.f32.mrb[0].mxu0
    %3259 = vdwg.mxu0
    %v3261 = vsel %vm867, %v2954, 0
    %v3264 = vsel %vm867, %v2955, 0
    %v3267 = vsel %vm867, %v2956, 0
    %v3270 = vsel %vm867, %v2957, 0
    %v3273 = vsel %vm867, %v2958, 0
    %v3276 = vsel %vm867, %v2959, 0
    %v3279 = vsel %vm867, %v2960, 0
    %v3282 = vsel %vm867, %v2961, 0
    %3284 = vmatprep.subr.mxu0 0.0
    %3285 = vmatpush1.msra.mxu0 %v2846
    %3286 = vmatprep.subr.mxu0 0.0
    %3287 = vmatpush1.msra.mxu0 0.0
    %3288 = vmatprep.subr.mxu0 0.0
    %3289 = vmatpush1.msra.mxu0 0.0
    %3290 = vmatprep.subr.mxu0 0.0
    %3291 = vmatpush1.msra.mxu0 0.0
    %3292 = vmatprep.subr.mxu0 0.0
    %3293 = vmatpush1.msra.mxu0 0.0
    %3294 = vmatprep.subr.mxu0 0.0
    %3295 = vmatpush1.msra.mxu0 0.0
    %3296 = vmatprep.subr.mxu0 0.0
    %3297 = vmatpush1.msra.mxu0 0.0
    %3298 = vmatprep.subr.mxu0 0.0
    %3299 = vmatpush1.msra.mxu0 0.0
    %3300 = vmatprep.subr.mxu0 0.0
    %3301 = vmatpush1.msra.mxu0 0.0
    %3302 = vmatprep.subr.mxu0 0.0
    %3303 = vmatpush1.msra.mxu0 0.0
    %3304 = vmatprep.subr.mxu0 0.0
    %3305 = vmatpush1.msra.mxu0 0.0
    %3306 = vmatprep.subr.mxu0 0.0
    %3307 = vmatpush1.msra.mxu0 0.0
    %3308 = vmatprep.subr.mxu0 0.0
    %3309 = vmatpush1.msra.mxu0 0.0
    %3310 = vmatprep.subr.mxu0 0.0
    %3311 = vmatpush1.msra.mxu0 0.0
    %3312 = vmatprep.subr.mxu0 0.0
    %3313 = vmatpush1.msra.mxu0 0.0
    %3314 = vmatprep.subr.mxu0 0.0
    %3315 = vmatpush1.msra.mxu0 0.0
    %3316 = vmatprep.subr.mxu0 0.0
    %3317 = vmatpush1.msra.mxu0 0.0
    %3318 = vmatprep.subr.mxu0 0.0
    %3319 = vmatpush1.msra.mxu0 0.0
    %3320 = vmatprep.subr.mxu0 0.0
    %3321 = vmatpush1.msra.mxu0 0.0
    %3322 = vmatprep.subr.mxu0 0.0
    %3323 = vmatpush1.msra.mxu0 0.0
    %3324 = vmatprep.subr.mxu0 0.0
    %3325 = vmatpush1.msra.mxu0 0.0
    %3326 = vmatprep.subr.mxu0 0.0
    %3327 = vmatpush1.msra.mxu0 0.0
    %3328 = vmatprep.subr.mxu0 0.0
    %3329 = vmatpush1.msra.mxu0 0.0
    %3330 = vmatprep.subr.mxu0 0.0
    %3331 = vmatpush1.msra.mxu0 0.0
    %3332 = vmatprep.subr.mxu0 0.0
    %3333 = vmatpush1.msra.mxu0 0.0
    %3334 = vmatprep.subr.mxu0 0.0
    %3335 = vmatpush1.msra.mxu0 0.0
    %3336 = vmatprep.subr.mxu0 0.0
    %3337 = vmatpush1.msra.mxu0 0.0
    %3338 = vmatprep.subr.mxu0 0.0
    %3339 = vmatpush1.msra.mxu0 0.0
    %3340 = vmatprep.subr.mxu0 0.0
    %3341 = vmatpush1.msra.mxu0 0.0
    %3342 = vmatprep.subr.mxu0 0.0
    %3343 = vmatpush1.msra.mxu0 0.0
    %3344 = vmatprep.subr.mxu0 0.0
    %3345 = vmatpush1.msra.mxu0 0.0
    %3346 = vmatprep.subr.mxu0 0.0
    %3347 = vmatpush1.msra.mxu0 0.0
    %3348 = vmatprep.mubr.f32.mxu0 0.0
    %3349 = vmatmul.mubr.f32.gmra.mrb[0].mxu0 %v3261
    %v3350 = vpop.f32.mrb[0].mxu0
    %v3351 = vadd.f32 0.0, %v3350
    %v3352 = vpop.f32.mrb[0].mxu0
    %3353 = vmatprep.mubr.f32.mxu0 0.0
    %3354 = vmatmul.mubr.f32.gmra.mrb[0].mxu0 %v3264
    %v3355 = vpop.f32.mrb[0].mxu0
    %v3356 = vadd.f32 0.0, %v3355
    %v3357 = vpop.f32.mrb[0].mxu0
    %3358 = vmatprep.mubr.f32.mxu0 0.0
    %3359 = vmatmul.mubr.f32.gmra.mrb[0].mxu0 %v3267
    %v3360 = vpop.f32.mrb[0].mxu0
    %v3361 = vadd.f32 0.0, %v3360
    %v3362 = vpop.f32.mrb[0].mxu0
    %3363 = vmatprep.mubr.f32.mxu0 0.0
    %3364 = vmatmul.mubr.f32.gmra.mrb[0].mxu0 %v3270
    %v3365 = vpop.f32.mrb[0].mxu0
    %v3366 = vadd.f32 0.0, %v3365
    %v3367 = vpop.f32.mrb[0].mxu0
    %3368 = vmatprep.mubr.f32.mxu0 0.0
    %3369 = vmatmul.mubr.f32.gmra.mrb[0].mxu0 %v3273
    %v3370 = vpop.f32.mrb[0].mxu0
    %v3371 = vadd.f32 0.0, %v3370
    %v3372 = vpop.f32.mrb[0].mxu0
    %3373 = vmatprep.mubr.f32.mxu0 0.0
    %3374 = vmatmul.mubr.f32.gmra.mrb[0].mxu0 %v3276
    %v3375 = vpop.f32.mrb[0].mxu0
    %v3376 = vadd.f32 0.0, %v3375
    %v3377 = vpop.f32.mrb[0].mxu0
    %3378 = vmatprep.mubr.f32.mxu0 0.0
    %3379 = vmatmul.mubr.f32.gmra.mrb[0].mxu0 %v3279
    %v3380 = vpop.f32.mrb[0].mxu0
    %v3381 = vadd.f32 0.0, %v3380
    %v3382 = vpop.f32.mrb[0].mxu0
    %3383 = vmatprep.mubr.f32.mxu0 0.0
    %3384 = vmatmul.mubr.f32.gmra.mrb[0].mxu0 %v3282
    %v3385 = vpop.f32.mrb[0].mxu0
    %v3386 = vadd.f32 0.0, %v3385
    %v3387 = vpop.f32.mrb[0].mxu0
    %3388 = vdwg.mxu0
    %v3390 = vsel %vm867, %v2986, 0
    %v3393 = vsel %vm867, %v2987, 0
    %v3396 = vsel %vm867, %v2988, 0
    %v3399 = vsel %vm867, %v2989, 0
    %v3402 = vsel %vm867, %v2990, 0
    %v3405 = vsel %vm867, %v2991, 0
    %v3408 = vsel %vm867, %v2992, 0
    %v3411 = vsel %vm867, %v2993, 0
    %3413 = vmatprep.subr.mxu0 0.0
    %3414 = vmatpush1.msra.mxu0 %v2851
    %3415 = vmatprep.subr.mxu0 0.0
    %3416 = vmatpush1.msra.mxu0 0.0
    %3417 = vmatprep.subr.mxu0 0.0
    %3418 = vmatpush1.msra.mxu0 0.0
    %3419 = vmatprep.subr.mxu0 0.0
    %3420 = vmatpush1.msra.mxu0 0.0
    %3421 = vmatprep.subr.mxu0 0.0
    %3422 = vmatpush1.msra.mxu0 0.0
    %3423 = vmatprep.subr.mxu0 0.0
    %3424 = vmatpush1.msra.mxu0 0.0
    %3425 = vmatprep.subr.mxu0 0.0
    %3426 = vmatpush1.msra.mxu0 0.0
    %3427 = vmatprep.subr.mxu0 0.0
    %3428 = vmatpush1.msra.mxu0 0.0
    %3429 = vmatprep.subr.mxu0 0.0
    %3430 = vmatpush1.msra.mxu0 0.0
    %3431 = vmatprep.subr.mxu0 0.0
    %3432 = vmatpush1.msra.mxu0 0.0
    %3433 = vmatprep.subr.mxu0 0.0
    %3434 = vmatpush1.msra.mxu0 0.0
    %3435 = vmatprep.subr.mxu0 0.0
    %3436 = vmatpush1.msra.mxu0 0.0
    %3437 = vmatprep.subr.mxu0 0.0
    %3438 = vmatpush1.msra.mxu0 0.0
    %3439 = vmatprep.subr.mxu0 0.0
    %3440 = vmatpush1.msra.mxu0 0.0
    %3441 = vmatprep.subr.mxu0 0.0
    %3442 = vmatpush1.msra.mxu0 0.0
    %3443 = vmatprep.subr.mxu0 0.0
    %3444 = vmatpush1.msra.mxu0 0.0
    %3445 = vmatprep.subr.mxu0 0.0
    %3446 = vmatpush1.msra.mxu0 0.0
    %3447 = vmatprep.subr.mxu0 0.0
    %3448 = vmatpush1.msra.mxu0 0.0
    %3449 = vmatprep.subr.mxu0 0.0
    %3450 = vmatpush1.msra.mxu0 0.0
    %3451 = vmatprep.subr.mxu0 0.0
    %3452 = vmatpush1.msra.mxu0 0.0
    %3453 = vmatprep.subr.mxu0 0.0
    %3454 = vmatpush1.msra.mxu0 0.0
    %3455 = vmatprep.subr.mxu0 0.0
    %3456 = vmatpush1.msra.mxu0 0.0
    %3457 = vmatprep.subr.mxu0 0.0
    %3458 = vmatpush1.msra.mxu0 0.0
    %3459 = vmatprep.subr.mxu0 0.0
    %3460 = vmatpush1.msra.mxu0 0.0
    %3461 = vmatprep.subr.mxu0 0.0
    %3462 = vmatpush1.msra.mxu0 0.0
    %3463 = vmatprep.subr.mxu0 0.0
    %3464 = vmatpush1.msra.mxu0 0.0
    %3465 = vmatprep.subr.mxu0 0.0
    %3466 = vmatpush1.msra.mxu0 0.0
    %3467 = vmatprep.subr.mxu0 0.0
    %3468 = vmatpush1.msra.mxu0 0.0
    %3469 = vmatprep.subr.mxu0 0.0
    %3470 = vmatpush1.msra.mxu0 0.0
    %3471 = vmatprep.subr.mxu0 0.0
    %3472 = vmatpush1.msra.mxu0 0.0
    %3473 = vmatprep.subr.mxu0 0.0
    %3474 = vmatpush1.msra.mxu0 0.0
    %3475 = vmatprep.subr.mxu0 0.0
    %3476 = vmatpush1.msra.mxu0 0.0
    %3477 = vmatprep.mubr.f32.mxu0 0.0
    %3478 = vmatmul.mubr.f32.gmra.mrb[0].mxu0 %v3390
    %v3479 = vpop.f32.mrb[0].mxu0
    %v3480 = vadd.f32 0.0, %v3479
    %v3481 = vpop.f32.mrb[0].mxu0
    %3482 = vmatprep.mubr.f32.mxu0 0.0
    %3483 = vmatmul.mubr.f32.gmra.mrb[0].mxu0 %v3393
    %v3484 = vpop.f32.mrb[0].mxu0
    %v3485 = vadd.f32 0.0, %v3484
    %v3486 = vpop.f32.mrb[0].mxu0
    %3487 = vmatprep.mubr.f32.mxu0 0.0
    %3488 = vmatmul.mubr.f32.gmra.mrb[0].mxu0 %v3396
    %v3489 = vpop.f32.mrb[0].mxu0
    %v3490 = vadd.f32 0.0, %v3489
    %v3491 = vpop.f32.mrb[0].mxu0
    %3492 = vmatprep.mubr.f32.mxu0 0.0
    %3493 = vmatmul.mubr.f32.gmra.mrb[0].mxu0 %v3399
    %v3494 = vpop.f32.mrb[0].mxu0
    %v3495 = vadd.f32 0.0, %v3494
    %v3496 = vpop.f32.mrb[0].mxu0
    %3497 = vmatprep.mubr.f32.mxu0 0.0
    %3498 = vmatmul.mubr.f32.gmra.mrb[0].mxu0 %v3402
    %v3499 = vpop.f32.mrb[0].mxu0
    %v3500 = vadd.f32 0.0, %v3499
    %v3501 = vpop.f32.mrb[0].mxu0
    %3502 = vmatprep.mubr.f32.mxu0 0.0
    %3503 = vmatmul.mubr.f32.gmra.mrb[0].mxu0 %v3405
    %v3504 = vpop.f32.mrb[0].mxu0
    %v3505 = vadd.f32 0.0, %v3504
    %v3506 = vpop.f32.mrb[0].mxu0
    %3507 = vmatprep.mubr.f32.mxu0 0.0
    %3508 = vmatmul.mubr.f32.gmra.mrb[0].mxu0 %v3408
    %v3509 = vpop.f32.mrb[0].mxu0
    %v3510 = vadd.f32 0.0, %v3509
    %v3511 = vpop.f32.mrb[0].mxu0
    %3512 = vmatprep.mubr.f32.mxu0 0.0
    %3513 = vmatmul.mubr.f32.gmra.mrb[0].mxu0 %v3411
    %v3514 = vpop.f32.mrb[0].mxu0
    %v3515 = vadd.f32 0.0, %v3514
    %v3516 = vpop.f32.mrb[0].mxu0
    %3517 = vdwg.mxu0
    %v3518 = vsel %vm1384, %v3093, -inf
    %3519 = vmax.xlane.f32.xlu0 %v3518
    %v3520 = vpop.xlane.xlu0 %3519
    %v3521 = vsel %vm1384, %v3098, -inf
    %3522 = vmax.xlane.f32.xlu0 %v3521
    %v3523 = vpop.xlane.xlu0 %3522
    %v3524 = vsel %vm1384, %v3103, -inf
    %3525 = vmax.xlane.f32.xlu0 %v3524
    %v3526 = vpop.xlane.xlu0 %3525
    %v3527 = vsel %vm1384, %v3108, -inf
    %3528 = vmax.xlane.f32.xlu0 %v3527
    %v3529 = vpop.xlane.xlu0 %3528
    %v3530 = vsel %vm1384, %v3113, -inf
    %3531 = vmax.xlane.f32.xlu0 %v3530
    %v3532 = vpop.xlane.xlu0 %3531
    %v3533 = vsel %vm1384, %v3118, -inf
    %3534 = vmax.xlane.f32.xlu0 %v3533
    %v3535 = vpop.xlane.xlu0 %3534
    %v3536 = vsel %vm1384, %v3123, -inf
    %3537 = vmax.xlane.f32.xlu0 %v3536
    %v3538 = vpop.xlane.xlu0 %3537
    %v3539 = vsel %vm1384, %v3128, -inf
    %3540 = vmax.xlane.f32.xlu0 %v3539
    %v3541 = vpop.xlane.xlu0 %3540
    %v3542 = vsel %vm1384, %v3222, -inf
    %3543 = vmax.xlane.f32.xlu0 %v3542
    %v3544 = vpop.xlane.xlu0 %3543
    %v3545 = vsel %vm1384, %v3227, -inf
    %3546 = vmax.xlane.f32.xlu0 %v3545
    %v3547 = vpop.xlane.xlu0 %3546
    %v3548 = vsel %vm1384, %v3232, -inf
    %3549 = vmax.xlane.f32.xlu0 %v3548
    %v3550 = vpop.xlane.xlu0 %3549
    %v3551 = vsel %vm1384, %v3237, -inf
    %3552 = vmax.xlane.f32.xlu0 %v3551
    %v3553 = vpop.xlane.xlu0 %3552
    %v3554 = vsel %vm1384, %v3242, -inf
    %3555 = vmax.xlane.f32.xlu0 %v3554
    %v3556 = vpop.xlane.xlu0 %3555
    %v3557 = vsel %vm1384, %v3247, -inf
    %3558 = vmax.xlane.f32.xlu0 %v3557
    %v3559 = vpop.xlane.xlu0 %3558
    %v3560 = vsel %vm1384, %v3252, -inf
    %3561 = vmax.xlane.f32.xlu0 %v3560
    %v3562 = vpop.xlane.xlu0 %3561
    %v3563 = vsel %vm1384, %v3257, -inf
    %3564 = vmax.xlane.f32.xlu0 %v3563
    %v3565 = vpop.xlane.xlu0 %3564
    %v3566 = vsel %vm1384, %v3351, -inf
    %3567 = vmax.xlane.f32.xlu0 %v3566
    %v3568 = vpop.xlane.xlu0 %3567
    %v3569 = vsel %vm1384, %v3356, -inf
    %3570 = vmax.xlane.f32.xlu0 %v3569
    %v3571 = vpop.xlane.xlu0 %3570
    %v3572 = vsel %vm1384, %v3361, -inf
    %3573 = vmax.xlane.f32.xlu0 %v3572
    %v3574 = vpop.xlane.xlu0 %3573
    %v3575 = vsel %vm1384, %v3366, -inf
    %3576 = vmax.xlane.f32.xlu0 %v3575
    %v3577 = vpop.xlane.xlu0 %3576
    %v3578 = vsel %vm1384, %v3371, -inf
    %3579 = vmax.xlane.f32.xlu0 %v3578
    %v3580 = vpop.xlane.xlu0 %3579
    %v3581 = vsel %vm1384, %v3376, -inf
    %3582 = vmax.xlane.f32.xlu0 %v3581
    %v3583 = vpop.xlane.xlu0 %3582
    %v3584 = vsel %vm1384, %v3381, -inf
    %3585 = vmax.xlane.f32.xlu0 %v3584
    %v3586 = vpop.xlane.xlu0 %3585
    %v3587 = vsel %vm1384, %v3386, -inf
    %3588 = vmax.xlane.f32.xlu0 %v3587
    %v3589 = vpop.xlane.xlu0 %3588
    %v3590 = vsel %vm1384, %v3480, -inf
    %3591 = vmax.xlane.f32.xlu0 %v3590
    %v3592 = vpop.xlane.xlu0 %3591
    %v3593 = vsel %vm1384, %v3485, -inf
    %3594 = vmax.xlane.f32.xlu0 %v3593
    %v3595 = vpop.xlane.xlu0 %3594
    %v3596 = vsel %vm1384, %v3490, -inf
    %3597 = vmax.xlane.f32.xlu0 %v3596
    %v3598 = vpop.xlane.xlu0 %3597
    %v3599 = vsel %vm1384, %v3495, -inf
    %3600 = vmax.xlane.f32.xlu0 %v3599
    %v3601 = vpop.xlane.xlu0 %3600
    %v3602 = vsel %vm1384, %v3500, -inf
    %3603 = vmax.xlane.f32.xlu0 %v3602
    %v3604 = vpop.xlane.xlu0 %3603
    %v3605 = vsel %vm1384, %v3505, -inf
    %3606 = vmax.xlane.f32.xlu0 %v3605
    %v3607 = vpop.xlane.xlu0 %3606
    %v3608 = vsel %vm1384, %v3510, -inf
    %3609 = vmax.xlane.f32.xlu0 %v3608
    %v3610 = vpop.xlane.xlu0 %3609
    %v3611 = vsel %vm1384, %v3515, -inf
    %3612 = vmax.xlane.f32.xlu0 %v3611
    %v3613 = vpop.xlane.xlu0 %3612
    %v3614 = vsub.f32 %v3093, %v3520
    %v3615 = vsub.f32 %v3098, %v3523
    %v3616 = vsub.f32 %v3103, %v3526
    %v3617 = vsub.f32 %v3108, %v3529
    %v3618 = vsub.f32 %v3113, %v3532
    %v3619 = vsub.f32 %v3118, %v3535
    %v3620 = vsub.f32 %v3123, %v3538
    %v3621 = vsub.f32 %v3128, %v3541
    %v3622 = vsub.f32 %v3222, %v3544
    %v3623 = vsub.f32 %v3227, %v3547
    %v3624 = vsub.f32 %v3232, %v3550
    %v3625 = vsub.f32 %v3237, %v3553
    %v3626 = vsub.f32 %v3242, %v3556
    %v3627 = vsub.f32 %v3247, %v3559
    %v3628 = vsub.f32 %v3252, %v3562
    %v3629 = vsub.f32 %v3257, %v3565
    %v3630 = vsub.f32 %v3351, %v3568
    %v3631 = vsub.f32 %v3356, %v3571
    %v3632 = vsub.f32 %v3361, %v3574
    %v3633 = vsub.f32 %v3366, %v3577
    %v3634 = vsub.f32 %v3371, %v3580
    %v3635 = vsub.f32 %v3376, %v3583
    %v3636 = vsub.f32 %v3381, %v3586
    %v3637 = vsub.f32 %v3386, %v3589
    %v3638 = vsub.f32 %v3480, %v3592
    %v3639 = vsub.f32 %v3485, %v3595
    %v3640 = vsub.f32 %v3490, %v3598
    %v3641 = vsub.f32 %v3495, %v3601
    %v3642 = vsub.f32 %v3500, %v3604
    %v3643 = vsub.f32 %v3505, %v3607
    %v3644 = vsub.f32 %v3510, %v3610
    %v3645 = vsub.f32 %v3515, %v3613
    %v3646 = vmul.f32 %v3614, 1.442695
    %v3647 = vpow.pop %v3646
    %v3648 = vmul.f32 %v3615, 1.442695
    %v3649 = vpow.pop %v3648
    %v3650 = vmul.f32 %v3616, 1.442695
    %v3651 = vpow.pop %v3650
    %v3652 = vmul.f32 %v3617, 1.442695
    %v3653 = vpow.pop %v3652
    %v3654 = vmul.f32 %v3618, 1.442695
    %v3655 = vpow.pop %v3654
    %v3656 = vmul.f32 %v3619, 1.442695
    %v3657 = vpow.pop %v3656
    %v3658 = vmul.f32 %v3620, 1.442695
    %v3659 = vpow.pop %v3658
    %v3660 = vmul.f32 %v3621, 1.442695
    %v3661 = vpow.pop %v3660
    %v3662 = vmul.f32 %v3622, 1.442695
    %v3663 = vpow.pop %v3662
    %v3664 = vmul.f32 %v3623, 1.442695
    %v3665 = vpow.pop %v3664
    %v3666 = vmul.f32 %v3624, 1.442695
    %v3667 = vpow.pop %v3666
    %v3668 = vmul.f32 %v3625, 1.442695
    %v3669 = vpow.pop %v3668
    %v3670 = vmul.f32 %v3626, 1.442695
    %v3671 = vpow.pop %v3670
    %v3672 = vmul.f32 %v3627, 1.442695
    %v3673 = vpow.pop %v3672
    %v3674 = vmul.f32 %v3628, 1.442695
    %v3675 = vpow.pop %v3674
    %v3676 = vmul.f32 %v3629, 1.442695
    %v3677 = vpow.pop %v3676
    %v3678 = vmul.f32 %v3630, 1.442695
    %v3679 = vpow.pop %v3678
    %v3680 = vmul.f32 %v3631, 1.442695
    %v3681 = vpow.pop %v3680
    %v3682 = vmul.f32 %v3632, 1.442695
    %v3683 = vpow.pop %v3682
    %v3684 = vmul.f32 %v3633, 1.442695
    %v3685 = vpow.pop %v3684
    %v3686 = vmul.f32 %v3634, 1.442695
    %v3687 = vpow.pop %v3686
    %v3688 = vmul.f32 %v3635, 1.442695
    %v3689 = vpow.pop %v3688
    %v3690 = vmul.f32 %v3636, 1.442695
    %v3691 = vpow.pop %v3690
    %v3692 = vmul.f32 %v3637, 1.442695
    %v3693 = vpow.pop %v3692
    %v3694 = vmul.f32 %v3638, 1.442695
    %v3695 = vpow.pop %v3694
    %v3696 = vmul.f32 %v3639, 1.442695
    %v3697 = vpow.pop %v3696
    %v3698 = vmul.f32 %v3640, 1.442695
    %v3699 = vpow.pop %v3698
    %v3700 = vmul.f32 %v3641, 1.442695
    %v3701 = vpow.pop %v3700
    %v3702 = vmul.f32 %v3642, 1.442695
    %v3703 = vpow.pop %v3702
    %v3704 = vmul.f32 %v3643, 1.442695
    %v3705 = vpow.pop %v3704
    %v3706 = vmul.f32 %v3644, 1.442695
    %v3707 = vpow.pop %v3706
    %v3708 = vmul.f32 %v3645, 1.442695
    %v3709 = vpow.pop %v3708
    %v3710 = vsel %vm1384, %v3647, 0.0
    %3711 = vadd.xlane.f32.xlu0 %v3710
    %v3712 = vpop.xlane.xlu0 %3711
    %v3713 = vsel %vm1384, %v3649, 0.0
    %3714 = vadd.xlane.f32.xlu0 %v3713
    %v3715 = vpop.xlane.xlu0 %3714
    %v3716 = vsel %vm1384, %v3651, 0.0
    %3717 = vadd.xlane.f32.xlu0 %v3716
    %v3718 = vpop.xlane.xlu0 %3717
    %v3719 = vsel %vm1384, %v3653, 0.0
    %3720 = vadd.xlane.f32.xlu0 %v3719
    %v3721 = vpop.xlane.xlu0 %3720
    %v3722 = vsel %vm1384, %v3655, 0.0
    %3723 = vadd.xlane.f32.xlu0 %v3722
    %v3724 = vpop.xlane.xlu0 %3723
    %v3725 = vsel %vm1384, %v3657, 0.0
    %3726 = vadd.xlane.f32.xlu0 %v3725
    %v3727 = vpop.xlane.xlu0 %3726
    %v3728 = vsel %vm1384, %v3659, 0.0
    %3729 = vadd.xlane.f32.xlu0 %v3728
    %v3730 = vpop.xlane.xlu0 %3729
    %v3731 = vsel %vm1384, %v3661, 0.0
    %3732 = vadd.xlane.f32.xlu0 %v3731
    %v3733 = vpop.xlane.xlu0 %3732
    %v3734 = vsel %vm1384, %v3663, 0.0
    %3735 = vadd.xlane.f32.xlu0 %v3734
    %v3736 = vpop.xlane.xlu0 %3735
    %v3737 = vsel %vm1384, %v3665, 0.0
    %3738 = vadd.xlane.f32.xlu0 %v3737
    %v3739 = vpop.xlane.xlu0 %3738
    %v3740 = vsel %vm1384, %v3667, 0.0
    %3741 = vadd.xlane.f32.xlu0 %v3740
    %v3742 = vpop.xlane.xlu0 %3741
    %v3743 = vsel %vm1384, %v3669, 0.0
    %3744 = vadd.xlane.f32.xlu0 %v3743
    %v3745 = vpop.xlane.xlu0 %3744
    %v3746 = vsel %vm1384, %v3671, 0.0
    %3747 = vadd.xlane.f32.xlu0 %v3746
    %v3748 = vpop.xlane.xlu0 %3747
    %v3749 = vsel %vm1384, %v3673, 0.0
    %3750 = vadd.xlane.f32.xlu0 %v3749
    %v3751 = vpop.xlane.xlu0 %3750
    %v3752 = vsel %vm1384, %v3675, 0.0
    %3753 = vadd.xlane.f32.xlu0 %v3752
    %v3754 = vpop.xlane.xlu0 %3753
    %v3755 = vsel %vm1384, %v3677, 0.0
    %3756 = vadd.xlane.f32.xlu0 %v3755
    %v3757 = vpop.xlane.xlu0 %3756
    %v3758 = vsel %vm1384, %v3679, 0.0
    %3759 = vadd.xlane.f32.xlu0 %v3758
    %v3760 = vpop.xlane.xlu0 %3759
    %v3761 = vsel %vm1384, %v3681, 0.0
    %3762 = vadd.xlane.f32.xlu0 %v3761
    %v3763 = vpop.xlane.xlu0 %3762
    %v3764 = vsel %vm1384, %v3683, 0.0
    %3765 = vadd.xlane.f32.xlu0 %v3764
    %v3766 = vpop.xlane.xlu0 %3765
    %v3767 = vsel %vm1384, %v3685, 0.0
    %3768 = vadd.xlane.f32.xlu0 %v3767
    %v3769 = vpop.xlane.xlu0 %3768
    %v3770 = vsel %vm1384, %v3687, 0.0
    %3771 = vadd.xlane.f32.xlu0 %v3770
    %v3772 = vpop.xlane.xlu0 %3771
    %v3773 = vsel %vm1384, %v3689, 0.0
    %3774 = vadd.xlane.f32.xlu0 %v3773
    %v3775 = vpop.xlane.xlu0 %3774
    %v3776 = vsel %vm1384, %v3691, 0.0
    %3777 = vadd.xlane.f32.xlu0 %v3776
    %v3778 = vpop.xlane.xlu0 %3777
    %v3779 = vsel %vm1384, %v3693, 0.0
    %3780 = vadd.xlane.f32.xlu0 %v3779
    %v3781 = vpop.xlane.xlu0 %3780
    %v3782 = vsel %vm1384, %v3695, 0.0
    %3783 = vadd.xlane.f32.xlu0 %v3782
    %v3784 = vpop.xlane.xlu0 %3783
    %v3785 = vsel %vm1384, %v3697, 0.0
    %3786 = vadd.xlane.f32.xlu0 %v3785
    %v3787 = vpop.xlane.xlu0 %3786
    %v3788 = vsel %vm1384, %v3699, 0.0
    %3789 = vadd.xlane.f32.xlu0 %v3788
    %v3790 = vpop.xlane.xlu0 %3789
    %v3791 = vsel %vm1384, %v3701, 0.0
    %3792 = vadd.xlane.f32.xlu0 %v3791
    %v3793 = vpop.xlane.xlu0 %3792
    %v3794 = vsel %vm1384, %v3703, 0.0
    %3795 = vadd.xlane.f32.xlu0 %v3794
    %v3796 = vpop.xlane.xlu0 %3795
    %v3797 = vsel %vm1384, %v3705, 0.0
    %3798 = vadd.xlane.f32.xlu0 %v3797
    %v3799 = vpop.xlane.xlu0 %3798
    %v3800 = vsel %vm1384, %v3707, 0.0
    %3801 = vadd.xlane.f32.xlu0 %v3800
    %v3802 = vpop.xlane.xlu0 %3801
    %v3803 = vsel %vm1384, %v3709, 0.0
    %3804 = vadd.xlane.f32.xlu0 %v3803
    %v3805 = vpop.xlane.xlu0 %3804
    %v3807 = vsel %vm1384, %v2856, 0
    %v3810 = vsel %vm1384, %v3647, 0
    %v3813 = vsel %vm1384, %v3649, 0
    %v3816 = vsel %vm1384, %v3651, 0
    %v3819 = vsel %vm1384, %v3653, 0
    %v3822 = vsel %vm1384, %v3655, 0
    %v3825 = vsel %vm1384, %v3657, 0
    %v3828 = vsel %vm1384, %v3659, 0
    %v3831 = vsel %vm1384, %v3661, 0
    %3833 = vmatprep.subr.mxu0 0.0
    %3834 = vmatpush1.xpose.msra.mxu0 %v3810
    %3835 = vmatprep.subr.mxu0 0.0
    %3836 = vmatpush1.xpose.msra.mxu0 %v3813
    %3837 = vmatprep.subr.mxu0 0.0
    %3838 = vmatpush1.xpose.msra.mxu0 %v3816
    %3839 = vmatprep.subr.mxu0 0.0
    %3840 = vmatpush1.xpose.msra.mxu0 %v3819
    %3841 = vmatprep.subr.mxu0 0.0
    %3842 = vmatpush1.xpose.msra.mxu0 %v3822
    %3843 = vmatprep.subr.mxu0 0.0
    %3844 = vmatpush1.xpose.msra.mxu0 %v3825
    %3845 = vmatprep.subr.mxu0 0.0
    %3846 = vmatpush1.xpose.msra.mxu0 %v3828
    %3847 = vmatprep.subr.mxu0 0.0
    %3848 = vmatpush1.xpose.msra.mxu0 %v3831
    %3849 = vmatprep.subr.mxu0 0.0
    %3850 = vmatpush1.xpose.msra.mxu0 0.0
    %3851 = vmatprep.subr.mxu0 0.0
    %3852 = vmatpush1.xpose.msra.mxu0 0.0
    %3853 = vmatprep.subr.mxu0 0.0
    %3854 = vmatpush1.xpose.msra.mxu0 0.0
    %3855 = vmatprep.subr.mxu0 0.0
    %3856 = vmatpush1.xpose.msra.mxu0 0.0
    %3857 = vmatprep.subr.mxu0 0.0
    %3858 = vmatpush1.xpose.msra.mxu0 0.0
    %3859 = vmatprep.subr.mxu0 0.0
    %3860 = vmatpush1.xpose.msra.mxu0 0.0
    %3861 = vmatprep.subr.mxu0 0.0
    %3862 = vmatpush1.xpose.msra.mxu0 0.0
    %3863 = vmatprep.subr.mxu0 0.0
    %3864 = vmatpush1.xpose.msra.mxu0 0.0
    %3865 = vmatprep.subr.mxu0 0.0
    %3866 = vmatpush1.xpose.msra.mxu0 0.0
    %3867 = vmatprep.subr.mxu0 0.0
    %3868 = vmatpush1.xpose.msra.mxu0 0.0
    %3869 = vmatprep.subr.mxu0 0.0
    %3870 = vmatpush1.xpose.msra.mxu0 0.0
    %3871 = vmatprep.subr.mxu0 0.0
    %3872 = vmatpush1.xpose.msra.mxu0 0.0
    %3873 = vmatprep.subr.mxu0 0.0
    %3874 = vmatpush1.xpose.msra.mxu0 0.0
    %3875 = vmatprep.subr.mxu0 0.0
    %3876 = vmatpush1.xpose.msra.mxu0 0.0
    %3877 = vmatprep.subr.mxu0 0.0
    %3878 = vmatpush1.xpose.msra.mxu0 0.0
    %3879 = vmatprep.subr.mxu0 0.0
    %3880 = vmatpush1.xpose.msra.mxu0 0.0
    %3881 = vmatprep.subr.mxu0 0.0
    %3882 = vmatpush1.xpose.msra.mxu0 0.0
    %3883 = vmatprep.subr.mxu0 0.0
    %3884 = vmatpush1.xpose.msra.mxu0 0.0
    %3885 = vmatprep.subr.mxu0 0.0
    %3886 = vmatpush1.xpose.msra.mxu0 0.0
    %3887 = vmatprep.subr.mxu0 0.0
    %3888 = vmatpush1.xpose.msra.mxu0 0.0
    %3889 = vmatprep.subr.mxu0 0.0
    %3890 = vmatpush1.xpose.msra.mxu0 0.0
    %3891 = vmatprep.subr.mxu0 0.0
    %3892 = vmatpush1.xpose.msra.mxu0 0.0
    %3893 = vmatprep.subr.mxu0 0.0
    %3894 = vmatpush1.xpose.msra.mxu0 0.0
    %3895 = vmatprep.subr.mxu0 0.0
    %3896 = vmatpush1.xpose.msra.mxu0 0.0
    %3897 = vmatprep.mubr.f32.mxu0 0.0
    %3898 = vmatmul.mubr.f32.gmra.mrb[0].mxu0 %v3807
    %v3899 = vpop.f32.mrb[0].mxu0
    %v3900 = vadd.f32 0.0, %v3899
    %v3901 = vpop.f32.mrb[0].mxu0
    %3902 = vdwg.mxu0
    %v3904 = vsel %vm1384, %v2861, 0
    %v3907 = vsel %vm1384, %v3663, 0
    %v3910 = vsel %vm1384, %v3665, 0
    %v3913 = vsel %vm1384, %v3667, 0
    %v3916 = vsel %vm1384, %v3669, 0
    %v3919 = vsel %vm1384, %v3671, 0
    %v3922 = vsel %vm1384, %v3673, 0
    %v3925 = vsel %vm1384, %v3675, 0
    %v3928 = vsel %vm1384, %v3677, 0
    %3930 = vmatprep.subr.mxu0 0.0
    %3931 = vmatpush1.xpose.msra.mxu0 %v3907
    %3932 = vmatprep.subr.mxu0 0.0
    %3933 = vmatpush1.xpose.msra.mxu0 %v3910
    %3934 = vmatprep.subr.mxu0 0.0
    %3935 = vmatpush1.xpose.msra.mxu0 %v3913
    %3936 = vmatprep.subr.mxu0 0.0
    %3937 = vmatpush1.xpose.msra.mxu0 %v3916
    %3938 = vmatprep.subr.mxu0 0.0
    %3939 = vmatpush1.xpose.msra.mxu0 %v3919
    %3940 = vmatprep.subr.mxu0 0.0
    %3941 = vmatpush1.xpose.msra.mxu0 %v3922
    %3942 = vmatprep.subr.mxu0 0.0
    %3943 = vmatpush1.xpose.msra.mxu0 %v3925
    %3944 = vmatprep.subr.mxu0 0.0
    %3945 = vmatpush1.xpose.msra.mxu0 %v3928
    %3946 = vmatprep.subr.mxu0 0.0
    %3947 = vmatpush1.xpose.msra.mxu0 0.0
    %3948 = vmatprep.subr.mxu0 0.0
    %3949 = vmatpush1.xpose.msra.mxu0 0.0
    %3950 = vmatprep.subr.mxu0 0.0
    %3951 = vmatpush1.xpose.msra.mxu0 0.0
    %3952 = vmatprep.subr.mxu0 0.0
    %3953 = vmatpush1.xpose.msra.mxu0 0.0
    %3954 = vmatprep.subr.mxu0 0.0
    %3955 = vmatpush1.xpose.msra.mxu0 0.0
    %3956 = vmatprep.subr.mxu0 0.0
    %3957 = vmatpush1.xpose.msra.mxu0 0.0
    %3958 = vmatprep.subr.mxu0 0.0
    %3959 = vmatpush1.xpose.msra.mxu0 0.0
    %3960 = vmatprep.subr.mxu0 0.0
    %3961 = vmatpush1.xpose.msra.mxu0 0.0
    %3962 = vmatprep.subr.mxu0 0.0
    %3963 = vmatpush1.xpose.msra.mxu0 0.0
    %3964 = vmatprep.subr.mxu0 0.0
    %3965 = vmatpush1.xpose.msra.mxu0 0.0
    %3966 = vmatprep.subr.mxu0 0.0
    %3967 = vmatpush1.xpose.msra.mxu0 0.0
    %3968 = vmatprep.subr.mxu0 0.0
    %3969 = vmatpush1.xpose.msra.mxu0 0.0
    %3970 = vmatprep.subr.mxu0 0.0
    %3971 = vmatpush1.xpose.msra.mxu0 0.0
    %3972 = vmatprep.subr.mxu0 0.0
    %3973 = vmatpush1.xpose.msra.mxu0 0.0
    %3974 = vmatprep.subr.mxu0 0.0
    %3975 = vmatpush1.xpose.msra.mxu0 0.0
    %3976 = vmatprep.subr.mxu0 0.0
    %3977 = vmatpush1.xpose.msra.mxu0 0.0
    %3978 = vmatprep.subr.mxu0 0.0
    %3979 = vmatpush1.xpose.msra.mxu0 0.0
    %3980 = vmatprep.subr.mxu0 0.0
    %3981 = vmatpush1.xpose.msra.mxu0 0.0
    %3982 = vmatprep.subr.mxu0 0.0
    %3983 = vmatpush1.xpose.msra.mxu0 0.0
    %3984 = vmatprep.subr.mxu0 0.0
    %3985 = vmatpush1.xpose.msra.mxu0 0.0
    %3986 = vmatprep.subr.mxu0 0.0
    %3987 = vmatpush1.xpose.msra.mxu0 0.0
    %3988 = vmatprep.subr.mxu0 0.0
    %3989 = vmatpush1.xpose.msra.mxu0 0.0
    %3990 = vmatprep.subr.mxu0 0.0
    %3991 = vmatpush1.xpose.msra.mxu0 0.0
    %3992 = vmatprep.subr.mxu0 0.0
    %3993 = vmatpush1.xpose.msra.mxu0 0.0
    %3994 = vmatprep.mubr.f32.mxu0 0.0
    %3995 = vmatmul.mubr.f32.gmra.mrb[0].mxu0 %v3904
    %v3996 = vpop.f32.mrb[0].mxu0
    %v3997 = vadd.f32 0.0, %v3996
    %v3998 = vpop.f32.mrb[0].mxu0
    %3999 = vdwg.mxu0
    %v4001 = vsel %vm1384, %v2866, 0
    %v4004 = vsel %vm1384, %v3679, 0
    %v4007 = vsel %vm1384, %v3681, 0
    %v4010 = vsel %vm1384, %v3683, 0
    %v4013 = vsel %vm1384, %v3685, 0
    %v4016 = vsel %vm1384, %v3687, 0
    %v4019 = vsel %vm1384, %v3689, 0
    %v4022 = vsel %vm1384, %v3691, 0
    %v4025 = vsel %vm1384, %v3693, 0
    %4027 = vmatprep.subr.mxu0 0.0
    %4028 = vmatpush1.xpose.msra.mxu0 %v4004
    %4029 = vmatprep.subr.mxu0 0.0
    %4030 = vmatpush1.xpose.msra.mxu0 %v4007
    %4031 = vmatprep.subr.mxu0 0.0
    %4032 = vmatpush1.xpose.msra.mxu0 %v4010
    %4033 = vmatprep.subr.mxu0 0.0
    %4034 = vmatpush1.xpose.msra.mxu0 %v4013
    %4035 = vmatprep.subr.mxu0 0.0
    %4036 = vmatpush1.xpose.msra.mxu0 %v4016
    %4037 = vmatprep.subr.mxu0 0.0
    %4038 = vmatpush1.xpose.msra.mxu0 %v4019
    %4039 = vmatprep.subr.mxu0 0.0
    %4040 = vmatpush1.xpose.msra.mxu0 %v4022
    %4041 = vmatprep.subr.mxu0 0.0
    %4042 = vmatpush1.xpose.msra.mxu0 %v4025
    %4043 = vmatprep.subr.mxu0 0.0
    %4044 = vmatpush1.xpose.msra.mxu0 0.0
    %4045 = vmatprep.subr.mxu0 0.0
    %4046 = vmatpush1.xpose.msra.mxu0 0.0
    %4047 = vmatprep.subr.mxu0 0.0
    %4048 = vmatpush1.xpose.msra.mxu0 0.0
    %4049 = vmatprep.subr.mxu0 0.0
    %4050 = vmatpush1.xpose.msra.mxu0 0.0
    %4051 = vmatprep.subr.mxu0 0.0
    %4052 = vmatpush1.xpose.msra.mxu0 0.0
    %4053 = vmatprep.subr.mxu0 0.0
    %4054 = vmatpush1.xpose.msra.mxu0 0.0
    %4055 = vmatprep.subr.mxu0 0.0
    %4056 = vmatpush1.xpose.msra.mxu0 0.0
    %4057 = vmatprep.subr.mxu0 0.0
    %4058 = vmatpush1.xpose.msra.mxu0 0.0
    %4059 = vmatprep.subr.mxu0 0.0
    %4060 = vmatpush1.xpose.msra.mxu0 0.0
    %4061 = vmatprep.subr.mxu0 0.0
    %4062 = vmatpush1.xpose.msra.mxu0 0.0
    %4063 = vmatprep.subr.mxu0 0.0
    %4064 = vmatpush1.xpose.msra.mxu0 0.0
    %4065 = vmatprep.subr.mxu0 0.0
    %4066 = vmatpush1.xpose.msra.mxu0 0.0
    %4067 = vmatprep.subr.mxu0 0.0
    %4068 = vmatpush1.xpose.msra.mxu0 0.0
    %4069 = vmatprep.subr.mxu0 0.0
    %4070 = vmatpush1.xpose.msra.mxu0 0.0
    %4071 = vmatprep.subr.mxu0 0.0
    %4072 = vmatpush1.xpose.msra.mxu0 0.0
    %4073 = vmatprep.subr.mxu0 0.0
    %4074 = vmatpush1.xpose.msra.mxu0 0.0
    %4075 = vmatprep.subr.mxu0 0.0
    %4076 = vmatpush1.xpose.msra.mxu0 0.0
    %4077 = vmatprep.subr.mxu0 0.0
    %4078 = vmatpush1.xpose.msra.mxu0 0.0
    %4079 = vmatprep.subr.mxu0 0.0
    %4080 = vmatpush1.xpose.msra.mxu0 0.0
    %4081 = vmatprep.subr.mxu0 0.0
    %4082 = vmatpush1.xpose.msra.mxu0 0.0
    %4083 = vmatprep.subr.mxu0 0.0
    %4084 = vmatpush1.xpose.msra.mxu0 0.0
    %4085 = vmatprep.subr.mxu0 0.0
    %4086 = vmatpush1.xpose.msra.mxu0 0.0
    %4087 = vmatprep.subr.mxu0 0.0
    %4088 = vmatpush1.xpose.msra.mxu0 0.0
    %4089 = vmatprep.subr.mxu0 0.0
    %4090 = vmatpush1.xpose.msra.mxu0 0.0
    %4091 = vmatprep.mubr.f32.mxu0 0.0
    %4092 = vmatmul.mubr.f32.gmra.mrb[0].mxu0 %v4001
    %v4093 = vpop.f32.mrb[0].mxu0
    %v4094 = vadd.f32 0.0, %v4093
    %v4095 = vpop.f32.mrb[0].mxu0
    %4096 = vdwg.mxu0
    %v4098 = vsel %vm1384, %v2871, 0
    %v4101 = vsel %vm1384, %v3695, 0
    %v4104 = vsel %vm1384, %v3697, 0
    %v4107 = vsel %vm1384, %v3699, 0
    %v4110 = vsel %vm1384, %v3701, 0
    %v4113 = vsel %vm1384, %v3703, 0
    %v4116 = vsel %vm1384, %v3705, 0
    %v4119 = vsel %vm1384, %v3707, 0
    %v4122 = vsel %vm1384, %v3709, 0
    %4124 = vmatprep.subr.mxu0 0.0
    %4125 = vmatpush1.xpose.msra.mxu0 %v4101
    %4126 = vmatprep.subr.mxu0 0.0
    %4127 = vmatpush1.xpose.msra.mxu0 %v4104
    %4128 = vmatprep.subr.mxu0 0.0
    %4129 = vmatpush1.xpose.msra.mxu0 %v4107
    %4130 = vmatprep.subr.mxu0 0.0
    %4131 = vmatpush1.xpose.msra.mxu0 %v4110
    %4132 = vmatprep.subr.mxu0 0.0
    %4133 = vmatpush1.xpose.msra.mxu0 %v4113
    %4134 = vmatprep.subr.mxu0 0.0
    %4135 = vmatpush1.xpose.msra.mxu0 %v4116
    %4136 = vmatprep.subr.mxu0 0.0
    %4137 = vmatpush1.xpose.msra.mxu0 %v4119
    %4138 = vmatprep.subr.mxu0 0.0
    %4139 = vmatpush1.xpose.msra.mxu0 %v4122
    %4140 = vmatprep.subr.mxu0 0.0
    %4141 = vmatpush1.xpose.msra.mxu0 0.0
    %4142 = vmatprep.subr.mxu0 0.0
    %4143 = vmatpush1.xpose.msra.mxu0 0.0
    %4144 = vmatprep.subr.mxu0 0.0
    %4145 = vmatpush1.xpose.msra.mxu0 0.0
    %4146 = vmatprep.subr.mxu0 0.0
    %4147 = vmatpush1.xpose.msra.mxu0 0.0
    %4148 = vmatprep.subr.mxu0 0.0
    %4149 = vmatpush1.xpose.msra.mxu0 0.0
    %4150 = vmatprep.subr.mxu0 0.0
    %4151 = vmatpush1.xpose.msra.mxu0 0.0
    %4152 = vmatprep.subr.mxu0 0.0
    %4153 = vmatpush1.xpose.msra.mxu0 0.0
    %4154 = vmatprep.subr.mxu0 0.0
    %4155 = vmatpush1.xpose.msra.mxu0 0.0
    %4156 = vmatprep.subr.mxu0 0.0
    %4157 = vmatpush1.xpose.msra.mxu0 0.0
    %4158 = vmatprep.subr.mxu0 0.0
    %4159 = vmatpush1.xpose.msra.mxu0 0.0
    %4160 = vmatprep.subr.mxu0 0.0
    %4161 = vmatpush1.xpose.msra.mxu0 0.0
    %4162 = vmatprep.subr.mxu0 0.0
    %4163 = vmatpush1.xpose.msra.mxu0 0.0
    %4164 = vmatprep.subr.mxu0 0.0
    %4165 = vmatpush1.xpose.msra.mxu0 0.0
    %4166 = vmatprep.subr.mxu0 0.0
    %4167 = vmatpush1.xpose.msra.mxu0 0.0
    %4168 = vmatprep.subr.mxu0 0.0
    %4169 = vmatpush1.xpose.msra.mxu0 0.0
    %4170 = vmatprep.subr.mxu0 0.0
    %4171 = vmatpush1.xpose.msra.mxu0 0.0
    %4172 = vmatprep.subr.mxu0 0.0
    %4173 = vmatpush1.xpose.msra.mxu0 0.0
    %4174 = vmatprep.subr.mxu0 0.0
    %4175 = vmatpush1.xpose.msra.mxu0 0.0
    %4176 = vmatprep.subr.mxu0 0.0
    %4177 = vmatpush1.xpose.msra.mxu0 0.0
    %4178 = vmatprep.subr.mxu0 0.0
    %4179 = vmatpush1.xpose.msra.mxu0 0.0
    %4180 = vmatprep.subr.mxu0 0.0
    %4181 = vmatpush1.xpose.msra.mxu0 0.0
    %4182 = vmatprep.subr.mxu0 0.0
    %4183 = vmatpush1.xpose.msra.mxu0 0.0
    %4184 = vmatprep.subr.mxu0 0.0
    %4185 = vmatpush1.xpose.msra.mxu0 0.0
    %4186 = vmatprep.subr.mxu0 0.0
    %4187 = vmatpush1.xpose.msra.mxu0 0.0
    %4188 = vmatprep.mubr.f32.mxu0 0.0
    %4189 = vmatmul.mubr.f32.gmra.mrb[0].mxu0 %v4098
    %v4190 = vpop.f32.mrb[0].mxu0
    %v4191 = vadd.f32 0.0, %v4190
    %v4192 = vpop.f32.mrb[0].mxu0
    %4193 = vdwg.mxu0
    %v4194 = vrcp.pop %v3712
    %v4195 = vrcp.pop %v3715
    %v4196 = vrcp.pop %v3718
    %v4197 = vrcp.pop %v3721
    %v4198 = vrcp.pop %v3724
    %v4199 = vrcp.pop %v3727
    %v4200 = vrcp.pop %v3730
    %v4201 = vrcp.pop %v3733
    %v4202 = vrcp.pop %v3736
    %v4203 = vrcp.pop %v3739
    %v4204 = vrcp.pop %v3742
    %v4205 = vrcp.pop %v3745
    %v4206 = vrcp.pop %v3748
    %v4207 = vrcp.pop %v3751
    %v4208 = vrcp.pop %v3754
    %v4209 = vrcp.pop %v3757
    %v4210 = vrcp.pop %v3760
    %v4211 = vrcp.pop %v3763
    %v4212 = vrcp.pop %v3766
    %v4213 = vrcp.pop %v3769
    %v4214 = vrcp.pop %v3772
    %v4215 = vrcp.pop %v3775
    %v4216 = vrcp.pop %v3778
    %v4217 = vrcp.pop %v3781
    %v4218 = vrcp.pop %v3784
    %v4219 = vrcp.pop %v3787
    %v4220 = vrcp.pop %v3790
    %v4221 = vrcp.pop %v3793
    %v4222 = vrcp.pop %v3796
    %v4223 = vrcp.pop %v3799
    %v4224 = vrcp.pop %v3802
    %v4225 = vrcp.pop %v3805
    %v4258 = vlaneseq
    %v4259 = vshrl.u32 %v4258, 7
    %v4260 = vsub.s32 %v2126, %v4259
    %v4261 = vrot.slane %v4194, %v4260
    %v4262 = vlaneseq
    %v4263 = vshrl.u32 %v4262, 7
    %v4264 = vsub.s32 %v2131, %v4263
    %v4265 = vrot.slane %v4195, %v4264
    %v4266 = vsel %vm2136, %v4265, %v4261
    %v4267 = vlaneseq
    %v4268 = vshrl.u32 %v4267, 7
    %v4269 = vsub.s32 %v2138, %v4268
    %v4270 = vrot.slane %v4196, %v4269
    %v4271 = vsel %vm2143, %v4270, %v4266
    %v4272 = vlaneseq
    %v4273 = vshrl.u32 %v4272, 7
    %v4274 = vsub.s32 %v2145, %v4273
    %v4275 = vrot.slane %v4197, %v4274
    %v4276 = vsel %vm2150, %v4275, %v4271
    %v4277 = vlaneseq
    %v4278 = vshrl.u32 %v4277, 7
    %v4279 = vsub.s32 %v2152, %v4278
    %v4280 = vrot.slane %v4198, %v4279
    %v4281 = vsel %vm2157, %v4280, %v4276
    %v4282 = vlaneseq
    %v4283 = vshrl.u32 %v4282, 7
    %v4284 = vsub.s32 %v2159, %v4283
    %v4285 = vrot.slane %v4199, %v4284
    %v4286 = vsel %vm2164, %v4285, %v4281
    %v4287 = vlaneseq
    %v4288 = vshrl.u32 %v4287, 7
    %v4289 = vsub.s32 %v2166, %v4288
    %v4290 = vrot.slane %v4200, %v4289
    %v4291 = vsel %vm2171, %v4290, %v4286
    %v4292 = vlaneseq
    %v4293 = vshrl.u32 %v4292, 7
    %v4294 = vsub.s32 %v2173, %v4293
    %v4295 = vrot.slane %v4201, %v4294
    %v4296 = vsel %vm2178, %v4295, %v4291
    %v4297 = vlaneseq
    %v4298 = vshrl.u32 %v4297, 7
    %v4299 = vsub.s32 %v2126, %v4298
    %v4300 = vrot.slane %v4202, %v4299
    %v4301 = vlaneseq
    %v4302 = vshrl.u32 %v4301, 7
    %v4303 = vsub.s32 %v2131, %v4302
    %v4304 = vrot.slane %v4203, %v4303
    %v4305 = vsel %vm2136, %v4304, %v4300
    %v4306 = vlaneseq
    %v4307 = vshrl.u32 %v4306, 7
    %v4308 = vsub.s32 %v2138, %v4307
    %v4309 = vrot.slane %v4204, %v4308
    %v4310 = vsel %vm2143, %v4309, %v4305
    %v4311 = vlaneseq
    %v4312 = vshrl.u32 %v4311, 7
    %v4313 = vsub.s32 %v2145, %v4312
    %v4314 = vrot.slane %v4205, %v4313
    %v4315 = vsel %vm2150, %v4314, %v4310
    %v4316 = vlaneseq
    %v4317 = vshrl.u32 %v4316, 7
    %v4318 = vsub.s32 %v2152, %v4317
    %v4319 = vrot.slane %v4206, %v4318
    %v4320 = vsel %vm2157, %v4319, %v4315
    %v4321 = vlaneseq
    %v4322 = vshrl.u32 %v4321, 7
    %v4323 = vsub.s32 %v2159, %v4322
    %v4324 = vrot.slane %v4207, %v4323
    %v4325 = vsel %vm2164, %v4324, %v4320
    %v4326 = vlaneseq
    %v4327 = vshrl.u32 %v4326, 7
    %v4328 = vsub.s32 %v2166, %v4327
    %v4329 = vrot.slane %v4208, %v4328
    %v4330 = vsel %vm2171, %v4329, %v4325
    %v4331 = vlaneseq
    %v4332 = vshrl.u32 %v4331, 7
    %v4333 = vsub.s32 %v2173, %v4332
    %v4334 = vrot.slane %v4209, %v4333
    %v4335 = vsel %vm2178, %v4334, %v4330
    %v4336 = vlaneseq
    %v4337 = vshrl.u32 %v4336, 7
    %v4338 = vsub.s32 %v2126, %v4337
    %v4339 = vrot.slane %v4210, %v4338
    %v4340 = vlaneseq
    %v4341 = vshrl.u32 %v4340, 7
    %v4342 = vsub.s32 %v2131, %v4341
    %v4343 = vrot.slane %v4211, %v4342
    %v4344 = vsel %vm2136, %v4343, %v4339
    %v4345 = vlaneseq
    %v4346 = vshrl.u32 %v4345, 7
    %v4347 = vsub.s32 %v2138, %v4346
    %v4348 = vrot.slane %v4212, %v4347
    %v4349 = vsel %vm2143, %v4348, %v4344
    %v4350 = vlaneseq
    %v4351 = vshrl.u32 %v4350, 7
    %v4352 = vsub.s32 %v2145, %v4351
    %v4353 = vrot.slane %v4213, %v4352
    %v4354 = vsel %vm2150, %v4353, %v4349
    %v4355 = vlaneseq
    %v4356 = vshrl.u32 %v4355, 7
    %v4357 = vsub.s32 %v2152, %v4356
    %v4358 = vrot.slane %v4214, %v4357
    %v4359 = vsel %vm2157, %v4358, %v4354
    %v4360 = vlaneseq
    %v4361 = vshrl.u32 %v4360, 7
    %v4362 = vsub.s32 %v2159, %v4361
    %v4363 = vrot.slane %v4215, %v4362
    %v4364 = vsel %vm2164, %v4363, %v4359
    %v4365 = vlaneseq
    %v4366 = vshrl.u32 %v4365, 7
    %v4367 = vsub.s32 %v2166, %v4366
    %v4368 = vrot.slane %v4216, %v4367
    %v4369 = vsel %vm2171, %v4368, %v4364
    %v4370 = vlaneseq
    %v4371 = vshrl.u32 %v4370, 7
    %v4372 = vsub.s32 %v2173, %v4371
    %v4373 = vrot.slane %v4217, %v4372
    %v4374 = vsel %vm2178, %v4373, %v4369
    %v4375 = vlaneseq
    %v4376 = vshrl.u32 %v4375, 7
    %v4377 = vsub.s32 %v2126, %v4376
    %v4378 = vrot.slane %v4218, %v4377
    %v4379 = vlaneseq
    %v4380 = vshrl.u32 %v4379, 7
    %v4381 = vsub.s32 %v2131, %v4380
    %v4382 = vrot.slane %v4219, %v4381
    %v4383 = vsel %vm2136, %v4382, %v4378
    %v4384 = vlaneseq
    %v4385 = vshrl.u32 %v4384, 7
    %v4386 = vsub.s32 %v2138, %v4385
    %v4387 = vrot.slane %v4220, %v4386
    %v4388 = vsel %vm2143, %v4387, %v4383
    %v4389 = vlaneseq
    %v4390 = vshrl.u32 %v4389, 7
    %v4391 = vsub.s32 %v2145, %v4390
    %v4392 = vrot.slane %v4221, %v4391
    %v4393 = vsel %vm2150, %v4392, %v4388
    %v4394 = vlaneseq
    %v4395 = vshrl.u32 %v4394, 7
    %v4396 = vsub.s32 %v2152, %v4395
    %v4397 = vrot.slane %v4222, %v4396
    %v4398 = vsel %vm2157, %v4397, %v4393
    %v4399 = vlaneseq
    %v4400 = vshrl.u32 %v4399, 7
    %v4401 = vsub.s32 %v2159, %v4400
    %v4402 = vrot.slane %v4223, %v4401
    %v4403 = vsel %vm2164, %v4402, %v4398
    %v4404 = vlaneseq
    %v4405 = vshrl.u32 %v4404, 7
    %v4406 = vsub.s32 %v2166, %v4405
    %v4407 = vrot.slane %v4224, %v4406
    %v4408 = vsel %vm2171, %v4407, %v4403
    %v4409 = vlaneseq
    %v4410 = vshrl.u32 %v4409, 7
    %v4411 = vsub.s32 %v2173, %v4410
    %v4412 = vrot.slane %v4225, %v4411
    %v4413 = vsel %vm2178, %v4412, %v4408
    %v4414 = vsel %vm2297, %v4296, %v4296
    %v4415 = vsel %vm2299, %v4296, %v4414
    %v4416 = vsel %vm2301, %v4296, %v4415
    %v4417 = vsel %vm2303, %v4296, %v4416
    %v4418 = vsel %vm2305, %v4296, %v4417
    %v4419 = vsel %vm2307, %v4296, %v4418
    %v4420 = vsel %vm2297, %v4335, %v4335
    %v4421 = vsel %vm2299, %v4335, %v4420
    %v4422 = vsel %vm2301, %v4335, %v4421
    %v4423 = vsel %vm2303, %v4335, %v4422
    %v4424 = vsel %vm2305, %v4335, %v4423
    %v4425 = vsel %vm2307, %v4335, %v4424
    %v4426 = vsel %vm2297, %v4374, %v4374
    %v4427 = vsel %vm2299, %v4374, %v4426
    %v4428 = vsel %vm2301, %v4374, %v4427
    %v4429 = vsel %vm2303, %v4374, %v4428
    %v4430 = vsel %vm2305, %v4374, %v4429
    %v4431 = vsel %vm2307, %v4374, %v4430
    %v4432 = vsel %vm2297, %v4413, %v4413
    %v4433 = vsel %vm2299, %v4413, %v4432
    %v4434 = vsel %vm2301, %v4413, %v4433
    %v4435 = vsel %vm2303, %v4413, %v4434
    %v4436 = vsel %vm2305, %v4413, %v4435
    %v4437 = vsel %vm2307, %v4413, %v4436
    %v4442 = vmul.f32 %v3900, %v4419
    %v4443 = vmul.f32 %v3997, %v4425
    %v4444 = vmul.f32 %v4094, %v4431
    %v4445 = vmul.f32 %v4191, %v4437
    %4446 = vmatprep.subr.mxu0 0.0
    %4447 = vmatpush1.msra.mxu0 %v4442
    %4448 = vmatprep.subr.mxu0 0.0
    %4449 = vmatpush1.msra.mxu0 %v4443
    %4450 = vmatprep.subr.mxu0 0.0
    %4451 = vmatpush1.msra.mxu0 %v4444
    %4452 = vmatprep.subr.mxu0 0.0
    %4453 = vmatpush1.msra.mxu0 %v4445
    %4454 = vmatprep.subr.mxu0 0.0
    %4455 = vmatpush1.msra.mxu0 0.0
    %4456 = vmatprep.subr.mxu0 0.0
    %4457 = vmatpush1.msra.mxu0 0.0
    %4458 = vmatprep.subr.mxu0 0.0
    %4459 = vmatpush1.msra.mxu0 0.0
    %4460 = vmatprep.subr.mxu0 0.0
    %4461 = vmatpush1.msra.mxu0 0.0
    %4462 = vmatprep.subr.mxu0 0.0
    %4463 = vmatpush1.msra.mxu0 0.0
    %4464 = vmatprep.subr.mxu0 0.0
    %4465 = vmatpush1.msra.mxu0 0.0
    %4466 = vmatprep.subr.mxu0 0.0
    %4467 = vmatpush1.msra.mxu0 0.0
    %4468 = vmatprep.subr.mxu0 0.0
    %4469 = vmatpush1.msra.mxu0 0.0
    %4470 = vmatprep.subr.mxu0 0.0
    %4471 = vmatpush1.msra.mxu0 0.0
    %4472 = vmatprep.subr.mxu0 0.0
    %4473 = vmatpush1.msra.mxu0 0.0
    %4474 = vmatprep.subr.mxu0 0.0
    %4475 = vmatpush1.msra.mxu0 0.0
    %4476 = vmatprep.subr.mxu0 0.0
    %4477 = vmatpush1.msra.mxu0 0.0
    %4478 = vmatprep.subr.mxu0 0.0
    %4479 = vmatpush1.msra.mxu0 0.0
    %4480 = vmatprep.subr.mxu0 0.0
    %4481 = vmatpush1.msra.mxu0 0.0
    %4482 = vmatprep.subr.mxu0 0.0
    %4483 = vmatpush1.msra.mxu0 0.0
    %4484 = vmatprep.subr.mxu0 0.0
    %4485 = vmatpush1.msra.mxu0 0.0
    %4486 = vmatprep.subr.mxu0 0.0
    %4487 = vmatpush1.msra.mxu0 0.0
    %4488 = vmatprep.subr.mxu0 0.0
    %4489 = vmatpush1.msra.mxu0 0.0
    %4490 = vmatprep.subr.mxu0 0.0
    %4491 = vmatpush1.msra.mxu0 0.0
    %4492 = vmatprep.subr.mxu0 0.0
    %4493 = vmatpush1.msra.mxu0 0.0
    %4494 = vmatprep.subr.mxu0 0.0
    %4495 = vmatpush1.msra.mxu0 0.0
    %4496 = vmatprep.subr.mxu0 0.0
    %4497 = vmatpush1.msra.mxu0 0.0
    %4498 = vmatprep.subr.mxu0 0.0
    %4499 = vmatpush1.msra.mxu0 0.0
    %4500 = vmatprep.subr.mxu0 0.0
    %4501 = vmatpush1.msra.mxu0 0.0
    %4502 = vmatprep.subr.mxu0 0.0
    %4503 = vmatpush1.msra.mxu0 0.0
    %4504 = vmatprep.subr.mxu0 0.0
    %4505 = vmatpush1.msra.mxu0 0.0
    %4506 = vmatprep.subr.mxu0 0.0
    %4507 = vmatpush1.msra.mxu0 0.0
    %4508 = vmatprep.subr.mxu0 0.0
    %4509 = vmatpush1.msra.mxu0 0.0
    %4510 = vmatprep.mubr.f32.mxu0 0.0
    %4511 = vmatmul.mubr.f32.gmra.mrb[0].mxu0 %v2356
    %v4512 = vpop.f32.mrb[0].mxu0
    %v4513 = vadd.f32 %v2338, %v4512
    %v4514 = vpop.f32.mrb[0].mxu0
    %4515 = vmatprep.mubr.f32.mxu0 0.0
    %4516 = vmatmul.mubr.f32.gmra.mrb[0].mxu0 %v2359
    %v4517 = vpop.f32.mrb[0].mxu0
    %v4518 = vadd.f32 %v2343, %v4517
    %v4519 = vpop.f32.mrb[0].mxu0
    %4520 = vmatprep.mubr.f32.mxu0 0.0
    %4521 = vmatmul.mubr.f32.gmra.mrb[0].mxu0 %v2362
    %v4522 = vpop.f32.mrb[0].mxu0
    %v4523 = vadd.f32 %v2348, %v4522
    %v4524 = vpop.f32.mrb[0].mxu0
    %4525 = vmatprep.mubr.f32.mxu0 0.0
    %4526 = vmatmul.mubr.f32.gmra.mrb[0].mxu0 %v2365
    %v4527 = vpop.f32.mrb[0].mxu0
    %v4528 = vadd.f32 %v2353, %v4527
    %v4529 = vpop.f32.mrb[0].mxu0
    %4530 = vdwg.mxu0
    %v4531 = vadd.f32 %v2461, %v4513
    %v4532 = vadd.f32 %v2462, %v4518
    %v4533 = vadd.f32 %v2463, %v4523
    %v4534 = vadd.f32 %v2464, %v4528
    %s4535 = scalar_lea.vmem [#allocation2], 32
    %4536 = vst.msk [vmem:[%s4535] sm:$0xff] %vm1384, %v4531
    %4537 = vst.msk [vmem:[%s4535 + $0x8] sm:$0xff] %vm1384, %v4532
    %4538 = vst.msk [vmem:[%s4535 + $0x10] sm:$0xff] %vm1384, %v4533
    %4539 = vst.msk [vmem:[%s4535 + $0x18] sm:$0xff] %vm1384, %v4534
    // Predicated region
    $region30: #{tpu_custom_call.1} parent=1 // pred_check
      _
    $region31: #{tpu_custom_call.1} parent=1 // pred_check_branch
      %4541 = sbr.rel (0) target = $region33
    $region32: #{tpu_custom_call.1} parent=1 // pred_region
      %s4543 = ssub.s32 1024, 1024
      %4544 = vsyncadd [#allocation3], %s4543
      %s4545 = sshll.u32 [#allocation2], 4
      %s4546 = int_to_ptr.vmem [resolvable:$true] %s4545
      %4551 = dma.vmem_to_hbm [thread:$0]  %s4546, 1024, %s7, [#allocation3], 128, 128, 8
    $region33: #{tpu_custom_call.1} parent=1 // pred_fallthru
      _
    // Predicated region
    $region34: #{tpu_custom_call.1} parent=1 // pred_check
      _
    $region35: #{tpu_custom_call.1} parent=1 // pred_check_branch
      %4553 = sbr.rel (0) target = $region37
    $region36: #{tpu_custom_call.1} parent=1 // pred_region
      %4554 = dma.done [#allocation3], 1024
    $region37: #{tpu_custom_call.1} parent=1 // pred_fallthru
      _
    %4555 = vsyncpa [#allocation3], 1

// kernel: tpu_custom_call.1
$region0: #{tpu_custom_call.1}
  #allocation0 [shape = 'u32[]', space=smem, size = 0x4, offset = 0x4, fixed_abs, tag = 'smem constant byte address 0x4 - core index']
  #allocation1 [shape = 'u32[144,128]{1,0:T(1,128)}', space=vmem, size = 0x12000, scoped, tag = 'internal scratch']
  %s0 = inlined_call_operand.vmem [shape: f32[2,32,64], index: 0, kind: input, shape index: {}]
  %s1 = inlined_call_operand.vmem [shape: f32[32,1], index: 1, kind: input, shape index: {}]
  %s2 = inlined_call_operand.vmem [shape: f32[32,1], index: 2, kind: input, shape index: {}]
  %s3 = inlined_call_operand.vmem [shape: f32[96,32], index: 3, kind: input, shape index: {}]
  %s4 = inlined_call_operand.vmem [shape: f32[96,1], index: 4, kind: input, shape index: {}]
  %s5 = inlined_call_operand.vmem [shape: f32[32,32], index: 5, kind: input, shape index: {}]
  %s6 = inlined_call_operand.vmem [shape: f32[32,1], index: 6, kind: input, shape index: {}]
  %s7 = inlined_call_operand.hbm [shape: f32[2,32,64], index: 7, kind: output, shape index: {}]
  %s8 = sld [smem:[#allocation0]]
  $region38: #{tpu_custom_call.1} parent=0
    _
  %s10 = ssub.s32 1, %s8
  %s11 = scalar_select 0, %s10, %s8
  $region1: #{tpu_custom_call.1} parent=0
    #allocation2 [shape = 'u8[32768]{0}', space=vmem, size = 0x8000, scoped, tag = 'output window, operand 0, single buffered']
    #allocation3 [shape = 's32[1]{0}', space=sflag, size = 0x4, scoped, tag = 'scoped memory for tpu_custom_call.1']
    %12 = vsyncpa [#allocation3], 0
    // Predicated region
    $region2: #{tpu_custom_call.1} parent=1 // pred_check
      _
    $region3: #{tpu_custom_call.1} parent=1 // pred_check_branch
      %14 = sbr.rel (0) target = $region5
    $region4: #{tpu_custom_call.1} parent=1 // pred_region
      _
    $region5: #{tpu_custom_call.1} parent=1 // pred_fallthru
      _
    // Predicated region
    $region6: #{tpu_custom_call.1} parent=1 // pred_check
      _
    $region7: #{tpu_custom_call.1} parent=1 // pred_check_branch
      %16 = sbr.rel (0) target = $region9
    $region8: #{tpu_custom_call.1} parent=1 // pred_region
      _
    $region9: #{tpu_custom_call.1} parent=1 // pred_fallthru
      _
    // Predicated region
    $region10: #{tpu_custom_call.1} parent=1 // pred_check
      _
    $region11: #{tpu_custom_call.1} parent=1 // pred_check_branch
      %18 = sbr.rel (0) target = $region13
    $region12: #{tpu_custom_call.1} parent=1 // pred_region
      _
    $region13: #{tpu_custom_call.1} parent=1 // pred_fallthru
      _
    // Predicated region
    $region14: #{tpu_custom_call.1} parent=1 // pred_check
      _
    $region15: #{tpu_custom_call.1} parent=1 // pred_check_branch
      %20 = sbr.rel (0) target = $region17
    $region16: #{tpu_custom_call.1} parent=1 // pred_region
      _
    $region17: #{tpu_custom_call.1} parent=1 // pred_fallthru
      _
    // Predicated region
    $region18: #{tpu_custom_call.1} parent=1 // pred_check
      _
    $region19: #{tpu_custom_call.1} parent=1 // pred_check_branch
      %22 = sbr.rel (0) target = $region21
    $region20: #{tpu_custom_call.1} parent=1 // pred_region
      _
    $region21: #{tpu_custom_call.1} parent=1 // pred_fallthru
      _
    // Predicated region
    $region22: #{tpu_custom_call.1} parent=1 // pred_check
      _
    $region23: #{tpu_custom_call.1} parent=1 // pred_check_branch
      %24 = sbr.rel (0) target = $region25
    $region24: #{tpu_custom_call.1} parent=1 // pred_region
      _
    $region25: #{tpu_custom_call.1} parent=1 // pred_fallthru
      _
    // Predicated region
    $region26: #{tpu_custom_call.1} parent=1 // pred_check
      _
    $region27: #{tpu_custom_call.1} parent=1 // pred_check_branch
      %26 = sbr.rel (0) target = $region29
    $region28: #{tpu_custom_call.1} parent=1 // pred_region
      _
    $region29: #{tpu_custom_call.1} parent=1 // pred_fallthru
      _
    %v27 = vld [vmem:[%s3] sm:$0xff]
    %v28 = vld [vmem:[%s3 + $0x8] sm:$0xff]
    %v29 = vld [vmem:[%s3 + $0x10] sm:$0xff]
    %v30 = vld [vmem:[%s3 + $0x18] sm:$0xff]
    %v31 = vld [vmem:[%s3 + $0x20] sm:$0xff]
    %v32 = vld [vmem:[%s3 + $0x28] sm:$0xff]
    %v33 = vld [vmem:[%s3 + $0x30] sm:$0xff]
    %v34 = vld [vmem:[%s3 + $0x38] sm:$0xff]
    %v35 = vld [vmem:[%s3 + $0x40] sm:$0xff]
    %v36 = vld [vmem:[%s3 + $0x48] sm:$0xff]
    %v37 = vld [vmem:[%s3 + $0x50] sm:$0xff]
    %v38 = vld [vmem:[%s3 + $0x58] sm:$0xff]
    %v39 = vld [vmem:[%s4] sm:$0xff]
    %v40 = vld [vmem:[%s4 + $0x8] sm:$0xff]
    %v41 = vld [vmem:[%s4 + $0x10] sm:$0xff]
    %v42 = vld [vmem:[%s4 + $0x18] sm:$0xff]
    %v43 = vld [vmem:[%s4 + $0x20] sm:$0xff]
    %v44 = vld [vmem:[%s4 + $0x28] sm:$0xff]
    %v45 = vld [vmem:[%s4 + $0x30] sm:$0xff]
    %v46 = vld [vmem:[%s4 + $0x38] sm:$0xff]
    %v47 = vld [vmem:[%s4 + $0x40] sm:$0xff]
    %v48 = vld [vmem:[%s4 + $0x48] sm:$0xff]
    %v49 = vld [vmem:[%s4 + $0x50] sm:$0xff]
    %v50 = vld [vmem:[%s4 + $0x58] sm:$0xff]
    %v51 = vld [vmem:[%s5] sm:$0xff]
    %v52 = vld [vmem:[%s5 + $0x8] sm:$0xff]
    %v53 = vld [vmem:[%s5 + $0x10] sm:$0xff]
    %v54 = vld [vmem:[%s5 + $0x18] sm:$0xff]
    %v55 = vld [vmem:[%s6] sm:$0xff]
    %v56 = vld [vmem:[%s6 + $0x8] sm:$0xff]
    %v57 = vld [vmem:[%s6 + $0x10] sm:$0xff]
    %v58 = vld [vmem:[%s6 + $0x18] sm:$0xff]
    %v59 = vld [vmem:[%s1] sm:$0xff]
    %v60 = vld [vmem:[%s1 + $0x8] sm:$0xff]
    %v61 = vld [vmem:[%s1 + $0x10] sm:$0xff]
    %v62 = vld [vmem:[%s1 + $0x18] sm:$0xff]
    %v63 = vld [vmem:[%s2] sm:$0xff]
    %v64 = vld [vmem:[%s2 + $0x8] sm:$0xff]
    %v65 = vld [vmem:[%s2 + $0x10] sm:$0xff]
    %v66 = vld [vmem:[%s2 + $0x18] sm:$0xff]
    %v67 = vld [vmem:[%s0] sm:$0xff]
    %v68 = vld [vmem:[%s0 + $0x8] sm:$0xff]
    %v69 = vld [vmem:[%s0 + $0x10] sm:$0xff]
    %v70 = vld [vmem:[%s0 + $0x18] sm:$0xff]
    %v75 = vcombine.high %v67, %v67
    %v76 = vcombine.high %v68, %v68
    %v77 = vcombine.high %v69, %v69
    %v78 = vcombine.high %v70, %v70
    %vm83 = vcmask 519168
    %v84 = vsel %vm83, %v67, 0.0
    %85 = vadd.xlane.f32.xlu0 %v84
    %v86 = vpop.xlane.xlu0 %85
    %v87 = vsel %vm83, %v75, 0.0
    %88 = vadd.xlane.f32.xlu0 %v87
    %v89 = vpop.xlane.xlu0 %88
    %v90 = vsel %vm83, %v68, 0.0
    %91 = vadd.xlane.f32.xlu0 %v90
    %v92 = vpop.xlane.xlu0 %91
    %v93 = vsel %vm83, %v76, 0.0
    %94 = vadd.xlane.f32.xlu0 %v93
    %v95 = vpop.xlane.xlu0 %94
    %v96 = vsel %vm83, %v69, 0.0
    %97 = vadd.xlane.f32.xlu0 %v96
    %v98 = vpop.xlane.xlu0 %97
    %v99 = vsel %vm83, %v77, 0.0
    %100 = vadd.xlane.f32.xlu0 %v99
    %v101 = vpop.xlane.xlu0 %100
    %v102 = vsel %vm83, %v70, 0.0
    %103 = vadd.xlane.f32.xlu0 %v102
    %v104 = vpop.xlane.xlu0 %103
    %v105 = vsel %vm83, %v78, 0.0
    %106 = vadd.xlane.f32.xlu0 %v105
    %v107 = vpop.xlane.xlu0 %106
    %vm108 = vcmask 1043456
    %v109 = vsel %vm108, %v86, 0.0
    %v110 = vrot.slane %v109, 4
    %v111 = vadd.f32 %v109, %v110
    %v112 = vrot.slane %v111, 2
    %v113 = vadd.f32 %v111, %v112
    %v114 = vrot.slane %v113, 1
    %v115 = vadd.f32 %v113, %v114
    %v116 = vsel %vm108, %v89, 0.0
    %v117 = vrot.slane %v116, 4
    %v118 = vadd.f32 %v116, %v117
    %v119 = vrot.slane %v118, 2
    %v120 = vadd.f32 %v118, %v119
    %v121 = vrot.slane %v120, 1
    %v122 = vadd.f32 %v120, %v121
    %v123 = vsel %vm108, %v92, 0.0
    %v124 = vrot.slane %v123, 4
    %v125 = vadd.f32 %v123, %v124
    %v126 = vrot.slane %v125, 2
    %v127 = vadd.f32 %v125, %v126
    %v128 = vrot.slane %v127, 1
    %v129 = vadd.f32 %v127, %v128
    %v130 = vsel %vm108, %v95, 0.0
    %v131 = vrot.slane %v130, 4
    %v132 = vadd.f32 %v130, %v131
    %v133 = vrot.slane %v132, 2
    %v134 = vadd.f32 %v132, %v133
    %v135 = vrot.slane %v134, 1
    %v136 = vadd.f32 %v134, %v135
    %v137 = vsel %vm108, %v98, 0.0
    %v138 = vrot.slane %v137, 4
    %v139 = vadd.f32 %v137, %v138
    %v140 = vrot.slane %v139, 2
    %v141 = vadd.f32 %v139, %v140
    %v142 = vrot.slane %v141, 1
    %v143 = vadd.f32 %v141, %v142
    %v144 = vsel %vm108, %v101, 0.0
    %v145 = vrot.slane %v144, 4
    %v146 = vadd.f32 %v144, %v145
    %v147 = vrot.slane %v146, 2
    %v148 = vadd.f32 %v146, %v147
    %v149 = vrot.slane %v148, 1
    %v150 = vadd.f32 %v148, %v149
    %v151 = vsel %vm108, %v104, 0.0
    %v152 = vrot.slane %v151, 4
    %v153 = vadd.f32 %v151, %v152
    %v154 = vrot.slane %v153, 2
    %v155 = vadd.f32 %v153, %v154
    %v156 = vrot.slane %v155, 1
    %v157 = vadd.f32 %v155, %v156
    %v158 = vsel %vm108, %v107, 0.0
    %v159 = vrot.slane %v158, 4
    %v160 = vadd.f32 %v158, %v159
    %v161 = vrot.slane %v160, 2
    %v162 = vadd.f32 %v160, %v161
    %v163 = vrot.slane %v162, 1
    %v164 = vadd.f32 %v162, %v163
    %v165 = vmul.f32 %v67, %v67
    %v166 = vmul.f32 %v75, %v75
    %v167 = vmul.f32 %v68, %v68
    %v168 = vmul.f32 %v76, %v76
    %v169 = vmul.f32 %v69, %v69
    %v170 = vmul.f32 %v77, %v77
    %v171 = vmul.f32 %v70, %v70
    %v172 = vmul.f32 %v78, %v78
    %v173 = vsel %vm83, %v165, 0.0
    %174 = vadd.xlane.f32.xlu0 %v173
    %v175 = vpop.xlane.xlu0 %174
    %v176 = vsel %vm83, %v166, 0.0
    %177 = vadd.xlane.f32.xlu0 %v176
    %v178 = vpop.xlane.xlu0 %177
    %v179 = vsel %vm83, %v167, 0.0
    %180 = vadd.xlane.f32.xlu0 %v179
    %v181 = vpop.xlane.xlu0 %180
    %v182 = vsel %vm83, %v168, 0.0
    %183 = vadd.xlane.f32.xlu0 %v182
    %v184 = vpop.xlane.xlu0 %183
    %v185 = vsel %vm83, %v169, 0.0
    %186 = vadd.xlane.f32.xlu0 %v185
    %v187 = vpop.xlane.xlu0 %186
    %v188 = vsel %vm83, %v170, 0.0
    %189 = vadd.xlane.f32.xlu0 %v188
    %v190 = vpop.xlane.xlu0 %189
    %v191 = vsel %vm83, %v171, 0.0
    %192 = vadd.xlane.f32.xlu0 %v191
    %v193 = vpop.xlane.xlu0 %192
    %v194 = vsel %vm83, %v172, 0.0
    %195 = vadd.xlane.f32.xlu0 %v194
    %v196 = vpop.xlane.xlu0 %195
    %v197 = vsel %vm108, %v175, 0.0
    %v198 = vrot.slane %v197, 4
    %v199 = vadd.f32 %v197, %v198
    %v200 = vrot.slane %v199, 2
    %v201 = vadd.f32 %v199, %v200
    %v202 = vrot.slane %v201, 1
    %v203 = vadd.f32 %v201, %v202
    %v204 = vsel %vm108, %v178, 0.0
    %v205 = vrot.slane %v204, 4
    %v206 = vadd.f32 %v204, %v205
    %v207 = vrot.slane %v206, 2
    %v208 = vadd.f32 %v206, %v207
    %v209 = vrot.slane %v208, 1
    %v210 = vadd.f32 %v208, %v209
    %v211 = vsel %vm108, %v181, 0.0
    %v212 = vrot.slane %v211, 4
    %v213 = vadd.f32 %v211, %v212
    %v214 = vrot.slane %v213, 2
    %v215 = vadd.f32 %v213, %v214
    %v216 = vrot.slane %v215, 1
    %v217 = vadd.f32 %v215, %v216
    %v218 = vsel %vm108, %v184, 0.0
    %v219 = vrot.slane %v218, 4
    %v220 = vadd.f32 %v218, %v219
    %v221 = vrot.slane %v220, 2
    %v222 = vadd.f32 %v220, %v221
    %v223 = vrot.slane %v222, 1
    %v224 = vadd.f32 %v222, %v223
    %v225 = vsel %vm108, %v187, 0.0
    %v226 = vrot.slane %v225, 4
    %v227 = vadd.f32 %v225, %v226
    %v228 = vrot.slane %v227, 2
    %v229 = vadd.f32 %v227, %v228
    %v230 = vrot.slane %v229, 1
    %v231 = vadd.f32 %v229, %v230
    %v232 = vsel %vm108, %v190, 0.0
    %v233 = vrot.slane %v232, 4
    %v234 = vadd.f32 %v232, %v233
    %v235 = vrot.slane %v234, 2
    %v236 = vadd.f32 %v234, %v235
    %v237 = vrot.slane %v236, 1
    %v238 = vadd.f32 %v236, %v237
    %v239 = vsel %vm108, %v193, 0.0
    %v240 = vrot.slane %v239, 4
    %v241 = vadd.f32 %v239, %v240
    %v242 = vrot.slane %v241, 2
    %v243 = vadd.f32 %v241, %v242
    %v244 = vrot.slane %v243, 1
    %v245 = vadd.f32 %v243, %v244
    %v246 = vsel %vm108, %v196, 0.0
    %v247 = vrot.slane %v246, 4
    %v248 = vadd.f32 %v246, %v247
    %v249 = vrot.slane %v248, 2
    %v250 = vadd.f32 %v248, %v249
    %v251 = vrot.slane %v250, 1
    %v252 = vadd.f32 %v250, %v251
    %v253 = vmul.f32 %v115, 0.00390625
    %v254 = vmul.f32 %v122, 0.00390625
    %v255 = vmul.f32 %v129, 0.00390625
    %v256 = vmul.f32 %v136, 0.00390625
    %v257 = vmul.f32 %v143, 0.00390625
    %v258 = vmul.f32 %v150, 0.00390625
    %v259 = vmul.f32 %v157, 0.00390625
    %v260 = vmul.f32 %v164, 0.00390625
    %v261 = vmul.f32 %v203, 0.00390625
    %v262 = vmul.f32 %v210, 0.00390625
    %v263 = vmul.f32 %v217, 0.00390625
    %v264 = vmul.f32 %v224, 0.00390625
    %v265 = vmul.f32 %v231, 0.00390625
    %v266 = vmul.f32 %v238, 0.00390625
    %v267 = vmul.f32 %v245, 0.00390625
    %v268 = vmul.f32 %v252, 0.00390625
    %v269 = vmul.f32 %v253, %v253
    %v270 = vmul.f32 %v254, %v254
    %v271 = vmul.f32 %v255, %v255
    %v272 = vmul.f32 %v256, %v256
    %v273 = vmul.f32 %v257, %v257
    %v274 = vmul.f32 %v258, %v258
    %v275 = vmul.f32 %v259, %v259
    %v276 = vmul.f32 %v260, %v260
    %v277 = vsub.f32 %v261, %v269
    %v278 = vsub.f32 %v262, %v270
    %v279 = vsub.f32 %v263, %v271
    %v280 = vsub.f32 %v264, %v272
    %v281 = vsub.f32 %v265, %v273
    %v282 = vsub.f32 %v266, %v274
    %v283 = vsub.f32 %v267, %v275
    %v284 = vsub.f32 %v268, %v276
    %v285 = vmax.f32 %v277, 0.0
    %v286 = vmax.f32 %v278, 0.0
    %v287 = vmax.f32 %v279, 0.0
    %v288 = vmax.f32 %v280, 0.0
    %v289 = vmax.f32 %v281, 0.0
    %v290 = vmax.f32 %v282, 0.0
    %v291 = vmax.f32 %v283, 0.0
    %v292 = vmax.f32 %v284, 0.0
    %v293 = vsub.f32 %v67, %v253
    %v294 = vsub.f32 %v75, %v254
    %v295 = vsub.f32 %v68, %v255
    %v296 = vsub.f32 %v76, %v256
    %v297 = vsub.f32 %v69, %v257
    %v298 = vsub.f32 %v77, %v258
    %v299 = vsub.f32 %v70, %v259
    %v300 = vsub.f32 %v78, %v260
    %v301 = vadd.f32 %v285, 1e-05
    %v302 = vadd.f32 %v286, 1e-05
    %v303 = vadd.f32 %v287, 1e-05
    %v304 = vadd.f32 %v288, 1e-05
    %v305 = vadd.f32 %v289, 1e-05
    %v306 = vadd.f32 %v290, 1e-05
    %v307 = vadd.f32 %v291, 1e-05
    %v308 = vadd.f32 %v292, 1e-05
    %v309 = vrsqrt.pop %v301
    %v310 = vrsqrt.pop %v302
    %v311 = vrsqrt.pop %v303
    %v312 = vrsqrt.pop %v304
    %v313 = vrsqrt.pop %v305
    %v314 = vrsqrt.pop %v306
    %v315 = vrsqrt.pop %v307
    %v316 = vrsqrt.pop %v308
    %v317 = vmul.f32 %v293, %v309
    %v318 = vmul.f32 %v294, %v310
    %v319 = vmul.f32 %v295, %v311
    %v320 = vmul.f32 %v296, %v312
    %v321 = vmul.f32 %v297, %v313
    %v322 = vmul.f32 %v298, %v314
    %v323 = vmul.f32 %v299, %v315
    %v324 = vmul.f32 %v300, %v316
    %326 = vset.pattern.permute.xlu0 0
    %327 = vperm.xlu0 %326, %v59
    %v328 = vpop.permute.xlu0 %327
    %330 = vset.pattern.permute.xlu0 0
    %331 = vperm.xlu0 %330, %v60
    %v332 = vpop.permute.xlu0 %331
    %334 = vset.pattern.permute.xlu0 0
    %335 = vperm.xlu0 %334, %v61
    %v336 = vpop.permute.xlu0 %335
    %338 = vset.pattern.permute.xlu0 0
    %339 = vperm.xlu0 %338, %v62
    %v340 = vpop.permute.xlu0 %339
    %v342 = vunpack.c.l.s4 839922192
    %v343 = vunpack.c.0.s8 %v342
    %v344 = vlaneseq
    %v345 = vshrl.u32 %v344, 7
    %v346 = vsub.s32 %v343, %v345
    %v347 = vrot.slane %v328, %v346
    %v349 = vunpack.c.l.s4 1985246804
    %v350 = vunpack.c.0.s8 %v349
    %v351 = vlaneseq
    %v352 = vshrl.u32 %v351, 7
    %v353 = vsub.s32 %v350, %v352
    %v354 = vrot.slane %v328, %v353
    %v356 = vunpack.c.l.s4 839922192
    %v357 = vunpack.c.0.s8 %v356
    %v358 = vlaneseq
    %v359 = vshrl.u32 %v358, 7
    %v360 = vsub.s32 %v357, %v359
    %v361 = vrot.slane %v332, %v360
    %v363 = vunpack.c.l.s4 1985246804
    %v364 = vunpack.c.0.s8 %v363
    %v365 = vlaneseq
    %v366 = vshrl.u32 %v365, 7
    %v367 = vsub.s32 %v364, %v366
    %v368 = vrot.slane %v332, %v367
    %v370 = vunpack.c.l.s4 839922192
    %v371 = vunpack.c.0.s8 %v370
    %v372 = vlaneseq
    %v373 = vshrl.u32 %v372, 7
    %v374 = vsub.s32 %v371, %v373
    %v375 = vrot.slane %v336, %v374
    %v377 = vunpack.c.l.s4 1985246804
    %v378 = vunpack.c.0.s8 %v377
    %v379 = vlaneseq
    %v380 = vshrl.u32 %v379, 7
    %v381 = vsub.s32 %v378, %v380
    %v382 = vrot.slane %v336, %v381
    %v384 = vunpack.c.l.s4 839922192
    %v385 = vunpack.c.0.s8 %v384
    %v386 = vlaneseq
    %v387 = vshrl.u32 %v386, 7
    %v388 = vsub.s32 %v385, %v387
    %v389 = vrot.slane %v340, %v388
    %v391 = vunpack.c.l.s4 1985246804
    %v392 = vunpack.c.0.s8 %v391
    %v393 = vlaneseq
    %v394 = vshrl.u32 %v393, 7
    %v395 = vsub.s32 %v392, %v394
    %v396 = vrot.slane %v340, %v395
    %v405 = vmul.f32 %v317, %v347
    %v406 = vmul.f32 %v318, %v354
    %v407 = vmul.f32 %v319, %v361
    %v408 = vmul.f32 %v320, %v368
    %v409 = vmul.f32 %v321, %v375
    %v410 = vmul.f32 %v322, %v382
    %v411 = vmul.f32 %v323, %v389
    %v412 = vmul.f32 %v324, %v396
    %414 = vset.pattern.permute.xlu0 0
    %415 = vperm.xlu0 %414, %v63
    %v416 = vpop.permute.xlu0 %415
    %418 = vset.pattern.permute.xlu0 0
    %419 = vperm.xlu0 %418, %v64
    %v420 = vpop.permute.xlu0 %419
    %422 = vset.pattern.permute.xlu0 0
    %423 = vperm.xlu0 %422, %v65
    %v424 = vpop.permute.xlu0 %423
    %426 = vset.pattern.permute.xlu0 0
    %427 = vperm.xlu0 %426, %v66
    %v428 = vpop.permute.xlu0 %427
    %v430 = vunpack.c.l.s4 839922192
    %v431 = vunpack.c.0.s8 %v430
    %v432 = vlaneseq
    %v433 = vshrl.u32 %v432, 7
    %v434 = vsub.s32 %v431, %v433
    %v435 = vrot.slane %v416, %v434
    %v437 = vunpack.c.l.s4 1985246804
    %v438 = vunpack.c.0.s8 %v437
    %v439 = vlaneseq
    %v440 = vshrl.u32 %v439, 7
    %v441 = vsub.s32 %v438, %v440
    %v442 = vrot.slane %v416, %v441
    %v444 = vunpack.c.l.s4 839922192
    %v445 = vunpack.c.0.s8 %v444
    %v446 = vlaneseq
    %v447 = vshrl.u32 %v446, 7
    %v448 = vsub.s32 %v445, %v447
    %v449 = vrot.slane %v420, %v448
    %v451 = vunpack.c.l.s4 1985246804
    %v452 = vunpack.c.0.s8 %v451
    %v453 = vlaneseq
    %v454 = vshrl.u32 %v453, 7
    %v455 = vsub.s32 %v452, %v454
    %v456 = vrot.slane %v420, %v455
    %v458 = vunpack.c.l.s4 839922192
    %v459 = vunpack.c.0.s8 %v458
    %v460 = vlaneseq
    %v461 = vshrl.u32 %v460, 7
    %v462 = vsub.s32 %v459, %v461
    %v463 = vrot.slane %v424, %v462
    %v465 = vunpack.c.l.s4 1985246804
    %v466 = vunpack.c.0.s8 %v465
    %v467 = vlaneseq
    %v468 = vshrl.u32 %v467, 7
    %v469 = vsub.s32 %v466, %v468
    %v470 = vrot.slane %v424, %v469
    %v472 = vunpack.c.l.s4 839922192
    %v473 = vunpack.c.0.s8 %v472
    %v474 = vlaneseq
    %v475 = vshrl.u32 %v474, 7
    %v476 = vsub.s32 %v473, %v475
    %v477 = vrot.slane %v428, %v476
    %v479 = vunpack.c.l.s4 1985246804
    %v480 = vunpack.c.0.s8 %v479
    %v481 = vlaneseq
    %v482 = vshrl.u32 %v481, 7
    %v483 = vsub.s32 %v480, %v482
    %v484 = vrot.slane %v428, %v483
    %v493 = vadd.f32 %v405, %v435
    %v494 = vadd.f32 %v406, %v442
    %v495 = vadd.f32 %v407, %v449
    %v496 = vadd.f32 %v408, %v456
    %v497 = vadd.f32 %v409, %v463
    %v498 = vadd.f32 %v410, %v470
    %v499 = vadd.f32 %v411, %v477
    %v500 = vadd.f32 %v412, %v484
    %502 = vset.pattern.permute.xlu0 0
    %503 = vperm.xlu0 %502, %v39
    %v504 = vpop.permute.xlu0 %503
    %507 = vset.pattern.permute.xlu0 0
    %508 = vperm.xlu0 %507, %v40
    %v509 = vpop.permute.xlu0 %508
    %512 = vset.pattern.permute.xlu0 0
    %513 = vperm.xlu0 %512, %v41
    %v514 = vpop.permute.xlu0 %513
    %517 = vset.pattern.permute.xlu0 0
    %518 = vperm.xlu0 %517, %v42
    %v519 = vpop.permute.xlu0 %518
    %522 = vset.pattern.permute.xlu0 0
    %523 = vperm.xlu0 %522, %v43
    %v524 = vpop.permute.xlu0 %523
    %527 = vset.pattern.permute.xlu0 0
    %528 = vperm.xlu0 %527, %v44
    %v529 = vpop.permute.xlu0 %528
    %532 = vset.pattern.permute.xlu0 0
    %533 = vperm.xlu0 %532, %v45
    %v534 = vpop.permute.xlu0 %533
    %537 = vset.pattern.permute.xlu0 0
    %538 = vperm.xlu0 %537, %v46
    %v539 = vpop.permute.xlu0 %538
    %542 = vset.pattern.permute.xlu0 0
    %543 = vperm.xlu0 %542, %v47
    %v544 = vpop.permute.xlu0 %543
    %547 = vset.pattern.permute.xlu0 0
    %548 = vperm.xlu0 %547, %v48
    %v549 = vpop.permute.xlu0 %548
    %552 = vset.pattern.permute.xlu0 0
    %553 = vperm.xlu0 %552, %v49
    %v554 = vpop.permute.xlu0 %553
    %557 = vset.pattern.permute.xlu0 0
    %558 = vperm.xlu0 %557, %v50
    %v559 = vpop.permute.xlu0 %558
    %v569 = vcombine.low %v493, %v494
    %v570 = vcombine.low %v495, %v496
    %v571 = vcombine.low %v497, %v498
    %v572 = vcombine.low %v499, %v500
    %vm577 = vcmask 261120
    %v579 = vsel %vm577, %v27, 0
    %v582 = vsel %vm577, %v28, 0
    %v585 = vsel %vm577, %v29, 0
    %v588 = vsel %vm577, %v30, 0
    %v591 = vsel %vm577, %v31, 0
    %v594 = vsel %vm577, %v32, 0
    %v597 = vsel %vm577, %v33, 0
    %v600 = vsel %vm577, %v34, 0
    %v603 = vsel %vm577, %v35, 0
    %v606 = vsel %vm577, %v36, 0
    %v609 = vsel %vm577, %v37, 0
    %v612 = vsel %vm577, %v38, 0
    %614 = vmatprep.subr.mxu0 0.0
    %615 = vmatpush1.msra.mxu0 %v569
    %616 = vmatprep.subr.mxu0 0.0
    %617 = vmatpush1.msra.mxu0 %v570
    %618 = vmatprep.subr.mxu0 0.0
    %619 = vmatpush1.msra.mxu0 %v571
    %620 = vmatprep.subr.mxu0 0.0
    %621 = vmatpush1.msra.mxu0 %v572
    %622 = vmatprep.subr.mxu0 0.0
    %623 = vmatpush1.msra.mxu0 0.0
    %624 = vmatprep.subr.mxu0 0.0
    %625 = vmatpush1.msra.mxu0 0.0
    %626 = vmatprep.subr.mxu0 0.0
    %627 = vmatpush1.msra.mxu0 0.0
    %628 = vmatprep.subr.mxu0 0.0
    %629 = vmatpush1.msra.mxu0 0.0
    %630 = vmatprep.subr.mxu0 0.0
    %631 = vmatpush1.msra.mxu0 0.0
    %632 = vmatprep.subr.mxu0 0.0
    %633 = vmatpush1.msra.mxu0 0.0
    %634 = vmatprep.subr.mxu0 0.0
    %635 = vmatpush1.msra.mxu0 0.0
    %636 = vmatprep.subr.mxu0 0.0
    %637 = vmatpush1.msra.mxu0 0.0
    %638 = vmatprep.subr.mxu0 0.0
    %639 = vmatpush1.msra.mxu0 0.0
    %640 = vmatprep.subr.mxu0 0.0
    %641 = vmatpush1.msra.mxu0 0.0
    %642 = vmatprep.subr.mxu0 0.0
    %643 = vmatpush1.msra.mxu0 0.0
    %644 = vmatprep.subr.mxu0 0.0
    %645 = vmatpush1.msra.mxu0 0.0
    %646 = vmatprep.subr.mxu0 0.0
    %647 = vmatpush1.msra.mxu0 0.0
    %648 = vmatprep.subr.mxu0 0.0
    %649 = vmatpush1.msra.mxu0 0.0
    %650 = vmatprep.subr.mxu0 0.0
    %651 = vmatpush1.msra.mxu0 0.0
    %652 = vmatprep.subr.mxu0 0.0
    %653 = vmatpush1.msra.mxu0 0.0
    %654 = vmatprep.subr.mxu0 0.0
    %655 = vmatpush1.msra.mxu0 0.0
    %656 = vmatprep.subr.mxu0 0.0
    %657 = vmatpush1.msra.mxu0 0.0
    %658 = vmatprep.subr.mxu0 0.0
    %659 = vmatpush1.msra.mxu0 0.0
    %660 = vmatprep.subr.mxu0 0.0
    %661 = vmatpush1.msra.mxu0 0.0
    %662 = vmatprep.subr.mxu0 0.0
    %663 = vmatpush1.msra.mxu0 0.0
    %664 = vmatprep.subr.mxu0 0.0
    %665 = vmatpush1.msra.mxu0 0.0
    %666 = vmatprep.subr.mxu0 0.0
    %667 = vmatpush1.msra.mxu0 0.0
    %668 = vmatprep.subr.mxu0 0.0
    %669 = vmatpush1.msra.mxu0 0.0
    %670 = vmatprep.subr.mxu0 0.0
    %671 = vmatpush1.msra.mxu0 0.0
    %672 = vmatprep.subr.mxu0 0.0
    %673 = vmatpush1.msra.mxu0 0.0
    %674 = vmatprep.subr.mxu0 0.0
    %675 = vmatpush1.msra.mxu0 0.0
    %676 = vmatprep.subr.mxu0 0.0
    %677 = vmatpush1.msra.mxu0 0.0
    %678 = vmatprep.mubr.f32.mxu0 0.0
    %679 = vmatmul.mubr.f32.gmra.mrb[0].mxu0 %v579
    %v680 = vpop.f32.mrb[0].mxu0
    %v681 = vadd.f32 %v504, %v680
    %v682 = vpop.f32.mrb[0].mxu0
    %683 = vmatprep.mubr.f32.mxu0 0.0
    %684 = vmatmul.mubr.f32.gmra.mrb[0].mxu0 %v582
    %v685 = vpop.f32.mrb[0].mxu0
    %v686 = vadd.f32 %v509, %v685
    %v687 = vpop.f32.mrb[0].mxu0
    %688 = vmatprep.mubr.f32.mxu0 0.0
    %689 = vmatmul.mubr.f32.gmra.mrb[0].mxu0 %v585
    %v690 = vpop.f32.mrb[0].mxu0
    %v691 = vadd.f32 %v514, %v690
    %v692 = vpop.f32.mrb[0].mxu0
    %693 = vmatprep.mubr.f32.mxu0 0.0
    %694 = vmatmul.mubr.f32.gmra.mrb[0].mxu0 %v588
    %v695 = vpop.f32.mrb[0].mxu0
    %v696 = vadd.f32 %v519, %v695
    %v697 = vpop.f32.mrb[0].mxu0
    %698 = vmatprep.mubr.f32.mxu0 0.0
    %699 = vmatmul.mubr.f32.gmra.mrb[0].mxu0 %v591
    %v700 = vpop.f32.mrb[0].mxu0
    %v701 = vadd.f32 %v524, %v700
    %v702 = vpop.f32.mrb[0].mxu0
    %703 = vmatprep.mubr.f32.mxu0 0.0
    %704 = vmatmul.mubr.f32.gmra.mrb[0].mxu0 %v594
    %v705 = vpop.f32.mrb[0].mxu0
    %v706 = vadd.f32 %v529, %v705
    %v707 = vpop.f32.mrb[0].mxu0
    %708 = vmatprep.mubr.f32.mxu0 0.0
    %709 = vmatmul.mubr.f32.gmra.mrb[0].mxu0 %v597
    %v710 = vpop.f32.mrb[0].mxu0
    %v711 = vadd.f32 %v534, %v710
    %v712 = vpop.f32.mrb[0].mxu0
    %713 = vmatprep.mubr.f32.mxu0 0.0
    %714 = vmatmul.mubr.f32.gmra.mrb[0].mxu0 %v600
    %v715 = vpop.f32.mrb[0].mxu0
    %v716 = vadd.f32 %v539, %v715
    %v717 = vpop.f32.mrb[0].mxu0
    %718 = vmatprep.mubr.f32.mxu0 0.0
    %719 = vmatmul.mubr.f32.gmra.mrb[0].mxu0 %v603
    %v720 = vpop.f32.mrb[0].mxu0
    %v721 = vadd.f32 %v544, %v720
    %v722 = vpop.f32.mrb[0].mxu0
    %723 = vmatprep.mubr.f32.mxu0 0.0
    %724 = vmatmul.mubr.f32.gmra.mrb[0].mxu0 %v606
    %v725 = vpop.f32.mrb[0].mxu0
    %v726 = vadd.f32 %v549, %v725
    %v727 = vpop.f32.mrb[0].mxu0
    %728 = vmatprep.mubr.f32.mxu0 0.0
    %729 = vmatmul.mubr.f32.gmra.mrb[0].mxu0 %v609
    %v730 = vpop.f32.mrb[0].mxu0
    %v731 = vadd.f32 %v554, %v730
    %v732 = vpop.f32.mrb[0].mxu0
    %733 = vmatprep.mubr.f32.mxu0 0.0
    %734 = vmatmul.mubr.f32.gmra.mrb[0].mxu0 %v612
    %v735 = vpop.f32.mrb[0].mxu0
    %v736 = vadd.f32 %v559, %v735
    %v737 = vpop.f32.mrb[0].mxu0
    %738 = vdwg.mxu0
    %739 = vxpose.xlu0.b32.start [1/16] %v681, 128
    %740 = vxpose.xlu0.b32.cont [2/16] 0.0, 128
    %741 = vxpose.xlu0.b32.cont [3/16] 0.0, 128
    %742 = vxpose.xlu0.b32.cont [4/16] 0.0, 128
    %743 = vxpose.xlu0.b32.cont [5/16] 0.0, 128
    %744 = vxpose.xlu0.b32.cont [6/16] 0.0, 128
    %745 = vxpose.xlu0.b32.cont [7/16] 0.0, 128
    %746 = vxpose.xlu0.b32.cont [8/16] 0.0, 128
    %747 = vxpose.xlu0.b32.cont [9/16] 0.0, 128
    %748 = vxpose.xlu0.b32.cont [10/16] 0.0, 128
    %749 = vxpose.xlu0.b32.cont [11/16] 0.0, 128
    %750 = vxpose.xlu0.b32.cont [12/16] 0.0, 128
    %751 = vxpose.xlu0.b32.cont [13/16] 0.0, 128
    %752 = vxpose.xlu0.b32.cont [14/16] 0.0, 128
    %753 = vxpose.xlu0.b32.cont [15/16] 0.0, 128
    %754 = vxpose.xlu0.b32.end [16/16] 0.0, 128
    %v755 = vpop.trf.xlu0
    %v756 = vpop.trf.xlu0
    %v757 = vpop.trf.xlu0
    %v758 = vpop.trf.xlu0
    %v759 = vpop.trf.xlu0
    %v760 = vpop.trf.xlu0
    %v761 = vpop.trf.xlu0
    %v762 = vpop.trf.xlu0
    %v763 = vpop.trf.xlu0
    %v764 = vpop.trf.xlu0
    %v765 = vpop.trf.xlu0
    %v766 = vpop.trf.xlu0
    %v767 = vpop.trf.xlu0
    %v768 = vpop.trf.xlu0
    %v769 = vpop.trf.xlu0
    %v770 = vpop.trf.xlu0
    %771 = vxpose.xlu0.b32.start [1/16] %v686, 128
    %772 = vxpose.xlu0.b32.cont [2/16] 0.0, 128
    %773 = vxpose.xlu0.b32.cont [3/16] 0.0, 128
    %774 = vxpose.xlu0.b32.cont [4/16] 0.0, 128
    %775 = vxpose.xlu0.b32.cont [5/16] 0.0, 128
    %776 = vxpose.xlu0.b32.cont [6/16] 0.0, 128
    %777 = vxpose.xlu0.b32.cont [7/16] 0.0, 128
    %778 = vxpose.xlu0.b32.cont [8/16] 0.0, 128
    %779 = vxpose.xlu0.b32.cont [9/16] 0.0, 128
    %780 = vxpose.xlu0.b32.cont [10/16] 0.0, 128
    %781 = vxpose.xlu0.b32.cont [11/16] 0.0, 128
    %782 = vxpose.xlu0.b32.cont [12/16] 0.0, 128
    %783 = vxpose.xlu0.b32.cont [13/16] 0.0, 128
    %784 = vxpose.xlu0.b32.cont [14/16] 0.0, 128
    %785 = vxpose.xlu0.b32.cont [15/16] 0.0, 128
    %786 = vxpose.xlu0.b32.end [16/16] 0.0, 128
    %v787 = vpop.trf.xlu0
    %v788 = vpop.trf.xlu0
    %v789 = vpop.trf.xlu0
    %v790 = vpop.trf.xlu0
    %v791 = vpop.trf.xlu0
    %v792 = vpop.trf.xlu0
    %v793 = vpop.trf.xlu0
    %v794 = vpop.trf.xlu0
    %v795 = vpop.trf.xlu0
    %v796 = vpop.trf.xlu0
    %v797 = vpop.trf.xlu0
    %v798 = vpop.trf.xlu0
    %v799 = vpop.trf.xlu0
    %v800 = vpop.trf.xlu0
    %v801 = vpop.trf.xlu0
    %v802 = vpop.trf.xlu0
    %803 = vxpose.xlu0.b32.start [1/16] %v691, 128
    %804 = vxpose.xlu0.b32.cont [2/16] 0.0, 128
    %805 = vxpose.xlu0.b32.cont [3/16] 0.0, 128
    %806 = vxpose.xlu0.b32.cont [4/16] 0.0, 128
    %807 = vxpose.xlu0.b32.cont [5/16] 0.0, 128
    %808 = vxpose.xlu0.b32.cont [6/16] 0.0, 128
    %809 = vxpose.xlu0.b32.cont [7/16] 0.0, 128
    %810 = vxpose.xlu0.b32.cont [8/16] 0.0, 128
    %811 = vxpose.xlu0.b32.cont [9/16] 0.0, 128
    %812 = vxpose.xlu0.b32.cont [10/16] 0.0, 128
    %813 = vxpose.xlu0.b32.cont [11/16] 0.0, 128
    %814 = vxpose.xlu0.b32.cont [12/16] 0.0, 128
    %815 = vxpose.xlu0.b32.cont [13/16] 0.0, 128
    %816 = vxpose.xlu0.b32.cont [14/16] 0.0, 128
    %817 = vxpose.xlu0.b32.cont [15/16] 0.0, 128
    %818 = vxpose.xlu0.b32.end [16/16] 0.0, 128
    %v819 = vpop.trf.xlu0
    %v820 = vpop.trf.xlu0
    %v821 = vpop.trf.xlu0
    %v822 = vpop.trf.xlu0
    %v823 = vpop.trf.xlu0
    %v824 = vpop.trf.xlu0
    %v825 = vpop.trf.xlu0
    %v826 = vpop.trf.xlu0
    %v827 = vpop.trf.xlu0
    %v828 = vpop.trf.xlu0
    %v829 = vpop.trf.xlu0
    %v830 = vpop.trf.xlu0
    %v831 = vpop.trf.xlu0
    %v832 = vpop.trf.xlu0
    %v833 = vpop.trf.xlu0
    %v834 = vpop.trf.xlu0
    %835 = vxpose.xlu0.b32.start [1/16] %v696, 128
    %836 = vxpose.xlu0.b32.cont [2/16] 0.0, 128
    %837 = vxpose.xlu0.b32.cont [3/16] 0.0, 128
    %838 = vxpose.xlu0.b32.cont [4/16] 0.0, 128
    %839 = vxpose.xlu0.b32.cont [5/16] 0.0, 128
    %840 = vxpose.xlu0.b32.cont [6/16] 0.0, 128
    %841 = vxpose.xlu0.b32.cont [7/16] 0.0, 128
    %842 = vxpose.xlu0.b32.cont [8/16] 0.0, 128
    %843 = vxpose.xlu0.b32.cont [9/16] 0.0, 128
    %844 = vxpose.xlu0.b32.cont [10/16] 0.0, 128
    %845 = vxpose.xlu0.b32.cont [11/16] 0.0, 128
    %846 = vxpose.xlu0.b32.cont [12/16] 0.0, 128
    %847 = vxpose.xlu0.b32.cont [13/16] 0.0, 128
    %848 = vxpose.xlu0.b32.cont [14/16] 0.0, 128
    %849 = vxpose.xlu0.b32.cont [15/16] 0.0, 128
    %850 = vxpose.xlu0.b32.end [16/16] 0.0, 128
    %v851 = vpop.trf.xlu0
    %v852 = vpop.trf.xlu0
    %v853 = vpop.trf.xlu0
    %v854 = vpop.trf.xlu0
    %v855 = vpop.trf.xlu0
    %v856 = vpop.trf.xlu0
    %v857 = vpop.trf.xlu0
    %v858 = vpop.trf.xlu0
    %v859 = vpop.trf.xlu0
    %v860 = vpop.trf.xlu0
    %v861 = vpop.trf.xlu0
    %v862 = vpop.trf.xlu0
    %v863 = vpop.trf.xlu0
    %v864 = vpop.trf.xlu0
    %v865 = vpop.trf.xlu0
    %v866 = vpop.trf.xlu0
    %vm867 = vcmask 64512
    %v869 = vsel %vm867, %v755, 0
    %v872 = vsel %vm867, %v756, 0
    %v875 = vsel %vm867, %v757, 0
    %v878 = vsel %vm867, %v758, 0
    %v881 = vsel %vm867, %v759, 0
    %v884 = vsel %vm867, %v760, 0
    %v887 = vsel %vm867, %v761, 0
    %v890 = vsel %vm867, %v762, 0
    %892 = vmatprep.subr.mxu0 0.0
    %893 = vmatpush1.msra.mxu0 %v701
    %894 = vmatprep.subr.mxu0 0.0
    %895 = vmatpush1.msra.mxu0 0.0
    %896 = vmatprep.subr.mxu0 0.0
    %897 = vmatpush1.msra.mxu0 0.0
    %898 = vmatprep.subr.mxu0 0.0
    %899 = vmatpush1.msra.mxu0 0.0
    %900 = vmatprep.subr.mxu0 0.0
    %901 = vmatpush1.msra.mxu0 0.0
    %902 = vmatprep.subr.mxu0 0.0
    %903 = vmatpush1.msra.mxu0 0.0
    %904 = vmatprep.subr.mxu0 0.0
    %905 = vmatpush1.msra.mxu0 0.0
    %906 = vmatprep.subr.mxu0 0.0
    %907 = vmatpush1.msra.mxu0 0.0
    %908 = vmatprep.subr.mxu0 0.0
    %909 = vmatpush1.msra.mxu0 0.0
    %910 = vmatprep.subr.mxu0 0.0
    %911 = vmatpush1.msra.mxu0 0.0
    %912 = vmatprep.subr.mxu0 0.0
    %913 = vmatpush1.msra.mxu0 0.0
    %914 = vmatprep.subr.mxu0 0.0
    %915 = vmatpush1.msra.mxu0 0.0
    %916 = vmatprep.subr.mxu0 0.0
    %917 = vmatpush1.msra.mxu0 0.0
    %918 = vmatprep.subr.mxu0 0.0
    %919 = vmatpush1.msra.mxu0 0.0
    %920 = vmatprep.subr.mxu0 0.0
    %921 = vmatpush1.msra.mxu0 0.0
    %922 = vmatprep.subr.mxu0 0.0
    %923 = vmatpush1.msra.mxu0 0.0
    %924 = vmatprep.subr.mxu0 0.0
    %925 = vmatpush1.msra.mxu0 0.0
    %926 = vmatprep.subr.mxu0 0.0
    %927 = vmatpush1.msra.mxu0 0.0
    %928 = vmatprep.subr.mxu0 0.0
    %929 = vmatpush1.msra.mxu0 0.0
    %930 = vmatprep.subr.mxu0 0.0
    %931 = vmatpush1.msra.mxu0 0.0
    %932 = vmatprep.subr.mxu0 0.0
    %933 = vmatpush1.msra.mxu0 0.0
    %934 = vmatprep.subr.mxu0 0.0
    %935 = vmatpush1.msra.mxu0 0.0
    %936 = vmatprep.subr.mxu0 0.0
    %937 = vmatpush1.msra.mxu0 0.0
    %938 = vmatprep.subr.mxu0 0.0
    %939 = vmatpush1.msra.mxu0 0.0
    %940 = vmatprep.subr.mxu0 0.0
    %941 = vmatpush1.msra.mxu0 0.0
    %942 = vmatprep.subr.mxu0 0.0
    %943 = vmatpush1.msra.mxu0 0.0
    %944 = vmatprep.subr.mxu0 0.0
    %945 = vmatpush1.msra.mxu0 0.0
    %946 = vmatprep.subr.mxu0 0.0
    %947 = vmatpush1.msra.mxu0 0.0
    %948 = vmatprep.subr.mxu0 0.0
    %949 = vmatpush1.msra.mxu0 0.0
    %950 = vmatprep.subr.mxu0 0.0
    %951 = vmatpush1.msra.mxu0 0.0
    %952 = vmatprep.subr.mxu0 0.0
    %953 = vmatpush1.msra.mxu0 0.0
    %954 = vmatprep.subr.mxu0 0.0
    %955 = vmatpush1.msra.mxu0 0.0
    %956 = vmatprep.mubr.f32.mxu0 0.0
    %957 = vmatmul.mubr.f32.gmra.mrb[0].mxu0 %v869
    %v958 = vpop.f32.mrb[0].mxu0
    %v959 = vadd.f32 0.0, %v958
    %v960 = vpop.f32.mrb[0].mxu0
    %961 = vmatprep.mubr.f32.mxu0 0.0
    %962 = vmatmul.mubr.f32.gmra.mrb[0].mxu0 %v872
    %v963 = vpop.f32.mrb[0].mxu0
    %v964 = vadd.f32 0.0, %v963
    %v965 = vpop.f32.mrb[0].mxu0
    %966 = vmatprep.mubr.f32.mxu0 0.0
    %967 = vmatmul.mubr.f32.gmra.mrb[0].mxu0 %v875
    %v968 = vpop.f32.mrb[0].mxu0
    %v969 = vadd.f32 0.0, %v968
    %v970 = vpop.f32.mrb[0].mxu0
    %971 = vmatprep.mubr.f32.mxu0 0.0
    %972 = vmatmul.mubr.f32.gmra.mrb[0].mxu0 %v878
    %v973 = vpop.f32.mrb[0].mxu0
    %v974 = vadd.f32 0.0, %v973
    %v975 = vpop.f32.mrb[0].mxu0
    %976 = vmatprep.mubr.f32.mxu0 0.0
    %977 = vmatmul.mubr.f32.gmra.mrb[0].mxu0 %v881
    %v978 = vpop.f32.mrb[0].mxu0
    %v979 = vadd.f32 0.0, %v978
    %v980 = vpop.f32.mrb[0].mxu0
    %981 = vmatprep.mubr.f32.mxu0 0.0
    %982 = vmatmul.mubr.f32.gmra.mrb[0].mxu0 %v884
    %v983 = vpop.f32.mrb[0].mxu0
    %v984 = vadd.f32 0.0, %v983
    %v985 = vpop.f32.mrb[0].mxu0
    %986 = vmatprep.mubr.f32.mxu0 0.0
    %987 = vmatmul.mubr.f32.gmra.mrb[0].mxu0 %v887
    %v988 = vpop.f32.mrb[0].mxu0
    %v989 = vadd.f32 0.0, %v988
    %v990 = vpop.f32.mrb[0].mxu0
    %991 = vmatprep.mubr.f32.mxu0 0.0
    %992 = vmatmul.mubr.f32.gmra.mrb[0].mxu0 %v890
    %v993 = vpop.f32.mrb[0].mxu0
    %v994 = vadd.f32 0.0, %v993
    %v995 = vpop.f32.mrb[0].mxu0
    %996 = vdwg.mxu0
    %v998 = vsel %vm867, %v787, 0
    %v1001 = vsel %vm867, %v788, 0
    %v1004 = vsel %vm867, %v789, 0
    %v1007 = vsel %vm867, %v790, 0
    %v1010 = vsel %vm867, %v791, 0
    %v1013 = vsel %vm867, %v792, 0
    %v1016 = vsel %vm867, %v793, 0
    %v1019 = vsel %vm867, %v794, 0
    %1021 = vmatprep.subr.mxu0 0.0
    %1022 = vmatpush1.msra.mxu0 %v706
    %1023 = vmatprep.subr.mxu0 0.0
    %1024 = vmatpush1.msra.mxu0 0.0
    %1025 = vmatprep.subr.mxu0 0.0
    %1026 = vmatpush1.msra.mxu0 0.0
    %1027 = vmatprep.subr.mxu0 0.0
    %1028 = vmatpush1.msra.mxu0 0.0
    %1029 = vmatprep.subr.mxu0 0.0
    %1030 = vmatpush1.msra.mxu0 0.0
    %1031 = vmatprep.subr.mxu0 0.0
    %1032 = vmatpush1.msra.mxu0 0.0
    %1033 = vmatprep.subr.mxu0 0.0
    %1034 = vmatpush1.msra.mxu0 0.0
    %1035 = vmatprep.subr.mxu0 0.0
    %1036 = vmatpush1.msra.mxu0 0.0
    %1037 = vmatprep.subr.mxu0 0.0
    %1038 = vmatpush1.msra.mxu0 0.0
    %1039 = vmatprep.subr.mxu0 0.0
    %1040 = vmatpush1.msra.mxu0 0.0
    %1041 = vmatprep.subr.mxu0 0.0
    %1042 = vmatpush1.msra.mxu0 0.0
    %1043 = vmatprep.subr.mxu0 0.0
    %1044 = vmatpush1.msra.mxu0 0.0
    %1045 = vmatprep.subr.mxu0 0.0
    %1046 = vmatpush1.msra.mxu0 0.0
    %1047 = vmatprep.subr.mxu0 0.0
    %1048 = vmatpush1.msra.mxu0 0.0
    %1049 = vmatprep.subr.mxu0 0.0
    %1050 = vmatpush1.msra.mxu0 0.0
    %1051 = vmatprep.subr.mxu0 0.0
    %1052 = vmatpush1.msra.mxu0 0.0
    %1053 = vmatprep.subr.mxu0 0.0
    %1054 = vmatpush1.msra.mxu0 0.0
    %1055 = vmatprep.subr.mxu0 0.0
    %1056 = vmatpush1.msra.mxu0 0.0
    %1057 = vmatprep.subr.mxu0 0.0
    %1058 = vmatpush1.msra.mxu0 0.0
    %1059 = vmatprep.subr.mxu0 0.0
    %1060 = vmatpush1.msra.mxu0 0.0
    %1061 = vmatprep.subr.mxu0 0.0
    %1062 = vmatpush1.msra.mxu0 0.0
    %1063 = vmatprep.subr.mxu0 0.0
    %1064 = vmatpush1.msra.mxu0 0.0
    %1065 = vmatprep.subr.mxu0 0.0
    %1066 = vmatpush1.msra.mxu0 0.0
    %1067 = vmatprep.subr.mxu0 0.0
    %1068 = vmatpush1.msra.mxu0 0.0
    %1069 = vmatprep.subr.mxu0 0.0
    %1070 = vmatpush1.msra.mxu0 0.0
    %1071 = vmatprep.subr.mxu0 0.0
    %1072 = vmatpush1.msra.mxu0 0.0
    %1073 = vmatprep.subr.mxu0 0.0
    %1074 = vmatpush1.msra.mxu0 0.0
    %1075 = vmatprep.subr.mxu0 0.0
    %1076 = vmatpush1.msra.mxu0 0.0
    %1077 = vmatprep.subr.mxu0 0.0
    %1078 = vmatpush1.msra.mxu0 0.0
    %1079 = vmatprep.subr.mxu0 0.0
    %1080 = vmatpush1.msra.mxu0 0.0
    %1081 = vmatprep.subr.mxu0 0.0
    %1082 = vmatpush1.msra.mxu0 0.0
    %1083 = vmatprep.subr.mxu0 0.0
    %1084 = vmatpush1.msra.mxu0 0.0
    %1085 = vmatprep.mubr.f32.mxu0 0.0
    %1086 = vmatmul.mubr.f32.gmra.mrb[0].mxu0 %v998
    %v1087 = vpop.f32.mrb[0].mxu0
    %v1088 = vadd.f32 0.0, %v1087
    %v1089 = vpop.f32.mrb[0].mxu0
    %1090 = vmatprep.mubr.f32.mxu0 0.0
    %1091 = vmatmul.mubr.f32.gmra.mrb[0].mxu0 %v1001
    %v1092 = vpop.f32.mrb[0].mxu0
    %v1093 = vadd.f32 0.0, %v1092
    %v1094 = vpop.f32.mrb[0].mxu0
    %1095 = vmatprep.mubr.f32.mxu0 0.0
    %1096 = vmatmul.mubr.f32.gmra.mrb[0].mxu0 %v1004
    %v1097 = vpop.f32.mrb[0].mxu0
    %v1098 = vadd.f32 0.0, %v1097
    %v1099 = vpop.f32.mrb[0].mxu0
    %1100 = vmatprep.mubr.f32.mxu0 0.0
    %1101 = vmatmul.mubr.f32.gmra.mrb[0].mxu0 %v1007
    %v1102 = vpop.f32.mrb[0].mxu0
    %v1103 = vadd.f32 0.0, %v1102
    %v1104 = vpop.f32.mrb[0].mxu0
    %1105 = vmatprep.mubr.f32.mxu0 0.0
    %1106 = vmatmul.mubr.f32.gmra.mrb[0].mxu0 %v1010
    %v1107 = vpop.f32.mrb[0].mxu0
    %v1108 = vadd.f32 0.0, %v1107
    %v1109 = vpop.f32.mrb[0].mxu0
    %1110 = vmatprep.mubr.f32.mxu0 0.0
    %1111 = vmatmul.mubr.f32.gmra.mrb[0].mxu0 %v1013
    %v1112 = vpop.f32.mrb[0].mxu0
    %v1113 = vadd.f32 0.0, %v1112
    %v1114 = vpop.f32.mrb[0].mxu0
    %1115 = vmatprep.mubr.f32.mxu0 0.0
    %1116 = vmatmul.mubr.f32.gmra.mrb[0].mxu0 %v1016
    %v1117 = vpop.f32.mrb[0].mxu0
    %v1118 = vadd.f32 0.0, %v1117
    %v1119 = vpop.f32.mrb[0].mxu0
    %1120 = vmatprep.mubr.f32.mxu0 0.0
    %1121 = vmatmul.mubr.f32.gmra.mrb[0].mxu0 %v1019
    %v1122 = vpop.f32.mrb[0].mxu0
    %v1123 = vadd.f32 0.0, %v1122
    %v1124 = vpop.f32.mrb[0].mxu0
    %1125 = vdwg.mxu0
    %v1127 = vsel %vm867, %v819, 0
    %v1130 = vsel %vm867, %v820, 0
    %v1133 = vsel %vm867, %v821, 0
    %v1136 = vsel %vm867, %v822, 0
    %v1139 = vsel %vm867, %v823, 0
    %v1142 = vsel %vm867, %v824, 0
    %v1145 = vsel %vm867, %v825, 0
    %v1148 = vsel %vm867, %v826, 0
    %1150 = vmatprep.subr.mxu0 0.0
    %1151 = vmatpush1.msra.mxu0 %v711
    %1152 = vmatprep.subr.mxu0 0.0
    %1153 = vmatpush1.msra.mxu0 0.0
    %1154 = vmatprep.subr.mxu0 0.0
    %1155 = vmatpush1.msra.mxu0 0.0
    %1156 = vmatprep.subr.mxu0 0.0
    %1157 = vmatpush1.msra.mxu0 0.0
    %1158 = vmatprep.subr.mxu0 0.0
    %1159 = vmatpush1.msra.mxu0 0.0
    %1160 = vmatprep.subr.mxu0 0.0
    %1161 = vmatpush1.msra.mxu0 0.0
    %1162 = vmatprep.subr.mxu0 0.0
    %1163 = vmatpush1.msra.mxu0 0.0
    %1164 = vmatprep.subr.mxu0 0.0
    %1165 = vmatpush1.msra.mxu0 0.0
    %1166 = vmatprep.subr.mxu0 0.0
    %1167 = vmatpush1.msra.mxu0 0.0
    %1168 = vmatprep.subr.mxu0 0.0
    %1169 = vmatpush1.msra.mxu0 0.0
    %1170 = vmatprep.subr.mxu0 0.0
    %1171 = vmatpush1.msra.mxu0 0.0
    %1172 = vmatprep.subr.mxu0 0.0
    %1173 = vmatpush1.msra.mxu0 0.0
    %1174 = vmatprep.subr.mxu0 0.0
    %1175 = vmatpush1.msra.mxu0 0.0
    %1176 = vmatprep.subr.mxu0 0.0
    %1177 = vmatpush1.msra.mxu0 0.0
    %1178 = vmatprep.subr.mxu0 0.0
    %1179 = vmatpush1.msra.mxu0 0.0
    %1180 = vmatprep.subr.mxu0 0.0
    %1181 = vmatpush1.msra.mxu0 0.0
    %1182 = vmatprep.subr.mxu0 0.0
    %1183 = vmatpush1.msra.mxu0 0.0
    %1184 = vmatprep.subr.mxu0 0.0
    %1185 = vmatpush1.msra.mxu0 0.0
    %1186 = vmatprep.subr.mxu0 0.0
    %1187 = vmatpush1.msra.mxu0 0.0
    %1188 = vmatprep.subr.mxu0 0.0
    %1189 = vmatpush1.msra.mxu0 0.0
    %1190 = vmatprep.subr.mxu0 0.0
    %1191 = vmatpush1.msra.mxu0 0.0
    %1192 = vmatprep.subr.mxu0 0.0
    %1193 = vmatpush1.msra.mxu0 0.0
    %1194 = vmatprep.subr.mxu0 0.0
    %1195 = vmatpush1.msra.mxu0 0.0
    %1196 = vmatprep.subr.mxu0 0.0
    %1197 = vmatpush1.msra.mxu0 0.0
    %1198 = vmatprep.subr.mxu0 0.0
    %1199 = vmatpush1.msra.mxu0 0.0
    %1200 = vmatprep.subr.mxu0 0.0
    %1201 = vmatpush1.msra.mxu0 0.0
    %1202 = vmatprep.subr.mxu0 0.0
    %1203 = vmatpush1.msra.mxu0 0.0
    %1204 = vmatprep.subr.mxu0 0.0
    %1205 = vmatpush1.msra.mxu0 0.0
    %1206 = vmatprep.subr.mxu0 0.0
    %1207 = vmatpush1.msra.mxu0 0.0
    %1208 = vmatprep.subr.mxu0 0.0
    %1209 = vmatpush1.msra.mxu0 0.0
    %1210 = vmatprep.subr.mxu0 0.0
    %1211 = vmatpush1.msra.mxu0 0.0
    %1212 = vmatprep.subr.mxu0 0.0
    %1213 = vmatpush1.msra.mxu0 0.0
    %1214 = vmatprep.mubr.f32.mxu0 0.0
    %1215 = vmatmul.mubr.f32.gmra.mrb[0].mxu0 %v1127
    %v1216 = vpop.f32.mrb[0].mxu0
    %v1217 = vadd.f32 0.0, %v1216
    %v1218 = vpop.f32.mrb[0].mxu0
    %1219 = vmatprep.mubr.f32.mxu0 0.0
    %1220 = vmatmul.mubr.f32.gmra.mrb[0].mxu0 %v1130
    %v1221 = vpop.f32.mrb[0].mxu0
    %v1222 = vadd.f32 0.0, %v1221
    %v1223 = vpop.f32.mrb[0].mxu0
    %1224 = vmatprep.mubr.f32.mxu0 0.0
    %1225 = vmatmul.mubr.f32.gmra.mrb[0].mxu0 %v1133
    %v1226 = vpop.f32.mrb[0].mxu0
    %v1227 = vadd.f32 0.0, %v1226
    %v1228 = vpop.f32.mrb[0].mxu0
    %1229 = vmatprep.mubr.f32.mxu0 0.0
    %1230 = vmatmul.mubr.f32.gmra.mrb[0].mxu0 %v1136
    %v1231 = vpop.f32.mrb[0].mxu0
    %v1232 = vadd.f32 0.0, %v1231
    %v1233 = vpop.f32.mrb[0].mxu0
    %1234 = vmatprep.mubr.f32.mxu0 0.0
    %1235 = vmatmul.mubr.f32.gmra.mrb[0].mxu0 %v1139
    %v1236 = vpop.f32.mrb[0].mxu0
    %v1237 = vadd.f32 0.0, %v1236
    %v1238 = vpop.f32.mrb[0].mxu0
    %1239 = vmatprep.mubr.f32.mxu0 0.0
    %1240 = vmatmul.mubr.f32.gmra.mrb[0].mxu0 %v1142
    %v1241 = vpop.f32.mrb[0].mxu0
    %v1242 = vadd.f32 0.0, %v1241
    %v1243 = vpop.f32.mrb[0].mxu0
    %1244 = vmatprep.mubr.f32.mxu0 0.0
    %1245 = vmatmul.mubr.f32.gmra.mrb[0].mxu0 %v1145
    %v1246 = vpop.f32.mrb[0].mxu0
    %v1247 = vadd.f32 0.0, %v1246
    %v1248 = vpop.f32.mrb[0].mxu0
    %1249 = vmatprep.mubr.f32.mxu0 0.0
    %1250 = vmatmul.mubr.f32.gmra.mrb[0].mxu0 %v1148
    %v1251 = vpop.f32.mrb[0].mxu0
    %v1252 = vadd.f32 0.0, %v1251
    %v1253 = vpop.f32.mrb[0].mxu0
    %1254 = vdwg.mxu0
    %v1256 = vsel %vm867, %v851, 0
    %v1259 = vsel %vm867, %v852, 0
    %v1262 = vsel %vm867, %v853, 0
    %v1265 = vsel %vm867, %v854, 0
    %v1268 = vsel %vm867, %v855, 0
    %v1271 = vsel %vm867, %v856, 0
    %v1274 = vsel %vm867, %v857, 0
    %v1277 = vsel %vm867, %v858, 0
    %1279 = vmatprep.subr.mxu0 0.0
    %1280 = vmatpush1.msra.mxu0 %v716
    %1281 = vmatprep.subr.mxu0 0.0
    %1282 = vmatpush1.msra.mxu0 0.0
    %1283 = vmatprep.subr.mxu0 0.0
    %1284 = vmatpush1.msra.mxu0 0.0
    %1285 = vmatprep.subr.mxu0 0.0
    %1286 = vmatpush1.msra.mxu0 0.0
    %1287 = vmatprep.subr.mxu0 0.0
    %1288 = vmatpush1.msra.mxu0 0.0
    %1289 = vmatprep.subr.mxu0 0.0
    %1290 = vmatpush1.msra.mxu0 0.0
    %1291 = vmatprep.subr.mxu0 0.0
    %1292 = vmatpush1.msra.mxu0 0.0
    %1293 = vmatprep.subr.mxu0 0.0
    %1294 = vmatpush1.msra.mxu0 0.0
    %1295 = vmatprep.subr.mxu0 0.0
    %1296 = vmatpush1.msra.mxu0 0.0
    %1297 = vmatprep.subr.mxu0 0.0
    %1298 = vmatpush1.msra.mxu0 0.0
    %1299 = vmatprep.subr.mxu0 0.0
    %1300 = vmatpush1.msra.mxu0 0.0
    %1301 = vmatprep.subr.mxu0 0.0
    %1302 = vmatpush1.msra.mxu0 0.0
    %1303 = vmatprep.subr.mxu0 0.0
    %1304 = vmatpush1.msra.mxu0 0.0
    %1305 = vmatprep.subr.mxu0 0.0
    %1306 = vmatpush1.msra.mxu0 0.0
    %1307 = vmatprep.subr.mxu0 0.0
    %1308 = vmatpush1.msra.mxu0 0.0
    %1309 = vmatprep.subr.mxu0 0.0
    %1310 = vmatpush1.msra.mxu0 0.0
    %1311 = vmatprep.subr.mxu0 0.0
    %1312 = vmatpush1.msra.mxu0 0.0
    %1313 = vmatprep.subr.mxu0 0.0
    %1314 = vmatpush1.msra.mxu0 0.0
    %1315 = vmatprep.subr.mxu0 0.0
    %1316 = vmatpush1.msra.mxu0 0.0
    %1317 = vmatprep.subr.mxu0 0.0
    %1318 = vmatpush1.msra.mxu0 0.0
    %1319 = vmatprep.subr.mxu0 0.0
    %1320 = vmatpush1.msra.mxu0 0.0
    %1321 = vmatprep.subr.mxu0 0.0
    %1322 = vmatpush1.msra.mxu0 0.0
    %1323 = vmatprep.subr.mxu0 0.0
    %1324 = vmatpush1.msra.mxu0 0.0
    %1325 = vmatprep.subr.mxu0 0.0
    %1326 = vmatpush1.msra.mxu0 0.0
    %1327 = vmatprep.subr.mxu0 0.0
    %1328 = vmatpush1.msra.mxu0 0.0
    %1329 = vmatprep.subr.mxu0 0.0
    %1330 = vmatpush1.msra.mxu0 0.0
    %1331 = vmatprep.subr.mxu0 0.0
    %1332 = vmatpush1.msra.mxu0 0.0
    %1333 = vmatprep.subr.mxu0 0.0
    %1334 = vmatpush1.msra.mxu0 0.0
    %1335 = vmatprep.subr.mxu0 0.0
    %1336 = vmatpush1.msra.mxu0 0.0
    %1337 = vmatprep.subr.mxu0 0.0
    %1338 = vmatpush1.msra.mxu0 0.0
    %1339 = vmatprep.subr.mxu0 0.0
    %1340 = vmatpush1.msra.mxu0 0.0
    %1341 = vmatprep.subr.mxu0 0.0
    %1342 = vmatpush1.msra.mxu0 0.0
    %1343 = vmatprep.mubr.f32.mxu0 0.0
    %1344 = vmatmul.mubr.f32.gmra.mrb[0].mxu0 %v1256
    %v1345 = vpop.f32.mrb[0].mxu0
    %v1346 = vadd.f32 0.0, %v1345
    %v1347 = vpop.f32.mrb[0].mxu0
    %1348 = vmatprep.mubr.f32.mxu0 0.0
    %1349 = vmatmul.mubr.f32.gmra.mrb[0].mxu0 %v1259
    %v1350 = vpop.f32.mrb[0].mxu0
    %v1351 = vadd.f32 0.0, %v1350
    %v1352 = vpop.f32.mrb[0].mxu0
    %1353 = vmatprep.mubr.f32.mxu0 0.0
    %1354 = vmatmul.mubr.f32.gmra.mrb[0].mxu0 %v1262
    %v1355 = vpop.f32.mrb[0].mxu0
    %v1356 = vadd.f32 0.0, %v1355
    %v1357 = vpop.f32.mrb[0].mxu0
    %1358 = vmatprep.mubr.f32.mxu0 0.0
    %1359 = vmatmul.mubr.f32.gmra.mrb[0].mxu0 %v1265
    %v1360 = vpop.f32.mrb[0].mxu0
    %v1361 = vadd.f32 0.0, %v1360
    %v1362 = vpop.f32.mrb[0].mxu0
    %1363 = vmatprep.mubr.f32.mxu0 0.0
    %1364 = vmatmul.mubr.f32.gmra.mrb[0].mxu0 %v1268
    %v1365 = vpop.f32.mrb[0].mxu0
    %v1366 = vadd.f32 0.0, %v1365
    %v1367 = vpop.f32.mrb[0].mxu0
    %1368 = vmatprep.mubr.f32.mxu0 0.0
    %1369 = vmatmul.mubr.f32.gmra.mrb[0].mxu0 %v1271
    %v1370 = vpop.f32.mrb[0].mxu0
    %v1371 = vadd.f32 0.0, %v1370
    %v1372 = vpop.f32.mrb[0].mxu0
    %1373 = vmatprep.mubr.f32.mxu0 0.0
    %1374 = vmatmul.mubr.f32.gmra.mrb[0].mxu0 %v1274
    %v1375 = vpop.f32.mrb[0].mxu0
    %v1376 = vadd.f32 0.0, %v1375
    %v1377 = vpop.f32.mrb[0].mxu0
    %1378 = vmatprep.mubr.f32.mxu0 0.0
    %1379 = vmatmul.mubr.f32.gmra.mrb[0].mxu0 %v1277
    %v1380 = vpop.f32.mrb[0].mxu0
    %v1381 = vadd.f32 0.0, %v1380
    %v1382 = vpop.f32.mrb[0].mxu0
    %1383 = vdwg.mxu0
    %vm1384 = vcmask 523264
    %v1385 = vsel %vm1384, %v959, -inf
    %1386 = vmax.xlane.f32.xlu0 %v1385
    %v1387 = vpop.xlane.xlu0 %1386
    %v1388 = vsel %vm1384, %v964, -inf
    %1389 = vmax.xlane.f32.xlu0 %v1388
    %v1390 = vpop.xlane.xlu0 %1389
    %v1391 = vsel %vm1384, %v969, -inf
    %1392 = vmax.xlane.f32.xlu0 %v1391
    %v1393 = vpop.xlane.xlu0 %1392
    %v1394 = vsel %vm1384, %v974, -inf
    %1395 = vmax.xlane.f32.xlu0 %v1394
    %v1396 = vpop.xlane.xlu0 %1395
    %v1397 = vsel %vm1384, %v979, -inf
    %1398 = vmax.xlane.f32.xlu0 %v1397
    %v1399 = vpop.xlane.xlu0 %1398
    %v1400 = vsel %vm1384, %v984, -inf
    %1401 = vmax.xlane.f32.xlu0 %v1400
    %v1402 = vpop.xlane.xlu0 %1401
    %v1403 = vsel %vm1384, %v989, -inf
    %1404 = vmax.xlane.f32.xlu0 %v1403
    %v1405 = vpop.xlane.xlu0 %1404
    %v1406 = vsel %vm1384, %v994, -inf
    %1407 = vmax.xlane.f32.xlu0 %v1406
    %v1408 = vpop.xlane.xlu0 %1407
    %v1409 = vsel %vm1384, %v1088, -inf
    %1410 = vmax.xlane.f32.xlu0 %v1409
    %v1411 = vpop.xlane.xlu0 %1410
    %v1412 = vsel %vm1384, %v1093, -inf
    %1413 = vmax.xlane.f32.xlu0 %v1412
    %v1414 = vpop.xlane.xlu0 %1413
    %v1415 = vsel %vm1384, %v1098, -inf
    %1416 = vmax.xlane.f32.xlu0 %v1415
    %v1417 = vpop.xlane.xlu0 %1416
    %v1418 = vsel %vm1384, %v1103, -inf
    %1419 = vmax.xlane.f32.xlu0 %v1418
    %v1420 = vpop.xlane.xlu0 %1419
    %v1421 = vsel %vm1384, %v1108, -inf
    %1422 = vmax.xlane.f32.xlu0 %v1421
    %v1423 = vpop.xlane.xlu0 %1422
    %v1424 = vsel %vm1384, %v1113, -inf
    %1425 = vmax.xlane.f32.xlu0 %v1424
    %v1426 = vpop.xlane.xlu0 %1425
    %v1427 = vsel %vm1384, %v1118, -inf
    %1428 = vmax.xlane.f32.xlu0 %v1427
    %v1429 = vpop.xlane.xlu0 %1428
    %v1430 = vsel %vm1384, %v1123, -inf
    %1431 = vmax.xlane.f32.xlu0 %v1430
    %v1432 = vpop.xlane.xlu0 %1431
    %v1433 = vsel %vm1384, %v1217, -inf
    %1434 = vmax.xlane.f32.xlu0 %v1433
    %v1435 = vpop.xlane.xlu0 %1434
    %v1436 = vsel %vm1384, %v1222, -inf
    %1437 = vmax.xlane.f32.xlu0 %v1436
    %v1438 = vpop.xlane.xlu0 %1437
    %v1439 = vsel %vm1384, %v1227, -inf
    %1440 = vmax.xlane.f32.xlu0 %v1439
    %v1441 = vpop.xlane.xlu0 %1440
    %v1442 = vsel %vm1384, %v1232, -inf
    %1443 = vmax.xlane.f32.xlu0 %v1442
    %v1444 = vpop.xlane.xlu0 %1443
    %v1445 = vsel %vm1384, %v1237, -inf
    %1446 = vmax.xlane.f32.xlu0 %v1445
    %v1447 = vpop.xlane.xlu0 %1446
    %v1448 = vsel %vm1384, %v1242, -inf
    %1449 = vmax.xlane.f32.xlu0 %v1448
    %v1450 = vpop.xlane.xlu0 %1449
    %v1451 = vsel %vm1384, %v1247, -inf
    %1452 = vmax.xlane.f32.xlu0 %v1451
    %v1453 = vpop.xlane.xlu0 %1452
    %v1454 = vsel %vm1384, %v1252, -inf
    %1455 = vmax.xlane.f32.xlu0 %v1454
    %v1456 = vpop.xlane.xlu0 %1455
    %v1457 = vsel %vm1384, %v1346, -inf
    %1458 = vmax.xlane.f32.xlu0 %v1457
    %v1459 = vpop.xlane.xlu0 %1458
    %v1460 = vsel %vm1384, %v1351, -inf
    %1461 = vmax.xlane.f32.xlu0 %v1460
    %v1462 = vpop.xlane.xlu0 %1461
    %v1463 = vsel %vm1384, %v1356, -inf
    %1464 = vmax.xlane.f32.xlu0 %v1463
    %v1465 = vpop.xlane.xlu0 %1464
    %v1466 = vsel %vm1384, %v1361, -inf
    %1467 = vmax.xlane.f32.xlu0 %v1466
    %v1468 = vpop.xlane.xlu0 %1467
    %v1469 = vsel %vm1384, %v1366, -inf
    %1470 = vmax.xlane.f32.xlu0 %v1469
    %v1471 = vpop.xlane.xlu0 %1470
    %v1472 = vsel %vm1384, %v1371, -inf
    %1473 = vmax.xlane.f32.xlu0 %v1472
    %v1474 = vpop.xlane.xlu0 %1473
    %v1475 = vsel %vm1384, %v1376, -inf
    %1476 = vmax.xlane.f32.xlu0 %v1475
    %v1477 = vpop.xlane.xlu0 %1476
    %v1478 = vsel %vm1384, %v1381, -inf
    %1479 = vmax.xlane.f32.xlu0 %v1478
    %v1480 = vpop.xlane.xlu0 %1479
    %v1481 = vsub.f32 %v959, %v1387
    %v1482 = vsub.f32 %v964, %v1390
    %v1483 = vsub.f32 %v969, %v1393
    %v1484 = vsub.f32 %v974, %v1396
    %v1485 = vsub.f32 %v979, %v1399
    %v1486 = vsub.f32 %v984, %v1402
    %v1487 = vsub.f32 %v989, %v1405
    %v1488 = vsub.f32 %v994, %v1408
    %v1489 = vsub.f32 %v1088, %v1411
    %v1490 = vsub.f32 %v1093, %v1414
    %v1491 = vsub.f32 %v1098, %v1417
    %v1492 = vsub.f32 %v1103, %v1420
    %v1493 = vsub.f32 %v1108, %v1423
    %v1494 = vsub.f32 %v1113, %v1426
    %v1495 = vsub.f32 %v1118, %v1429
    %v1496 = vsub.f32 %v1123, %v1432
    %v1497 = vsub.f32 %v1217, %v1435
    %v1498 = vsub.f32 %v1222, %v1438
    %v1499 = vsub.f32 %v1227, %v1441
    %v1500 = vsub.f32 %v1232, %v1444
    %v1501 = vsub.f32 %v1237, %v1447
    %v1502 = vsub.f32 %v1242, %v1450
    %v1503 = vsub.f32 %v1247, %v1453
    %v1504 = vsub.f32 %v1252, %v1456
    %v1505 = vsub.f32 %v1346, %v1459
    %v1506 = vsub.f32 %v1351, %v1462
    %v1507 = vsub.f32 %v1356, %v1465
    %v1508 = vsub.f32 %v1361, %v1468
    %v1509 = vsub.f32 %v1366, %v1471
    %v1510 = vsub.f32 %v1371, %v1474
    %v1511 = vsub.f32 %v1376, %v1477
    %v1512 = vsub.f32 %v1381, %v1480
    %v1513 = vmul.f32 %v1481, 1.442695
    %v1514 = vpow.pop %v1513
    %v1515 = vmul.f32 %v1482, 1.442695
    %v1516 = vpow.pop %v1515
    %v1517 = vmul.f32 %v1483, 1.442695
    %v1518 = vpow.pop %v1517
    %v1519 = vmul.f32 %v1484, 1.442695
    %v1520 = vpow.pop %v1519
    %v1521 = vmul.f32 %v1485, 1.442695
    %v1522 = vpow.pop %v1521
    %v1523 = vmul.f32 %v1486, 1.442695
    %v1524 = vpow.pop %v1523
    %v1525 = vmul.f32 %v1487, 1.442695
    %v1526 = vpow.pop %v1525
    %v1527 = vmul.f32 %v1488, 1.442695
    %v1528 = vpow.pop %v1527
    %v1529 = vmul.f32 %v1489, 1.442695
    %v1530 = vpow.pop %v1529
    %v1531 = vmul.f32 %v1490, 1.442695
    %v1532 = vpow.pop %v1531
    %v1533 = vmul.f32 %v1491, 1.442695
    %v1534 = vpow.pop %v1533
    %v1535 = vmul.f32 %v1492, 1.442695
    %v1536 = vpow.pop %v1535
    %v1537 = vmul.f32 %v1493, 1.442695
    %v1538 = vpow.pop %v1537
    %v1539 = vmul.f32 %v1494, 1.442695
    %v1540 = vpow.pop %v1539
    %v1541 = vmul.f32 %v1495, 1.442695
    %v1542 = vpow.pop %v1541
    %v1543 = vmul.f32 %v1496, 1.442695
    %v1544 = vpow.pop %v1543
    %v1545 = vmul.f32 %v1497, 1.442695
    %v1546 = vpow.pop %v1545
    %v1547 = vmul.f32 %v1498, 1.442695
    %v1548 = vpow.pop %v1547
    %v1549 = vmul.f32 %v1499, 1.442695
    %v1550 = vpow.pop %v1549
    %v1551 = vmul.f32 %v1500, 1.442695
    %v1552 = vpow.pop %v1551
    %v1553 = vmul.f32 %v1501, 1.442695
    %v1554 = vpow.pop %v1553
    %v1555 = vmul.f32 %v1502, 1.442695
    %v1556 = vpow.pop %v1555
    %v1557 = vmul.f32 %v1503, 1.442695
    %v1558 = vpow.pop %v1557
    %v1559 = vmul.f32 %v1504, 1.442695
    %v1560 = vpow.pop %v1559
    %v1561 = vmul.f32 %v1505, 1.442695
    %v1562 = vpow.pop %v1561
    %v1563 = vmul.f32 %v1506, 1.442695
    %v1564 = vpow.pop %v1563
    %v1565 = vmul.f32 %v1507, 1.442695
    %v1566 = vpow.pop %v1565
    %v1567 = vmul.f32 %v1508, 1.442695
    %v1568 = vpow.pop %v1567
    %v1569 = vmul.f32 %v1509, 1.442695
    %v1570 = vpow.pop %v1569
    %v1571 = vmul.f32 %v1510, 1.442695
    %v1572 = vpow.pop %v1571
    %v1573 = vmul.f32 %v1511, 1.442695
    %v1574 = vpow.pop %v1573
    %v1575 = vmul.f32 %v1512, 1.442695
    %v1576 = vpow.pop %v1575
    %v1577 = vsel %vm1384, %v1514, 0.0
    %1578 = vadd.xlane.f32.xlu0 %v1577
    %v1579 = vpop.xlane.xlu0 %1578
    %v1580 = vsel %vm1384, %v1516, 0.0
    %1581 = vadd.xlane.f32.xlu0 %v1580
    %v1582 = vpop.xlane.xlu0 %1581
    %v1583 = vsel %vm1384, %v1518, 0.0
    %1584 = vadd.xlane.f32.xlu0 %v1583
    %v1585 = vpop.xlane.xlu0 %1584
    %v1586 = vsel %vm1384, %v1520, 0.0
    %1587 = vadd.xlane.f32.xlu0 %v1586
    %v1588 = vpop.xlane.xlu0 %1587
    %v1589 = vsel %vm1384, %v1522, 0.0
    %1590 = vadd.xlane.f32.xlu0 %v1589
    %v1591 = vpop.xlane.xlu0 %1590
    %v1592 = vsel %vm1384, %v1524, 0.0
    %1593 = vadd.xlane.f32.xlu0 %v1592
    %v1594 = vpop.xlane.xlu0 %1593
    %v1595 = vsel %vm1384, %v1526, 0.0
    %1596 = vadd.xlane.f32.xlu0 %v1595
    %v1597 = vpop.xlane.xlu0 %1596
    %v1598 = vsel %vm1384, %v1528, 0.0
    %1599 = vadd.xlane.f32.xlu0 %v1598
    %v1600 = vpop.xlane.xlu0 %1599
    %v1601 = vsel %vm1384, %v1530, 0.0
    %1602 = vadd.xlane.f32.xlu0 %v1601
    %v1603 = vpop.xlane.xlu0 %1602
    %v1604 = vsel %vm1384, %v1532, 0.0
    %1605 = vadd.xlane.f32.xlu0 %v1604
    %v1606 = vpop.xlane.xlu0 %1605
    %v1607 = vsel %vm1384, %v1534, 0.0
    %1608 = vadd.xlane.f32.xlu0 %v1607
    %v1609 = vpop.xlane.xlu0 %1608
    %v1610 = vsel %vm1384, %v1536, 0.0
    %1611 = vadd.xlane.f32.xlu0 %v1610
    %v1612 = vpop.xlane.xlu0 %1611
    %v1613 = vsel %vm1384, %v1538, 0.0
    %1614 = vadd.xlane.f32.xlu0 %v1613
    %v1615 = vpop.xlane.xlu0 %1614
    %v1616 = vsel %vm1384, %v1540, 0.0
    %1617 = vadd.xlane.f32.xlu0 %v1616
    %v1618 = vpop.xlane.xlu0 %1617
    %v1619 = vsel %vm1384, %v1542, 0.0
    %1620 = vadd.xlane.f32.xlu0 %v1619
    %v1621 = vpop.xlane.xlu0 %1620
    %v1622 = vsel %vm1384, %v1544, 0.0
    %1623 = vadd.xlane.f32.xlu0 %v1622
    %v1624 = vpop.xlane.xlu0 %1623
    %v1625 = vsel %vm1384, %v1546, 0.0
    %1626 = vadd.xlane.f32.xlu0 %v1625
    %v1627 = vpop.xlane.xlu0 %1626
    %v1628 = vsel %vm1384, %v1548, 0.0
    %1629 = vadd.xlane.f32.xlu0 %v1628
    %v1630 = vpop.xlane.xlu0 %1629
    %v1631 = vsel %vm1384, %v1550, 0.0
    %1632 = vadd.xlane.f32.xlu0 %v1631
    %v1633 = vpop.xlane.xlu0 %1632
    %v1634 = vsel %vm1384, %v1552, 0.0
    %1635 = vadd.xlane.f32.xlu0 %v1634
    %v1636 = vpop.xlane.xlu0 %1635
    %v1637 = vsel %vm1384, %v1554, 0.0
    %1638 = vadd.xlane.f32.xlu0 %v1637
    %v1639 = vpop.xlane.xlu0 %1638
    %v1640 = vsel %vm1384, %v1556, 0.0
    %1641 = vadd.xlane.f32.xlu0 %v1640
    %v1642 = vpop.xlane.xlu0 %1641
    %v1643 = vsel %vm1384, %v1558, 0.0
    %1644 = vadd.xlane.f32.xlu0 %v1643
    %v1645 = vpop.xlane.xlu0 %1644
    %v1646 = vsel %vm1384, %v1560, 0.0
    %1647 = vadd.xlane.f32.xlu0 %v1646
    %v1648 = vpop.xlane.xlu0 %1647
    %v1649 = vsel %vm1384, %v1562, 0.0
    %1650 = vadd.xlane.f32.xlu0 %v1649
    %v1651 = vpop.xlane.xlu0 %1650
    %v1652 = vsel %vm1384, %v1564, 0.0
    %1653 = vadd.xlane.f32.xlu0 %v1652
    %v1654 = vpop.xlane.xlu0 %1653
    %v1655 = vsel %vm1384, %v1566, 0.0
    %1656 = vadd.xlane.f32.xlu0 %v1655
    %v1657 = vpop.xlane.xlu0 %1656
    %v1658 = vsel %vm1384, %v1568, 0.0
    %1659 = vadd.xlane.f32.xlu0 %v1658
    %v1660 = vpop.xlane.xlu0 %1659
    %v1661 = vsel %vm1384, %v1570, 0.0
    %1662 = vadd.xlane.f32.xlu0 %v1661
    %v1663 = vpop.xlane.xlu0 %1662
    %v1664 = vsel %vm1384, %v1572, 0.0
    %1665 = vadd.xlane.f32.xlu0 %v1664
    %v1666 = vpop.xlane.xlu0 %1665
    %v1667 = vsel %vm1384, %v1574, 0.0
    %1668 = vadd.xlane.f32.xlu0 %v1667
    %v1669 = vpop.xlane.xlu0 %1668
    %v1670 = vsel %vm1384, %v1576, 0.0
    %1671 = vadd.xlane.f32.xlu0 %v1670
    %v1672 = vpop.xlane.xlu0 %1671
    %v1674 = vsel %vm1384, %v721, 0
    %v1677 = vsel %vm1384, %v1514, 0
    %v1680 = vsel %vm1384, %v1516, 0
    %v1683 = vsel %vm1384, %v1518, 0
    %v1686 = vsel %vm1384, %v1520, 0
    %v1689 = vsel %vm1384, %v1522, 0
    %v1692 = vsel %vm1384, %v1524, 0
    %v1695 = vsel %vm1384, %v1526, 0
    %v1698 = vsel %vm1384, %v1528, 0
    %1700 = vmatprep.subr.mxu0 0.0
    %1701 = vmatpush1.xpose.msra.mxu0 %v1677
    %1702 = vmatprep.subr.mxu0 0.0
    %1703 = vmatpush1.xpose.msra.mxu0 %v1680
    %1704 = vmatprep.subr.mxu0 0.0
    %1705 = vmatpush1.xpose.msra.mxu0 %v1683
    %1706 = vmatprep.subr.mxu0 0.0
    %1707 = vmatpush1.xpose.msra.mxu0 %v1686
    %1708 = vmatprep.subr.mxu0 0.0
    %1709 = vmatpush1.xpose.msra.mxu0 %v1689
    %1710 = vmatprep.subr.mxu0 0.0
    %1711 = vmatpush1.xpose.msra.mxu0 %v1692
    %1712 = vmatprep.subr.mxu0 0.0
    %1713 = vmatpush1.xpose.msra.mxu0 %v1695
    %1714 = vmatprep.subr.mxu0 0.0
    %1715 = vmatpush1.xpose.msra.mxu0 %v1698
    %1716 = vmatprep.subr.mxu0 0.0
    %1717 = vmatpush1.xpose.msra.mxu0 0.0
    %1718 = vmatprep.subr.mxu0 0.0
    %1719 = vmatpush1.xpose.msra.mxu0 0.0
    %1720 = vmatprep.subr.mxu0 0.0
    %1721 = vmatpush1.xpose.msra.mxu0 0.0
    %1722 = vmatprep.subr.mxu0 0.0
    %1723 = vmatpush1.xpose.msra.mxu0 0.0
    %1724 = vmatprep.subr.mxu0 0.0
    %1725 = vmatpush1.xpose.msra.mxu0 0.0
    %1726 = vmatprep.subr.mxu0 0.0
    %1727 = vmatpush1.xpose.msra.mxu0 0.0
    %1728 = vmatprep.subr.mxu0 0.0
    %1729 = vmatpush1.xpose.msra.mxu0 0.0
    %1730 = vmatprep.subr.mxu0 0.0
    %1731 = vmatpush1.xpose.msra.mxu0 0.0
    %1732 = vmatprep.subr.mxu0 0.0
    %1733 = vmatpush1.xpose.msra.mxu0 0.0
    %1734 = vmatprep.subr.mxu0 0.0
    %1735 = vmatpush1.xpose.msra.mxu0 0.0
    %1736 = vmatprep.subr.mxu0 0.0
    %1737 = vmatpush1.xpose.msra.mxu0 0.0
    %1738 = vmatprep.subr.mxu0 0.0
    %1739 = vmatpush1.xpose.msra.mxu0 0.0
    %1740 = vmatprep.subr.mxu0 0.0
    %1741 = vmatpush1.xpose.msra.mxu0 0.0
    %1742 = vmatprep.subr.mxu0 0.0
    %1743 = vmatpush1.xpose.msra.mxu0 0.0
    %1744 = vmatprep.subr.mxu0 0.0
    %1745 = vmatpush1.xpose.msra.mxu0 0.0
    %1746 = vmatprep.subr.mxu0 0.0
    %1747 = vmatpush1.xpose.msra.mxu0 0.0
    %1748 = vmatprep.subr.mxu0 0.0
    %1749 = vmatpush1.xpose.msra.mxu0 0.0
    %1750 = vmatprep.subr.mxu0 0.0
    %1751 = vmatpush1.xpose.msra.mxu0 0.0
    %1752 = vmatprep.subr.mxu0 0.0
    %1753 = vmatpush1.xpose.msra.mxu0 0.0
    %1754 = vmatprep.subr.mxu0 0.0
    %1755 = vmatpush1.xpose.msra.mxu0 0.0
    %1756 = vmatprep.subr.mxu0 0.0
    %1757 = vmatpush1.xpose.msra.mxu0 0.0
    %1758 = vmatprep.subr.mxu0 0.0
    %1759 = vmatpush1.xpose.msra.mxu0 0.0
    %1760 = vmatprep.subr.mxu0 0.0
    %1761 = vmatpush1.xpose.msra.mxu0 0.0
    %1762 = vmatprep.subr.mxu0 0.0
    %1763 = vmatpush1.xpose.msra.mxu0 0.0
    %1764 = vmatprep.mubr.f32.mxu0 0.0
    %1765 = vmatmul.mubr.f32.gmra.mrb[0].mxu0 %v1674
    %v1766 = vpop.f32.mrb[0].mxu0
    %v1767 = vadd.f32 0.0, %v1766
    %v1768 = vpop.f32.mrb[0].mxu0
    %1769 = vdwg.mxu0
    %v1771 = vsel %vm1384, %v726, 0
    %v1774 = vsel %vm1384, %v1530, 0
    %v1777 = vsel %vm1384, %v1532, 0
    %v1780 = vsel %vm1384, %v1534, 0
    %v1783 = vsel %vm1384, %v1536, 0
    %v1786 = vsel %vm1384, %v1538, 0
    %v1789 = vsel %vm1384, %v1540, 0
    %v1792 = vsel %vm1384, %v1542, 0
    %v1795 = vsel %vm1384, %v1544, 0
    %1797 = vmatprep.subr.mxu0 0.0
    %1798 = vmatpush1.xpose.msra.mxu0 %v1774
    %1799 = vmatprep.subr.mxu0 0.0
    %1800 = vmatpush1.xpose.msra.mxu0 %v1777
    %1801 = vmatprep.subr.mxu0 0.0
    %1802 = vmatpush1.xpose.msra.mxu0 %v1780
    %1803 = vmatprep.subr.mxu0 0.0
    %1804 = vmatpush1.xpose.msra.mxu0 %v1783
    %1805 = vmatprep.subr.mxu0 0.0
    %1806 = vmatpush1.xpose.msra.mxu0 %v1786
    %1807 = vmatprep.subr.mxu0 0.0
    %1808 = vmatpush1.xpose.msra.mxu0 %v1789
    %1809 = vmatprep.subr.mxu0 0.0
    %1810 = vmatpush1.xpose.msra.mxu0 %v1792
    %1811 = vmatprep.subr.mxu0 0.0
    %1812 = vmatpush1.xpose.msra.mxu0 %v1795
    %1813 = vmatprep.subr.mxu0 0.0
    %1814 = vmatpush1.xpose.msra.mxu0 0.0
    %1815 = vmatprep.subr.mxu0 0.0
    %1816 = vmatpush1.xpose.msra.mxu0 0.0
    %1817 = vmatprep.subr.mxu0 0.0
    %1818 = vmatpush1.xpose.msra.mxu0 0.0
    %1819 = vmatprep.subr.mxu0 0.0
    %1820 = vmatpush1.xpose.msra.mxu0 0.0
    %1821 = vmatprep.subr.mxu0 0.0
    %1822 = vmatpush1.xpose.msra.mxu0 0.0
    %1823 = vmatprep.subr.mxu0 0.0
    %1824 = vmatpush1.xpose.msra.mxu0 0.0
    %1825 = vmatprep.subr.mxu0 0.0
    %1826 = vmatpush1.xpose.msra.mxu0 0.0
    %1827 = vmatprep.subr.mxu0 0.0
    %1828 = vmatpush1.xpose.msra.mxu0 0.0
    %1829 = vmatprep.subr.mxu0 0.0
    %1830 = vmatpush1.xpose.msra.mxu0 0.0
    %1831 = vmatprep.subr.mxu0 0.0
    %1832 = vmatpush1.xpose.msra.mxu0 0.0
    %1833 = vmatprep.subr.mxu0 0.0
    %1834 = vmatpush1.xpose.msra.mxu0 0.0
    %1835 = vmatprep.subr.mxu0 0.0
    %1836 = vmatpush1.xpose.msra.mxu0 0.0
    %1837 = vmatprep.subr.mxu0 0.0
    %1838 = vmatpush1.xpose.msra.mxu0 0.0
    %1839 = vmatprep.subr.mxu0 0.0
    %1840 = vmatpush1.xpose.msra.mxu0 0.0
    %1841 = vmatprep.subr.mxu0 0.0
    %1842 = vmatpush1.xpose.msra.mxu0 0.0
    %1843 = vmatprep.subr.mxu0 0.0
    %1844 = vmatpush1.xpose.msra.mxu0 0.0
    %1845 = vmatprep.subr.mxu0 0.0
    %1846 = vmatpush1.xpose.msra.mxu0 0.0
    %1847 = vmatprep.subr.mxu0 0.0
    %1848 = vmatpush1.xpose.msra.mxu0 0.0
    %1849 = vmatprep.subr.mxu0 0.0
    %1850 = vmatpush1.xpose.msra.mxu0 0.0
    %1851 = vmatprep.subr.mxu0 0.0
    %1852 = vmatpush1.xpose.msra.mxu0 0.0
    %1853 = vmatprep.subr.mxu0 0.0
    %1854 = vmatpush1.xpose.msra.mxu0 0.0
    %1855 = vmatprep.subr.mxu0 0.0
    %1856 = vmatpush1.xpose.msra.mxu0 0.0
    %1857 = vmatprep.subr.mxu0 0.0
    %1858 = vmatpush1.xpose.msra.mxu0 0.0
    %1859 = vmatprep.subr.mxu0 0.0
    %1860 = vmatpush1.xpose.msra.mxu0 0.0
    %1861 = vmatprep.mubr.f32.mxu0 0.0
    %1862 = vmatmul.mubr.f32.gmra.mrb[0].mxu0 %v1771
    %v1863 = vpop.f32.mrb[0].mxu0
    %v1864 = vadd.f32 0.0, %v1863
    %v1865 = vpop.f32.mrb[0].mxu0
    %1866 = vdwg.mxu0
    %v1868 = vsel %vm1384, %v731, 0
    %v1871 = vsel %vm1384, %v1546, 0
    %v1874 = vsel %vm1384, %v1548, 0
    %v1877 = vsel %vm1384, %v1550, 0
    %v1880 = vsel %vm1384, %v1552, 0
    %v1883 = vsel %vm1384, %v1554, 0
    %v1886 = vsel %vm1384, %v1556, 0
    %v1889 = vsel %vm1384, %v1558, 0
    %v1892 = vsel %vm1384, %v1560, 0
    %1894 = vmatprep.subr.mxu0 0.0
    %1895 = vmatpush1.xpose.msra.mxu0 %v1871
    %1896 = vmatprep.subr.mxu0 0.0
    %1897 = vmatpush1.xpose.msra.mxu0 %v1874
    %1898 = vmatprep.subr.mxu0 0.0
    %1899 = vmatpush1.xpose.msra.mxu0 %v1877
    %1900 = vmatprep.subr.mxu0 0.0
    %1901 = vmatpush1.xpose.msra.mxu0 %v1880
    %1902 = vmatprep.subr.mxu0 0.0
    %1903 = vmatpush1.xpose.msra.mxu0 %v1883
    %1904 = vmatprep.subr.mxu0 0.0
    %1905 = vmatpush1.xpose.msra.mxu0 %v1886
    %1906 = vmatprep.subr.mxu0 0.0
    %1907 = vmatpush1.xpose.msra.mxu0 %v1889
    %1908 = vmatprep.subr.mxu0 0.0
    %1909 = vmatpush1.xpose.msra.mxu0 %v1892
    %1910 = vmatprep.subr.mxu0 0.0
    %1911 = vmatpush1.xpose.msra.mxu0 0.0
    %1912 = vmatprep.subr.mxu0 0.0
    %1913 = vmatpush1.xpose.msra.mxu0 0.0
    %1914 = vmatprep.subr.mxu0 0.0
    %1915 = vmatpush1.xpose.msra.mxu0 0.0
    %1916 = vmatprep.subr.mxu0 0.0
    %1917 = vmatpush1.xpose.msra.mxu0 0.0
    %1918 = vmatprep.subr.mxu0 0.0
    %1919 = vmatpush1.xpose.msra.mxu0 0.0
    %1920 = vmatprep.subr.mxu0 0.0
    %1921 = vmatpush1.xpose.msra.mxu0 0.0
    %1922 = vmatprep.subr.mxu0 0.0
    %1923 = vmatpush1.xpose.msra.mxu0 0.0
    %1924 = vmatprep.subr.mxu0 0.0
    %1925 = vmatpush1.xpose.msra.mxu0 0.0
    %1926 = vmatprep.subr.mxu0 0.0
    %1927 = vmatpush1.xpose.msra.mxu0 0.0
    %1928 = vmatprep.subr.mxu0 0.0
    %1929 = vmatpush1.xpose.msra.mxu0 0.0
    %1930 = vmatprep.subr.mxu0 0.0
    %1931 = vmatpush1.xpose.msra.mxu0 0.0
    %1932 = vmatprep.subr.mxu0 0.0
    %1933 = vmatpush1.xpose.msra.mxu0 0.0
    %1934 = vmatprep.subr.mxu0 0.0
    %1935 = vmatpush1.xpose.msra.mxu0 0.0
    %1936 = vmatprep.subr.mxu0 0.0
    %1937 = vmatpush1.xpose.msra.mxu0 0.0
    %1938 = vmatprep.subr.mxu0 0.0
    %1939 = vmatpush1.xpose.msra.mxu0 0.0
    %1940 = vmatprep.subr.mxu0 0.0
    %1941 = vmatpush1.xpose.msra.mxu0 0.0
    %1942 = vmatprep.subr.mxu0 0.0
    %1943 = vmatpush1.xpose.msra.mxu0 0.0
    %1944 = vmatprep.subr.mxu0 0.0
    %1945 = vmatpush1.xpose.msra.mxu0 0.0
    %1946 = vmatprep.subr.mxu0 0.0
    %1947 = vmatpush1.xpose.msra.mxu0 0.0
    %1948 = vmatprep.subr.mxu0 0.0
    %1949 = vmatpush1.xpose.msra.mxu0 0.0
    %1950 = vmatprep.subr.mxu0 0.0
    %1951 = vmatpush1.xpose.msra.mxu0 0.0
    %1952 = vmatprep.subr.mxu0 0.0
    %1953 = vmatpush1.xpose.msra.mxu0 0.0
    %1954 = vmatprep.subr.mxu0 0.0
    %1955 = vmatpush1.xpose.msra.mxu0 0.0
    %1956 = vmatprep.subr.mxu0 0.0
    %1957 = vmatpush1.xpose.msra.mxu0 0.0
    %1958 = vmatprep.mubr.f32.mxu0 0.0
    %1959 = vmatmul.mubr.f32.gmra.mrb[0].mxu0 %v1868
    %v1960 = vpop.f32.mrb[0].mxu0
    %v1961 = vadd.f32 0.0, %v1960
    %v1962 = vpop.f32.mrb[0].mxu0
    %1963 = vdwg.mxu0
    %v1965 = vsel %vm1384, %v736, 0
    %v1968 = vsel %vm1384, %v1562, 0
    %v1971 = vsel %vm1384, %v1564, 0
    %v1974 = vsel %vm1384, %v1566, 0
    %v1977 = vsel %vm1384, %v1568, 0
    %v1980 = vsel %vm1384, %v1570, 0
    %v1983 = vsel %vm1384, %v1572, 0
    %v1986 = vsel %vm1384, %v1574, 0
    %v1989 = vsel %vm1384, %v1576, 0
    %1991 = vmatprep.subr.mxu0 0.0
    %1992 = vmatpush1.xpose.msra.mxu0 %v1968
    %1993 = vmatprep.subr.mxu0 0.0
    %1994 = vmatpush1.xpose.msra.mxu0 %v1971
    %1995 = vmatprep.subr.mxu0 0.0
    %1996 = vmatpush1.xpose.msra.mxu0 %v1974
    %1997 = vmatprep.subr.mxu0 0.0
    %1998 = vmatpush1.xpose.msra.mxu0 %v1977
    %1999 = vmatprep.subr.mxu0 0.0
    %2000 = vmatpush1.xpose.msra.mxu0 %v1980
    %2001 = vmatprep.subr.mxu0 0.0
    %2002 = vmatpush1.xpose.msra.mxu0 %v1983
    %2003 = vmatprep.subr.mxu0 0.0
    %2004 = vmatpush1.xpose.msra.mxu0 %v1986
    %2005 = vmatprep.subr.mxu0 0.0
    %2006 = vmatpush1.xpose.msra.mxu0 %v1989
    %2007 = vmatprep.subr.mxu0 0.0
    %2008 = vmatpush1.xpose.msra.mxu0 0.0
    %2009 = vmatprep.subr.mxu0 0.0
    %2010 = vmatpush1.xpose.msra.mxu0 0.0
    %2011 = vmatprep.subr.mxu0 0.0
    %2012 = vmatpush1.xpose.msra.mxu0 0.0
    %2013 = vmatprep.subr.mxu0 0.0
    %2014 = vmatpush1.xpose.msra.mxu0 0.0
    %2015 = vmatprep.subr.mxu0 0.0
    %2016 = vmatpush1.xpose.msra.mxu0 0.0
    %2017 = vmatprep.subr.mxu0 0.0
    %2018 = vmatpush1.xpose.msra.mxu0 0.0
    %2019 = vmatprep.subr.mxu0 0.0
    %2020 = vmatpush1.xpose.msra.mxu0 0.0
    %2021 = vmatprep.subr.mxu0 0.0
    %2022 = vmatpush1.xpose.msra.mxu0 0.0
    %2023 = vmatprep.subr.mxu0 0.0
    %2024 = vmatpush1.xpose.msra.mxu0 0.0
    %2025 = vmatprep.subr.mxu0 0.0
    %2026 = vmatpush1.xpose.msra.mxu0 0.0
    %2027 = vmatprep.subr.mxu0 0.0
    %2028 = vmatpush1.xpose.msra.mxu0 0.0
    %2029 = vmatprep.subr.mxu0 0.0
    %2030 = vmatpush1.xpose.msra.mxu0 0.0
    %2031 = vmatprep.subr.mxu0 0.0
    %2032 = vmatpush1.xpose.msra.mxu0 0.0
    %2033 = vmatprep.subr.mxu0 0.0
    %2034 = vmatpush1.xpose.msra.mxu0 0.0
    %2035 = vmatprep.subr.mxu0 0.0
    %2036 = vmatpush1.xpose.msra.mxu0 0.0
    %2037 = vmatprep.subr.mxu0 0.0
    %2038 = vmatpush1.xpose.msra.mxu0 0.0
    %2039 = vmatprep.subr.mxu0 0.0
    %2040 = vmatpush1.xpose.msra.mxu0 0.0
    %2041 = vmatprep.subr.mxu0 0.0
    %2042 = vmatpush1.xpose.msra.mxu0 0.0
    %2043 = vmatprep.subr.mxu0 0.0
    %2044 = vmatpush1.xpose.msra.mxu0 0.0
    %2045 = vmatprep.subr.mxu0 0.0
    %2046 = vmatpush1.xpose.msra.mxu0 0.0
    %2047 = vmatprep.subr.mxu0 0.0
    %2048 = vmatpush1.xpose.msra.mxu0 0.0
    %2049 = vmatprep.subr.mxu0 0.0
    %2050 = vmatpush1.xpose.msra.mxu0 0.0
    %2051 = vmatprep.subr.mxu0 0.0
    %2052 = vmatpush1.xpose.msra.mxu0 0.0
    %2053 = vmatprep.subr.mxu0 0.0
    %2054 = vmatpush1.xpose.msra.mxu0 0.0
    %2055 = vmatprep.mubr.f32.mxu0 0.0
    %2056 = vmatmul.mubr.f32.gmra.mrb[0].mxu0 %v1965
    %v2057 = vpop.f32.mrb[0].mxu0
    %v2058 = vadd.f32 0.0, %v2057
    %v2059 = vpop.f32.mrb[0].mxu0
    %2060 = vdwg.mxu0
    %v2061 = vrcp.pop %v1579
    %v2062 = vrcp.pop %v1582
    %v2063 = vrcp.pop %v1585
    %v2064 = vrcp.pop %v1588
    %v2065 = vrcp.pop %v1591
    %v2066 = vrcp.pop %v1594
    %v2067 = vrcp.pop %v1597
    %v2068 = vrcp.pop %v1600
    %v2069 = vrcp.pop %v1603
    %v2070 = vrcp.pop %v1606
    %v2071 = vrcp.pop %v1609
    %v2072 = vrcp.pop %v1612
    %v2073 = vrcp.pop %v1615
    %v2074 = vrcp.pop %v1618
    %v2075 = vrcp.pop %v1621
    %v2076 = vrcp.pop %v1624
    %v2077 = vrcp.pop %v1627
    %v2078 = vrcp.pop %v1630
    %v2079 = vrcp.pop %v1633
    %v2080 = vrcp.pop %v1636
    %v2081 = vrcp.pop %v1639
    %v2082 = vrcp.pop %v1642
    %v2083 = vrcp.pop %v1645
    %v2084 = vrcp.pop %v1648
    %v2085 = vrcp.pop %v1651
    %v2086 = vrcp.pop %v1654
    %v2087 = vrcp.pop %v1657
    %v2088 = vrcp.pop %v1660
    %v2089 = vrcp.pop %v1663
    %v2090 = vrcp.pop %v1666
    %v2091 = vrcp.pop %v1669
    %v2092 = vrcp.pop %v1672
    %v2125 = vlaneseq
    %v2126 = vand.u32 %v2125, 127
    %v2127 = vlaneseq
    %v2128 = vshrl.u32 %v2127, 7
    %v2129 = vsub.s32 %v2126, %v2128
    %v2130 = vrot.slane %v2061, %v2129
    %v2131 = vadd.s32 %v2126, 4294967288
    %v2132 = vlaneseq
    %v2133 = vshrl.u32 %v2132, 7
    %v2134 = vsub.s32 %v2131, %v2133
    %v2135 = vrot.slane %v2062, %v2134
    %vm2136 = vcmask 130112
    %v2137 = vsel %vm2136, %v2135, %v2130
    %v2138 = vadd.s32 %v2126, 4294967280
    %v2139 = vlaneseq
    %v2140 = vshrl.u32 %v2139, 7
    %v2141 = vsub.s32 %v2138, %v2140
    %v2142 = vrot.slane %v2063, %v2141
    %vm2143 = vcmask 195712
    %v2144 = vsel %vm2143, %v2142, %v2137
    %v2145 = vadd.s32 %v2126, 4294967272
    %v2146 = vlaneseq
    %v2147 = vshrl.u32 %v2146, 7
    %v2148 = vsub.s32 %v2145, %v2147
    %v2149 = vrot.slane %v2064, %v2148
    %vm2150 = vcmask 261312
    %v2151 = vsel %vm2150, %v2149, %v2144
    %v2152 = vadd.s32 %v2126, 4294967264
    %v2153 = vlaneseq
    %v2154 = vshrl.u32 %v2153, 7
    %v2155 = vsub.s32 %v2152, %v2154
    %v2156 = vrot.slane %v2065, %v2155
    %vm2157 = vcmask 326912
    %v2158 = vsel %vm2157, %v2156, %v2151
    %v2159 = vadd.s32 %v2126, 4294967256
    %v2160 = vlaneseq
    %v2161 = vshrl.u32 %v2160, 7
    %v2162 = vsub.s32 %v2159, %v2161
    %v2163 = vrot.slane %v2066, %v2162
    %vm2164 = vcmask 392512
    %v2165 = vsel %vm2164, %v2163, %v2158
    %v2166 = vadd.s32 %v2126, 4294967248
    %v2167 = vlaneseq
    %v2168 = vshrl.u32 %v2167, 7
    %v2169 = vsub.s32 %v2166, %v2168
    %v2170 = vrot.slane %v2067, %v2169
    %vm2171 = vcmask 458112
    %v2172 = vsel %vm2171, %v2170, %v2165
    %v2173 = vadd.s32 %v2126, 4294967240
    %v2174 = vlaneseq
    %v2175 = vshrl.u32 %v2174, 7
    %v2176 = vsub.s32 %v2173, %v2175
    %v2177 = vrot.slane %v2068, %v2176
    %vm2178 = vcmask 523712
    %v2179 = vsel %vm2178, %v2177, %v2172
    %v2180 = vlaneseq
    %v2181 = vshrl.u32 %v2180, 7
    %v2182 = vsub.s32 %v2126, %v2181
    %v2183 = vrot.slane %v2069, %v2182
    %v2184 = vlaneseq
    %v2185 = vshrl.u32 %v2184, 7
    %v2186 = vsub.s32 %v2131, %v2185
    %v2187 = vrot.slane %v2070, %v2186
    %v2188 = vsel %vm2136, %v2187, %v2183
    %v2189 = vlaneseq
    %v2190 = vshrl.u32 %v2189, 7
    %v2191 = vsub.s32 %v2138, %v2190
    %v2192 = vrot.slane %v2071, %v2191
    %v2193 = vsel %vm2143, %v2192, %v2188
    %v2194 = vlaneseq
    %v2195 = vshrl.u32 %v2194, 7
    %v2196 = vsub.s32 %v2145, %v2195
    %v2197 = vrot.slane %v2072, %v2196
    %v2198 = vsel %vm2150, %v2197, %v2193
    %v2199 = vlaneseq
    %v2200 = vshrl.u32 %v2199, 7
    %v2201 = vsub.s32 %v2152, %v2200
    %v2202 = vrot.slane %v2073, %v2201
    %v2203 = vsel %vm2157, %v2202, %v2198
    %v2204 = vlaneseq
    %v2205 = vshrl.u32 %v2204, 7
    %v2206 = vsub.s32 %v2159, %v2205
    %v2207 = vrot.slane %v2074, %v2206
    %v2208 = vsel %vm2164, %v2207, %v2203
    %v2209 = vlaneseq
    %v2210 = vshrl.u32 %v2209, 7
    %v2211 = vsub.s32 %v2166, %v2210
    %v2212 = vrot.slane %v2075, %v2211
    %v2213 = vsel %vm2171, %v2212, %v2208
    %v2214 = vlaneseq
    %v2215 = vshrl.u32 %v2214, 7
    %v2216 = vsub.s32 %v2173, %v2215
    %v2217 = vrot.slane %v2076, %v2216
    %v2218 = vsel %vm2178, %v2217, %v2213
    %v2219 = vlaneseq
    %v2220 = vshrl.u32 %v2219, 7
    %v2221 = vsub.s32 %v2126, %v2220
    %v2222 = vrot.slane %v2077, %v2221
    %v2223 = vlaneseq
    %v2224 = vshrl.u32 %v2223, 7
    %v2225 = vsub.s32 %v2131, %v2224
    %v2226 = vrot.slane %v2078, %v2225
    %v2227 = vsel %vm2136, %v2226, %v2222
    %v2228 = vlaneseq
    %v2229 = vshrl.u32 %v2228, 7
    %v2230 = vsub.s32 %v2138, %v2229
    %v2231 = vrot.slane %v2079, %v2230
    %v2232 = vsel %vm2143, %v2231, %v2227
    %v2233 = vlaneseq
    %v2234 = vshrl.u32 %v2233, 7
    %v2235 = vsub.s32 %v2145, %v2234
    %v2236 = vrot.slane %v2080, %v2235
    %v2237 = vsel %vm2150, %v2236, %v2232
    %v2238 = vlaneseq
    %v2239 = vshrl.u32 %v2238, 7
    %v2240 = vsub.s32 %v2152, %v2239
    %v2241 = vrot.slane %v2081, %v2240
    %v2242 = vsel %vm2157, %v2241, %v2237
    %v2243 = vlaneseq
    %v2244 = vshrl.u32 %v2243, 7
    %v2245 = vsub.s32 %v2159, %v2244
    %v2246 = vrot.slane %v2082, %v2245
    %v2247 = vsel %vm2164, %v2246, %v2242
    %v2248 = vlaneseq
    %v2249 = vshrl.u32 %v2248, 7
    %v2250 = vsub.s32 %v2166, %v2249
    %v2251 = vrot.slane %v2083, %v2250
    %v2252 = vsel %vm2171, %v2251, %v2247
    %v2253 = vlaneseq
    %v2254 = vshrl.u32 %v2253, 7
    %v2255 = vsub.s32 %v2173, %v2254
    %v2256 = vrot.slane %v2084, %v2255
    %v2257 = vsel %vm2178, %v2256, %v2252
    %v2258 = vlaneseq
    %v2259 = vshrl.u32 %v2258, 7
    %v2260 = vsub.s32 %v2126, %v2259
    %v2261 = vrot.slane %v2085, %v2260
    %v2262 = vlaneseq
    %v2263 = vshrl.u32 %v2262, 7
    %v2264 = vsub.s32 %v2131, %v2263
    %v2265 = vrot.slane %v2086, %v2264
    %v2266 = vsel %vm2136, %v2265, %v2261
    %v2267 = vlaneseq
    %v2268 = vshrl.u32 %v2267, 7
    %v2269 = vsub.s32 %v2138, %v2268
    %v2270 = vrot.slane %v2087, %v2269
    %v2271 = vsel %vm2143, %v2270, %v2266
    %v2272 = vlaneseq
    %v2273 = vshrl.u32 %v2272, 7
    %v2274 = vsub.s32 %v2145, %v2273
    %v2275 = vrot.slane %v2088, %v2274
    %v2276 = vsel %vm2150, %v2275, %v2271
    %v2277 = vlaneseq
    %v2278 = vshrl.u32 %v2277, 7
    %v2279 = vsub.s32 %v2152, %v2278
    %v2280 = vrot.slane %v2089, %v2279
    %v2281 = vsel %vm2157, %v2280, %v2276
    %v2282 = vlaneseq
    %v2283 = vshrl.u32 %v2282, 7
    %v2284 = vsub.s32 %v2159, %v2283
    %v2285 = vrot.slane %v2090, %v2284
    %v2286 = vsel %vm2164, %v2285, %v2281
    %v2287 = vlaneseq
    %v2288 = vshrl.u32 %v2287, 7
    %v2289 = vsub.s32 %v2166, %v2288
    %v2290 = vrot.slane %v2091, %v2289
    %v2291 = vsel %vm2171, %v2290, %v2286
    %v2292 = vlaneseq
    %v2293 = vshrl.u32 %v2292, 7
    %v2294 = vsub.s32 %v2173, %v2293
    %v2295 = vrot.slane %v2092, %v2294
    %v2296 = vsel %vm2178, %v2295, %v2291
    %vm2297 = vcmask 1042434
    %v2298 = vsel %vm2297, %v2179, %v2179
    %vm2299 = vcmask 1043459
    %v2300 = vsel %vm2299, %v2179, %v2298
    %vm2301 = vcmask 1044484
    %v2302 = vsel %vm2301, %v2179, %v2300
    %vm2303 = vcmask 1045509
    %v2304 = vsel %vm2303, %v2179, %v2302
    %vm2305 = vcmask 1046534
    %v2306 = vsel %vm2305, %v2179, %v2304
    %vm2307 = vcmask 1047559
    %v2308 = vsel %vm2307, %v2179, %v2306
    %v2309 = vsel %vm2297, %v2218, %v2218
    %v2310 = vsel %vm2299, %v2218, %v2309
    %v2311 = vsel %vm2301, %v2218, %v2310
    %v2312 = vsel %vm2303, %v2218, %v2311
    %v2313 = vsel %vm2305, %v2218, %v2312
    %v2314 = vsel %vm2307, %v2218, %v2313
    %v2315 = vsel %vm2297, %v2257, %v2257
    %v2316 = vsel %vm2299, %v2257, %v2315
    %v2317 = vsel %vm2301, %v2257, %v2316
    %v2318 = vsel %vm2303, %v2257, %v2317
    %v2319 = vsel %vm2305, %v2257, %v2318
    %v2320 = vsel %vm2307, %v2257, %v2319
    %v2321 = vsel %vm2297, %v2296, %v2296
    %v2322 = vsel %vm2299, %v2296, %v2321
    %v2323 = vsel %vm2301, %v2296, %v2322
    %v2324 = vsel %vm2303, %v2296, %v2323
    %v2325 = vsel %vm2305, %v2296, %v2324
    %v2326 = vsel %vm2307, %v2296, %v2325
    %v2331 = vmul.f32 %v1767, %v2308
    %v2332 = vmul.f32 %v1864, %v2314
    %v2333 = vmul.f32 %v1961, %v2320
    %v2334 = vmul.f32 %v2058, %v2326
    %2336 = vset.pattern.permute.xlu0 0
    %2337 = vperm.xlu0 %2336, %v55
    %v2338 = vpop.permute.xlu0 %2337
    %2341 = vset.pattern.permute.xlu0 0
    %2342 = vperm.xlu0 %2341, %v56
    %v2343 = vpop.permute.xlu0 %2342
    %2346 = vset.pattern.permute.xlu0 0
    %2347 = vperm.xlu0 %2346, %v57
    %v2348 = vpop.permute.xlu0 %2347
    %2351 = vset.pattern.permute.xlu0 0
    %2352 = vperm.xlu0 %2351, %v58
    %v2353 = vpop.permute.xlu0 %2352
    %v2356 = vsel %vm577, %v51, 0
    %v2359 = vsel %vm577, %v52, 0
    %v2362 = vsel %vm577, %v53, 0
    %v2365 = vsel %vm577, %v54, 0
    %2367 = vmatprep.subr.mxu0 0.0
    %2368 = vmatpush1.msra.mxu0 %v2331
    %2369 = vmatprep.subr.mxu0 0.0
    %2370 = vmatpush1.msra.mxu0 %v2332
    %2371 = vmatprep.subr.mxu0 0.0
    %2372 = vmatpush1.msra.mxu0 %v2333
    %2373 = vmatprep.subr.mxu0 0.0
    %2374 = vmatpush1.msra.mxu0 %v2334
    %2375 = vmatprep.subr.mxu0 0.0
    %2376 = vmatpush1.msra.mxu0 0.0
    %2377 = vmatprep.subr.mxu0 0.0
    %2378 = vmatpush1.msra.mxu0 0.0
    %2379 = vmatprep.subr.mxu0 0.0
    %2380 = vmatpush1.msra.mxu0 0.0
    %2381 = vmatprep.subr.mxu0 0.0
    %2382 = vmatpush1.msra.mxu0 0.0
    %2383 = vmatprep.subr.mxu0 0.0
    %2384 = vmatpush1.msra.mxu0 0.0
    %2385 = vmatprep.subr.mxu0 0.0
    %2386 = vmatpush1.msra.mxu0 0.0
    %2387 = vmatprep.subr.mxu0 0.0
    %2388 = vmatpush1.msra.mxu0 0.0
    %2389 = vmatprep.subr.mxu0 0.0
    %2390 = vmatpush1.msra.mxu0 0.0
    %2391 = vmatprep.subr.mxu0 0.0
    %2392 = vmatpush1.msra.mxu0 0.0
    %2393 = vmatprep.subr.mxu0 0.0
    %2394 = vmatpush1.msra.mxu0 0.0
    %2395 = vmatprep.subr.mxu0 0.0
    %2396 = vmatpush1.msra.mxu0 0.0
    %2397 = vmatprep.subr.mxu0 0.0
    %2398 = vmatpush1.msra.mxu0 0.0
    %2399 = vmatprep.subr.mxu0 0.0
    %2400 = vmatpush1.msra.mxu0 0.0
    %2401 = vmatprep.subr.mxu0 0.0
    %2402 = vmatpush1.msra.mxu0 0.0
    %2403 = vmatprep.subr.mxu0 0.0
    %2404 = vmatpush1.msra.mxu0 0.0
    %2405 = vmatprep.subr.mxu0 0.0
    %2406 = vmatpush1.msra.mxu0 0.0
    %2407 = vmatprep.subr.mxu0 0.0
    %2408 = vmatpush1.msra.mxu0 0.0
    %2409 = vmatprep.subr.mxu0 0.0
    %2410 = vmatpush1.msra.mxu0 0.0
    %2411 = vmatprep.subr.mxu0 0.0
    %2412 = vmatpush1.msra.mxu0 0.0
    %2413 = vmatprep.subr.mxu0 0.0
    %2414 = vmatpush1.msra.mxu0 0.0
    %2415 = vmatprep.subr.mxu0 0.0
    %2416 = vmatpush1.msra.mxu0 0.0
    %2417 = vmatprep.subr.mxu0 0.0
    %2418 = vmatpush1.msra.mxu0 0.0
    %2419 = vmatprep.subr.mxu0 0.0
    %2420 = vmatpush1.msra.mxu0 0.0
    %2421 = vmatprep.subr.mxu0 0.0
    %2422 = vmatpush1.msra.mxu0 0.0
    %2423 = vmatprep.subr.mxu0 0.0
    %2424 = vmatpush1.msra.mxu0 0.0
    %2425 = vmatprep.subr.mxu0 0.0
    %2426 = vmatpush1.msra.mxu0 0.0
    %2427 = vmatprep.subr.mxu0 0.0
    %2428 = vmatpush1.msra.mxu0 0.0
    %2429 = vmatprep.subr.mxu0 0.0
    %2430 = vmatpush1.msra.mxu0 0.0
    %2431 = vmatprep.mubr.f32.mxu0 0.0
    %2432 = vmatmul.mubr.f32.gmra.mrb[0].mxu0 %v2356
    %v2433 = vpop.f32.mrb[0].mxu0
    %v2434 = vadd.f32 %v2338, %v2433
    %v2435 = vpop.f32.mrb[0].mxu0
    %2436 = vmatprep.mubr.f32.mxu0 0.0
    %2437 = vmatmul.mubr.f32.gmra.mrb[0].mxu0 %v2359
    %v2438 = vpop.f32.mrb[0].mxu0
    %v2439 = vadd.f32 %v2343, %v2438
    %v2440 = vpop.f32.mrb[0].mxu0
    %2441 = vmatprep.mubr.f32.mxu0 0.0
    %2442 = vmatmul.mubr.f32.gmra.mrb[0].mxu0 %v2362
    %v2443 = vpop.f32.mrb[0].mxu0
    %v2444 = vadd.f32 %v2348, %v2443
    %v2445 = vpop.f32.mrb[0].mxu0
    %2446 = vmatprep.mubr.f32.mxu0 0.0
    %2447 = vmatmul.mubr.f32.gmra.mrb[0].mxu0 %v2365
    %v2448 = vpop.f32.mrb[0].mxu0
    %v2449 = vadd.f32 %v2353, %v2448
    %v2450 = vpop.f32.mrb[0].mxu0
    %2451 = vdwg.mxu0
    %v2452 = vadd.f32 %v67, %v2434
    %v2453 = vadd.f32 %v68, %v2439
    %v2454 = vadd.f32 %v69, %v2444
    %v2455 = vadd.f32 %v70, %v2449
    %2456 = vst.msk [vmem:[#allocation2] sm:$0xff] %vm1384, %v2452
    %2457 = vst.msk [vmem:[#allocation2 + $0x8] sm:$0xff] %vm1384, %v2453
    %2458 = vst.msk [vmem:[#allocation2 + $0x10] sm:$0xff] %vm1384, %v2454
    %2459 = vst.msk [vmem:[#allocation2 + $0x18] sm:$0xff] %vm1384, %v2455
    %s2460 = scalar_lea.vmem %s0, 32
    %v2461 = vld [vmem:[%s2460] sm:$0xff]
    %v2462 = vld [vmem:[%s2460 + $0x8] sm:$0xff]
    %v2463 = vld [vmem:[%s2460 + $0x10] sm:$0xff]
    %v2464 = vld [vmem:[%s2460 + $0x18] sm:$0xff]
    %v2469 = vcombine.high %v2461, %v2461
    %v2470 = vcombine.high %v2462, %v2462
    %v2471 = vcombine.high %v2463, %v2463
    %v2472 = vcombine.high %v2464, %v2464
    %v2477 = vsel %vm83, %v2461, 0.0
    %2478 = vadd.xlane.f32.xlu0 %v2477
    %v2479 = vpop.xlane.xlu0 %2478
    %v2480 = vsel %vm83, %v2469, 0.0
    %2481 = vadd.xlane.f32.xlu0 %v2480
    %v2482 = vpop.xlane.xlu0 %2481
    %v2483 = vsel %vm83, %v2462, 0.0
    %2484 = vadd.xlane.f32.xlu0 %v2483
    %v2485 = vpop.xlane.xlu0 %2484
    %v2486 = vsel %vm83, %v2470, 0.0
    %2487 = vadd.xlane.f32.xlu0 %v2486
    %v2488 = vpop.xlane.xlu0 %2487
    %v2489 = vsel %vm83, %v2463, 0.0
    %2490 = vadd.xlane.f32.xlu0 %v2489
    %v2491 = vpop.xlane.xlu0 %2490
    %v2492 = vsel %vm83, %v2471, 0.0
    %2493 = vadd.xlane.f32.xlu0 %v2492
    %v2494 = vpop.xlane.xlu0 %2493
    %v2495 = vsel %vm83, %v2464, 0.0
    %2496 = vadd.xlane.f32.xlu0 %v2495
    %v2497 = vpop.xlane.xlu0 %2496
    %v2498 = vsel %vm83, %v2472, 0.0
    %2499 = vadd.xlane.f32.xlu0 %v2498
    %v2500 = vpop.xlane.xlu0 %2499
    %v2501 = vsel %vm108, %v2479, 0.0
    %v2502 = vrot.slane %v2501, 4
    %v2503 = vadd.f32 %v2501, %v2502
    %v2504 = vrot.slane %v2503, 2
    %v2505 = vadd.f32 %v2503, %v2504
    %v2506 = vrot.slane %v2505, 1
    %v2507 = vadd.f32 %v2505, %v2506
    %v2508 = vsel %vm108, %v2482, 0.0
    %v2509 = vrot.slane %v2508, 4
    %v2510 = vadd.f32 %v2508, %v2509
    %v2511 = vrot.slane %v2510, 2
    %v2512 = vadd.f32 %v2510, %v2511
    %v2513 = vrot.slane %v2512, 1
    %v2514 = vadd.f32 %v2512, %v2513
    %v2515 = vsel %vm108, %v2485, 0.0
    %v2516 = vrot.slane %v2515, 4
    %v2517 = vadd.f32 %v2515, %v2516
    %v2518 = vrot.slane %v2517, 2
    %v2519 = vadd.f32 %v2517, %v2518
    %v2520 = vrot.slane %v2519, 1
    %v2521 = vadd.f32 %v2519, %v2520
    %v2522 = vsel %vm108, %v2488, 0.0
    %v2523 = vrot.slane %v2522, 4
    %v2524 = vadd.f32 %v2522, %v2523
    %v2525 = vrot.slane %v2524, 2
    %v2526 = vadd.f32 %v2524, %v2525
    %v2527 = vrot.slane %v2526, 1
    %v2528 = vadd.f32 %v2526, %v2527
    %v2529 = vsel %vm108, %v2491, 0.0
    %v2530 = vrot.slane %v2529, 4
    %v2531 = vadd.f32 %v2529, %v2530
    %v2532 = vrot.slane %v2531, 2
    %v2533 = vadd.f32 %v2531, %v2532
    %v2534 = vrot.slane %v2533, 1
    %v2535 = vadd.f32 %v2533, %v2534
    %v2536 = vsel %vm108, %v2494, 0.0
    %v2537 = vrot.slane %v2536, 4
    %v2538 = vadd.f32 %v2536, %v2537
    %v2539 = vrot.slane %v2538, 2
    %v2540 = vadd.f32 %v2538, %v2539
    %v2541 = vrot.slane %v2540, 1
    %v2542 = vadd.f32 %v2540, %v2541
    %v2543 = vsel %vm108, %v2497, 0.0
    %v2544 = vrot.slane %v2543, 4
    %v2545 = vadd.f32 %v2543, %v2544
    %v2546 = vrot.slane %v2545, 2
    %v2547 = vadd.f32 %v2545, %v2546
    %v2548 = vrot.slane %v2547, 1
    %v2549 = vadd.f32 %v2547, %v2548
    %v2550 = vsel %vm108, %v2500, 0.0
    %v2551 = vrot.slane %v2550, 4
    %v2552 = vadd.f32 %v2550, %v2551
    %v2553 = vrot.slane %v2552, 2
    %v2554 = vadd.f32 %v2552, %v2553
    %v2555 = vrot.slane %v2554, 1
    %v2556 = vadd.f32 %v2554, %v2555
    %v2557 = vmul.f32 %v2461, %v2461
    %v2558 = vmul.f32 %v2469, %v2469
    %v2559 = vmul.f32 %v2462, %v2462
    %v2560 = vmul.f32 %v2470, %v2470
    %v2561 = vmul.f32 %v2463, %v2463
    %v2562 = vmul.f32 %v2471, %v2471
    %v2563 = vmul.f32 %v2464, %v2464
    %v2564 = vmul.f32 %v2472, %v2472
    %v2565 = vsel %vm83, %v2557, 0.0
    %2566 = vadd.xlane.f32.xlu0 %v2565
    %v2567 = vpop.xlane.xlu0 %2566
    %v2568 = vsel %vm83, %v2558, 0.0
    %2569 = vadd.xlane.f32.xlu0 %v2568
    %v2570 = vpop.xlane.xlu0 %2569
    %v2571 = vsel %vm83, %v2559, 0.0
    %2572 = vadd.xlane.f32.xlu0 %v2571
    %v2573 = vpop.xlane.xlu0 %2572
    %v2574 = vsel %vm83, %v2560, 0.0
    %2575 = vadd.xlane.f32.xlu0 %v2574
    %v2576 = vpop.xlane.xlu0 %2575
    %v2577 = vsel %vm83, %v2561, 0.0
    %2578 = vadd.xlane.f32.xlu0 %v2577
    %v2579 = vpop.xlane.xlu0 %2578
    %v2580 = vsel %vm83, %v2562, 0.0
    %2581 = vadd.xlane.f32.xlu0 %v2580
    %v2582 = vpop.xlane.xlu0 %2581
    %v2583 = vsel %vm83, %v2563, 0.0
    %2584 = vadd.xlane.f32.xlu0 %v2583
    %v2585 = vpop.xlane.xlu0 %2584
    %v2586 = vsel %vm83, %v2564, 0.0
    %2587 = vadd.xlane.f32.xlu0 %v2586
    %v2588 = vpop.xlane.xlu0 %2587
    %v2589 = vsel %vm108, %v2567, 0.0
    %v2590 = vrot.slane %v2589, 4
    %v2591 = vadd.f32 %v2589, %v2590
    %v2592 = vrot.slane %v2591, 2
    %v2593 = vadd.f32 %v2591, %v2592
    %v2594 = vrot.slane %v2593, 1
    %v2595 = vadd.f32 %v2593, %v2594
    %v2596 = vsel %vm108, %v2570, 0.0
    %v2597 = vrot.slane %v2596, 4
    %v2598 = vadd.f32 %v2596, %v2597
    %v2599 = vrot.slane %v2598, 2
    %v2600 = vadd.f32 %v2598, %v2599
    %v2601 = vrot.slane %v2600, 1
    %v2602 = vadd.f32 %v2600, %v2601
    %v2603 = vsel %vm108, %v2573, 0.0
    %v2604 = vrot.slane %v2603, 4
    %v2605 = vadd.f32 %v2603, %v2604
    %v2606 = vrot.slane %v2605, 2
    %v2607 = vadd.f32 %v2605, %v2606
    %v2608 = vrot.slane %v2607, 1
    %v2609 = vadd.f32 %v2607, %v2608
    %v2610 = vsel %vm108, %v2576, 0.0
    %v2611 = vrot.slane %v2610, 4
    %v2612 = vadd.f32 %v2610, %v2611
    %v2613 = vrot.slane %v2612, 2
    %v2614 = vadd.f32 %v2612, %v2613
    %v2615 = vrot.slane %v2614, 1
    %v2616 = vadd.f32 %v2614, %v2615
    %v2617 = vsel %vm108, %v2579, 0.0
    %v2618 = vrot.slane %v2617, 4
    %v2619 = vadd.f32 %v2617, %v2618
    %v2620 = vrot.slane %v2619, 2
    %v2621 = vadd.f32 %v2619, %v2620
    %v2622 = vrot.slane %v2621, 1
    %v2623 = vadd.f32 %v2621, %v2622
    %v2624 = vsel %vm108, %v2582, 0.0
    %v2625 = vrot.slane %v2624, 4
    %v2626 = vadd.f32 %v2624, %v2625
    %v2627 = vrot.slane %v2626, 2
    %v2628 = vadd.f32 %v2626, %v2627
    %v2629 = vrot.slane %v2628, 1
    %v2630 = vadd.f32 %v2628, %v2629
    %v2631 = vsel %vm108, %v2585, 0.0
    %v2632 = vrot.slane %v2631, 4
    %v2633 = vadd.f32 %v2631, %v2632
    %v2634 = vrot.slane %v2633, 2
    %v2635 = vadd.f32 %v2633, %v2634
    %v2636 = vrot.slane %v2635, 1
    %v2637 = vadd.f32 %v2635, %v2636
    %v2638 = vsel %vm108, %v2588, 0.0
    %v2639 = vrot.slane %v2638, 4
    %v2640 = vadd.f32 %v2638, %v2639
    %v2641 = vrot.slane %v2640, 2
    %v2642 = vadd.f32 %v2640, %v2641
    %v2643 = vrot.slane %v2642, 1
    %v2644 = vadd.f32 %v2642, %v2643
    %v2645 = vmul.f32 %v2507, 0.00390625
    %v2646 = vmul.f32 %v2514, 0.00390625
    %v2647 = vmul.f32 %v2521, 0.00390625
    %v2648 = vmul.f32 %v2528, 0.00390625
    %v2649 = vmul.f32 %v2535, 0.00390625
    %v2650 = vmul.f32 %v2542, 0.00390625
    %v2651 = vmul.f32 %v2549, 0.00390625
    %v2652 = vmul.f32 %v2556, 0.00390625
    %v2653 = vmul.f32 %v2595, 0.00390625
    %v2654 = vmul.f32 %v2602, 0.00390625
    %v2655 = vmul.f32 %v2609, 0.00390625
    %v2656 = vmul.f32 %v2616, 0.00390625
    %v2657 = vmul.f32 %v2623, 0.00390625
    %v2658 = vmul.f32 %v2630, 0.00390625
    %v2659 = vmul.f32 %v2637, 0.00390625
    %v2660 = vmul.f32 %v2644, 0.00390625
    %v2661 = vmul.f32 %v2645, %v2645
    %v2662 = vmul.f32 %v2646, %v2646
    %v2663 = vmul.f32 %v2647, %v2647
    %v2664 = vmul.f32 %v2648, %v2648
    %v2665 = vmul.f32 %v2649, %v2649
    %v2666 = vmul.f32 %v2650, %v2650
    %v2667 = vmul.f32 %v2651, %v2651
    %v2668 = vmul.f32 %v2652, %v2652
    %v2669 = vsub.f32 %v2653, %v2661
    %v2670 = vsub.f32 %v2654, %v2662
    %v2671 = vsub.f32 %v2655, %v2663
    %v2672 = vsub.f32 %v2656, %v2664
    %v2673 = vsub.f32 %v2657, %v2665
    %v2674 = vsub.f32 %v2658, %v2666
    %v2675 = vsub.f32 %v2659, %v2667
    %v2676 = vsub.f32 %v2660, %v2668
    %v2677 = vmax.f32 %v2669, 0.0
    %v2678 = vmax.f32 %v2670, 0.0
    %v2679 = vmax.f32 %v2671, 0.0
    %v2680 = vmax.f32 %v2672, 0.0
    %v2681 = vmax.f32 %v2673, 0.0
    %v2682 = vmax.f32 %v2674, 0.0
    %v2683 = vmax.f32 %v2675, 0.0
    %v2684 = vmax.f32 %v2676, 0.0
    %v2685 = vsub.f32 %v2461, %v2645
    %v2686 = vsub.f32 %v2469, %v2646
    %v2687 = vsub.f32 %v2462, %v2647
    %v2688 = vsub.f32 %v2470, %v2648
    %v2689 = vsub.f32 %v2463, %v2649
    %v2690 = vsub.f32 %v2471, %v2650
    %v2691 = vsub.f32 %v2464, %v2651
    %v2692 = vsub.f32 %v2472, %v2652
    %v2693 = vadd.f32 %v2677, 1e-05
    %v2694 = vadd.f32 %v2678, 1e-05
    %v2695 = vadd.f32 %v2679, 1e-05
    %v2696 = vadd.f32 %v2680, 1e-05
    %v2697 = vadd.f32 %v2681, 1e-05
    %v2698 = vadd.f32 %v2682, 1e-05
    %v2699 = vadd.f32 %v2683, 1e-05
    %v2700 = vadd.f32 %v2684, 1e-05
    %v2701 = vrsqrt.pop %v2693
    %v2702 = vrsqrt.pop %v2694
    %v2703 = vrsqrt.pop %v2695
    %v2704 = vrsqrt.pop %v2696
    %v2705 = vrsqrt.pop %v2697
    %v2706 = vrsqrt.pop %v2698
    %v2707 = vrsqrt.pop %v2699
    %v2708 = vrsqrt.pop %v2700
    %v2709 = vmul.f32 %v2685, %v2701
    %v2710 = vmul.f32 %v2686, %v2702
    %v2711 = vmul.f32 %v2687, %v2703
    %v2712 = vmul.f32 %v2688, %v2704
    %v2713 = vmul.f32 %v2689, %v2705
    %v2714 = vmul.f32 %v2690, %v2706
    %v2715 = vmul.f32 %v2691, %v2707
    %v2716 = vmul.f32 %v2692, %v2708
    %v2717 = vmul.f32 %v2709, %v347
    %v2718 = vmul.f32 %v2710, %v354
    %v2719 = vmul.f32 %v2711, %v361
    %v2720 = vmul.f32 %v2712, %v368
    %v2721 = vmul.f32 %v2713, %v375
    %v2722 = vmul.f32 %v2714, %v382
    %v2723 = vmul.f32 %v2715, %v389
    %v2724 = vmul.f32 %v2716, %v396
    %v2725 = vadd.f32 %v2717, %v435
    %v2726 = vadd.f32 %v2718, %v442
    %v2727 = vadd.f32 %v2719, %v449
    %v2728 = vadd.f32 %v2720, %v456
    %v2729 = vadd.f32 %v2721, %v463
    %v2730 = vadd.f32 %v2722, %v470
    %v2731 = vadd.f32 %v2723, %v477
    %v2732 = vadd.f32 %v2724, %v484
    %v2741 = vcombine.low %v2725, %v2726
    %v2742 = vcombine.low %v2727, %v2728
    %v2743 = vcombine.low %v2729, %v2730
    %v2744 = vcombine.low %v2731, %v2732
    %2749 = vmatprep.subr.mxu0 0.0
    %2750 = vmatpush1.msra.mxu0 %v2741
    %2751 = vmatprep.subr.mxu0 0.0
    %2752 = vmatpush1.msra.mxu0 %v2742
    %2753 = vmatprep.subr.mxu0 0.0
    %2754 = vmatpush1.msra.mxu0 %v2743
    %2755 = vmatprep.subr.mxu0 0.0
    %2756 = vmatpush1.msra.mxu0 %v2744
    %2757 = vmatprep.subr.mxu0 0.0
    %2758 = vmatpush1.msra.mxu0 0.0
    %2759 = vmatprep.subr.mxu0 0.0
    %2760 = vmatpush1.msra.mxu0 0.0
    %2761 = vmatprep.subr.mxu0 0.0
    %2762 = vmatpush1.msra.mxu0 0.0
    %2763 = vmatprep.subr.mxu0 0.0
    %2764 = vmatpush1.msra.mxu0 0.0
    %2765 = vmatprep.subr.mxu0 0.0
    %2766 = vmatpush1.msra.mxu0 0.0
    %2767 = vmatprep.subr.mxu0 0.0
    %2768 = vmatpush1.msra.mxu0 0.0
    %2769 = vmatprep.subr.mxu0 0.0
    %2770 = vmatpush1.msra.mxu0 0.0
    %2771 = vmatprep.subr.mxu0 0.0
    %2772 = vmatpush1.msra.mxu0 0.0
    %2773 = vmatprep.subr.mxu0 0.0
    %2774 = vmatpush1.msra.mxu0 0.0
    %2775 = vmatprep.subr.mxu0 0.0
    %2776 = vmatpush1.msra.mxu0 0.0
    %2777 = vmatprep.subr.mxu0 0.0
    %2778 = vmatpush1.msra.mxu0 0.0
    %2779 = vmatprep.subr.mxu0 0.0
    %2780 = vmatpush1.msra.mxu0 0.0
    %2781 = vmatprep.subr.mxu0 0.0
    %2782 = vmatpush1.msra.mxu0 0.0
    %2783 = vmatprep.subr.mxu0 0.0
    %2784 = vmatpush1.msra.mxu0 0.0
    %2785 = vmatprep.subr.mxu0 0.0
    %2786 = vmatpush1.msra.mxu0 0.0
    %2787 = vmatprep.subr.mxu0 0.0
    %2788 = vmatpush1.msra.mxu0 0.0
    %2789 = vmatprep.subr.mxu0 0.0
    %2790 = vmatpush1.msra.mxu0 0.0
    %2791 = vmatprep.subr.mxu0 0.0
    %2792 = vmatpush1.msra.mxu0 0.0
    %2793 = vmatprep.subr.mxu0 0.0
    %2794 = vmatpush1.msra.mxu0 0.0
    %2795 = vmatprep.subr.mxu0 0.0
    %2796 = vmatpush1.msra.mxu0 0.0
    %2797 = vmatprep.subr.mxu0 0.0
    %2798 = vmatpush1.msra.mxu0 0.0
    %2799 = vmatprep.subr.mxu0 0.0
    %2800 = vmatpush1.msra.mxu0 0.0
    %2801 = vmatprep.subr.mxu0 0.0
    %2802 = vmatpush1.msra.mxu0 0.0
    %2803 = vmatprep.subr.mxu0 0.0
    %2804 = vmatpush1.msra.mxu0 0.0
    %2805 = vmatprep.subr.mxu0 0.0
    %2806 = vmatpush1.msra.mxu0 0.0
    %2807 = vmatprep.subr.mxu0 0.0
    %2808 = vmatpush1.msra.mxu0 0.0
    %2809 = vmatprep.subr.mxu0 0.0
    %2810 = vmatpush1.msra.mxu0 0.0
    %2811 = vmatprep.subr.mxu0 0.0
    %2812 = vmatpush1.msra.mxu0 0.0
    %2813 = vmatprep.mubr.f32.mxu0 0.0
    %2814 = vmatmul.mubr.f32.gmra.mrb[0].mxu0 %v579
    %v2815 = vpop.f32.mrb[0].mxu0
    %v2816 = vadd.f32 %v504, %v2815
    %v2817 = vpop.f32.mrb[0].mxu0
    %2818 = vmatprep.mubr.f32.mxu0 0.0
    %2819 = vmatmul.mubr.f32.gmra.mrb[0].mxu0 %v582
    %v2820 = vpop.f32.mrb[0].mxu0
    %v2821 = vadd.f32 %v509, %v2820
    %v2822 = vpop.f32.mrb[0].mxu0
    %2823 = vmatprep.mubr.f32.mxu0 0.0
    %2824 = vmatmul.mubr.f32.gmra.mrb[0].mxu0 %v585
    %v2825 = vpop.f32.mrb[0].mxu0
    %v2826 = vadd.f32 %v514, %v2825
    %v2827 = vpop.f32.mrb[0].mxu0
    %2828 = vmatprep.mubr.f32.mxu0 0.0
    %2829 = vmatmul.mubr.f32.gmra.mrb[0].mxu0 %v588
    %v2830 = vpop.f32.mrb[0].mxu0
    %v2831 = vadd.f32 %v519, %v2830
    %v2832 = vpop.f32.mrb[0].mxu0
    %2833 = vmatprep.mubr.f32.mxu0 0.0
    %2834 = vmatmul.mubr.f32.gmra.mrb[0].mxu0 %v591
    %v2835 = vpop.f32.mrb[0].mxu0
    %v2836 = vadd.f32 %v524, %v2835
    %v2837 = vpop.f32.mrb[0].mxu0
    %2838 = vmatprep.mubr.f32.mxu0 0.0
    %2839 = vmatmul.mubr.f32.gmra.mrb[0].mxu0 %v594
    %v2840 = vpop.f32.mrb[0].mxu0
    %v2841 = vadd.f32 %v529, %v2840
    %v2842 = vpop.f32.mrb[0].mxu0
    %2843 = vmatprep.mubr.f32.mxu0 0.0
    %2844 = vmatmul.mubr.f32.gmra.mrb[0].mxu0 %v597
    %v2845 = vpop.f32.mrb[0].mxu0
    %v2846 = vadd.f32 %v534, %v2845
    %v2847 = vpop.f32.mrb[0].mxu0
    %2848 = vmatprep.mubr.f32.mxu0 0.0
    %2849 = vmatmul.mubr.f32.gmra.mrb[0].mxu0 %v600
    %v2850 = vpop.f32.mrb[0].mxu0
    %v2851 = vadd.f32 %v539, %v2850
    %v2852 = vpop.f32.mrb[0].mxu0
    %2853 = vmatprep.mubr.f32.mxu0 0.0
    %2854 = vmatmul.mubr.f32.gmra.mrb[0].mxu0 %v603
    %v2855 = vpop.f32.mrb[0].mxu0
    %v2856 = vadd.f32 %v544, %v2855
    %v2857 = vpop.f32.mrb[0].mxu0
    %2858 = vmatprep.mubr.f32.mxu0 0.0
    %2859 = vmatmul.mubr.f32.gmra.mrb[0].mxu0 %v606
    %v2860 = vpop.f32.mrb[0].mxu0
    %v2861 = vadd.f32 %v549, %v2860
    %v2862 = vpop.f32.mrb[0].mxu0
    %2863 = vmatprep.mubr.f32.mxu0 0.0
    %2864 = vmatmul.mubr.f32.gmra.mrb[0].mxu0 %v609
    %v2865 = vpop.f32.mrb[0].mxu0
    %v2866 = vadd.f32 %v554, %v2865
    %v2867 = vpop.f32.mrb[0].mxu0
    %2868 = vmatprep.mubr.f32.mxu0 0.0
    %2869 = vmatmul.mubr.f32.gmra.mrb[0].mxu0 %v612
    %v2870 = vpop.f32.mrb[0].mxu0
    %v2871 = vadd.f32 %v559, %v2870
    %v2872 = vpop.f32.mrb[0].mxu0
    %2873 = vdwg.mxu0
    %2874 = vxpose.xlu0.b32.start [1/16] %v2816, 128
    %2875 = vxpose.xlu0.b32.cont [2/16] 0.0, 128
    %2876 = vxpose.xlu0.b32.cont [3/16] 0.0, 128
    %2877 = vxpose.xlu0.b32.cont [4/16] 0.0, 128
    %2878 = vxpose.xlu0.b32.cont [5/16] 0.0, 128
    %2879 = vxpose.xlu0.b32.cont [6/16] 0.0, 128
    %2880 = vxpose.xlu0.b32.cont [7/16] 0.0, 128
    %2881 = vxpose.xlu0.b32.cont [8/16] 0.0, 128
    %2882 = vxpose.xlu0.b32.cont [9/16] 0.0, 128
    %2883 = vxpose.xlu0.b32.cont [10/16] 0.0, 128
    %2884 = vxpose.xlu0.b32.cont [11/16] 0.0, 128
    %2885 = vxpose.xlu0.b32.cont [12/16] 0.0, 128
    %2886 = vxpose.xlu0.b32.cont [13/16] 0.0, 128
    %2887 = vxpose.xlu0.b32.cont [14/16] 0.0, 128
    %2888 = vxpose.xlu0.b32.cont [15/16] 0.0, 128
    %2889 = vxpose.xlu0.b32.end [16/16] 0.0, 128
    %v2890 = vpop.trf.xlu0
    %v2891 = vpop.trf.xlu0
    %v2892 = vpop.trf.xlu0
    %v2893 = vpop.trf.xlu0
    %v2894 = vpop.trf.xlu0
    %v2895 = vpop.trf.xlu0
    %v2896 = vpop.trf.xlu0
    %v2897 = vpop.trf.xlu0
    %v2898 = vpop.trf.xlu0
    %v2899 = vpop.trf.xlu0
    %v2900 = vpop.trf.xlu0
    %v2901 = vpop.trf.xlu0
    %v2902 = vpop.trf.xlu0
    %v2903 = vpop.trf.xlu0
    %v2904 = vpop.trf.xlu0
    %v2905 = vpop.trf.xlu0
    %2906 = vxpose.xlu0.b32.start [1/16] %v2821, 128
    %2907 = vxpose.xlu0.b32.cont [2/16] 0.0, 128
    %2908 = vxpose.xlu0.b32.cont [3/16] 0.0, 128
    %2909 = vxpose.xlu0.b32.cont [4/16] 0.0, 128
    %2910 = vxpose.xlu0.b32.cont [5/16] 0.0, 128
    %2911 = vxpose.xlu0.b32.cont [6/16] 0.0, 128
    %2912 = vxpose.xlu0.b32.cont [7/16] 0.0, 128
    %2913 = vxpose.xlu0.b32.cont [8/16] 0.0, 128
    %2914 = vxpose.xlu0.b32.cont [9/16] 0.0, 128
    %2915 = vxpose.xlu0.b32.cont [10/16] 0.0, 128
    %2916 = vxpose.xlu0.b32.cont [11/16] 0.0, 128
    %2917 = vxpose.xlu0.b32.cont [12/16] 0.0, 128
    %2918 = vxpose.xlu0.b32.cont [13/16] 0.0, 128
    %2919 = vxpose.xlu0.b32.cont [14/16] 0.0, 128
    %2920 = vxpose.xlu0.b32.cont [15/16] 0.0, 128
    %2921 = vxpose.xlu0.b32.end [16/16] 0.0, 128
    %v2922 = vpop.trf.xlu0
    %v2923 = vpop.trf.xlu0
    %v2924 = vpop.trf.xlu0
    %v2925 = vpop.trf.xlu0
    %v2926 = vpop.trf.xlu0
    %v2927 = vpop.trf.xlu0
    %v2928 = vpop.trf.xlu0
    %v2929 = vpop.trf.xlu0
    %v2930 = vpop.trf.xlu0
    %v2931 = vpop.trf.xlu0
    %v2932 = vpop.trf.xlu0
    %v2933 = vpop.trf.xlu0
    %v2934 = vpop.trf.xlu0
    %v2935 = vpop.trf.xlu0
    %v2936 = vpop.trf.xlu0
    %v2937 = vpop.trf.xlu0
    %2938 = vxpose.xlu0.b32.start [1/16] %v2826, 128
    %2939 = vxpose.xlu0.b32.cont [2/16] 0.0, 128
    %2940 = vxpose.xlu0.b32.cont [3/16] 0.0, 128
    %2941 = vxpose.xlu0.b32.cont [4/16] 0.0, 128
    %2942 = vxpose.xlu0.b32.cont [5/16] 0.0, 128
    %2943 = vxpose.xlu0.b32.cont [6/16] 0.0, 128
    %2944 = vxpose.xlu0.b32.cont [7/16] 0.0, 128
    %2945 = vxpose.xlu0.b32.cont [8/16] 0.0, 128
    %2946 = vxpose.xlu0.b32.cont [9/16] 0.0, 128
    %2947 = vxpose.xlu0.b32.cont [10/16] 0.0, 128
    %2948 = vxpose.xlu0.b32.cont [11/16] 0.0, 128
    %2949 = vxpose.xlu0.b32.cont [12/16] 0.0, 128
    %2950 = vxpose.xlu0.b32.cont [13/16] 0.0, 128
    %2951 = vxpose.xlu0.b32.cont [14/16] 0.0, 128
    %2952 = vxpose.xlu0.b32.cont [15/16] 0.0, 128
    %2953 = vxpose.xlu0.b32.end [16/16] 0.0, 128
    %v2954 = vpop.trf.xlu0
    %v2955 = vpop.trf.xlu0
    %v2956 = vpop.trf.xlu0
    %v2957 = vpop.trf.xlu0
    %v2958 = vpop.trf.xlu0
    %v2959 = vpop.trf.xlu0
    %v2960 = vpop.trf.xlu0
    %v2961 = vpop.trf.xlu0
    %v2962 = vpop.trf.xlu0
    %v2963 = vpop.trf.xlu0
    %v2964 = vpop.trf.xlu0
    %v2965 = vpop.trf.xlu0
    %v2966 = vpop.trf.xlu0
    %v2967 = vpop.trf.xlu0
    %v2968 = vpop.trf.xlu0
    %v2969 = vpop.trf.xlu0
    %2970 = vxpose.xlu0.b32.start [1/16] %v2831, 128
    %2971 = vxpose.xlu0.b32.cont [2/16] 0.0, 128
    %2972 = vxpose.xlu0.b32.cont [3/16] 0.0, 128
    %2973 = vxpose.xlu0.b32.cont [4/16] 0.0, 128
    %2974 = vxpose.xlu0.b32.cont [5/16] 0.0, 128
    %2975 = vxpose.xlu0.b32.cont [6/16] 0.0, 128
    %2976 = vxpose.xlu0.b32.cont [7/16] 0.0, 128
    %2977 = vxpose.xlu0.b32.cont [8/16] 0.0, 128
    %2978 = vxpose.xlu0.b32.cont [9/16] 0.0, 128
    %2979 = vxpose.xlu0.b32.cont [10/16] 0.0, 128
    %2980 = vxpose.xlu0.b32.cont [11/16] 0.0, 128
    %2981 = vxpose.xlu0.b32.cont [12/16] 0.0, 128
    %2982 = vxpose.xlu0.b32.cont [13/16] 0.0, 128
    %2983 = vxpose.xlu0.b32.cont [14/16] 0.0, 128
    %2984 = vxpose.xlu0.b32.cont [15/16] 0.0, 128
    %2985 = vxpose.xlu0.b32.end [16/16] 0.0, 128
    %v2986 = vpop.trf.xlu0
    %v2987 = vpop.trf.xlu0
    %v2988 = vpop.trf.xlu0
    %v2989 = vpop.trf.xlu0
    %v2990 = vpop.trf.xlu0
    %v2991 = vpop.trf.xlu0
    %v2992 = vpop.trf.xlu0
    %v2993 = vpop.trf.xlu0
    %v2994 = vpop.trf.xlu0
    %v2995 = vpop.trf.xlu0
    %v2996 = vpop.trf.xlu0
    %v2997 = vpop.trf.xlu0
    %v2998 = vpop.trf.xlu0
    %v2999 = vpop.trf.xlu0
    %v3000 = vpop.trf.xlu0
    %v3001 = vpop.trf.xlu0
    %v3003 = vsel %vm867, %v2890, 0
    %v3006 = vsel %vm867, %v2891, 0
    %v3009 = vsel %vm867, %v2892, 0
    %v3012 = vsel %vm867, %v2893, 0
    %v3015 = vsel %vm867, %v2894, 0
    %v3018 = vsel %vm867, %v2895, 0
    %v3021 = vsel %vm867, %v2896, 0
    %v3024 = vsel %vm867, %v2897, 0
    %3026 = vmatprep.subr.mxu0 0.0
    %3027 = vmatpush1.msra.mxu0 %v2836
    %3028 = vmatprep.subr.mxu0 0.0
    %3029 = vmatpush1.msra.mxu0 0.0
    %3030 = vmatprep.subr.mxu0 0.0
    %3031 = vmatpush1.msra.mxu0 0.0
    %3032 = vmatprep.subr.mxu0 0.0
    %3033 = vmatpush1.msra.mxu0 0.0
    %3034 = vmatprep.subr.mxu0 0.0
    %3035 = vmatpush1.msra.mxu0 0.0
    %3036 = vmatprep.subr.mxu0 0.0
    %3037 = vmatpush1.msra.mxu0 0.0
    %3038 = vmatprep.subr.mxu0 0.0
    %3039 = vmatpush1.msra.mxu0 0.0
    %3040 = vmatprep.subr.mxu0 0.0
    %3041 = vmatpush1.msra.mxu0 0.0
    %3042 = vmatprep.subr.mxu0 0.0
    %3043 = vmatpush1.msra.mxu0 0.0
    %3044 = vmatprep.subr.mxu0 0.0
    %3045 = vmatpush1.msra.mxu0 0.0
    %3046 = vmatprep.subr.mxu0 0.0
    %3047 = vmatpush1.msra.mxu0 0.0
    %3048 = vmatprep.subr.mxu0 0.0
    %3049 = vmatpush1.msra.mxu0 0.0
    %3050 = vmatprep.subr.mxu0 0.0
    %3051 = vmatpush1.msra.mxu0 0.0
    %3052 = vmatprep.subr.mxu0 0.0
    %3053 = vmatpush1.msra.mxu0 0.0
    %3054 = vmatprep.subr.mxu0 0.0
    %3055 = vmatpush1.msra.mxu0 0.0
    %3056 = vmatprep.subr.mxu0 0.0
    %3057 = vmatpush1.msra.mxu0 0.0
    %3058 = vmatprep.subr.mxu0 0.0
    %3059 = vmatpush1.msra.mxu0 0.0
    %3060 = vmatprep.subr.mxu0 0.0
    %3061 = vmatpush1.msra.mxu0 0.0
    %3062 = vmatprep.subr.mxu0 0.0
    %3063 = vmatpush1.msra.mxu0 0.0
    %3064 = vmatprep.subr.mxu0 0.0
    %3065 = vmatpush1.msra.mxu0 0.0
    %3066 = vmatprep.subr.mxu0 0.0
    %3067 = vmatpush1.msra.mxu0 0.0
    %3068 = vmatprep.subr.mxu0 0.0
    %3069 = vmatpush1.msra.mxu0 0.0
    %3070 = vmatprep.subr.mxu0 0.0
    %3071 = vmatpush1.msra.mxu0 0.0
    %3072 = vmatprep.subr.mxu0 0.0
    %3073 = vmatpush1.msra.mxu0 0.0
    %3074 = vmatprep.subr.mxu0 0.0
    %3075 = vmatpush1.msra.mxu0 0.0
    %3076 = vmatprep.subr.mxu0 0.0
    %3077 = vmatpush1.msra.mxu0 0.0
    %3078 = vmatprep.subr.mxu0 0.0
    %3079 = vmatpush1.msra.mxu0 0.0
    %3080 = vmatprep.subr.mxu0 0.0
    %3081 = vmatpush1.msra.mxu0 0.0
    %3082 = vmatprep.subr.mxu0 0.0
    %3083 = vmatpush1.msra.mxu0 0.0
    %3084 = vmatprep.subr.mxu0 0.0
    %3085 = vmatpush1.msra.mxu0 0.0
    %3086 = vmatprep.subr.mxu0 0.0
    %3087 = vmatpush1.msra.mxu0 0.0
    %3088 = vmatprep.subr.mxu0 0.0
    %3089 = vmatpush1.msra.mxu0 0.0
    %3090 = vmatprep.mubr.f32.mxu0 0.0
    %3091 = vmatmul.mubr.f32.gmra.mrb[0].mxu0 %v3003
    %v3092 = vpop.f32.mrb[0].mxu0
    %v3093 = vadd.f32 0.0, %v3092
    %v3094 = vpop.f32.mrb[0].mxu0
    %3095 = vmatprep.mubr.f32.mxu0 0.0
    %3096 = vmatmul.mubr.f32.gmra.mrb[0].mxu0 %v3006
    %v3097 = vpop.f32.mrb[0].mxu0
    %v3098 = vadd.f32 0.0, %v3097
    %v3099 = vpop.f32.mrb[0].mxu0
    %3100 = vmatprep.mubr.f32.mxu0 0.0
    %3101 = vmatmul.mubr.f32.gmra.mrb[0].mxu0 %v3009
    %v3102 = vpop.f32.mrb[0].mxu0
    %v3103 = vadd.f32 0.0, %v3102
    %v3104 = vpop.f32.mrb[0].mxu0
    %3105 = vmatprep.mubr.f32.mxu0 0.0
    %3106 = vmatmul.mubr.f32.gmra.mrb[0].mxu0 %v3012
    %v3107 = vpop.f32.mrb[0].mxu0
    %v3108 = vadd.f32 0.0, %v3107
    %v3109 = vpop.f32.mrb[0].mxu0
    %3110 = vmatprep.mubr.f32.mxu0 0.0
    %3111 = vmatmul.mubr.f32.gmra.mrb[0].mxu0 %v3015
    %v3112 = vpop.f32.mrb[0].mxu0
    %v3113 = vadd.f32 0.0, %v3112
    %v3114 = vpop.f32.mrb[0].mxu0
    %3115 = vmatprep.mubr.f32.mxu0 0.0
    %3116 = vmatmul.mubr.f32.gmra.mrb[0].mxu0 %v3018
    %v3117 = vpop.f32.mrb[0].mxu0
    %v3118 = vadd.f32 0.0, %v3117
    %v3119 = vpop.f32.mrb[0].mxu0
    %3120 = vmatprep.mubr.f32.mxu0 0.0
    %3121 = vmatmul.mubr.f32.gmra.mrb[0].mxu0 %v3021
    %v3122 = vpop.f32.mrb[0].mxu0
    %v3123 = vadd.f32 0.0, %v3122
    %v3124 = vpop.f32.mrb[0].mxu0
    %3125 = vmatprep.mubr.f32.mxu0 0.0
    %3126 = vmatmul.mubr.f32.gmra.mrb[0].mxu0 %v3024
    %v3127 = vpop.f32.mrb[0].mxu0
    %v3128 = vadd.f32 0.0, %v3127
    %v3129 = vpop.f32.mrb[0].mxu0
    %3130 = vdwg.mxu0
    %v3132 = vsel %vm867, %v2922, 0
    %v3135 = vsel %vm867, %v2923, 0
    %v3138 = vsel %vm867, %v2924, 0
    %v3141 = vsel %vm867, %v2925, 0
    %v3144 = vsel %vm867, %v2926, 0
    %v3147 = vsel %vm867, %v2927, 0
    %v3150 = vsel %vm867, %v2928, 0
    %v3153 = vsel %vm867, %v2929, 0
    %3155 = vmatprep.subr.mxu0 0.0
    %3156 = vmatpush1.msra.mxu0 %v2841
    %3157 = vmatprep.subr.mxu0 0.0
    %3158 = vmatpush1.msra.mxu0 0.0
    %3159 = vmatprep.subr.mxu0 0.0
    %3160 = vmatpush1.msra.mxu0 0.0
    %3161 = vmatprep.subr.mxu0 0.0
    %3162 = vmatpush1.msra.mxu0 0.0
    %3163 = vmatprep.subr.mxu0 0.0
    %3164 = vmatpush1.msra.mxu0 0.0
    %3165 = vmatprep.subr.mxu0 0.0
    %3166 = vmatpush1.msra.mxu0 0.0
    %3167 = vmatprep.subr.mxu0 0.0
    %3168 = vmatpush1.msra.mxu0 0.0
    %3169 = vmatprep.subr.mxu0 0.0
    %3170 = vmatpush1.msra.mxu0 0.0
    %3171 = vmatprep.subr.mxu0 0.0
    %3172 = vmatpush1.msra.mxu0 0.0
    %3173 = vmatprep.subr.mxu0 0.0
    %3174 = vmatpush1.msra.mxu0 0.0
    %3175 = vmatprep.subr.mxu0 0.0
    %3176 = vmatpush1.msra.mxu0 0.0
    %3177 = vmatprep.subr.mxu0 0.0
    %3178 = vmatpush1.msra.mxu0 0.0
    %3179 = vmatprep.subr.mxu0 0.0
    %3180 = vmatpush1.msra.mxu0 0.0
    %3181 = vmatprep.subr.mxu0 0.0
    %3182 = vmatpush1.msra.mxu0 0.0
    %3183 = vmatprep.subr.mxu0 0.0
    %3184 = vmatpush1.msra.mxu0 0.0
    %3185 = vmatprep.subr.mxu0 0.0
    %3186 = vmatpush1.msra.mxu0 0.0
    %3187 = vmatprep.subr.mxu0 0.0
    %3188 = vmatpush1.msra.mxu0 0.0
    %3189 = vmatprep.subr.mxu0 0.0
    %3190 = vmatpush1.msra.mxu0 0.0
    %3191 = vmatprep.subr.mxu0 0.0
    %3192 = vmatpush1.msra.mxu0 0.0
    %3193 = vmatprep.subr.mxu0 0.0
    %3194 = vmatpush1.msra.mxu0 0.0
    %3195 = vmatprep.subr.mxu0 0.0
    %3196 = vmatpush1.msra.mxu0 0.0
    %3197 = vmatprep.subr.mxu0 0.0
    %3198 = vmatpush1.msra.mxu0 0.0
    %3199 = vmatprep.subr.mxu0 0.0
    %3200 = vmatpush1.msra.mxu0 0.0
    %3201 = vmatprep.subr.mxu0 0.0
    %3202 = vmatpush1.msra.mxu0 0.0
    %3203 = vmatprep.subr.mxu0 0.0
    %3204 = vmatpush1.msra.mxu0 0.0
    %3205 = vmatprep.subr.mxu0 0.0
    %3206 = vmatpush1.msra.mxu0 0.0
    %3207 = vmatprep.subr.mxu0 0.0
    %3208 = vmatpush1.msra.mxu0 0.0
    %3209 = vmatprep.subr.mxu0 0.0
    %3210 = vmatpush1.msra.mxu0 0.0
    %3211 = vmatprep.subr.mxu0 0.0
    %3212 = vmatpush1.msra.mxu0 0.0
    %3213 = vmatprep.subr.mxu0 0.0
    %3214 = vmatpush1.msra.mxu0 0.0
    %3215 = vmatprep.subr.mxu0 0.0
    %3216 = vmatpush1.msra.mxu0 0.0
    %3217 = vmatprep.subr.mxu0 0.0
    %3218 = vmatpush1.msra.mxu0 0.0
    %3219 = vmatprep.mubr.f32.mxu0 0.0
    %3220 = vmatmul.mubr.f32.gmra.mrb[0].mxu0 %v3132
    %v3221 = vpop.f32.mrb[0].mxu0
    %v3222 = vadd.f32 0.0, %v3221
    %v3223 = vpop.f32.mrb[0].mxu0
    %3224 = vmatprep.mubr.f32.mxu0 0.0
    %3225 = vmatmul.mubr.f32.gmra.mrb[0].mxu0 %v3135
    %v3226 = vpop.f32.mrb[0].mxu0
    %v3227 = vadd.f32 0.0, %v3226
    %v3228 = vpop.f32.mrb[0].mxu0
    %3229 = vmatprep.mubr.f32.mxu0 0.0
    %3230 = vmatmul.mubr.f32.gmra.mrb[0].mxu0 %v3138
    %v3231 = vpop.f32.mrb[0].mxu0
    %v3232 = vadd.f32 0.0, %v3231
    %v3233 = vpop.f32.mrb[0].mxu0
    %3234 = vmatprep.mubr.f32.mxu0 0.0
    %3235 = vmatmul.mubr.f32.gmra.mrb[0].mxu0 %v3141
    %v3236 = vpop.f32.mrb[0].mxu0
    %v3237 = vadd.f32 0.0, %v3236
    %v3238 = vpop.f32.mrb[0].mxu0
    %3239 = vmatprep.mubr.f32.mxu0 0.0
    %3240 = vmatmul.mubr.f32.gmra.mrb[0].mxu0 %v3144
    %v3241 = vpop.f32.mrb[0].mxu0
    %v3242 = vadd.f32 0.0, %v3241
    %v3243 = vpop.f32.mrb[0].mxu0
    %3244 = vmatprep.mubr.f32.mxu0 0.0
    %3245 = vmatmul.mubr.f32.gmra.mrb[0].mxu0 %v3147
    %v3246 = vpop.f32.mrb[0].mxu0
    %v3247 = vadd.f32 0.0, %v3246
    %v3248 = vpop.f32.mrb[0].mxu0
    %3249 = vmatprep.mubr.f32.mxu0 0.0
    %3250 = vmatmul.mubr.f32.gmra.mrb[0].mxu0 %v3150
    %v3251 = vpop.f32.mrb[0].mxu0
    %v3252 = vadd.f32 0.0, %v3251
    %v3253 = vpop.f32.mrb[0].mxu0
    %3254 = vmatprep.mubr.f32.mxu0 0.0
    %3255 = vmatmul.mubr.f32.gmra.mrb[0].mxu0 %v3153
    %v3256 = vpop.f32.mrb[0].mxu0
    %v3257 = vadd.f32 0.0, %v3256
    %v3258 = vpop.f32.mrb[0].mxu0
    %3259 = vdwg.mxu0
    %v3261 = vsel %vm867, %v2954, 0
    %v3264 = vsel %vm867, %v2955, 0
    %v3267 = vsel %vm867, %v2956, 0
    %v3270 = vsel %vm867, %v2957, 0
    %v3273 = vsel %vm867, %v2958, 0
    %v3276 = vsel %vm867, %v2959, 0
    %v3279 = vsel %vm867, %v2960, 0
    %v3282 = vsel %vm867, %v2961, 0
    %3284 = vmatprep.subr.mxu0 0.0
    %3285 = vmatpush1.msra.mxu0 %v2846
    %3286 = vmatprep.subr.mxu0 0.0
    %3287 = vmatpush1.msra.mxu0 0.0
    %3288 = vmatprep.subr.mxu0 0.0
    %3289 = vmatpush1.msra.mxu0 0.0
    %3290 = vmatprep.subr.mxu0 0.0
    %3291 = vmatpush1.msra.mxu0 0.0
    %3292 = vmatprep.subr.mxu0 0.0
    %3293 = vmatpush1.msra.mxu0 0.0
    %3294 = vmatprep.subr.mxu0 0.0
    %3295 = vmatpush1.msra.mxu0 0.0
    %3296 = vmatprep.subr.mxu0 0.0
    %3297 = vmatpush1.msra.mxu0 0.0
    %3298 = vmatprep.subr.mxu0 0.0
    %3299 = vmatpush1.msra.mxu0 0.0
    %3300 = vmatprep.subr.mxu0 0.0
    %3301 = vmatpush1.msra.mxu0 0.0
    %3302 = vmatprep.subr.mxu0 0.0
    %3303 = vmatpush1.msra.mxu0 0.0
    %3304 = vmatprep.subr.mxu0 0.0
    %3305 = vmatpush1.msra.mxu0 0.0
    %3306 = vmatprep.subr.mxu0 0.0
    %3307 = vmatpush1.msra.mxu0 0.0
    %3308 = vmatprep.subr.mxu0 0.0
    %3309 = vmatpush1.msra.mxu0 0.0
    %3310 = vmatprep.subr.mxu0 0.0
    %3311 = vmatpush1.msra.mxu0 0.0
    %3312 = vmatprep.subr.mxu0 0.0
    %3313 = vmatpush1.msra.mxu0 0.0
    %3314 = vmatprep.subr.mxu0 0.0
    %3315 = vmatpush1.msra.mxu0 0.0
    %3316 = vmatprep.subr.mxu0 0.0
    %3317 = vmatpush1.msra.mxu0 0.0
    %3318 = vmatprep.subr.mxu0 0.0
    %3319 = vmatpush1.msra.mxu0 0.0
    %3320 = vmatprep.subr.mxu0 0.0
    %3321 = vmatpush1.msra.mxu0 0.0
    %3322 = vmatprep.subr.mxu0 0.0
    %3323 = vmatpush1.msra.mxu0 0.0
    %3324 = vmatprep.subr.mxu0 0.0
    %3325 = vmatpush1.msra.mxu0 0.0
    %3326 = vmatprep.subr.mxu0 0.0
    %3327 = vmatpush1.msra.mxu0 0.0
    %3328 = vmatprep.subr.mxu0 0.0
    %3329 = vmatpush1.msra.mxu0 0.0
    %3330 = vmatprep.subr.mxu0 0.0
    %3331 = vmatpush1.msra.mxu0 0.0
    %3332 = vmatprep.subr.mxu0 0.0
    %3333 = vmatpush1.msra.mxu0 0.0
    %3334 = vmatprep.subr.mxu0 0.0
    %3335 = vmatpush1.msra.mxu0 0.0
    %3336 = vmatprep.subr.mxu0 0.0
    %3337 = vmatpush1.msra.mxu0 0.0
    %3338 = vmatprep.subr.mxu0 0.0
    %3339 = vmatpush1.msra.mxu0 0.0
    %3340 = vmatprep.subr.mxu0 0.0
    %3341 = vmatpush1.msra.mxu0 0.0
    %3342 = vmatprep.subr.mxu0 0.0
    %3343 = vmatpush1.msra.mxu0 0.0
    %3344 = vmatprep.subr.mxu0 0.0
    %3345 = vmatpush1.msra.mxu0 0.0
    %3346 = vmatprep.subr.mxu0 0.0
    %3347 = vmatpush1.msra.mxu0 0.0
    %3348 = vmatprep.mubr.f32.mxu0 0.0
    %3349 = vmatmul.mubr.f32.gmra.mrb[0].mxu0 %v3261
    %v3350 = vpop.f32.mrb[0].mxu0
    %v3351 = vadd.f32 0.0, %v3350
    %v3352 = vpop.f32.mrb[0].mxu0
    %3353 = vmatprep.mubr.f32.mxu0 0.0
    %3354 = vmatmul.mubr.f32.gmra.mrb[0].mxu0 %v3264
    %v3355 = vpop.f32.mrb[0].mxu0
    %v3356 = vadd.f32 0.0, %v3355
    %v3357 = vpop.f32.mrb[0].mxu0
    %3358 = vmatprep.mubr.f32.mxu0 0.0
    %3359 = vmatmul.mubr.f32.gmra.mrb[0].mxu0 %v3267
    %v3360 = vpop.f32.mrb[0].mxu0
    %v3361 = vadd.f32 0.0, %v3360
    %v3362 = vpop.f32.mrb[0].mxu0
    %3363 = vmatprep.mubr.f32.mxu0 0.0
    %3364 = vmatmul.mubr.f32.gmra.mrb[0].mxu0 %v3270
    %v3365 = vpop.f32.mrb[0].mxu0
    %v3366 = vadd.f32 0.0, %v3365
    %v3367 = vpop.f32.mrb[0].mxu0
    %3368 = vmatprep.mubr.f32.mxu0 0.0
    %3369 = vmatmul.mubr.f32.gmra.mrb[0].mxu0 %v3273
    %v3370 = vpop.f32.mrb[0].mxu0
    %v3371 = vadd.f32 0.0, %v3370
    %v3372 = vpop.f32.mrb[0].mxu0
    %3373 = vmatprep.mubr.f32.mxu0 0.0
    %3374 = vmatmul.mubr.f32.gmra.mrb[0].mxu0 %v3276
    %v3375 = vpop.f32.mrb[0].mxu0
    %v3376 = vadd.f32 0.0, %v3375
    %v3377 = vpop.f32.mrb[0].mxu0
    %3378 = vmatprep.mubr.f32.mxu0 0.0
    %3379 = vmatmul.mubr.f32.gmra.mrb[0].mxu0 %v3279
    %v3380 = vpop.f32.mrb[0].mxu0
    %v3381 = vadd.f32 0.0, %v3380
    %v3382 = vpop.f32.mrb[0].mxu0
    %3383 = vmatprep.mubr.f32.mxu0 0.0
    %3384 = vmatmul.mubr.f32.gmra.mrb[0].mxu0 %v3282
    %v3385 = vpop.f32.mrb[0].mxu0
    %v3386 = vadd.f32 0.0, %v3385
    %v3387 = vpop.f32.mrb[0].mxu0
    %3388 = vdwg.mxu0
    %v3390 = vsel %vm867, %v2986, 0
    %v3393 = vsel %vm867, %v2987, 0
    %v3396 = vsel %vm867, %v2988, 0
    %v3399 = vsel %vm867, %v2989, 0
    %v3402 = vsel %vm867, %v2990, 0
    %v3405 = vsel %vm867, %v2991, 0
    %v3408 = vsel %vm867, %v2992, 0
    %v3411 = vsel %vm867, %v2993, 0
    %3413 = vmatprep.subr.mxu0 0.0
    %3414 = vmatpush1.msra.mxu0 %v2851
    %3415 = vmatprep.subr.mxu0 0.0
    %3416 = vmatpush1.msra.mxu0 0.0
    %3417 = vmatprep.subr.mxu0 0.0
    %3418 = vmatpush1.msra.mxu0 0.0
    %3419 = vmatprep.subr.mxu0 0.0
    %3420 = vmatpush1.msra.mxu0 0.0
    %3421 = vmatprep.subr.mxu0 0.0
    %3422 = vmatpush1.msra.mxu0 0.0
    %3423 = vmatprep.subr.mxu0 0.0
    %3424 = vmatpush1.msra.mxu0 0.0
    %3425 = vmatprep.subr.mxu0 0.0
    %3426 = vmatpush1.msra.mxu0 0.0
    %3427 = vmatprep.subr.mxu0 0.0
    %3428 = vmatpush1.msra.mxu0 0.0
    %3429 = vmatprep.subr.mxu0 0.0
    %3430 = vmatpush1.msra.mxu0 0.0
    %3431 = vmatprep.subr.mxu0 0.0
    %3432 = vmatpush1.msra.mxu0 0.0
    %3433 = vmatprep.subr.mxu0 0.0
    %3434 = vmatpush1.msra.mxu0 0.0
    %3435 = vmatprep.subr.mxu0 0.0
    %3436 = vmatpush1.msra.mxu0 0.0
    %3437 = vmatprep.subr.mxu0 0.0
    %3438 = vmatpush1.msra.mxu0 0.0
    %3439 = vmatprep.subr.mxu0 0.0
    %3440 = vmatpush1.msra.mxu0 0.0
    %3441 = vmatprep.subr.mxu0 0.0
    %3442 = vmatpush1.msra.mxu0 0.0
    %3443 = vmatprep.subr.mxu0 0.0
    %3444 = vmatpush1.msra.mxu0 0.0
    %3445 = vmatprep.subr.mxu0 0.0
    %3446 = vmatpush1.msra.mxu0 0.0
    %3447 = vmatprep.subr.mxu0 0.0
    %3448 = vmatpush1.msra.mxu0 0.0
    %3449 = vmatprep.subr.mxu0 0.0
    %3450 = vmatpush1.msra.mxu0 0.0
    %3451 = vmatprep.subr.mxu0 0.0
    %3452 = vmatpush1.msra.mxu0 0.0
    %3453 = vmatprep.subr.mxu0 0.0
    %3454 = vmatpush1.msra.mxu0 0.0
    %3455 = vmatprep.subr.mxu0 0.0
    %3456 = vmatpush1.msra.mxu0 0.0
    %3457 = vmatprep.subr.mxu0 0.0
    %3458 = vmatpush1.msra.mxu0 0.0
    %3459 = vmatprep.subr.mxu0 0.0
    %3460 = vmatpush1.msra.mxu0 0.0
    %3461 = vmatprep.subr.mxu0 0.0
    %3462 = vmatpush1.msra.mxu0 0.0
    %3463 = vmatprep.subr.mxu0 0.0
    %3464 = vmatpush1.msra.mxu0 0.0
    %3465 = vmatprep.subr.mxu0 0.0
    %3466 = vmatpush1.msra.mxu0 0.0
    %3467 = vmatprep.subr.mxu0 0.0
    %3468 = vmatpush1.msra.mxu0 0.0
    %3469 = vmatprep.subr.mxu0 0.0
    %3470 = vmatpush1.msra.mxu0 0.0
    %3471 = vmatprep.subr.mxu0 0.0
    %3472 = vmatpush1.msra.mxu0 0.0
    %3473 = vmatprep.subr.mxu0 0.0
    %3474 = vmatpush1.msra.mxu0 0.0
    %3475 = vmatprep.subr.mxu0 0.0
    %3476 = vmatpush1.msra.mxu0 0.0
    %3477 = vmatprep.mubr.f32.mxu0 0.0
    %3478 = vmatmul.mubr.f32.gmra.mrb[0].mxu0 %v3390
    %v3479 = vpop.f32.mrb[0].mxu0
    %v3480 = vadd.f32 0.0, %v3479
    %v3481 = vpop.f32.mrb[0].mxu0
    %3482 = vmatprep.mubr.f32.mxu0 0.0
    %3483 = vmatmul.mubr.f32.gmra.mrb[0].mxu0 %v3393
    %v3484 = vpop.f32.mrb[0].mxu0
    %v3485 = vadd.f32 0.0, %v3484
    %v3486 = vpop.f32.mrb[0].mxu0
    %3487 = vmatprep.mubr.f32.mxu0 0.0
    %3488 = vmatmul.mubr.f32.gmra.mrb[0].mxu0 %v3396
    %v3489 = vpop.f32.mrb[0].mxu0
    %v3490 = vadd.f32 0.0, %v3489
    %v3491 = vpop.f32.mrb[0].mxu0
    %3492 = vmatprep.mubr.f32.mxu0 0.0
    %3493 = vmatmul.mubr.f32.gmra.mrb[0].mxu0 %v3399
    %v3494 = vpop.f32.mrb[0].mxu0
    %v3495 = vadd.f32 0.0, %v3494
    %v3496 = vpop.f32.mrb[0].mxu0
    %3497 = vmatprep.mubr.f32.mxu0 0.0
    %3498 = vmatmul.mubr.f32.gmra.mrb[0].mxu0 %v3402
    %v3499 = vpop.f32.mrb[0].mxu0
    %v3500 = vadd.f32 0.0, %v3499
    %v3501 = vpop.f32.mrb[0].mxu0
    %3502 = vmatprep.mubr.f32.mxu0 0.0
    %3503 = vmatmul.mubr.f32.gmra.mrb[0].mxu0 %v3405
    %v3504 = vpop.f32.mrb[0].mxu0
    %v3505 = vadd.f32 0.0, %v3504
    %v3506 = vpop.f32.mrb[0].mxu0
    %3507 = vmatprep.mubr.f32.mxu0 0.0
    %3508 = vmatmul.mubr.f32.gmra.mrb[0].mxu0 %v3408
    %v3509 = vpop.f32.mrb[0].mxu0
    %v3510 = vadd.f32 0.0, %v3509
    %v3511 = vpop.f32.mrb[0].mxu0
    %3512 = vmatprep.mubr.f32.mxu0 0.0
    %3513 = vmatmul.mubr.f32.gmra.mrb[0].mxu0 %v3411
    %v3514 = vpop.f32.mrb[0].mxu0
    %v3515 = vadd.f32 0.0, %v3514
    %v3516 = vpop.f32.mrb[0].mxu0
    %3517 = vdwg.mxu0
    %v3518 = vsel %vm1384, %v3093, -inf
    %3519 = vmax.xlane.f32.xlu0 %v3518
    %v3520 = vpop.xlane.xlu0 %3519
    %v3521 = vsel %vm1384, %v3098, -inf
    %3522 = vmax.xlane.f32.xlu0 %v3521
    %v3523 = vpop.xlane.xlu0 %3522
    %v3524 = vsel %vm1384, %v3103, -inf
    %3525 = vmax.xlane.f32.xlu0 %v3524
    %v3526 = vpop.xlane.xlu0 %3525
    %v3527 = vsel %vm1384, %v3108, -inf
    %3528 = vmax.xlane.f32.xlu0 %v3527
    %v3529 = vpop.xlane.xlu0 %3528
    %v3530 = vsel %vm1384, %v3113, -inf
    %3531 = vmax.xlane.f32.xlu0 %v3530
    %v3532 = vpop.xlane.xlu0 %3531
    %v3533 = vsel %vm1384, %v3118, -inf
    %3534 = vmax.xlane.f32.xlu0 %v3533
    %v3535 = vpop.xlane.xlu0 %3534
    %v3536 = vsel %vm1384, %v3123, -inf
    %3537 = vmax.xlane.f32.xlu0 %v3536
    %v3538 = vpop.xlane.xlu0 %3537
    %v3539 = vsel %vm1384, %v3128, -inf
    %3540 = vmax.xlane.f32.xlu0 %v3539
    %v3541 = vpop.xlane.xlu0 %3540
    %v3542 = vsel %vm1384, %v3222, -inf
    %3543 = vmax.xlane.f32.xlu0 %v3542
    %v3544 = vpop.xlane.xlu0 %3543
    %v3545 = vsel %vm1384, %v3227, -inf
    %3546 = vmax.xlane.f32.xlu0 %v3545
    %v3547 = vpop.xlane.xlu0 %3546
    %v3548 = vsel %vm1384, %v3232, -inf
    %3549 = vmax.xlane.f32.xlu0 %v3548
    %v3550 = vpop.xlane.xlu0 %3549
    %v3551 = vsel %vm1384, %v3237, -inf
    %3552 = vmax.xlane.f32.xlu0 %v3551
    %v3553 = vpop.xlane.xlu0 %3552
    %v3554 = vsel %vm1384, %v3242, -inf
    %3555 = vmax.xlane.f32.xlu0 %v3554
    %v3556 = vpop.xlane.xlu0 %3555
    %v3557 = vsel %vm1384, %v3247, -inf
    %3558 = vmax.xlane.f32.xlu0 %v3557
    %v3559 = vpop.xlane.xlu0 %3558
    %v3560 = vsel %vm1384, %v3252, -inf
    %3561 = vmax.xlane.f32.xlu0 %v3560
    %v3562 = vpop.xlane.xlu0 %3561
    %v3563 = vsel %vm1384, %v3257, -inf
    %3564 = vmax.xlane.f32.xlu0 %v3563
    %v3565 = vpop.xlane.xlu0 %3564
    %v3566 = vsel %vm1384, %v3351, -inf
    %3567 = vmax.xlane.f32.xlu0 %v3566
    %v3568 = vpop.xlane.xlu0 %3567
    %v3569 = vsel %vm1384, %v3356, -inf
    %3570 = vmax.xlane.f32.xlu0 %v3569
    %v3571 = vpop.xlane.xlu0 %3570
    %v3572 = vsel %vm1384, %v3361, -inf
    %3573 = vmax.xlane.f32.xlu0 %v3572
    %v3574 = vpop.xlane.xlu0 %3573
    %v3575 = vsel %vm1384, %v3366, -inf
    %3576 = vmax.xlane.f32.xlu0 %v3575
    %v3577 = vpop.xlane.xlu0 %3576
    %v3578 = vsel %vm1384, %v3371, -inf
    %3579 = vmax.xlane.f32.xlu0 %v3578
    %v3580 = vpop.xlane.xlu0 %3579
    %v3581 = vsel %vm1384, %v3376, -inf
    %3582 = vmax.xlane.f32.xlu0 %v3581
    %v3583 = vpop.xlane.xlu0 %3582
    %v3584 = vsel %vm1384, %v3381, -inf
    %3585 = vmax.xlane.f32.xlu0 %v3584
    %v3586 = vpop.xlane.xlu0 %3585
    %v3587 = vsel %vm1384, %v3386, -inf
    %3588 = vmax.xlane.f32.xlu0 %v3587
    %v3589 = vpop.xlane.xlu0 %3588
    %v3590 = vsel %vm1384, %v3480, -inf
    %3591 = vmax.xlane.f32.xlu0 %v3590
    %v3592 = vpop.xlane.xlu0 %3591
    %v3593 = vsel %vm1384, %v3485, -inf
    %3594 = vmax.xlane.f32.xlu0 %v3593
    %v3595 = vpop.xlane.xlu0 %3594
    %v3596 = vsel %vm1384, %v3490, -inf
    %3597 = vmax.xlane.f32.xlu0 %v3596
    %v3598 = vpop.xlane.xlu0 %3597
    %v3599 = vsel %vm1384, %v3495, -inf
    %3600 = vmax.xlane.f32.xlu0 %v3599
    %v3601 = vpop.xlane.xlu0 %3600
    %v3602 = vsel %vm1384, %v3500, -inf
    %3603 = vmax.xlane.f32.xlu0 %v3602
    %v3604 = vpop.xlane.xlu0 %3603
    %v3605 = vsel %vm1384, %v3505, -inf
    %3606 = vmax.xlane.f32.xlu0 %v3605
    %v3607 = vpop.xlane.xlu0 %3606
    %v3608 = vsel %vm1384, %v3510, -inf
    %3609 = vmax.xlane.f32.xlu0 %v3608
    %v3610 = vpop.xlane.xlu0 %3609
    %v3611 = vsel %vm1384, %v3515, -inf
    %3612 = vmax.xlane.f32.xlu0 %v3611
    %v3613 = vpop.xlane.xlu0 %3612
    %v3614 = vsub.f32 %v3093, %v3520
    %v3615 = vsub.f32 %v3098, %v3523
    %v3616 = vsub.f32 %v3103, %v3526
    %v3617 = vsub.f32 %v3108, %v3529
    %v3618 = vsub.f32 %v3113, %v3532
    %v3619 = vsub.f32 %v3118, %v3535
    %v3620 = vsub.f32 %v3123, %v3538
    %v3621 = vsub.f32 %v3128, %v3541
    %v3622 = vsub.f32 %v3222, %v3544
    %v3623 = vsub.f32 %v3227, %v3547
    %v3624 = vsub.f32 %v3232, %v3550
    %v3625 = vsub.f32 %v3237, %v3553
    %v3626 = vsub.f32 %v3242, %v3556
    %v3627 = vsub.f32 %v3247, %v3559
    %v3628 = vsub.f32 %v3252, %v3562
    %v3629 = vsub.f32 %v3257, %v3565
    %v3630 = vsub.f32 %v3351, %v3568
    %v3631 = vsub.f32 %v3356, %v3571
    %v3632 = vsub.f32 %v3361, %v3574
    %v3633 = vsub.f32 %v3366, %v3577
    %v3634 = vsub.f32 %v3371, %v3580
    %v3635 = vsub.f32 %v3376, %v3583
    %v3636 = vsub.f32 %v3381, %v3586
    %v3637 = vsub.f32 %v3386, %v3589
    %v3638 = vsub.f32 %v3480, %v3592
    %v3639 = vsub.f32 %v3485, %v3595
    %v3640 = vsub.f32 %v3490, %v3598
    %v3641 = vsub.f32 %v3495, %v3601
    %v3642 = vsub.f32 %v3500, %v3604
    %v3643 = vsub.f32 %v3505, %v3607
    %v3644 = vsub.f32 %v3510, %v3610
    %v3645 = vsub.f32 %v3515, %v3613
    %v3646 = vmul.f32 %v3614, 1.442695
    %v3647 = vpow.pop %v3646
    %v3648 = vmul.f32 %v3615, 1.442695
    %v3649 = vpow.pop %v3648
    %v3650 = vmul.f32 %v3616, 1.442695
    %v3651 = vpow.pop %v3650
    %v3652 = vmul.f32 %v3617, 1.442695
    %v3653 = vpow.pop %v3652
    %v3654 = vmul.f32 %v3618, 1.442695
    %v3655 = vpow.pop %v3654
    %v3656 = vmul.f32 %v3619, 1.442695
    %v3657 = vpow.pop %v3656
    %v3658 = vmul.f32 %v3620, 1.442695
    %v3659 = vpow.pop %v3658
    %v3660 = vmul.f32 %v3621, 1.442695
    %v3661 = vpow.pop %v3660
    %v3662 = vmul.f32 %v3622, 1.442695
    %v3663 = vpow.pop %v3662
    %v3664 = vmul.f32 %v3623, 1.442695
    %v3665 = vpow.pop %v3664
    %v3666 = vmul.f32 %v3624, 1.442695
    %v3667 = vpow.pop %v3666
    %v3668 = vmul.f32 %v3625, 1.442695
    %v3669 = vpow.pop %v3668
    %v3670 = vmul.f32 %v3626, 1.442695
    %v3671 = vpow.pop %v3670
    %v3672 = vmul.f32 %v3627, 1.442695
    %v3673 = vpow.pop %v3672
    %v3674 = vmul.f32 %v3628, 1.442695
    %v3675 = vpow.pop %v3674
    %v3676 = vmul.f32 %v3629, 1.442695
    %v3677 = vpow.pop %v3676
    %v3678 = vmul.f32 %v3630, 1.442695
    %v3679 = vpow.pop %v3678
    %v3680 = vmul.f32 %v3631, 1.442695
    %v3681 = vpow.pop %v3680
    %v3682 = vmul.f32 %v3632, 1.442695
    %v3683 = vpow.pop %v3682
    %v3684 = vmul.f32 %v3633, 1.442695
    %v3685 = vpow.pop %v3684
    %v3686 = vmul.f32 %v3634, 1.442695
    %v3687 = vpow.pop %v3686
    %v3688 = vmul.f32 %v3635, 1.442695
    %v3689 = vpow.pop %v3688
    %v3690 = vmul.f32 %v3636, 1.442695
    %v3691 = vpow.pop %v3690
    %v3692 = vmul.f32 %v3637, 1.442695
    %v3693 = vpow.pop %v3692
    %v3694 = vmul.f32 %v3638, 1.442695
    %v3695 = vpow.pop %v3694
    %v3696 = vmul.f32 %v3639, 1.442695
    %v3697 = vpow.pop %v3696
    %v3698 = vmul.f32 %v3640, 1.442695
    %v3699 = vpow.pop %v3698
    %v3700 = vmul.f32 %v3641, 1.442695
    %v3701 = vpow.pop %v3700
    %v3702 = vmul.f32 %v3642, 1.442695
    %v3703 = vpow.pop %v3702
    %v3704 = vmul.f32 %v3643, 1.442695
    %v3705 = vpow.pop %v3704
    %v3706 = vmul.f32 %v3644, 1.442695
    %v3707 = vpow.pop %v3706
    %v3708 = vmul.f32 %v3645, 1.442695
    %v3709 = vpow.pop %v3708
    %v3710 = vsel %vm1384, %v3647, 0.0
    %3711 = vadd.xlane.f32.xlu0 %v3710
    %v3712 = vpop.xlane.xlu0 %3711
    %v3713 = vsel %vm1384, %v3649, 0.0
    %3714 = vadd.xlane.f32.xlu0 %v3713
    %v3715 = vpop.xlane.xlu0 %3714
    %v3716 = vsel %vm1384, %v3651, 0.0
    %3717 = vadd.xlane.f32.xlu0 %v3716
    %v3718 = vpop.xlane.xlu0 %3717
    %v3719 = vsel %vm1384, %v3653, 0.0
    %3720 = vadd.xlane.f32.xlu0 %v3719
    %v3721 = vpop.xlane.xlu0 %3720
    %v3722 = vsel %vm1384, %v3655, 0.0
    %3723 = vadd.xlane.f32.xlu0 %v3722
    %v3724 = vpop.xlane.xlu0 %3723
    %v3725 = vsel %vm1384, %v3657, 0.0
    %3726 = vadd.xlane.f32.xlu0 %v3725
    %v3727 = vpop.xlane.xlu0 %3726
    %v3728 = vsel %vm1384, %v3659, 0.0
    %3729 = vadd.xlane.f32.xlu0 %v3728
    %v3730 = vpop.xlane.xlu0 %3729
    %v3731 = vsel %vm1384, %v3661, 0.0
    %3732 = vadd.xlane.f32.xlu0 %v3731
    %v3733 = vpop.xlane.xlu0 %3732
    %v3734 = vsel %vm1384, %v3663, 0.0
    %3735 = vadd.xlane.f32.xlu0 %v3734
    %v3736 = vpop.xlane.xlu0 %3735
    %v3737 = vsel %vm1384, %v3665, 0.0
    %3738 = vadd.xlane.f32.xlu0 %v3737
    %v3739 = vpop.xlane.xlu0 %3738
    %v3740 = vsel %vm1384, %v3667, 0.0
    %3741 = vadd.xlane.f32.xlu0 %v3740
    %v3742 = vpop.xlane.xlu0 %3741
    %v3743 = vsel %vm1384, %v3669, 0.0
    %3744 = vadd.xlane.f32.xlu0 %v3743
    %v3745 = vpop.xlane.xlu0 %3744
    %v3746 = vsel %vm1384, %v3671, 0.0
    %3747 = vadd.xlane.f32.xlu0 %v3746
    %v3748 = vpop.xlane.xlu0 %3747
    %v3749 = vsel %vm1384, %v3673, 0.0
    %3750 = vadd.xlane.f32.xlu0 %v3749
    %v3751 = vpop.xlane.xlu0 %3750
    %v3752 = vsel %vm1384, %v3675, 0.0
    %3753 = vadd.xlane.f32.xlu0 %v3752
    %v3754 = vpop.xlane.xlu0 %3753
    %v3755 = vsel %vm1384, %v3677, 0.0
    %3756 = vadd.xlane.f32.xlu0 %v3755
    %v3757 = vpop.xlane.xlu0 %3756
    %v3758 = vsel %vm1384, %v3679, 0.0
    %3759 = vadd.xlane.f32.xlu0 %v3758
    %v3760 = vpop.xlane.xlu0 %3759
    %v3761 = vsel %vm1384, %v3681, 0.0
    %3762 = vadd.xlane.f32.xlu0 %v3761
    %v3763 = vpop.xlane.xlu0 %3762
    %v3764 = vsel %vm1384, %v3683, 0.0
    %3765 = vadd.xlane.f32.xlu0 %v3764
    %v3766 = vpop.xlane.xlu0 %3765
    %v3767 = vsel %vm1384, %v3685, 0.0
    %3768 = vadd.xlane.f32.xlu0 %v3767
    %v3769 = vpop.xlane.xlu0 %3768
    %v3770 = vsel %vm1384, %v3687, 0.0
    %3771 = vadd.xlane.f32.xlu0 %v3770
    %v3772 = vpop.xlane.xlu0 %3771
    %v3773 = vsel %vm1384, %v3689, 0.0
    %3774 = vadd.xlane.f32.xlu0 %v3773
    %v3775 = vpop.xlane.xlu0 %3774
    %v3776 = vsel %vm1384, %v3691, 0.0
    %3777 = vadd.xlane.f32.xlu0 %v3776
    %v3778 = vpop.xlane.xlu0 %3777
    %v3779 = vsel %vm1384, %v3693, 0.0
    %3780 = vadd.xlane.f32.xlu0 %v3779
    %v3781 = vpop.xlane.xlu0 %3780
    %v3782 = vsel %vm1384, %v3695, 0.0
    %3783 = vadd.xlane.f32.xlu0 %v3782
    %v3784 = vpop.xlane.xlu0 %3783
    %v3785 = vsel %vm1384, %v3697, 0.0
    %3786 = vadd.xlane.f32.xlu0 %v3785
    %v3787 = vpop.xlane.xlu0 %3786
    %v3788 = vsel %vm1384, %v3699, 0.0
    %3789 = vadd.xlane.f32.xlu0 %v3788
    %v3790 = vpop.xlane.xlu0 %3789
    %v3791 = vsel %vm1384, %v3701, 0.0
    %3792 = vadd.xlane.f32.xlu0 %v3791
    %v3793 = vpop.xlane.xlu0 %3792
    %v3794 = vsel %vm1384, %v3703, 0.0
    %3795 = vadd.xlane.f32.xlu0 %v3794
    %v3796 = vpop.xlane.xlu0 %3795
    %v3797 = vsel %vm1384, %v3705, 0.0
    %3798 = vadd.xlane.f32.xlu0 %v3797
    %v3799 = vpop.xlane.xlu0 %3798
    %v3800 = vsel %vm1384, %v3707, 0.0
    %3801 = vadd.xlane.f32.xlu0 %v3800
    %v3802 = vpop.xlane.xlu0 %3801
    %v3803 = vsel %vm1384, %v3709, 0.0
    %3804 = vadd.xlane.f32.xlu0 %v3803
    %v3805 = vpop.xlane.xlu0 %3804
    %v3807 = vsel %vm1384, %v2856, 0
    %v3810 = vsel %vm1384, %v3647, 0
    %v3813 = vsel %vm1384, %v3649, 0
    %v3816 = vsel %vm1384, %v3651, 0
    %v3819 = vsel %vm1384, %v3653, 0
    %v3822 = vsel %vm1384, %v3655, 0
    %v3825 = vsel %vm1384, %v3657, 0
    %v3828 = vsel %vm1384, %v3659, 0
    %v3831 = vsel %vm1384, %v3661, 0
    %3833 = vmatprep.subr.mxu0 0.0
    %3834 = vmatpush1.xpose.msra.mxu0 %v3810
    %3835 = vmatprep.subr.mxu0 0.0
    %3836 = vmatpush1.xpose.msra.mxu0 %v3813
    %3837 = vmatprep.subr.mxu0 0.0
    %3838 = vmatpush1.xpose.msra.mxu0 %v3816
    %3839 = vmatprep.subr.mxu0 0.0
    %3840 = vmatpush1.xpose.msra.mxu0 %v3819
    %3841 = vmatprep.subr.mxu0 0.0
    %3842 = vmatpush1.xpose.msra.mxu0 %v3822
    %3843 = vmatprep.subr.mxu0 0.0
    %3844 = vmatpush1.xpose.msra.mxu0 %v3825
    %3845 = vmatprep.subr.mxu0 0.0
    %3846 = vmatpush1.xpose.msra.mxu0 %v3828
    %3847 = vmatprep.subr.mxu0 0.0
    %3848 = vmatpush1.xpose.msra.mxu0 %v3831
    %3849 = vmatprep.subr.mxu0 0.0
    %3850 = vmatpush1.xpose.msra.mxu0 0.0
    %3851 = vmatprep.subr.mxu0 0.0
    %3852 = vmatpush1.xpose.msra.mxu0 0.0
    %3853 = vmatprep.subr.mxu0 0.0
    %3854 = vmatpush1.xpose.msra.mxu0 0.0
    %3855 = vmatprep.subr.mxu0 0.0
    %3856 = vmatpush1.xpose.msra.mxu0 0.0
    %3857 = vmatprep.subr.mxu0 0.0
    %3858 = vmatpush1.xpose.msra.mxu0 0.0
    %3859 = vmatprep.subr.mxu0 0.0
    %3860 = vmatpush1.xpose.msra.mxu0 0.0
    %3861 = vmatprep.subr.mxu0 0.0
    %3862 = vmatpush1.xpose.msra.mxu0 0.0
    %3863 = vmatprep.subr.mxu0 0.0
    %3864 = vmatpush1.xpose.msra.mxu0 0.0
    %3865 = vmatprep.subr.mxu0 0.0
    %3866 = vmatpush1.xpose.msra.mxu0 0.0
    %3867 = vmatprep.subr.mxu0 0.0
    %3868 = vmatpush1.xpose.msra.mxu0 0.0
    %3869 = vmatprep.subr.mxu0 0.0
    %3870 = vmatpush1.xpose.msra.mxu0 0.0
    %3871 = vmatprep.subr.mxu0 0.0
    %3872 = vmatpush1.xpose.msra.mxu0 0.0
    %3873 = vmatprep.subr.mxu0 0.0
    %3874 = vmatpush1.xpose.msra.mxu0 0.0
    %3875 = vmatprep.subr.mxu0 0.0
    %3876 = vmatpush1.xpose.msra.mxu0 0.0
    %3877 = vmatprep.subr.mxu0 0.0
    %3878 = vmatpush1.xpose.msra.mxu0 0.0
    %3879 = vmatprep.subr.mxu0 0.0
    %3880 = vmatpush1.xpose.msra.mxu0 0.0
    %3881 = vmatprep.subr.mxu0 0.0
    %3882 = vmatpush1.xpose.msra.mxu0 0.0
    %3883 = vmatprep.subr.mxu0 0.0
    %3884 = vmatpush1.xpose.msra.mxu0 0.0
    %3885 = vmatprep.subr.mxu0 0.0
    %3886 = vmatpush1.xpose.msra.mxu0 0.0
    %3887 = vmatprep.subr.mxu0 0.0
    %3888 = vmatpush1.xpose.msra.mxu0 0.0
    %3889 = vmatprep.subr.mxu0 0.0
    %3890 = vmatpush1.xpose.msra.mxu0 0.0
    %3891 = vmatprep.subr.mxu0 0.0
    %3892 = vmatpush1.xpose.msra.mxu0 0.0
    %3893 = vmatprep.subr.mxu0 0.0
    %3894 = vmatpush1.xpose.msra.mxu0 0.0
    %3895 = vmatprep.subr.mxu0 0.0
    %3896 = vmatpush1.xpose.msra.mxu0 0.0
    %3897 = vmatprep.mubr.f32.mxu0 0.0
    %3898 = vmatmul.mubr.f32.gmra.mrb[0].mxu0 %v3807
    %v3899 = vpop.f32.mrb[0].mxu0
    %v3900 = vadd.f32 0.0, %v3899
    %v3901 = vpop.f32.mrb[0].mxu0
    %3902 = vdwg.mxu0
    %v3904 = vsel %vm1384, %v2861, 0
    %v3907 = vsel %vm1384, %v3663, 0
    %v3910 = vsel %vm1384, %v3665, 0
    %v3913 = vsel %vm1384, %v3667, 0
    %v3916 = vsel %vm1384, %v3669, 0
    %v3919 = vsel %vm1384, %v3671, 0
    %v3922 = vsel %vm1384, %v3673, 0
    %v3925 = vsel %vm1384, %v3675, 0
    %v3928 = vsel %vm1384, %v3677, 0
    %3930 = vmatprep.subr.mxu0 0.0
    %3931 = vmatpush1.xpose.msra.mxu0 %v3907
    %3932 = vmatprep.subr.mxu0 0.0
    %3933 = vmatpush1.xpose.msra.mxu0 %v3910
    %3934 = vmatprep.subr.mxu0 0.0
    %3935 = vmatpush1.xpose.msra.mxu0 %v3913
    %3936 = vmatprep.subr.mxu0 0.0
    %3937 = vmatpush1.xpose.msra.mxu0 %v3916
    %3938 = vmatprep.subr.mxu0 0.0
    %3939 = vmatpush1.xpose.msra.mxu0 %v3919
    %3940 = vmatprep.subr.mxu0 0.0
    %3941 = vmatpush1.xpose.msra.mxu0 %v3922
    %3942 = vmatprep.subr.mxu0 0.0
    %3943 = vmatpush1.xpose.msra.mxu0 %v3925
    %3944 = vmatprep.subr.mxu0 0.0
    %3945 = vmatpush1.xpose.msra.mxu0 %v3928
    %3946 = vmatprep.subr.mxu0 0.0
    %3947 = vmatpush1.xpose.msra.mxu0 0.0
    %3948 = vmatprep.subr.mxu0 0.0
    %3949 = vmatpush1.xpose.msra.mxu0 0.0
    %3950 = vmatprep.subr.mxu0 0.0
    %3951 = vmatpush1.xpose.msra.mxu0 0.0
    %3952 = vmatprep.subr.mxu0 0.0
    %3953 = vmatpush1.xpose.msra.mxu0 0.0
    %3954 = vmatprep.subr.mxu0 0.0
    %3955 = vmatpush1.xpose.msra.mxu0 0.0
    %3956 = vmatprep.subr.mxu0 0.0
    %3957 = vmatpush1.xpose.msra.mxu0 0.0
    %3958 = vmatprep.subr.mxu0 0.0
    %3959 = vmatpush1.xpose.msra.mxu0 0.0
    %3960 = vmatprep.subr.mxu0 0.0
    %3961 = vmatpush1.xpose.msra.mxu0 0.0
    %3962 = vmatprep.subr.mxu0 0.0
    %3963 = vmatpush1.xpose.msra.mxu0 0.0
    %3964 = vmatprep.subr.mxu0 0.0
    %3965 = vmatpush1.xpose.msra.mxu0 0.0
    %3966 = vmatprep.subr.mxu0 0.0
    %3967 = vmatpush1.xpose.msra.mxu0 0.0
    %3968 = vmatprep.subr.mxu0 0.0
    %3969 = vmatpush1.xpose.msra.mxu0 0.0
    %3970 = vmatprep.subr.mxu0 0.0
    %3971 = vmatpush1.xpose.msra.mxu0 0.0
    %3972 = vmatprep.subr.mxu0 0.0
    %3973 = vmatpush1.xpose.msra.mxu0 0.0
    %3974 = vmatprep.subr.mxu0 0.0
    %3975 = vmatpush1.xpose.msra.mxu0 0.0
    %3976 = vmatprep.subr.mxu0 0.0
    %3977 = vmatpush1.xpose.msra.mxu0 0.0
    %3978 = vmatprep.subr.mxu0 0.0
    %3979 = vmatpush1.xpose.msra.mxu0 0.0
    %3980 = vmatprep.subr.mxu0 0.0
    %3981 = vmatpush1.xpose.msra.mxu0 0.0
    %3982 = vmatprep.subr.mxu0 0.0
    %3983 = vmatpush1.xpose.msra.mxu0 0.0
    %3984 = vmatprep.subr.mxu0 0.0
    %3985 = vmatpush1.xpose.msra.mxu0 0.0
    %3986 = vmatprep.subr.mxu0 0.0
    %3987 = vmatpush1.xpose.msra.mxu0 0.0
    %3988 = vmatprep.subr.mxu0 0.0
    %3989 = vmatpush1.xpose.msra.mxu0 0.0
    %3990 = vmatprep.subr.mxu0 0.0
    %3991 = vmatpush1.xpose.msra.mxu0 0.0
    %3992 = vmatprep.subr.mxu0 0.0
    %3993 = vmatpush1.xpose.msra.mxu0 0.0
    %3994 = vmatprep.mubr.f32.mxu0 0.0
    %3995 = vmatmul.mubr.f32.gmra.mrb[0].mxu0 %v3904
    %v3996 = vpop.f32.mrb[0].mxu0
    %v3997 = vadd.f32 0.0, %v3996
    %v3998 = vpop.f32.mrb[0].mxu0
    %3999 = vdwg.mxu0
    %v4001 = vsel %vm1384, %v2866, 0
    %v4004 = vsel %vm1384, %v3679, 0
    %v4007 = vsel %vm1384, %v3681, 0
    %v4010 = vsel %vm1384, %v3683, 0
    %v4013 = vsel %vm1384, %v3685, 0
    %v4016 = vsel %vm1384, %v3687, 0
    %v4019 = vsel %vm1384, %v3689, 0
    %v4022 = vsel %vm1384, %v3691, 0
    %v4025 = vsel %vm1384, %v3693, 0
    %4027 = vmatprep.subr.mxu0 0.0
    %4028 = vmatpush1.xpose.msra.mxu0 %v4004
    %4029 = vmatprep.subr.mxu0 0.0
    %4030 = vmatpush1.xpose.msra.mxu0 %v4007
    %4031 = vmatprep.subr.mxu0 0.0
    %4032 = vmatpush1.xpose.msra.mxu0 %v4010
    %4033 = vmatprep.subr.mxu0 0.0
    %4034 = vmatpush1.xpose.msra.mxu0 %v4013
    %4035 = vmatprep.subr.mxu0 0.0
    %4036 = vmatpush1.xpose.msra.mxu0 %v4016
    %4037 = vmatprep.subr.mxu0 0.0
    %4038 = vmatpush1.xpose.msra.mxu0 %v4019
    %4039 = vmatprep.subr.mxu0 0.0
    %4040 = vmatpush1.xpose.msra.mxu0 %v4022
    %4041 = vmatprep.subr.mxu0 0.0
    %4042 = vmatpush1.xpose.msra.mxu0 %v4025
    %4043 = vmatprep.subr.mxu0 0.0
    %4044 = vmatpush1.xpose.msra.mxu0 0.0
    %4045 = vmatprep.subr.mxu0 0.0
    %4046 = vmatpush1.xpose.msra.mxu0 0.0
    %4047 = vmatprep.subr.mxu0 0.0
    %4048 = vmatpush1.xpose.msra.mxu0 0.0
    %4049 = vmatprep.subr.mxu0 0.0
    %4050 = vmatpush1.xpose.msra.mxu0 0.0
    %4051 = vmatprep.subr.mxu0 0.0
    %4052 = vmatpush1.xpose.msra.mxu0 0.0
    %4053 = vmatprep.subr.mxu0 0.0
    %4054 = vmatpush1.xpose.msra.mxu0 0.0
    %4055 = vmatprep.subr.mxu0 0.0
    %4056 = vmatpush1.xpose.msra.mxu0 0.0
    %4057 = vmatprep.subr.mxu0 0.0
    %4058 = vmatpush1.xpose.msra.mxu0 0.0
    %4059 = vmatprep.subr.mxu0 0.0
    %4060 = vmatpush1.xpose.msra.mxu0 0.0
    %4061 = vmatprep.subr.mxu0 0.0
    %4062 = vmatpush1.xpose.msra.mxu0 0.0
    %4063 = vmatprep.subr.mxu0 0.0
    %4064 = vmatpush1.xpose.msra.mxu0 0.0
    %4065 = vmatprep.subr.mxu0 0.0
    %4066 = vmatpush1.xpose.msra.mxu0 0.0
    %4067 = vmatprep.subr.mxu0 0.0
    %4068 = vmatpush1.xpose.msra.mxu0 0.0
    %4069 = vmatprep.subr.mxu0 0.0
    %4070 = vmatpush1.xpose.msra.mxu0 0.0
    %4071 = vmatprep.subr.mxu0 0.0
    %4072 = vmatpush1.xpose.msra.mxu0 0.0
    %4073 = vmatprep.subr.mxu0 0.0
    %4074 = vmatpush1.xpose.msra.mxu0 0.0
    %4075 = vmatprep.subr.mxu0 0.0
    %4076 = vmatpush1.xpose.msra.mxu0 0.0
    %4077 = vmatprep.subr.mxu0 0.0
    %4078 = vmatpush1.xpose.msra.mxu0 0.0
    %4079 = vmatprep.subr.mxu0 0.0
    %4080 = vmatpush1.xpose.msra.mxu0 0.0
    %4081 = vmatprep.subr.mxu0 0.0
    %4082 = vmatpush1.xpose.msra.mxu0 0.0
    %4083 = vmatprep.subr.mxu0 0.0
    %4084 = vmatpush1.xpose.msra.mxu0 0.0
    %4085 = vmatprep.subr.mxu0 0.0
    %4086 = vmatpush1.xpose.msra.mxu0 0.0
    %4087 = vmatprep.subr.mxu0 0.0
    %4088 = vmatpush1.xpose.msra.mxu0 0.0
    %4089 = vmatprep.subr.mxu0 0.0
    %4090 = vmatpush1.xpose.msra.mxu0 0.0
    %4091 = vmatprep.mubr.f32.mxu0 0.0
    %4092 = vmatmul.mubr.f32.gmra.mrb[0].mxu0 %v4001
    %v4093 = vpop.f32.mrb[0].mxu0
    %v4094 = vadd.f32 0.0, %v4093
    %v4095 = vpop.f32.mrb[0].mxu0
    %4096 = vdwg.mxu0
    %v4098 = vsel %vm1384, %v2871, 0
    %v4101 = vsel %vm1384, %v3695, 0
    %v4104 = vsel %vm1384, %v3697, 0
    %v4107 = vsel %vm1384, %v3699, 0
    %v4110 = vsel %vm1384, %v3701, 0
    %v4113 = vsel %vm1384, %v3703, 0
    %v4116 = vsel %vm1384, %v3705, 0
    %v4119 = vsel %vm1384, %v3707, 0
    %v4122 = vsel %vm1384, %v3709, 0
    %4124 = vmatprep.subr.mxu0 0.0
    %4125 = vmatpush1.xpose.msra.mxu0 %v4101
    %4126 = vmatprep.subr.mxu0 0.0
    %4127 = vmatpush1.xpose.msra.mxu0 %v4104
    %4128 = vmatprep.subr.mxu0 0.0
    %4129 = vmatpush1.xpose.msra.mxu0 %v4107
    %4130 = vmatprep.subr.mxu0 0.0
    %4131 = vmatpush1.xpose.msra.mxu0 %v4110
    %4132 = vmatprep.subr.mxu0 0.0
    %4133 = vmatpush1.xpose.msra.mxu0 %v4113
    %4134 = vmatprep.subr.mxu0 0.0
    %4135 = vmatpush1.xpose.msra.mxu0 %v4116
    %4136 = vmatprep.subr.mxu0 0.0
    %4137 = vmatpush1.xpose.msra.mxu0 %v4119
    %4138 = vmatprep.subr.mxu0 0.0
    %4139 = vmatpush1.xpose.msra.mxu0 %v4122
    %4140 = vmatprep.subr.mxu0 0.0
    %4141 = vmatpush1.xpose.msra.mxu0 0.0
    %4142 = vmatprep.subr.mxu0 0.0
    %4143 = vmatpush1.xpose.msra.mxu0 0.0
    %4144 = vmatprep.subr.mxu0 0.0
    %4145 = vmatpush1.xpose.msra.mxu0 0.0
    %4146 = vmatprep.subr.mxu0 0.0
    %4147 = vmatpush1.xpose.msra.mxu0 0.0
    %4148 = vmatprep.subr.mxu0 0.0
    %4149 = vmatpush1.xpose.msra.mxu0 0.0
    %4150 = vmatprep.subr.mxu0 0.0
    %4151 = vmatpush1.xpose.msra.mxu0 0.0
    %4152 = vmatprep.subr.mxu0 0.0
    %4153 = vmatpush1.xpose.msra.mxu0 0.0
    %4154 = vmatprep.subr.mxu0 0.0
    %4155 = vmatpush1.xpose.msra.mxu0 0.0
    %4156 = vmatprep.subr.mxu0 0.0
    %4157 = vmatpush1.xpose.msra.mxu0 0.0
    %4158 = vmatprep.subr.mxu0 0.0
    %4159 = vmatpush1.xpose.msra.mxu0 0.0
    %4160 = vmatprep.subr.mxu0 0.0
    %4161 = vmatpush1.xpose.msra.mxu0 0.0
    %4162 = vmatprep.subr.mxu0 0.0
    %4163 = vmatpush1.xpose.msra.mxu0 0.0
    %4164 = vmatprep.subr.mxu0 0.0
    %4165 = vmatpush1.xpose.msra.mxu0 0.0
    %4166 = vmatprep.subr.mxu0 0.0
    %4167 = vmatpush1.xpose.msra.mxu0 0.0
    %4168 = vmatprep.subr.mxu0 0.0
    %4169 = vmatpush1.xpose.msra.mxu0 0.0
    %4170 = vmatprep.subr.mxu0 0.0
    %4171 = vmatpush1.xpose.msra.mxu0 0.0
    %4172 = vmatprep.subr.mxu0 0.0
    %4173 = vmatpush1.xpose.msra.mxu0 0.0
    %4174 = vmatprep.subr.mxu0 0.0
    %4175 = vmatpush1.xpose.msra.mxu0 0.0
    %4176 = vmatprep.subr.mxu0 0.0
    %4177 = vmatpush1.xpose.msra.mxu0 0.0
    %4178 = vmatprep.subr.mxu0 0.0
    %4179 = vmatpush1.xpose.msra.mxu0 0.0
    %4180 = vmatprep.subr.mxu0 0.0
    %4181 = vmatpush1.xpose.msra.mxu0 0.0
    %4182 = vmatprep.subr.mxu0 0.0
    %4183 = vmatpush1.xpose.msra.mxu0 0.0
    %4184 = vmatprep.subr.mxu0 0.0
    %4185 = vmatpush1.xpose.msra.mxu0 0.0
    %4186 = vmatprep.subr.mxu0 0.0
    %4187 = vmatpush1.xpose.msra.mxu0 0.0
    %4188 = vmatprep.mubr.f32.mxu0 0.0
    %4189 = vmatmul.mubr.f32.gmra.mrb[0].mxu0 %v4098
    %v4190 = vpop.f32.mrb[0].mxu0
    %v4191 = vadd.f32 0.0, %v4190
    %v4192 = vpop.f32.mrb[0].mxu0
    %4193 = vdwg.mxu0
    %v4194 = vrcp.pop %v3712
    %v4195 = vrcp.pop %v3715
    %v4196 = vrcp.pop %v3718
    %v4197 = vrcp.pop %v3721
    %v4198 = vrcp.pop %v3724
    %v4199 = vrcp.pop %v3727
    %v4200 = vrcp.pop %v3730
    %v4201 = vrcp.pop %v3733
    %v4202 = vrcp.pop %v3736
    %v4203 = vrcp.pop %v3739
    %v4204 = vrcp.pop %v3742
    %v4205 = vrcp.pop %v3745
    %v4206 = vrcp.pop %v3748
    %v4207 = vrcp.pop %v3751
    %v4208 = vrcp.pop %v3754
    %v4209 = vrcp.pop %v3757
    %v4210 = vrcp.pop %v3760
    %v4211 = vrcp.pop %v3763
    %v4212 = vrcp.pop %v3766
    %v4213 = vrcp.pop %v3769
    %v4214 = vrcp.pop %v3772
    %v4215 = vrcp.pop %v3775
    %v4216 = vrcp.pop %v3778
    %v4217 = vrcp.pop %v3781
    %v4218 = vrcp.pop %v3784
    %v4219 = vrcp.pop %v3787
    %v4220 = vrcp.pop %v3790
    %v4221 = vrcp.pop %v3793
    %v4222 = vrcp.pop %v3796
    %v4223 = vrcp.pop %v3799
    %v4224 = vrcp.pop %v3802
    %v4225 = vrcp.pop %v3805
    %v4258 = vlaneseq
    %v4259 = vshrl.u32 %v4258, 7
    %v4260 = vsub.s32 %v2126, %v4259
    %v4261 = vrot.slane %v4194, %v4260
    %v4262 = vlaneseq
    %v4263 = vshrl.u32 %v4262, 7
    %v4264 = vsub.s32 %v2131, %v4263
    %v4265 = vrot.slane %v4195, %v4264
    %v4266 = vsel %vm2136, %v4265, %v4261
    %v4267 = vlaneseq
    %v4268 = vshrl.u32 %v4267, 7
    %v4269 = vsub.s32 %v2138, %v4268
    %v4270 = vrot.slane %v4196, %v4269
    %v4271 = vsel %vm2143, %v4270, %v4266
    %v4272 = vlaneseq
    %v4273 = vshrl.u32 %v4272, 7
    %v4274 = vsub.s32 %v2145, %v4273
    %v4275 = vrot.slane %v4197, %v4274
    %v4276 = vsel %vm2150, %v4275, %v4271
    %v4277 = vlaneseq
    %v4278 = vshrl.u32 %v4277, 7
    %v4279 = vsub.s32 %v2152, %v4278
    %v4280 = vrot.slane %v4198, %v4279
    %v4281 = vsel %vm2157, %v4280, %v4276
    %v4282 = vlaneseq
    %v4283 = vshrl.u32 %v4282, 7
    %v4284 = vsub.s32 %v2159, %v4283
    %v4285 = vrot.slane %v4199, %v4284
    %v4286 = vsel %vm2164, %v4285, %v4281
    %v4287 = vlaneseq
    %v4288 = vshrl.u32 %v4287, 7
    %v4289 = vsub.s32 %v2166, %v4288
    %v4290 = vrot.slane %v4200, %v4289
    %v4291 = vsel %vm2171, %v4290, %v4286
    %v4292 = vlaneseq
    %v4293 = vshrl.u32 %v4292, 7
    %v4294 = vsub.s32 %v2173, %v4293
    %v4295 = vrot.slane %v4201, %v4294
    %v4296 = vsel %vm2178, %v4295, %v4291
    %v4297 = vlaneseq
    %v4298 = vshrl.u32 %v4297, 7
    %v4299 = vsub.s32 %v2126, %v4298
    %v4300 = vrot.slane %v4202, %v4299
    %v4301 = vlaneseq
    %v4302 = vshrl.u32 %v4301, 7
    %v4303 = vsub.s32 %v2131, %v4302
    %v4304 = vrot.slane %v4203, %v4303
    %v4305 = vsel %vm2136, %v4304, %v4300
    %v4306 = vlaneseq
    %v4307 = vshrl.u32 %v4306, 7
    %v4308 = vsub.s32 %v2138, %v4307
    %v4309 = vrot.slane %v4204, %v4308
    %v4310 = vsel %vm2143, %v4309, %v4305
    %v4311 = vlaneseq
    %v4312 = vshrl.u32 %v4311, 7
    %v4313 = vsub.s32 %v2145, %v4312
    %v4314 = vrot.slane %v4205, %v4313
    %v4315 = vsel %vm2150, %v4314, %v4310
    %v4316 = vlaneseq
    %v4317 = vshrl.u32 %v4316, 7
    %v4318 = vsub.s32 %v2152, %v4317
    %v4319 = vrot.slane %v4206, %v4318
    %v4320 = vsel %vm2157, %v4319, %v4315
    %v4321 = vlaneseq
    %v4322 = vshrl.u32 %v4321, 7
    %v4323 = vsub.s32 %v2159, %v4322
    %v4324 = vrot.slane %v4207, %v4323
    %v4325 = vsel %vm2164, %v4324, %v4320
    %v4326 = vlaneseq
    %v4327 = vshrl.u32 %v4326, 7
    %v4328 = vsub.s32 %v2166, %v4327
    %v4329 = vrot.slane %v4208, %v4328
    %v4330 = vsel %vm2171, %v4329, %v4325
    %v4331 = vlaneseq
    %v4332 = vshrl.u32 %v4331, 7
    %v4333 = vsub.s32 %v2173, %v4332
    %v4334 = vrot.slane %v4209, %v4333
    %v4335 = vsel %vm2178, %v4334, %v4330
    %v4336 = vlaneseq
    %v4337 = vshrl.u32 %v4336, 7
    %v4338 = vsub.s32 %v2126, %v4337
    %v4339 = vrot.slane %v4210, %v4338
    %v4340 = vlaneseq
    %v4341 = vshrl.u32 %v4340, 7
    %v4342 = vsub.s32 %v2131, %v4341
    %v4343 = vrot.slane %v4211, %v4342
    %v4344 = vsel %vm2136, %v4343, %v4339
    %v4345 = vlaneseq
    %v4346 = vshrl.u32 %v4345, 7
    %v4347 = vsub.s32 %v2138, %v4346
    %v4348 = vrot.slane %v4212, %v4347
    %v4349 = vsel %vm2143, %v4348, %v4344
    %v4350 = vlaneseq
    %v4351 = vshrl.u32 %v4350, 7
    %v4352 = vsub.s32 %v2145, %v4351
    %v4353 = vrot.slane %v4213, %v4352
    %v4354 = vsel %vm2150, %v4353, %v4349
    %v4355 = vlaneseq
    %v4356 = vshrl.u32 %v4355, 7
    %v4357 = vsub.s32 %v2152, %v4356
    %v4358 = vrot.slane %v4214, %v4357
    %v4359 = vsel %vm2157, %v4358, %v4354
    %v4360 = vlaneseq
    %v4361 = vshrl.u32 %v4360, 7
    %v4362 = vsub.s32 %v2159, %v4361
    %v4363 = vrot.slane %v4215, %v4362
    %v4364 = vsel %vm2164, %v4363, %v4359
    %v4365 = vlaneseq
    %v4366 = vshrl.u32 %v4365, 7
    %v4367 = vsub.s32 %v2166, %v4366
    %v4368 = vrot.slane %v4216, %v4367
    %v4369 = vsel %vm2171, %v4368, %v4364
    %v4370 = vlaneseq
    %v4371 = vshrl.u32 %v4370, 7
    %v4372 = vsub.s32 %v2173, %v4371
    %v4373 = vrot.slane %v4217, %v4372
    %v4374 = vsel %vm2178, %v4373, %v4369
    %v4375 = vlaneseq
    %v4376 = vshrl.u32 %v4375, 7
    %v4377 = vsub.s32 %v2126, %v4376
    %v4378 = vrot.slane %v4218, %v4377
    %v4379 = vlaneseq
    %v4380 = vshrl.u32 %v4379, 7
    %v4381 = vsub.s32 %v2131, %v4380
    %v4382 = vrot.slane %v4219, %v4381
    %v4383 = vsel %vm2136, %v4382, %v4378
    %v4384 = vlaneseq
    %v4385 = vshrl.u32 %v4384, 7
    %v4386 = vsub.s32 %v2138, %v4385
    %v4387 = vrot.slane %v4220, %v4386
    %v4388 = vsel %vm2143, %v4387, %v4383
    %v4389 = vlaneseq
    %v4390 = vshrl.u32 %v4389, 7
    %v4391 = vsub.s32 %v2145, %v4390
    %v4392 = vrot.slane %v4221, %v4391
    %v4393 = vsel %vm2150, %v4392, %v4388
    %v4394 = vlaneseq
    %v4395 = vshrl.u32 %v4394, 7
    %v4396 = vsub.s32 %v2152, %v4395
    %v4397 = vrot.slane %v4222, %v4396
    %v4398 = vsel %vm2157, %v4397, %v4393
    %v4399 = vlaneseq
    %v4400 = vshrl.u32 %v4399, 7
    %v4401 = vsub.s32 %v2159, %v4400
    %v4402 = vrot.slane %v4223, %v4401
    %v4403 = vsel %vm2164, %v4402, %v4398
    %v4404 = vlaneseq
    %v4405 = vshrl.u32 %v4404, 7
    %v4406 = vsub.s32 %v2166, %v4405
    %v4407 = vrot.slane %v4224, %v4406
    %v4408 = vsel %vm2171, %v4407, %v4403
    %v4409 = vlaneseq
    %v4410 = vshrl.u32 %v4409, 7
    %v4411 = vsub.s32 %v2173, %v4410
    %v4412 = vrot.slane %v4225, %v4411
    %v4413 = vsel %vm2178, %v4412, %v4408
    %v4414 = vsel %vm2297, %v4296, %v4296
    %v4415 = vsel %vm2299, %v4296, %v4414
    %v4416 = vsel %vm2301, %v4296, %v4415
    %v4417 = vsel %vm2303, %v4296, %v4416
    %v4418 = vsel %vm2305, %v4296, %v4417
    %v4419 = vsel %vm2307, %v4296, %v4418
    %v4420 = vsel %vm2297, %v4335, %v4335
    %v4421 = vsel %vm2299, %v4335, %v4420
    %v4422 = vsel %vm2301, %v4335, %v4421
    %v4423 = vsel %vm2303, %v4335, %v4422
    %v4424 = vsel %vm2305, %v4335, %v4423
    %v4425 = vsel %vm2307, %v4335, %v4424
    %v4426 = vsel %vm2297, %v4374, %v4374
    %v4427 = vsel %vm2299, %v4374, %v4426
    %v4428 = vsel %vm2301, %v4374, %v4427
    %v4429 = vsel %vm2303, %v4374, %v4428
    %v4430 = vsel %vm2305, %v4374, %v4429
    %v4431 = vsel %vm2307, %v4374, %v4430
    %v4432 = vsel %vm2297, %v4413, %v4413
    %v4433 = vsel %vm2299, %v4413, %v4432
    %v4434 = vsel %vm2301, %v4413, %v4433
    %v4435 = vsel %vm2303, %v4413, %v4434
    %v4436 = vsel %vm2305, %v4413, %v4435
    %v4437 = vsel %vm2307, %v4413, %v4436
    %v4442 = vmul.f32 %v3900, %v4419
    %v4443 = vmul.f32 %v3997, %v4425
    %v4444 = vmul.f32 %v4094, %v4431
    %v4445 = vmul.f32 %v4191, %v4437
    %4446 = vmatprep.subr.mxu0 0.0
    %4447 = vmatpush1.msra.mxu0 %v4442
    %4448 = vmatprep.subr.mxu0 0.0
    %4449 = vmatpush1.msra.mxu0 %v4443
    %4450 = vmatprep.subr.mxu0 0.0
    %4451 = vmatpush1.msra.mxu0 %v4444
    %4452 = vmatprep.subr.mxu0 0.0
    %4453 = vmatpush1.msra.mxu0 %v4445
    %4454 = vmatprep.subr.mxu0 0.0
    %4455 = vmatpush1.msra.mxu0 0.0
    %4456 = vmatprep.subr.mxu0 0.0
    %4457 = vmatpush1.msra.mxu0 0.0
    %4458 = vmatprep.subr.mxu0 0.0
    %4459 = vmatpush1.msra.mxu0 0.0
    %4460 = vmatprep.subr.mxu0 0.0
    %4461 = vmatpush1.msra.mxu0 0.0
    %4462 = vmatprep.subr.mxu0 0.0
    %4463 = vmatpush1.msra.mxu0 0.0
    %4464 = vmatprep.subr.mxu0 0.0
    %4465 = vmatpush1.msra.mxu0 0.0
    %4466 = vmatprep.subr.mxu0 0.0
    %4467 = vmatpush1.msra.mxu0 0.0
    %4468 = vmatprep.subr.mxu0 0.0
    %4469 = vmatpush1.msra.mxu0 0.0
    %4470 = vmatprep.subr.mxu0 0.0
    %4471 = vmatpush1.msra.mxu0 0.0
    %4472 = vmatprep.subr.mxu0 0.0
    %4473 = vmatpush1.msra.mxu0 0.0
    %4474 = vmatprep.subr.mxu0 0.0
    %4475 = vmatpush1.msra.mxu0 0.0
    %4476 = vmatprep.subr.mxu0 0.0
    %4477 = vmatpush1.msra.mxu0 0.0
    %4478 = vmatprep.subr.mxu0 0.0
    %4479 = vmatpush1.msra.mxu0 0.0
    %4480 = vmatprep.subr.mxu0 0.0
    %4481 = vmatpush1.msra.mxu0 0.0
    %4482 = vmatprep.subr.mxu0 0.0
    %4483 = vmatpush1.msra.mxu0 0.0
    %4484 = vmatprep.subr.mxu0 0.0
    %4485 = vmatpush1.msra.mxu0 0.0
    %4486 = vmatprep.subr.mxu0 0.0
    %4487 = vmatpush1.msra.mxu0 0.0
    %4488 = vmatprep.subr.mxu0 0.0
    %4489 = vmatpush1.msra.mxu0 0.0
    %4490 = vmatprep.subr.mxu0 0.0
    %4491 = vmatpush1.msra.mxu0 0.0
    %4492 = vmatprep.subr.mxu0 0.0
    %4493 = vmatpush1.msra.mxu0 0.0
    %4494 = vmatprep.subr.mxu0 0.0
    %4495 = vmatpush1.msra.mxu0 0.0
    %4496 = vmatprep.subr.mxu0 0.0
    %4497 = vmatpush1.msra.mxu0 0.0
    %4498 = vmatprep.subr.mxu0 0.0
    %4499 = vmatpush1.msra.mxu0 0.0
    %4500 = vmatprep.subr.mxu0 0.0
    %4501 = vmatpush1.msra.mxu0 0.0
    %4502 = vmatprep.subr.mxu0 0.0
    %4503 = vmatpush1.msra.mxu0 0.0
    %4504 = vmatprep.subr.mxu0 0.0
    %4505 = vmatpush1.msra.mxu0 0.0
    %4506 = vmatprep.subr.mxu0 0.0
    %4507 = vmatpush1.msra.mxu0 0.0
    %4508 = vmatprep.subr.mxu0 0.0
    %4509 = vmatpush1.msra.mxu0 0.0
    %4510 = vmatprep.mubr.f32.mxu0 0.0
    %4511 = vmatmul.mubr.f32.gmra.mrb[0].mxu0 %v2356
    %v4512 = vpop.f32.mrb[0].mxu0
    %v4513 = vadd.f32 %v2338, %v4512
    %v4514 = vpop.f32.mrb[0].mxu0
    %4515 = vmatprep.mubr.f32.mxu0 0.0
    %4516 = vmatmul.mubr.f32.gmra.mrb[0].mxu0 %v2359
    %v4517 = vpop.f32.mrb[0].mxu0
    %v4518 = vadd.f32 %v2343, %v4517
    %v4519 = vpop.f32.mrb[0].mxu0
    %4520 = vmatprep.mubr.f32.mxu0 0.0
    %4521 = vmatmul.mubr.f32.gmra.mrb[0].mxu0 %v2362
    %v4522 = vpop.f32.mrb[0].mxu0
    %v4523 = vadd.f32 %v2348, %v4522
    %v4524 = vpop.f32.mrb[0].mxu0
    %4525 = vmatprep.mubr.f32.mxu0 0.0
    %4526 = vmatmul.mubr.f32.gmra.mrb[0].mxu0 %v2365
    %v4527 = vpop.f32.mrb[0].mxu0
    %v4528 = vadd.f32 %v2353, %v4527
    %v4529 = vpop.f32.mrb[0].mxu0
    %4530 = vdwg.mxu0
    %v4531 = vadd.f32 %v2461, %v4513
    %v4532 = vadd.f32 %v2462, %v4518
    %v4533 = vadd.f32 %v2463, %v4523
    %v4534 = vadd.f32 %v2464, %v4528
    %s4535 = scalar_lea.vmem [#allocation2], 32
    %4536 = vst.msk [vmem:[%s4535] sm:$0xff] %vm1384, %v4531
    %4537 = vst.msk [vmem:[%s4535 + $0x8] sm:$0xff] %vm1384, %v4532
    %4538 = vst.msk [vmem:[%s4535 + $0x10] sm:$0xff] %vm1384, %v4533
    %4539 = vst.msk [vmem:[%s4535 + $0x18] sm:$0xff] %vm1384, %v4534
    // Predicated region
    $region30: #{tpu_custom_call.1} parent=1 // pred_check
      _
    $region31: #{tpu_custom_call.1} parent=1 // pred_check_branch
      %4541 = sbr.rel (0) target = $region33
    $region32: #{tpu_custom_call.1} parent=1 // pred_region
      %s4543 = ssub.s32 1024, 1024
      %4544 = vsyncadd [#allocation3], %s4543
      %s4545 = sshll.u32 [#allocation2], 4
      %s4546 = int_to_ptr.vmem [resolvable:$true] %s4545
      %4551 = dma.vmem_to_hbm [thread:$0]  %s4546, 1024, %s7, [#allocation3], 128, 128, 8
    $region33: #{tpu_custom_call.1} parent=1 // pred_fallthru
      _
    // Predicated region
    $region34: #{tpu_custom_call.1} parent=1 // pred_check
      _
    $region35: #{tpu_custom_call.1} parent=1 // pred_check_branch
      %4553 = sbr.rel (0) target = $region37
    $region36: #{tpu_custom_call.1} parent=1 // pred_region
      %4554 = dma.done [#allocation3], 1024
    $region37: #{tpu_custom_call.1} parent=1 // pred_fallthru
      _
    %4555 = vsyncpa [#allocation3], 1

</llo_original>
